<compile_context>
chip_gen: v6e
topology: v6e:2x2x1
jax: 0.10.0
libtpu: 0.0.40
codegen_flags: <defaults>
</compile_context>

<pallas_src>
import math
from functools import partial

import jax
import jax.numpy as jnp
from jax.experimental import pallas as pl
from jax.experimental.pallas import tpu as pltpu


# ------------------------------------------------------------------ model constants

LATENT_DIM = 512
FF_SIZE = 1024
NUM_LAYERS = 6
NUM_HEADS = 4
HEAD_DIM = LATENT_DIM // NUM_HEADS          # 128 -> one lane block per head
STYLE_NUMS = 34
NFEATS = 263
LATENT_SIZE = 1
N_TOK = LATENT_SIZE * 2                     # 2 global motion tokens
MAX_POS = 64                                # learned positional table length
NFEATS_PAD = 384                            # 263 -> 3*128 lane-aligned
CLS_PAD = 128                               # classifier out 34 -> 128 lane-dense
LN_EPS = 1e-5
_GELU_C = 0.7978845608028654                # sqrt(2/pi)
_NEG_INF = -1e9


def _round_up(x, m):
    return (x + m - 1) // m * m


def _layernorm(x, g, b, eps):
    mu = jnp.mean(x, axis=-1, keepdims=True)
    xc = x - mu
    var = jnp.mean(xc * xc, axis=-1, keepdims=True)
    return xc * jax.lax.rsqrt(var + eps) * g + b


def _gelu_tanh(x):
    # TODO(synk): torch F.gelu defaults to the erf form; tanh approx differs ~1e-3.
    return 0.5 * x * (1.0 + jnp.tanh(_GELU_C * (x + 0.044715 * x * x * x)))


# ------------------------------------------------------------------------- kernel

def _encoder_kernel(
        lens_ref,                                    # scalar prefetch (SMEM), [B] i32
        x_ref, skelw_ref, skelb_ref, tok_ref, qpos_ref,
        wqkv_ref, wo_ref, w1_ref, w2_ref, vecs_ref,
        fg_ref, fb_ref, cw_ref, cb_ref,
        style_ref, logits_ref,
        h_scratch,
        *, num_heads, head_dim, n_tok, t_frames, s_pad, eps):
    b = pl.program_id(0)
    layer = pl.program_id(1)
    d_model = num_heads * head_dim

    # ---- layer 0: fused skel_embedding + token prepend + positional embedding ----
    @pl.when(layer == 0)
    def _():
        emb = (jnp.dot(x_ref[0], skelw_ref[...],
                       preferred_element_type=jnp.float32) + skelb_ref[...])
        parts = [tok_ref[...] + qpos_ref[0:n_tok, :],
                 emb + qpos_ref[n_tok:n_tok + t_frames, :]]
        n_pad = s_pad - n_tok - t_frames
        if n_pad:
            parts.append(jnp.zeros((n_pad, d_model), jnp.float32))
        h_scratch[...] = jnp.concatenate(parts, axis=0)

    h = h_scratch[...]                               # [S_pad, D] f32, VMEM-resident
    hb = h.astype(jnp.bfloat16)

    # ---- packed per-layer bias / LayerNorm vectors (one DMA block) ----
    vecs = vecs_ref[0]                               # [8, 3D] f32
    bqkv = vecs[0:1, :]                              # [1, 3D]
    b1 = vecs[1:2, :FF_SIZE]                         # [1, F]
    bo = vecs[2:3, :d_model]
    b2 = vecs[2:3, d_model:2 * d_model]
    ln1g = vecs[3:4, :d_model]
    ln1b = vecs[3:4, d_model:2 * d_model]
    ln2g = vecs[4:5, :d_model]
    ln2b = vecs[4:5, d_model:2 * d_model]

    # ---- key-padding bias row for this batch, built in-kernel (no [M,M] tensor) ----
    length = lens_ref[b]
    col = jax.lax.broadcasted_iota(jnp.int32, (1, s_pad), 1)
    valid = (col < n_tok) | ((col < n_tok + t_frames) & ((col - n_tok) < length))
    bias = jnp.where(valid, 0.0, _NEG_INF)           # [1, S_pad] f32

    # ---- self attention (1/sqrt(Dh) pre-folded into the q projection) ----
    qkv = (jnp.dot(hb, wqkv_ref[0], preferred_element_type=jnp.float32) + bqkv)
    qkv_b = qkv.astype(jnp.bfloat16)

    head_outs = []
    for hh in range(num_heads):                      # static unroll, Dh = 128
        lo = hh * head_dim
        q = qkv_b[:, lo:lo + head_dim]
        k = qkv_b[:, d_model + lo:d_model + lo + head_dim]
        v = qkv_b[:, 2 * d_model + lo:2 * d_model + lo + head_dim]
        s = jax.lax.dot_general(q, k, (((1,), (1,)), ((), ())),
                                preferred_element_type=jnp.float32)
        s = s + bias                                 # broadcast key bias over queries
        s_max = jnp.max(s, axis=-1, keepdims=True)   # softmax stays in f32
        p = jnp.exp(s - s_max)
        p = p * pl.reciprocal(jnp.sum(p, axis=-1, keepdims=True), approx=True)
        head_outs.append(jnp.dot(p.astype(jnp.bfloat16), v,
                                 preferred_element_type=jnp.float32))
    # lane-placement concat (128-aligned) -> ONE K=512 out-projection matmul
    attn = jnp.concatenate(head_outs, axis=-1)       # [S_pad, D]
    o = (jnp.dot(attn.astype(jnp.bfloat16), wo_ref[0],
                 preferred_element_type=jnp.float32) + bo)
    h1 = _layernorm(h + o, ln1g, ln1b, eps)          # norm1(src + attn)

    # ---- feed forward ----
    f = (jnp.dot(h1.astype(jnp.bfloat16), w1_ref[0],
                 preferred_element_type=jnp.float32) + b1)
    f = _gelu_tanh(f)                                # f32 elementwise
    g = (jnp.dot(f.astype(jnp.bfloat16), w2_ref[0],
                 preferred_element_type=jnp.float32) + b2)
    h_new = _layernorm(h1 + g, ln2g, ln2b, eps)      # norm2(src + ffn)
    h_scratch[...] = h_new

    # ---- final encoder LayerNorm + classifier: only the first 8 rows (token 0) ----
    @pl.when(layer == pl.num_programs(1) - 1)
    def _():
        top = h_new[0:8, :]                          # row 0 is the style token
        ln = _layernorm(top, fg_ref[...], fb_ref[...], eps)
        style_ref[0] = ln
        logits_ref[0] = (jnp.dot(ln.astype(jnp.bfloat16), cw_ref[...],
                                 preferred_element_type=jnp.float32) + cb_ref[...])


def encoder_stack(lengths, x, prepped, *, t_frames, s_pad):
    """lengths: [B] i32, x: [B, T, NFEATS_PAD] bf16 -> ([B,8,D] f32, [B,8,128] f32)."""
    B = x.shape[0]
    D, F, L = LATENT_DIM, FF_SIZE, NUM_LAYERS
    st = prepped["stacked"]

    cbat = lambda b, l, lens: (b, 0, 0)              # per-batch 3-D blocks
    c2 = lambda b, l, lens: (0, 0)                   # constant 2-D blocks
    lay = lambda b, l, lens: (l, 0, 0)               # per-layer 3-D stacked weights

    grid_spec = pltpu.PrefetchScalarGridSpec(
        num_scalar_prefetch=1,                       # lengths -> SMEM
        grid=(B, L),
        in_specs=[
            pl.BlockSpec((1, t_frames, NFEATS_PAD), cbat),   # x (bf16)
            pl.BlockSpec((NFEATS_PAD, D), c2),               # skel_w (bf16)
            pl.BlockSpec((1, D), c2),                        # skel_b
            pl.BlockSpec((N_TOK, D), c2),                    # global motion tokens
            pl.BlockSpec((MAX_POS, D), c2),                  # learned positional table
            pl.BlockSpec((1, D, 3 * D), lay),                # wqkv (bf16)
            pl.BlockSpec((1, D, D), lay),                    # wo   (bf16, unsplit)
            pl.BlockSpec((1, D, F), lay),                    # w1   (bf16)
            pl.BlockSpec((1, F, D), lay),                    # w2   (bf16)
            pl.BlockSpec((1, 8, 3 * D), lay),                # packed per-layer vectors
            pl.BlockSpec((1, D), c2),                        # final_g
            pl.BlockSpec((1, D), c2),                        # final_b
            pl.BlockSpec((D, CLS_PAD), c2),                  # cls_w (bf16)
            pl.BlockSpec((1, CLS_PAD), c2),                  # cls_b
        ],
        out_specs=[
            pl.BlockSpec((1, 8, D), cbat),                   # token-0 LN rows
            pl.BlockSpec((1, 8, CLS_PAD), cbat),             # token-0 logits (lane-dense)
        ],
        scratch_shapes=[pltpu.VMEM((s_pad, D), jnp.float32)],  # carried activation
    )
    out_shape = (jax.ShapeDtypeStruct((B, 8, D), jnp.float32),
                 jax.ShapeDtypeStruct((B, 8, CLS_PAD), jnp.float32))

    return pl.pallas_call(
        partial(_encoder_kernel,
                num_heads=NUM_HEADS, head_dim=HEAD_DIM, n_tok=N_TOK,
                t_frames=t_frames, s_pad=s_pad, eps=LN_EPS),
        grid_spec=grid_spec,
        out_shape=out_shape,
        compiler_params=pltpu.CompilerParams(
            dimension_semantics=("parallel", "arbitrary"),
            vmem_limit_bytes=48 * 1024 * 1024),
    )(lengths, x,
      prepped["skel_w"], prepped["skel_b"],
      prepped["global_token"], prepped["query_pos"],
      st["wqkv"], st["wo"], st["w1"], st["w2"], st["vecs"],
      prepped["final_g"], prepped["final_b"],
      prepped["cls_w"], prepped["cls_b"])


# ---------------------------------------------------------------------- parameters

def init_params(key):
    def dense(k, din, dout, scale=0.02):
        kw, kb = jax.random.split(k)
        return (jax.random.normal(kw, (din, dout), jnp.float32) * scale,
                jax.random.normal(kb, (dout,), jnp.float32) * scale)

    keys = jax.random.split(key, 4 + NUM_LAYERS)
    params = {}
    params["skel_w"], params["skel_b"] = dense(keys[0], NFEATS, LATENT_DIM)
    params["global_token"] = 0.02 * jax.random.normal(
        keys[1], (N_TOK, LATENT_DIM), jnp.float32)
    params["query_pos"] = 0.02 * jax.random.normal(
        keys[2], (MAX_POS, LATENT_DIM), jnp.float32)
    params["cls_w"], params["cls_b"] = dense(keys[3], LATENT_DIM, STYLE_NUMS)
    params["final_g"] = jnp.ones((LATENT_DIM,), jnp.float32)
    params["final_b"] = jnp.zeros((LATENT_DIM,), jnp.float32)

    layers = []
    for i in range(NUM_LAYERS):
        lk = jax.random.split(keys[4 + i], 4)
        layer = {}
        layer["wqkv"], layer["bqkv"] = dense(lk[0], LATENT_DIM, 3 * LATENT_DIM)
        layer["wo"], layer["bo"] = dense(lk[1], LATENT_DIM, LATENT_DIM)
        layer["w1"], layer["b1"] = dense(lk[2], LATENT_DIM, FF_SIZE)
        layer["w2"], layer["b2"] = dense(lk[3], FF_SIZE, LATENT_DIM)
        layer["ln1_g"] = jnp.ones((LATENT_DIM,), jnp.float32)
        layer["ln1_b"] = jnp.zeros((LATENT_DIM,), jnp.float32)
        layer["ln2_g"] = jnp.ones((LATENT_DIM,), jnp.float32)
        layer["ln2_b"] = jnp.zeros((LATENT_DIM,), jnp.float32)
        layers.append(layer)
    params["layers"] = layers
    return params


def prepare_params(params):
    """Stack per-layer weights on a layer axis, cast matmul weights to bf16, fold
    1/sqrt(Dh) into the q projection, pack small per-layer vectors into one block,
    lane-pad skel / classifier matrices."""
    D, F, L = LATENT_DIM, FF_SIZE, NUM_LAYERS
    scale = 1.0 / math.sqrt(HEAD_DIM)

    def stack(name):
        return jnp.stack([l[name] for l in params["layers"]], axis=0)

    wqkv = stack("wqkv")                                   # [L, D, 3D] f32
    bqkv = stack("bqkv")                                   # [L, 3D]    f32
    wqkv = wqkv.at[:, :, :D].multiply(scale)               # fold attention scale into q
    bqkv = bqkv.at[:, :D].multiply(scale)

    # pack all per-layer bias / LayerNorm vectors into one [L, 8, 3D] f32 block
    vecs = jnp.zeros((L, 8, 3 * D), jnp.float32)
    vecs = vecs.at[:, 0, :].set(bqkv)
    vecs = vecs.at[:, 1, :F].set(stack("b1"))
    vecs = vecs.at[:, 2, :D].set(stack("bo"))
    vecs = vecs.at[:, 2, D:2 * D].set(stack("b2"))
    vecs = vecs.at[:, 3, :D].set(stack("ln1_g"))
    vecs = vecs.at[:, 3, D:2 * D].set(stack("ln1_b"))
    vecs = vecs.at[:, 4, :D].set(stack("ln2_g"))
    vecs = vecs.at[:, 4, D:2 * D].set(stack("ln2_b"))

    # TODO(synk): optional int8/per-channel weight streaming (v5e/v6e HBM-bound regime)
    # left out to preserve numerical parity with the PyTorch reference.
    stacked = {
        "wqkv": wqkv.astype(jnp.bfloat16),
        "wo": stack("wo").astype(jnp.bfloat16),            # unsplit: one K=512 out-proj
        "w1": stack("w1").astype(jnp.bfloat16),
        "w2": stack("w2").astype(jnp.bfloat16),
        "vecs": vecs,
    }

    skel_w = jnp.zeros((NFEATS_PAD, D), jnp.float32).at[:NFEATS].set(params["skel_w"])
    cls_w = jnp.zeros((D, CLS_PAD), jnp.float32).at[:, :STYLE_NUMS].set(params["cls_w"])
    cls_b = jnp.zeros((CLS_PAD,), jnp.float32).at[:STYLE_NUMS].set(params["cls_b"])

    return {
        "skel_w": skel_w.astype(jnp.bfloat16),
        "skel_b": params["skel_b"].reshape(1, D),
        "global_token": params["global_token"],
        "query_pos": params["query_pos"],
        "final_g": params["final_g"].reshape(1, D),
        "final_b": params["final_b"].reshape(1, D),
        "cls_w": cls_w.astype(jnp.bfloat16),
        "cls_b": cls_b.reshape(1, CLS_PAD),
        "stacked": stacked,
    }


# ------------------------------------------------------------------------- forward

def style_encoder_forward(prepped, features, lengths):
    """features: [B, 263, 1, T] (PyTorch reference layout), lengths: [B] int."""
    B, nfeats, njoints, T = features.shape
    assert njoints == 1, "reference model squeezes the joint dim (njoints must be 1)"
    S = N_TOK + T
    assert S <= MAX_POS, "sequence longer than learned positional table"
    S_pad = _round_up(S, 8)

    # minimal wrapper glue: permute(0,3,2,1) -> [B, T, 263], cast bf16, lane-pad to 384
    x = jnp.transpose(features, (0, 3, 2, 1)).reshape(B, T, nfeats)
    x = x.astype(jnp.bfloat16)
    x = jnp.pad(x, ((0, 0), (0, 0), (0, NFEATS_PAD - nfeats)))
    lengths = jnp.asarray(lengths, jnp.int32)

    style_out, logits_out = encoder_stack(lengths, x, prepped,
                                          t_frames=T, s_pad=S_pad)

    style_code = style_out[:, 0, :]                      # dist[0] -> [B, D]
    pred = logits_out[:, 0, :STYLE_NUMS]                 # [B, 34]
    return style_code, pred


# ---------------------------------------------------------------------------- main

if __name__ == "__main__":
    key = jax.random.PRNGKey(0)
    kp, kx = jax.random.split(key)

    B, T = 2, 8                                    # small example: batch=2, 8 frames
    params = init_params(kp)
    prepped = prepare_params(params)
    features = jax.random.normal(kx, (B, NFEATS, 1, T), jnp.float32)
    lengths = jnp.array([8, 5], dtype=jnp.int32)   # second sample has 3 padded frames

    fwd = jax.jit(style_encoder_forward)
    style_code, pred = fwd(prepped, features, lengths)
    jax.block_until_ready((style_code, pred))

    assert style_code.shape == (B, LATENT_DIM)
    assert pred.shape == (B, STYLE_NUMS)
    assert bool(jnp.all(jnp.isfinite(style_code))) and bool(jnp.all(jnp.isfinite(pred)))
    print("KERNEL_OK")
</pallas_src>

<mosaic_0001>
module attributes {stable_mosaic.version = 11 : i64} {
  func.func @_encoder_kernel(%arg0: i32, %arg1: i32, %arg2: memref<2xi32, #tpu.memory_space<smem>>, %arg3: memref<1x8x384xbf16, #tpu.memory_space<vmem>>, %arg4: memref<384x512xbf16, #tpu.memory_space<vmem>>, %arg5: memref<1x512xf32, #tpu.memory_space<vmem>>, %arg6: memref<2x512xf32, #tpu.memory_space<vmem>>, %arg7: memref<64x512xf32, #tpu.memory_space<vmem>>, %arg8: memref<1x512x1536xbf16, #tpu.memory_space<vmem>>, %arg9: memref<1x512x512xbf16, #tpu.memory_space<vmem>>, %arg10: memref<1x512x1024xbf16, #tpu.memory_space<vmem>>, %arg11: memref<1x1024x512xbf16, #tpu.memory_space<vmem>>, %arg12: memref<1x8x1536xf32, #tpu.memory_space<vmem>>, %arg13: memref<1x512xf32, #tpu.memory_space<vmem>>, %arg14: memref<1x512xf32, #tpu.memory_space<vmem>>, %arg15: memref<512x128xbf16, #tpu.memory_space<vmem>>, %arg16: memref<1x128xf32, #tpu.memory_space<vmem>>, %arg17: memref<1x8x512xf32, #tpu.memory_space<vmem>>, %arg18: memref<1x8x128xf32, #tpu.memory_space<vmem>>, %arg19: memref<16x512xf32, #tpu.memory_space<vmem>>) attributes {dimension_semantics = [#tpu.dimension_semantics<parallel>, #tpu.dimension_semantics<arbitrary>], iteration_bounds = array<i64: 2, 6>, scalar_prefetch = 1 : i64, scratch_operands = 1 : i64, tpu.core_type = #tpu.core_type<tc>, window_params = [{transform_indices = @transform_0, window_bounds = array<i64: 1, 8, 384>}, {pipeline_mode = #tpu.pipeline_mode<synchronous>, transform_indices = @transform_1, window_bounds = array<i64: 384, 512>}, {pipeline_mode = #tpu.pipeline_mode<synchronous>, transform_indices = @transform_2, window_bounds = array<i64: 1, 512>}, {pipeline_mode = #tpu.pipeline_mode<synchronous>, transform_indices = @transform_3, window_bounds = array<i64: 2, 512>}, {pipeline_mode = #tpu.pipeline_mode<synchronous>, transform_indices = @transform_4, window_bounds = array<i64: 64, 512>}, {transform_indices = @transform_5, window_bounds = array<i64: 1, 512, 1536>}, {transform_indices = @transform_6, window_bounds = array<i64: 1, 512, 512>}, {transform_indices = @transform_7, window_bounds = array<i64: 1, 512, 1024>}, {transform_indices = @transform_8, window_bounds = array<i64: 1, 1024, 512>}, {transform_indices = @transform_9, window_bounds = array<i64: 1, 8, 1536>}, {pipeline_mode = #tpu.pipeline_mode<synchronous>, transform_indices = @transform_10, window_bounds = array<i64: 1, 512>}, {pipeline_mode = #tpu.pipeline_mode<synchronous>, transform_indices = @transform_11, window_bounds = array<i64: 1, 512>}, {pipeline_mode = #tpu.pipeline_mode<synchronous>, transform_indices = @transform_12, window_bounds = array<i64: 512, 128>}, {pipeline_mode = #tpu.pipeline_mode<synchronous>, transform_indices = @transform_13, window_bounds = array<i64: 1, 128>}, {transform_indices = @transform_14, window_bounds = array<i64: 1, 8, 512>}, {transform_indices = @transform_15, window_bounds = array<i64: 1, 8, 128>}]} {
    %c0_i32 = arith.constant 0 : i32
    %0 = arith.cmpi eq, %arg1, %c0_i32 : i32
    %1 = arith.extui %0 : i1 to i32
    %c0_i32_0 = arith.constant 0 : i32
    %2 = arith.cmpi ne, %1, %c0_i32_0 : i32
    scf.if %2 {
      %c0_56 = arith.constant 0 : index
      %c0_57 = arith.constant 0 : index
      %c0_58 = arith.constant 0 : index
      %187 = vector.load %arg3[%c0_56, %c0_57, %c0_58] : memref<1x8x384xbf16, #tpu.memory_space<vmem>>, vector<1x8x384xbf16>
      %188 = vector.shape_cast %187 : vector<1x8x384xbf16> to vector<8x384xbf16>
      %c0_59 = arith.constant 0 : index
      %c0_60 = arith.constant 0 : index
      %189 = vector.load %arg4[%c0_59, %c0_60] : memref<384x512xbf16, #tpu.memory_space<vmem>>, vector<384x512xbf16>
      %cst_61 = arith.constant dense<0.000000e+00> : vector<8x512xf32>
      %190 = tpu.matmul %188, %189, %cst_61 {dimension_numbers = #tpu.dot_dimension_numbers<[1], [0], [0], [1], [0, 0, 1, 1], [], []>} : vector<8x384xbf16>, vector<384x512xbf16>, vector<8x512xf32> -> vector<8x512xf32>
      %c0_62 = arith.constant 0 : index
      %c0_63 = arith.constant 0 : index
      %191 = vector.load %arg5[%c0_62, %c0_63] : memref<1x512xf32, #tpu.memory_space<vmem>>, vector<1x512xf32>
      %192 = vector.broadcast %191 : vector<1x512xf32> to vector<8x512xf32>
      %193 = arith.addf %190, %192 : vector<8x512xf32>
      %c0_64 = arith.constant 0 : index
      %c0_65 = arith.constant 0 : index
      %194 = vector.load %arg6[%c0_64, %c0_65] : memref<2x512xf32, #tpu.memory_space<vmem>>, vector<2x512xf32>
      %c0_66 = arith.constant 0 : index
      %c0_67 = arith.constant 0 : index
      %195 = vector.load %arg7[%c0_66, %c0_67] : memref<64x512xf32, #tpu.memory_space<vmem>>, vector<2x512xf32>
      %196 = arith.addf %194, %195 : vector<2x512xf32>
      %c2 = arith.constant 2 : index
      %c0_68 = arith.constant 0 : index
      %197 = vector.load %arg7[%c2, %c0_68] : memref<64x512xf32, #tpu.memory_space<vmem>>, vector<8x512xf32>
      %198 = arith.addf %193, %197 : vector<8x512xf32>
      %cst_69 = arith.constant 0.000000e+00 : f32
      %199 = vector.broadcast %cst_69 : f32 to vector<6x512xf32>
      %200 = tpu.concatenate %196, %198, %199 in 0 : vector<2x512xf32>, vector<8x512xf32>, vector<6x512xf32> -> vector<16x512xf32>
      %c0_70 = arith.constant 0 : index
      %c0_71 = arith.constant 0 : index
      %201 = vector.load %arg19[%c0_70, %c0_71] : memref<16x512xf32, #tpu.memory_space<vmem>>, vector<16x512xf32>
      tpu.vector_store %arg19[%c0_70, %c0_71], %200 {strides = array<i32>} : memref<16x512xf32, #tpu.memory_space<vmem>>, vector<16x512xf32>,
    } else {
    }
    %c0 = arith.constant 0 : index
    %c0_1 = arith.constant 0 : index
    %3 = vector.load %arg19[%c0, %c0_1] : memref<16x512xf32, #tpu.memory_space<vmem>>, vector<16x512xf32>
    %4 = arith.truncf %3 : vector<16x512xf32> to vector<16x512xbf16>
    %c0_2 = arith.constant 0 : index
    %c0_3 = arith.constant 0 : index
    %c0_4 = arith.constant 0 : index
    %5 = vector.load %arg12[%c0_2, %c0_3, %c0_4] : memref<1x8x1536xf32, #tpu.memory_space<vmem>>, vector<1x8x1536xf32>
    %6 = vector.shape_cast %5 : vector<1x8x1536xf32> to vector<8x1536xf32>
    %7 = vector.extract_strided_slice %6 {offsets = [0, 0], sizes = [1, 1536], strides = [1, 1]} : vector<8x1536xf32> to vector<1x1536xf32>
    %8 = vector.extract_strided_slice %6 {offsets = [1, 0], sizes = [1, 1024], strides = [1, 1]} : vector<8x1536xf32> to vector<1x1024xf32>
    %9 = vector.extract_strided_slice %6 {offsets = [2, 0], sizes = [1, 512], strides = [1, 1]} : vector<8x1536xf32> to vector<1x512xf32>
    %10 = vector.extract_strided_slice %6 {offsets = [2, 512], sizes = [1, 512], strides = [1, 1]} : vector<8x1536xf32> to vector<1x512xf32>
    %11 = vector.extract_strided_slice %6 {offsets = [3, 0], sizes = [1, 512], strides = [1, 1]} : vector<8x1536xf32> to vector<1x512xf32>
    %12 = vector.extract_strided_slice %6 {offsets = [3, 512], sizes = [1, 512], strides = [1, 1]} : vector<8x1536xf32> to vector<1x512xf32>
    %13 = vector.extract_strided_slice %6 {offsets = [4, 0], sizes = [1, 512], strides = [1, 1]} : vector<8x1536xf32> to vector<1x512xf32>
    %14 = vector.extract_strided_slice %6 {offsets = [4, 512], sizes = [1, 512], strides = [1, 1]} : vector<8x1536xf32> to vector<1x512xf32>
    %15 = arith.index_cast %arg0 : i32 to index
    %16 = memref.load %arg2[%15] : memref<2xi32, #tpu.memory_space<smem>>
    %17 = tpu.iota {dimensions = array<i32: 1>} : vector<1x16xi32>
    %c2_i32 = arith.constant 2 : i32
    %18 = vector.broadcast %c2_i32 : i32 to vector<1x16xi32>
    %19 = arith.cmpi slt, %17, %18 : vector<1x16xi32>
    %c10_i32 = arith.constant 10 : i32
    %20 = vector.broadcast %c10_i32 : i32 to vector<1x16xi32>
    %21 = arith.cmpi slt, %17, %20 : vector<1x16xi32>
    %c2_i32_5 = arith.constant 2 : i32
    %22 = vector.broadcast %c2_i32_5 : i32 to vector<1x16xi32>
    %23 = arith.subi %17, %22 : vector<1x16xi32>
    %24 = vector.broadcast %16 : i32 to vector<1x16xi32>
    %25 = arith.cmpi slt, %23, %24 : vector<1x16xi32>
    %26 = arith.andi %21, %25 : vector<1x16xi1>
    %27 = arith.ori %19, %26 : vector<1x16xi1>
    %cst = arith.constant 0.000000e+00 : f32
    %cst_6 = arith.constant -1.000000e+09 : f32
    %28 = vector.broadcast %cst : f32 to vector<1x16xf32>
    %29 = vector.broadcast %cst_6 : f32 to vector<1x16xf32>
    %30 = arith.select %27, %28, %29 : vector<1x16xi1>, vector<1x16xf32>
    %c0_7 = arith.constant 0 : index
    %c0_8 = arith.constant 0 : index
    %c0_9 = arith.constant 0 : index
    %31 = vector.load %arg8[%c0_7, %c0_8, %c0_9] : memref<1x512x1536xbf16, #tpu.memory_space<vmem>>, vector<1x512x1536xbf16>
    %32 = vector.shape_cast %31 : vector<1x512x1536xbf16> to vector<512x1536xbf16>
    %cst_10 = arith.constant dense<0.000000e+00> : vector<16x1536xf32>
    %33 = tpu.matmul %4, %32, %cst_10 {dimension_numbers = #tpu.dot_dimension_numbers<[1], [0], [0], [1], [0, 0, 1, 1], [], []>} : vector<16x512xbf16>, vector<512x1536xbf16>, vector<16x1536xf32> -> vector<16x1536xf32>
    %34 = vector.broadcast %7 : vector<1x1536xf32> to vector<16x1536xf32>
    %35 = arith.addf %33, %34 : vector<16x1536xf32>
    %36 = arith.truncf %35 : vector<16x1536xf32> to vector<16x1536xbf16>
    %37 = vector.extract_strided_slice %36 {offsets = [0, 0], sizes = [16, 128], strides = [1, 1]} : vector<16x1536xbf16> to vector<16x128xbf16>
    %38 = vector.extract_strided_slice %36 {offsets = [0, 512], sizes = [16, 128], strides = [1, 1]} : vector<16x1536xbf16> to vector<16x128xbf16>
    %39 = vector.extract_strided_slice %36 {offsets = [0, 1024], sizes = [16, 128], strides = [1, 1]} : vector<16x1536xbf16> to vector<16x128xbf16>
    %cst_11 = arith.constant dense<0.000000e+00> : vector<16x16xf32>
    %40 = tpu.matmul %37, %38, %cst_11 {dimension_numbers = #tpu.dot_dimension_numbers<[1], [1], [0], [0], [0, 0, 1, 0], [], []>} : vector<16x128xbf16>, vector<16x128xbf16>, vector<16x16xf32> -> vector<16x16xf32>
    %41 = vector.broadcast %30 : vector<1x16xf32> to vector<16x16xf32>
    %42 = arith.addf %40, %41 : vector<16x16xf32>
    %cst_12 = arith.constant dense<0xFF800000> : vector<16xf32>
    %43 = vector.multi_reduction <maximumf>, %42, %cst_12 [1] : vector<16x16xf32> to vector<16xf32>
    %44 = vector.shape_cast %43 : vector<16xf32> to vector<16x1xf32>
    %45 = vector.broadcast %44 : vector<16x1xf32> to vector<16x16xf32>
    %46 = arith.subf %42, %45 : vector<16x16xf32>
    %47 = math.exp %46 : vector<16x16xf32>
    %cst_13 = arith.constant dense<0.000000e+00> : vector<16xf32>
    %48 = vector.multi_reduction <add>, %47, %cst_13 [1] : vector<16x16xf32> to vector<16xf32>
    %49 = vector.shape_cast %48 : vector<16xf32> to vector<16x1xf32>
    %50 = tpu.reciprocal %49 {approx = true} : vector<16x1xf32> -> vector<16x1xf32>
    %51 = vector.broadcast %50 : vector<16x1xf32> to vector<16x16xf32>
    %52 = arith.mulf %47, %51 : vector<16x16xf32>
    %53 = arith.truncf %52 : vector<16x16xf32> to vector<16x16xbf16>
    %cst_14 = arith.constant dense<0.000000e+00> : vector<16x128xf32>
    %54 = tpu.matmul %53, %39, %cst_14 {dimension_numbers = #tpu.dot_dimension_numbers<[1], [0], [0], [1], [0, 0, 1, 1], [], []>} : vector<16x16xbf16>, vector<16x128xbf16>, vector<16x128xf32> -> vector<16x128xf32>
    %55 = vector.extract_strided_slice %36 {offsets = [0, 128], sizes = [16, 128], strides = [1, 1]} : vector<16x1536xbf16> to vector<16x128xbf16>
    %56 = vector.extract_strided_slice %36 {offsets = [0, 640], sizes = [16, 128], strides = [1, 1]} : vector<16x1536xbf16> to vector<16x128xbf16>
    %57 = vector.extract_strided_slice %36 {offsets = [0, 1152], sizes = [16, 128], strides = [1, 1]} : vector<16x1536xbf16> to vector<16x128xbf16>
    %cst_15 = arith.constant dense<0.000000e+00> : vector<16x16xf32>
    %58 = tpu.matmul %55, %56, %cst_15 {dimension_numbers = #tpu.dot_dimension_numbers<[1], [1], [0], [0], [0, 0, 1, 0], [], []>} : vector<16x128xbf16>, vector<16x128xbf16>, vector<16x16xf32> -> vector<16x16xf32>
    %59 = vector.broadcast %30 : vector<1x16xf32> to vector<16x16xf32>
    %60 = arith.addf %58, %59 : vector<16x16xf32>
    %cst_16 = arith.constant dense<0xFF800000> : vector<16xf32>
    %61 = vector.multi_reduction <maximumf>, %60, %cst_16 [1] : vector<16x16xf32> to vector<16xf32>
    %62 = vector.shape_cast %61 : vector<16xf32> to vector<16x1xf32>
    %63 = vector.broadcast %62 : vector<16x1xf32> to vector<16x16xf32>
    %64 = arith.subf %60, %63 : vector<16x16xf32>
    %65 = math.exp %64 : vector<16x16xf32>
    %cst_17 = arith.constant dense<0.000000e+00> : vector<16xf32>
    %66 = vector.multi_reduction <add>, %65, %cst_17 [1] : vector<16x16xf32> to vector<16xf32>
    %67 = vector.shape_cast %66 : vector<16xf32> to vector<16x1xf32>
    %68 = tpu.reciprocal %67 {approx = true} : vector<16x1xf32> -> vector<16x1xf32>
    %69 = vector.broadcast %68 : vector<16x1xf32> to vector<16x16xf32>
    %70 = arith.mulf %65, %69 : vector<16x16xf32>
    %71 = arith.truncf %70 : vector<16x16xf32> to vector<16x16xbf16>
    %cst_18 = arith.constant dense<0.000000e+00> : vector<16x128xf32>
    %72 = tpu.matmul %71, %57, %cst_18 {dimension_numbers = #tpu.dot_dimension_numbers<[1], [0], [0], [1], [0, 0, 1, 1], [], []>} : vector<16x16xbf16>, vector<16x128xbf16>, vector<16x128xf32> -> vector<16x128xf32>
    %73 = vector.extract_strided_slice %36 {offsets = [0, 256], sizes = [16, 128], strides = [1, 1]} : vector<16x1536xbf16> to vector<16x128xbf16>
    %74 = vector.extract_strided_slice %36 {offsets = [0, 768], sizes = [16, 128], strides = [1, 1]} : vector<16x1536xbf16> to vector<16x128xbf16>
    %75 = vector.extract_strided_slice %36 {offsets = [0, 1280], sizes = [16, 128], strides = [1, 1]} : vector<16x1536xbf16> to vector<16x128xbf16>
    %cst_19 = arith.constant dense<0.000000e+00> : vector<16x16xf32>
    %76 = tpu.matmul %73, %74, %cst_19 {dimension_numbers = #tpu.dot_dimension_numbers<[1], [1], [0], [0], [0, 0, 1, 0], [], []>} : vector<16x128xbf16>, vector<16x128xbf16>, vector<16x16xf32> -> vector<16x16xf32>
    %77 = vector.broadcast %30 : vector<1x16xf32> to vector<16x16xf32>
    %78 = arith.addf %76, %77 : vector<16x16xf32>
    %cst_20 = arith.constant dense<0xFF800000> : vector<16xf32>
    %79 = vector.multi_reduction <maximumf>, %78, %cst_20 [1] : vector<16x16xf32> to vector<16xf32>
    %80 = vector.shape_cast %79 : vector<16xf32> to vector<16x1xf32>
    %81 = vector.broadcast %80 : vector<16x1xf32> to vector<16x16xf32>
    %82 = arith.subf %78, %81 : vector<16x16xf32>
    %83 = math.exp %82 : vector<16x16xf32>
    %cst_21 = arith.constant dense<0.000000e+00> : vector<16xf32>
    %84 = vector.multi_reduction <add>, %83, %cst_21 [1] : vector<16x16xf32> to vector<16xf32>
    %85 = vector.shape_cast %84 : vector<16xf32> to vector<16x1xf32>
    %86 = tpu.reciprocal %85 {approx = true} : vector<16x1xf32> -> vector<16x1xf32>
    %87 = vector.broadcast %86 : vector<16x1xf32> to vector<16x16xf32>
    %88 = arith.mulf %83, %87 : vector<16x16xf32>
    %89 = arith.truncf %88 : vector<16x16xf32> to vector<16x16xbf16>
    %cst_22 = arith.constant dense<0.000000e+00> : vector<16x128xf32>
    %90 = tpu.matmul %89, %75, %cst_22 {dimension_numbers = #tpu.dot_dimension_numbers<[1], [0], [0], [1], [0, 0, 1, 1], [], []>} : vector<16x16xbf16>, vector<16x128xbf16>, vector<16x128xf32> -> vector<16x128xf32>
    %91 = vector.extract_strided_slice %36 {offsets = [0, 384], sizes = [16, 128], strides = [1, 1]} : vector<16x1536xbf16> to vector<16x128xbf16>
    %92 = vector.extract_strided_slice %36 {offsets = [0, 896], sizes = [16, 128], strides = [1, 1]} : vector<16x1536xbf16> to vector<16x128xbf16>
    %93 = vector.extract_strided_slice %36 {offsets = [0, 1408], sizes = [16, 128], strides = [1, 1]} : vector<16x1536xbf16> to vector<16x128xbf16>
    %cst_23 = arith.constant dense<0.000000e+00> : vector<16x16xf32>
    %94 = tpu.matmul %91, %92, %cst_23 {dimension_numbers = #tpu.dot_dimension_numbers<[1], [1], [0], [0], [0, 0, 1, 0], [], []>} : vector<16x128xbf16>, vector<16x128xbf16>, vector<16x16xf32> -> vector<16x16xf32>
    %95 = vector.broadcast %30 : vector<1x16xf32> to vector<16x16xf32>
    %96 = arith.addf %94, %95 : vector<16x16xf32>
    %cst_24 = arith.constant dense<0xFF800000> : vector<16xf32>
    %97 = vector.multi_reduction <maximumf>, %96, %cst_24 [1] : vector<16x16xf32> to vector<16xf32>
    %98 = vector.shape_cast %97 : vector<16xf32> to vector<16x1xf32>
    %99 = vector.broadcast %98 : vector<16x1xf32> to vector<16x16xf32>
    %100 = arith.subf %96, %99 : vector<16x16xf32>
    %101 = math.exp %100 : vector<16x16xf32>
    %cst_25 = arith.constant dense<0.000000e+00> : vector<16xf32>
    %102 = vector.multi_reduction <add>, %101, %cst_25 [1] : vector<16x16xf32> to vector<16xf32>
    %103 = vector.shape_cast %102 : vector<16xf32> to vector<16x1xf32>
    %104 = tpu.reciprocal %103 {approx = true} : vector<16x1xf32> -> vector<16x1xf32>
    %105 = vector.broadcast %104 : vector<16x1xf32> to vector<16x16xf32>
    %106 = arith.mulf %101, %105 : vector<16x16xf32>
    %107 = arith.truncf %106 : vector<16x16xf32> to vector<16x16xbf16>
    %cst_26 = arith.constant dense<0.000000e+00> : vector<16x128xf32>
    %108 = tpu.matmul %107, %93, %cst_26 {dimension_numbers = #tpu.dot_dimension_numbers<[1], [0], [0], [1], [0, 0, 1, 1], [], []>} : vector<16x16xbf16>, vector<16x128xbf16>, vector<16x128xf32> -> vector<16x128xf32>
    %109 = tpu.concatenate %54, %72, %90, %108 in 1 : vector<16x128xf32>, vector<16x128xf32>, vector<16x128xf32>, vector<16x128xf32> -> vector<16x512xf32>
    %110 = arith.truncf %109 : vector<16x512xf32> to vector<16x512xbf16>
    %c0_27 = arith.constant 0 : index
    %c0_28 = arith.constant 0 : index
    %c0_29 = arith.constant 0 : index
    %111 = vector.load %arg9[%c0_27, %c0_28, %c0_29] : memref<1x512x512xbf16, #tpu.memory_space<vmem>>, vector<1x512x512xbf16>
    %112 = vector.shape_cast %111 : vector<1x512x512xbf16> to vector<512x512xbf16>
    %cst_30 = arith.constant dense<0.000000e+00> : vector<16x512xf32>
    %113 = tpu.matmul %110, %112, %cst_30 {dimension_numbers = #tpu.dot_dimension_numbers<[1], [0], [0], [1], [0, 0, 1, 1], [], []>} : vector<16x512xbf16>, vector<512x512xbf16>, vector<16x512xf32> -> vector<16x512xf32>
    %114 = vector.broadcast %9 : vector<1x512xf32> to vector<16x512xf32>
    %115 = arith.addf %113, %114 : vector<16x512xf32>
    %116 = arith.addf %3, %115 : vector<16x512xf32>
    %cst_31 = arith.constant dense<0.000000e+00> : vector<16xf32>
    %117 = vector.multi_reduction <add>, %116, %cst_31 [1] : vector<16x512xf32> to vector<16xf32>
    %118 = vector.shape_cast %117 : vector<16xf32> to vector<16x1xf32>
    %cst_32 = arith.constant 5.120000e+02 : f32
    %119 = vector.broadcast %cst_32 : f32 to vector<16x1xf32>
    %120 = arith.divf %118, %119 : vector<16x1xf32>
    %121 = vector.broadcast %120 : vector<16x1xf32> to vector<16x512xf32>
    %122 = arith.subf %116, %121 : vector<16x512xf32>
    %123 = arith.mulf %122, %122 : vector<16x512xf32>
    %cst_33 = arith.constant dense<0.000000e+00> : vector<16xf32>
    %124 = vector.multi_reduction <add>, %123, %cst_33 [1] : vector<16x512xf32> to vector<16xf32>
    %125 = vector.shape_cast %124 : vector<16xf32> to vector<16x1xf32>
    %cst_34 = arith.constant 5.120000e+02 : f32
    %126 = vector.broadcast %cst_34 : f32 to vector<16x1xf32>
    %127 = arith.divf %125, %126 : vector<16x1xf32>
    %cst_35 = arith.constant 9.99999974E-6 : f32
    %128 = vector.broadcast %cst_35 : f32 to vector<16x1xf32>
    %129 = arith.addf %127, %128 : vector<16x1xf32>
    %130 = math.rsqrt %129 : vector<16x1xf32>
    %131 = vector.broadcast %130 : vector<16x1xf32> to vector<16x512xf32>
    %132 = arith.mulf %122, %131 : vector<16x512xf32>
    %133 = vector.broadcast %11 : vector<1x512xf32> to vector<16x512xf32>
    %134 = arith.mulf %132, %133 : vector<16x512xf32>
    %135 = vector.broadcast %12 : vector<1x512xf32> to vector<16x512xf32>
    %136 = arith.addf %134, %135 : vector<16x512xf32>
    %137 = arith.truncf %136 : vector<16x512xf32> to vector<16x512xbf16>
    %c0_36 = arith.constant 0 : index
    %c0_37 = arith.constant 0 : index
    %c0_38 = arith.constant 0 : index
    %138 = vector.load %arg10[%c0_36, %c0_37, %c0_38] : memref<1x512x1024xbf16, #tpu.memory_space<vmem>>, vector<1x512x1024xbf16>
    %139 = vector.shape_cast %138 : vector<1x512x1024xbf16> to vector<512x1024xbf16>
    %cst_39 = arith.constant dense<0.000000e+00> : vector<16x1024xf32>
    %140 = tpu.matmul %137, %139, %cst_39 {dimension_numbers = #tpu.dot_dimension_numbers<[1], [0], [0], [1], [0, 0, 1, 1], [], []>} : vector<16x512xbf16>, vector<512x1024xbf16>, vector<16x1024xf32> -> vector<16x1024xf32>
    %141 = vector.broadcast %8 : vector<1x1024xf32> to vector<16x1024xf32>
    %142 = arith.addf %140, %141 : vector<16x1024xf32>
    %cst_40 = arith.constant 5.000000e-01 : f32
    %143 = vector.broadcast %cst_40 : f32 to vector<16x1024xf32>
    %144 = arith.mulf %143, %142 : vector<16x1024xf32>
    %cst_41 = arith.constant 4.471500e-02 : f32
    %145 = vector.broadcast %cst_41 : f32 to vector<16x1024xf32>
    %146 = arith.mulf %145, %142 : vector<16x1024xf32>
    %147 = arith.mulf %146, %142 : vector<16x1024xf32>
    %148 = arith.mulf %147, %142 : vector<16x1024xf32>
    %149 = arith.addf %142, %148 : vector<16x1024xf32>
    %cst_42 = arith.constant 0.797884583 : f32
    %150 = vector.broadcast %cst_42 : f32 to vector<16x1024xf32>
    %151 = arith.mulf %150, %149 : vector<16x1024xf32>
    %152 = math.tanh %151 : vector<16x1024xf32>
    %cst_43 = arith.constant 1.000000e+00 : f32
    %153 = vector.broadcast %cst_43 : f32 to vector<16x1024xf32>
    %154 = arith.addf %153, %152 : vector<16x1024xf32>
    %155 = arith.mulf %144, %154 : vector<16x1024xf32>
    %156 = arith.truncf %155 : vector<16x1024xf32> to vector<16x1024xbf16>
    %c0_44 = arith.constant 0 : index
    %c0_45 = arith.constant 0 : index
    %c0_46 = arith.constant 0 : index
    %157 = vector.load %arg11[%c0_44, %c0_45, %c0_46] : memref<1x1024x512xbf16, #tpu.memory_space<vmem>>, vector<1x1024x512xbf16>
    %158 = vector.shape_cast %157 : vector<1x1024x512xbf16> to vector<1024x512xbf16>
    %cst_47 = arith.constant dense<0.000000e+00> : vector<16x512xf32>
    %159 = tpu.matmul %156, %158, %cst_47 {dimension_numbers = #tpu.dot_dimension_numbers<[1], [0], [0], [1], [0, 0, 1, 1], [], []>} : vector<16x1024xbf16>, vector<1024x512xbf16>, vector<16x512xf32> -> vector<16x512xf32>
    %160 = vector.broadcast %10 : vector<1x512xf32> to vector<16x512xf32>
    %161 = arith.addf %159, %160 : vector<16x512xf32>
    %162 = arith.addf %136, %161 : vector<16x512xf32>
    %cst_48 = arith.constant dense<0.000000e+00> : vector<16xf32>
    %163 = vector.multi_reduction <add>, %162, %cst_48 [1] : vector<16x512xf32> to vector<16xf32>
    %164 = vector.shape_cast %163 : vector<16xf32> to vector<16x1xf32>
    %cst_49 = arith.constant 5.120000e+02 : f32
    %165 = vector.broadcast %cst_49 : f32 to vector<16x1xf32>
    %166 = arith.divf %164, %165 : vector<16x1xf32>
    %167 = vector.broadcast %166 : vector<16x1xf32> to vector<16x512xf32>
    %168 = arith.subf %162, %167 : vector<16x512xf32>
    %169 = arith.mulf %168, %168 : vector<16x512xf32>
    %cst_50 = arith.constant dense<0.000000e+00> : vector<16xf32>
    %170 = vector.multi_reduction <add>, %169, %cst_50 [1] : vector<16x512xf32> to vector<16xf32>
    %171 = vector.shape_cast %170 : vector<16xf32> to vector<16x1xf32>
    %cst_51 = arith.constant 5.120000e+02 : f32
    %172 = vector.broadcast %cst_51 : f32 to vector<16x1xf32>
    %173 = arith.divf %171, %172 : vector<16x1xf32>
    %cst_52 = arith.constant 9.99999974E-6 : f32
    %174 = vector.broadcast %cst_52 : f32 to vector<16x1xf32>
    %175 = arith.addf %173, %174 : vector<16x1xf32>
    %176 = math.rsqrt %175 : vector<16x1xf32>
    %177 = vector.broadcast %176 : vector<16x1xf32> to vector<16x512xf32>
    %178 = arith.mulf %168, %177 : vector<16x512xf32>
    %179 = vector.broadcast %13 : vector<1x512xf32> to vector<16x512xf32>
    %180 = arith.mulf %178, %179 : vector<16x512xf32>
    %181 = vector.broadcast %14 : vector<1x512xf32> to vector<16x512xf32>
    %182 = arith.addf %180, %181 : vector<16x512xf32>
    %c0_53 = arith.constant 0 : index
    %c0_54 = arith.constant 0 : index
    %183 = vector.load %arg19[%c0_53, %c0_54] : memref<16x512xf32, #tpu.memory_space<vmem>>, vector<16x512xf32>
    tpu.vector_store %arg19[%c0_53, %c0_54], %182 {strides = array<i32>} : memref<16x512xf32, #tpu.memory_space<vmem>>, vector<16x512xf32>,
    %c5_i32 = arith.constant 5 : i32
    %184 = arith.cmpi eq, %arg1, %c5_i32 : i32
    %185 = arith.extui %184 : i1 to i32
    %c0_i32_55 = arith.constant 0 : i32
    %186 = arith.cmpi ne, %185, %c0_i32_55 : i32
    scf.if %186 {
      %187 = vector.extract_strided_slice %182 {offsets = [0, 0], sizes = [8, 512], strides = [1, 1]} : vector<16x512xf32> to vector<8x512xf32>
      %c0_56 = arith.constant 0 : index
      %c0_57 = arith.constant 0 : index
      %188 = vector.load %arg13[%c0_56, %c0_57] : memref<1x512xf32, #tpu.memory_space<vmem>>, vector<1x512xf32>
      %c0_58 = arith.constant 0 : index
      %c0_59 = arith.constant 0 : index
      %189 = vector.load %arg14[%c0_58, %c0_59] : memref<1x512xf32, #tpu.memory_space<vmem>>, vector<1x512xf32>
      %cst_60 = arith.constant dense<0.000000e+00> : vector<8xf32>
      %190 = vector.multi_reduction <add>, %187, %cst_60 [1] : vector<8x512xf32> to vector<8xf32>
      %191 = vector.shape_cast %190 : vector<8xf32> to vector<8x1xf32>
      %cst_61 = arith.constant 5.120000e+02 : f32
      %192 = vector.broadcast %cst_61 : f32 to vector<8x1xf32>
      %193 = arith.divf %191, %192 : vector<8x1xf32>
      %194 = vector.broadcast %193 : vector<8x1xf32> to vector<8x512xf32>
      %195 = arith.subf %187, %194 : vector<8x512xf32>
      %196 = arith.mulf %195, %195 : vector<8x512xf32>
      %cst_62 = arith.constant dense<0.000000e+00> : vector<8xf32>
      %197 = vector.multi_reduction <add>, %196, %cst_62 [1] : vector<8x512xf32> to vector<8xf32>
      %198 = vector.shape_cast %197 : vector<8xf32> to vector<8x1xf32>
      %cst_63 = arith.constant 5.120000e+02 : f32
      %199 = vector.broadcast %cst_63 : f32 to vector<8x1xf32>
      %200 = arith.divf %198, %199 : vector<8x1xf32>
      %cst_64 = arith.constant 9.99999974E-6 : f32
      %201 = vector.broadcast %cst_64 : f32 to vector<8x1xf32>
      %202 = arith.addf %200, %201 : vector<8x1xf32>
      %203 = math.rsqrt %202 : vector<8x1xf32>
      %204 = vector.broadcast %203 : vector<8x1xf32> to vector<8x512xf32>
      %205 = arith.mulf %195, %204 : vector<8x512xf32>
      %206 = vector.broadcast %188 : vector<1x512xf32> to vector<8x512xf32>
      %207 = arith.mulf %205, %206 : vector<8x512xf32>
      %208 = vector.broadcast %189 : vector<1x512xf32> to vector<8x512xf32>
      %209 = arith.addf %207, %208 : vector<8x512xf32>
      %c0_65 = arith.constant 0 : index
      %c0_66 = arith.constant 0 : index
      %c0_67 = arith.constant 0 : index
      %210 = vector.load %arg17[%c0_65, %c0_66, %c0_67] : memref<1x8x512xf32, #tpu.memory_space<vmem>>, vector<1x8x512xf32>
      %211 = vector.shape_cast %210 : vector<1x8x512xf32> to vector<8x512xf32>
      %212 = vector.shape_cast %209 : vector<8x512xf32> to vector<1x8x512xf32>
      tpu.vector_store %arg17[%c0_65, %c0_66, %c0_67], %212 {strides = array<i32>} : memref<1x8x512xf32, #tpu.memory_space<vmem>>, vector<1x8x512xf32>,
      %213 = arith.truncf %209 : vector<8x512xf32> to vector<8x512xbf16>
      %c0_68 = arith.constant 0 : index
      %c0_69 = arith.constant 0 : index
      %214 = vector.load %arg15[%c0_68, %c0_69] : memref<512x128xbf16, #tpu.memory_space<vmem>>, vector<512x128xbf16>
      %cst_70 = arith.constant dense<0.000000e+00> : vector<8x128xf32>
      %215 = tpu.matmul %213, %214, %cst_70 {dimension_numbers = #tpu.dot_dimension_numbers<[1], [0], [0], [1], [0, 0, 1, 1], [], []>} : vector<8x512xbf16>, vector<512x128xbf16>, vector<8x128xf32> -> vector<8x128xf32>
      %c0_71 = arith.constant 0 : index
      %c0_72 = arith.constant 0 : index
      %216 = vector.load %arg16[%c0_71, %c0_72] : memref<1x128xf32, #tpu.memory_space<vmem>>, vector<1x128xf32>
      %217 = vector.broadcast %216 : vector<1x128xf32> to vector<8x128xf32>
      %218 = arith.addf %215, %217 : vector<8x128xf32>
      %c0_73 = arith.constant 0 : index
      %c0_74 = arith.constant 0 : index
      %c0_75 = arith.constant 0 : index
      %219 = vector.load %arg18[%c0_73, %c0_74, %c0_75] : memref<1x8x128xf32, #tpu.memory_space<vmem>>, vector<1x8x128xf32>
      %220 = vector.shape_cast %219 : vector<1x8x128xf32> to vector<8x128xf32>
      %221 = vector.shape_cast %218 : vector<8x128xf32> to vector<1x8x128xf32>
      tpu.vector_store %arg18[%c0_73, %c0_74, %c0_75], %221 {strides = array<i32>} : memref<1x8x128xf32, #tpu.memory_space<vmem>>, vector<1x8x128xf32>,
    } else {
    }
    return
  }
  func.func @transform_0(%arg0: i32, %arg1: i32, %arg2: memref<2xi32, #tpu.memory_space<smem>>) -> (i32, i32, i32) {
    %c0_i32 = arith.constant 0 : i32
    %c0_i32_0 = arith.constant 0 : i32
    %c0_i32_1 = arith.constant 0 : i32
    return %arg0, %c0_i32, %c0_i32_0 : i32, i32, i32
  }
  func.func @transform_1(%arg0: i32, %arg1: i32, %arg2: memref<2xi32, #tpu.memory_space<smem>>) -> (i32, i32) {
    %c0_i32 = arith.constant 0 : i32
    %c0_i32_0 = arith.constant 0 : i32
    %c0_i32_1 = arith.constant 0 : i32
    return %c0_i32, %c0_i32_0 : i32, i32
  }
  func.func @transform_2(%arg0: i32, %arg1: i32, %arg2: memref<2xi32, #tpu.memory_space<smem>>) -> (i32, i32) {
    %c0_i32 = arith.constant 0 : i32
    %c0_i32_0 = arith.constant 0 : i32
    %c0_i32_1 = arith.constant 0 : i32
    return %c0_i32, %c0_i32_0 : i32, i32
  }
  func.func @transform_3(%arg0: i32, %arg1: i32, %arg2: memref<2xi32, #tpu.memory_space<smem>>) -> (i32, i32) {
    %c0_i32 = arith.constant 0 : i32
    %c0_i32_0 = arith.constant 0 : i32
    %c0_i32_1 = arith.constant 0 : i32
    return %c0_i32, %c0_i32_0 : i32, i32
  }
  func.func @transform_4(%arg0: i32, %arg1: i32, %arg2: memref<2xi32, #tpu.memory_space<smem>>) -> (i32, i32) {
    %c0_i32 = arith.constant 0 : i32
    %c0_i32_0 = arith.constant 0 : i32
    %c0_i32_1 = arith.constant 0 : i32
    return %c0_i32, %c0_i32_0 : i32, i32
  }
  func.func @transform_5(%arg0: i32, %arg1: i32, %arg2: memref<2xi32, #tpu.memory_space<smem>>) -> (i32, i32, i32) {
    %c0_i32 = arith.constant 0 : i32
    %c0_i32_0 = arith.constant 0 : i32
    %c0_i32_1 = arith.constant 0 : i32
    return %arg1, %c0_i32, %c0_i32_0 : i32, i32, i32
  }
  func.func @transform_6(%arg0: i32, %arg1: i32, %arg2: memref<2xi32, #tpu.memory_space<smem>>) -> (i32, i32, i32) {
    %c0_i32 = arith.constant 0 : i32
    %c0_i32_0 = arith.constant 0 : i32
    %c0_i32_1 = arith.constant 0 : i32
    return %arg1, %c0_i32, %c0_i32_0 : i32, i32, i32
  }
  func.func @transform_7(%arg0: i32, %arg1: i32, %arg2: memref<2xi32, #tpu.memory_space<smem>>) -> (i32, i32, i32) {
    %c0_i32 = arith.constant 0 : i32
    %c0_i32_0 = arith.constant 0 : i32
    %c0_i32_1 = arith.constant 0 : i32
    return %arg1, %c0_i32, %c0_i32_0 : i32, i32, i32
  }
  func.func @transform_8(%arg0: i32, %arg1: i32, %arg2: memref<2xi32, #tpu.memory_space<smem>>) -> (i32, i32, i32) {
    %c0_i32 = arith.constant 0 : i32
    %c0_i32_0 = arith.constant 0 : i32
    %c0_i32_1 = arith.constant 0 : i32
    return %arg1, %c0_i32, %c0_i32_0 : i32, i32, i32
  }
  func.func @transform_9(%arg0: i32, %arg1: i32, %arg2: memref<2xi32, #tpu.memory_space<smem>>) -> (i32, i32, i32) {
    %c0_i32 = arith.constant 0 : i32
    %c0_i32_0 = arith.constant 0 : i32
    %c0_i32_1 = arith.constant 0 : i32
    return %arg1, %c0_i32, %c0_i32_0 : i32, i32, i32
  }
  func.func @transform_10(%arg0: i32, %arg1: i32, %arg2: memref<2xi32, #tpu.memory_space<smem>>) -> (i32, i32) {
    %c0_i32 = arith.constant 0 : i32
    %c0_i32_0 = arith.constant 0 : i32
    %c0_i32_1 = arith.constant 0 : i32
    return %c0_i32, %c0_i32_0 : i32, i32
  }
  func.func @transform_11(%arg0: i32, %arg1: i32, %arg2: memref<2xi32, #tpu.memory_space<smem>>) -> (i32, i32) {
    %c0_i32 = arith.constant 0 : i32
    %c0_i32_0 = arith.constant 0 : i32
    %c0_i32_1 = arith.constant 0 : i32
    return %c0_i32, %c0_i32_0 : i32, i32
  }
  func.func @transform_12(%arg0: i32, %arg1: i32, %arg2: memref<2xi32, #tpu.memory_space<smem>>) -> (i32, i32) {
    %c0_i32 = arith.constant 0 : i32
    %c0_i32_0 = arith.constant 0 : i32
    %c0_i32_1 = arith.constant 0 : i32
    return %c0_i32, %c0_i32_0 : i32, i32
  }
  func.func @transform_13(%arg0: i32, %arg1: i32, %arg2: memref<2xi32, #tpu.memory_space<smem>>) -> (i32, i32) {
    %c0_i32 = arith.constant 0 : i32
    %c0_i32_0 = arith.constant 0 : i32
    %c0_i32_1 = arith.constant 0 : i32
    return %c0_i32, %c0_i32_0 : i32, i32
  }
  func.func @transform_14(%arg0: i32, %arg1: i32, %arg2: memref<2xi32, #tpu.memory_space<smem>>) -> (i32, i32, i32) {
    %c0_i32 = arith.constant 0 : i32
    %c0_i32_0 = arith.constant 0 : i32
    %c0_i32_1 = arith.constant 0 : i32
    return %arg0, %c0_i32, %c0_i32_0 : i32, i32, i32
  }
  func.func @transform_15(%arg0: i32, %arg1: i32, %arg2: memref<2xi32, #tpu.memory_space<smem>>) -> (i32, i32, i32) {
    %c0_i32 = arith.constant 0 : i32
    %c0_i32_0 = arith.constant 0 : i32
    %c0_i32_1 = arith.constant 0 : i32
    return %arg0, %c0_i32, %c0_i32_0 : i32, i32, i32
  }
}

</mosaic_0001>

<llo_original>
// kernel: style_encoder_forward.1
$region0: #{style_encoder_forward.1}
  #allocation0 [shape = 'u32[]', space=smem, size = 0x4, offset = 0x4, fixed_abs, tag = 'smem constant byte address 0x4 - core index']
  #allocation1 [shape = 'u32[144,128]{1,0:T(1,128)}', space=vmem, size = 0x12000, scoped, tag = 'internal scratch']
  #allocation2 [shape = 'f32[16,512]{1,0:T(8,128)}', space=vmem, size = 0x8000, scoped, tag = 'scratch operand']
  #allocation3 [shape = 's32[1]{0}', space=sflag, size = 0x4, scoped, tag = 'scoped memory for style_encoder_forward.1']
  #allocation4 [shape = 'u8[512]{0}', space=smem, size = 0x200, scoped, tag = 'prefetched SMEM operand 0']
  %s0 = inlined_call_operand.hbm [shape: s32[2], index: 0, kind: input, shape index: {}]
  %s1 = inlined_call_operand.vmem [shape: bf16[2,8,384], index: 1, kind: input, shape index: {}]
  %s2 = inlined_call_operand.hbm [shape: bf16[384,512], index: 2, kind: input, shape index: {}]
  %s3 = inlined_call_operand.hbm [shape: f32[1,512], index: 3, kind: input, shape index: {}]
  %s4 = inlined_call_operand.hbm [shape: f32[2,512], index: 4, kind: input, shape index: {}]
  %s5 = inlined_call_operand.hbm [shape: f32[64,512], index: 5, kind: input, shape index: {}]
  %s6 = inlined_call_operand.hbm [shape: bf16[6,512,1536], index: 6, kind: input, shape index: {}]
  %s7 = inlined_call_operand.hbm [shape: bf16[6,512,512], index: 7, kind: input, shape index: {}]
  %s8 = inlined_call_operand.hbm [shape: bf16[6,512,1024], index: 8, kind: input, shape index: {}]
  %s9 = inlined_call_operand.hbm [shape: bf16[6,1024,512], index: 9, kind: input, shape index: {}]
  %s10 = inlined_call_operand.hbm [shape: f32[6,8,1536], index: 10, kind: input, shape index: {}]
  %s11 = inlined_call_operand.hbm [shape: f32[1,512], index: 11, kind: input, shape index: {}]
  %s12 = inlined_call_operand.hbm [shape: f32[1,512], index: 12, kind: input, shape index: {}]
  %s13 = inlined_call_operand.hbm [shape: bf16[512,128], index: 13, kind: input, shape index: {}]
  %s14 = inlined_call_operand.hbm [shape: f32[1,128], index: 14, kind: input, shape index: {}]
  %s15 = inlined_call_operand.vmem [shape: f32[2,8,512], index: 15, kind: output, shape index: {0}]
  %s16 = inlined_call_operand.vmem [shape: f32[2,8,128], index: 16, kind: output, shape index: {1}]
  %17 = xla_tuple %s15, %s16
  %s18 = sld [smem:[#allocation0]]
  $region157: #{style_encoder_forward.1} parent=0
    _
  %s20 = ssub.s32 1, %s18
  %s21 = scalar_select 0, %s20, %s18
  %23 = dma.hbm_to_smem %s0, 16, [#allocation4], [#allocation3]
  %24 = dma.done [#allocation3], 16
  %25 = sfence
  $region1: #{style_encoder_forward.1} parent=0
    #allocation5 [shape = 'u8[393216]{0}', space=vmem, size = 0x60000, scoped, tag = 'input window, operand 2, single buffered']
    #allocation6 [shape = 's32[2]{0}', space=sflag, size = 0x8, scoped, tag = 'scoped memory for style_encoder_forward.1']
    #allocation7 [shape = 'u8[2048]{0}', space=vmem, size = 0x800, scoped, tag = 'input window, operand 3, single buffered']
    #allocation8 [shape = 's32[1]{0}', space=sflag, size = 0x4, scoped, tag = 'scoped memory for style_encoder_forward.1']
    #allocation9 [shape = 'u8[4096]{0}', space=vmem, size = 0x1000, scoped, tag = 'input window, operand 4, single buffered']
    #allocation10 [shape = 'u8[131072]{0}', space=vmem, size = 0x20000, scoped, tag = 'input window, operand 5, single buffered']
    #allocation11 [shape = 's32[1]{0}', space=sflag, size = 0x4, scoped, tag = 'scoped memory for style_encoder_forward.1']
    #allocation12 [shape = 'u8[3145728]{0}', space=vmem, size = 0x300000, scoped, tag = 'input window, operand 6']
    #allocation13 [shape = 'u8[1048576]{0}', space=vmem, size = 0x100000, scoped, tag = 'input window, operand 7']
    #allocation14 [shape = 'u8[2097152]{0}', space=vmem, size = 0x200000, scoped, tag = 'input window, operand 8']
    #allocation15 [shape = 'u8[2097152]{0}', space=vmem, size = 0x200000, scoped, tag = 'input window, operand 9']
    #allocation16 [shape = 'u8[98304]{0}', space=vmem, size = 0x18000, scoped, tag = 'input window, operand 10']
    #allocation17 [shape = 'u8[2048]{0}', space=vmem, size = 0x800, scoped, tag = 'input window, operand 11, single buffered']
    #allocation18 [shape = 'u8[2048]{0}', space=vmem, size = 0x800, scoped, tag = 'input window, operand 12, single buffered']
    #allocation19 [shape = 'u8[131072]{0}', space=vmem, size = 0x20000, scoped, tag = 'input window, operand 13, single buffered']
    #allocation20 [shape = 's32[1]{0}', space=sflag, size = 0x4, scoped, tag = 'scoped memory for style_encoder_forward.1']
    #allocation21 [shape = 'u8[512]{0}', space=vmem, size = 0x400, scoped, tag = 'input window, operand 14, single buffered']
    %26 = vsyncpa [#allocation6], 0
    %27 = vsyncpa [#allocation8], 0
    %28 = vsyncpa [#allocation11], 0
    %29 = vsyncpa [#allocation20], 0
    loop: start=0, step=1, limit=14
    $region2: #{style_encoder_forward.1} parent=1 // loop_pre_header
      _
    $region3: #{style_encoder_forward.1} parent=1 // loop_header
      %s31 = sphi 0, %s35
      %p32 = scmp.ge.s32.totalorder %s31, 14
      %s38 = sphi 0, %s50
      %s39 = sphi 0, %s46
      %s40 = sphi 0, %s38
      %s41 = sphi 0, %s39
      %s42 = sphi 0, %s40
      %s43 = sphi 0, %s41
      %s53 = sphi 0, %s55
      %s56 = sphi 0, %s53
      %s57 = sphi 0, %s56
      %s73 = sphi 0, %s57
      %s77 = sphi 0, %s77
      %s79 = sphi 0, %s77
      %s80 = sphi 0, %s79
      %s94 = sphi 0, %s80
      %s98 = sphi 0, %s98
      %s100 = sphi 0, %s98
      %s101 = sphi 0, %s100
      %s115 = sphi 0, %s101
      %s119 = sphi 0, %s119
      %s121 = sphi 0, %s119
      %s122 = sphi 0, %s121
      %s136 = sphi 0, %s122
      %s140 = sphi 0, %s140
      %s142 = sphi 0, %s140
      %s143 = sphi 0, %s142
      %s157 = sphi 0, %s143
      %s163 = sphi 0, %s165
      %s166 = sphi 0, %s163
      %s167 = sphi 0, %s166
      %s183 = sphi 0, %s167
      %s189 = sphi 0, %s191
      %s192 = sphi 0, %s189
      %s193 = sphi 0, %s192
      %s209 = sphi 0, %s193
      %s215 = sphi 0, %s217
      %s218 = sphi 0, %s215
      %s219 = sphi 0, %s218
      %s235 = sphi 0, %s219
      %s241 = sphi 0, %s243
      %s244 = sphi 0, %s241
      %s245 = sphi 0, %s244
      %s261 = sphi 0, %s245
      %s267 = sphi 0, %s269
      %s270 = sphi 0, %s267
      %s271 = sphi 0, %s270
      %s287 = sphi 0, %s271
      %s291 = sphi 0, %s291
      %s293 = sphi 0, %s291
      %s294 = sphi 0, %s293
      %s308 = sphi 0, %s294
      %s312 = sphi 0, %s312
      %s314 = sphi 0, %s312
      %s315 = sphi 0, %s314
      %s329 = sphi 0, %s315
      %s333 = sphi 0, %s333
      %s335 = sphi 0, %s333
      %s336 = sphi 0, %s335
      %s350 = sphi 0, %s336
      %s354 = sphi 0, %s354
      %s356 = sphi 0, %s354
      %s357 = sphi 0, %s356
      %s371 = sphi 0, %s357
      %s377 = sphi 0, %s379
      %s380 = sphi 0, %s377
      %s381 = sphi 0, %s380
      %s397 = sphi 0, %s381
      %s403 = sphi 0, %s405
      %s406 = sphi 0, %s403
      %s407 = sphi 0, %s406
      %s423 = sphi 0, %s407
    $region4: #{style_encoder_forward.1} parent=1 // loop_header_branch
      %34 = sbr.rel (%p32) target = $region8
    $region5: #{style_encoder_forward.1} parent=1 // loop_body
      %s36 = ssub.s32 %s31, 1
      %s37 = ssub.s32 %s31, 2
      %s44 = sadd.s32 1, %s39
      %p45 = scmp.ge.s32.totalorder %s44, 6
      %s46 = scalar_select %p45, 0, %s44
      %s47 = sadd.s32 1, %s38
      %s48 = scalar_select %p45, %s47, %s38
      %p49 = scmp.ge.s32.totalorder %s48, 2
      %s50 = scalar_select %p49, 0, %s48
      %s51 = ssub.s32 %s38, %s50
      %p52 = scmp.eq.s32.totalorder %s51, 0
      %s54 = sadd.s32 %s53, 1
      %s55 = scalar_select %p52, %s53, %s54
      %p58 = pneg %p52
      %p59 = scmp.eq.s32.totalorder %s31, 11
      %p60 = por %p58, %p59
      %p61 = scmp.ne.s32.totalorder %s53, %s56
      %p62 = scmp.eq.s32.totalorder %s31, 0
      %p63 = por %p61, %p62
      %p64 = scmp.ne.s32.totalorder %s53, %s56
      %p65 = scmp.eq.s32.totalorder %s36, 11
      %p66 = por %p64, %p65
      %p67 = scmp.ne.s32.totalorder %s56, %s57
      %p68 = scmp.eq.s32.totalorder %s36, 0
      %p69 = por %p67, %p68
      %p70 = scmp.ne.s32.totalorder %s56, %s57
      %p71 = scmp.eq.s32.totalorder %s37, 11
      %p72 = por %p70, %p71
      %p74 = scmp.ne.s32.totalorder %s57, %s73
      %p75 = scmp.eq.s32.totalorder %s37, 0
      %p76 = por %p74, %p75
      %s78 = sadd.s32 %s77, 1
      %p81 = scmp.eq.s32.totalorder %s31, 11
      %p82 = scmp.ne.s32.totalorder %s77, %s79
      %p83 = scmp.eq.s32.totalorder %s31, 0
      %p84 = por %p82, %p83
      %p85 = scmp.ne.s32.totalorder %s77, %s79
      %p86 = scmp.eq.s32.totalorder %s36, 11
      %p87 = por %p85, %p86
      %p88 = scmp.ne.s32.totalorder %s79, %s80
      %p89 = scmp.eq.s32.totalorder %s36, 0
      %p90 = por %p88, %p89
      %p91 = scmp.ne.s32.totalorder %s79, %s80
      %p92 = scmp.eq.s32.totalorder %s37, 11
      %p93 = por %p91, %p92
      %p95 = scmp.ne.s32.totalorder %s80, %s94
      %p96 = scmp.eq.s32.totalorder %s37, 0
      %p97 = por %p95, %p96
      %s99 = sadd.s32 %s98, 1
      %p102 = scmp.eq.s32.totalorder %s31, 11
      %p103 = scmp.ne.s32.totalorder %s98, %s100
      %p104 = scmp.eq.s32.totalorder %s31, 0
      %p105 = por %p103, %p104
      %p106 = scmp.ne.s32.totalorder %s98, %s100
      %p107 = scmp.eq.s32.totalorder %s36, 11
      %p108 = por %p106, %p107
      %p109 = scmp.ne.s32.totalorder %s100, %s101
      %p110 = scmp.eq.s32.totalorder %s36, 0
      %p111 = por %p109, %p110
      %p112 = scmp.ne.s32.totalorder %s100, %s101
      %p113 = scmp.eq.s32.totalorder %s37, 11
      %p114 = por %p112, %p113
      %p116 = scmp.ne.s32.totalorder %s101, %s115
      %p117 = scmp.eq.s32.totalorder %s37, 0
      %p118 = por %p116, %p117
      %s120 = sadd.s32 %s119, 1
      %p123 = scmp.eq.s32.totalorder %s31, 11
      %p124 = scmp.ne.s32.totalorder %s119, %s121
      %p125 = scmp.eq.s32.totalorder %s31, 0
      %p126 = por %p124, %p125
      %p127 = scmp.ne.s32.totalorder %s119, %s121
      %p128 = scmp.eq.s32.totalorder %s36, 11
      %p129 = por %p127, %p128
      %p130 = scmp.ne.s32.totalorder %s121, %s122
      %p131 = scmp.eq.s32.totalorder %s36, 0
      %p132 = por %p130, %p131
      %p133 = scmp.ne.s32.totalorder %s121, %s122
      %p134 = scmp.eq.s32.totalorder %s37, 11
      %p135 = por %p133, %p134
      %p137 = scmp.ne.s32.totalorder %s122, %s136
      %p138 = scmp.eq.s32.totalorder %s37, 0
      %p139 = por %p137, %p138
      %s141 = sadd.s32 %s140, 1
      %p144 = scmp.eq.s32.totalorder %s31, 11
      %p145 = scmp.ne.s32.totalorder %s140, %s142
      %p146 = scmp.eq.s32.totalorder %s31, 0
      %p147 = por %p145, %p146
      %p148 = scmp.ne.s32.totalorder %s140, %s142
      %p149 = scmp.eq.s32.totalorder %s36, 11
      %p150 = por %p148, %p149
      %p151 = scmp.ne.s32.totalorder %s142, %s143
      %p152 = scmp.eq.s32.totalorder %s36, 0
      %p153 = por %p151, %p152
      %p154 = scmp.ne.s32.totalorder %s142, %s143
      %p155 = scmp.eq.s32.totalorder %s37, 11
      %p156 = por %p154, %p155
      %p158 = scmp.ne.s32.totalorder %s143, %s157
      %p159 = scmp.eq.s32.totalorder %s37, 0
      %p160 = por %p158, %p159
      %s161 = ssub.s32 %s39, %s46
      %p162 = scmp.eq.s32.totalorder %s161, 0
      %s164 = sadd.s32 %s163, 1
      %s165 = scalar_select %p162, %s163, %s164
      %p168 = pneg %p162
      %p169 = scmp.eq.s32.totalorder %s31, 11
      %p170 = por %p168, %p169
      %p171 = scmp.ne.s32.totalorder %s163, %s166
      %p172 = scmp.eq.s32.totalorder %s31, 0
      %p173 = por %p171, %p172
      %p174 = scmp.ne.s32.totalorder %s163, %s166
      %p175 = scmp.eq.s32.totalorder %s36, 11
      %p176 = por %p174, %p175
      %p177 = scmp.ne.s32.totalorder %s166, %s167
      %p178 = scmp.eq.s32.totalorder %s36, 0
      %p179 = por %p177, %p178
      %p180 = scmp.ne.s32.totalorder %s166, %s167
      %p181 = scmp.eq.s32.totalorder %s37, 11
      %p182 = por %p180, %p181
      %p184 = scmp.ne.s32.totalorder %s167, %s183
      %p185 = scmp.eq.s32.totalorder %s37, 0
      %p186 = por %p184, %p185
      %s187 = ssub.s32 %s39, %s46
      %p188 = scmp.eq.s32.totalorder %s187, 0
      %s190 = sadd.s32 %s189, 1
      %s191 = scalar_select %p188, %s189, %s190
      %p194 = pneg %p188
      %p195 = scmp.eq.s32.totalorder %s31, 11
      %p196 = por %p194, %p195
      %p197 = scmp.ne.s32.totalorder %s189, %s192
      %p198 = scmp.eq.s32.totalorder %s31, 0
      %p199 = por %p197, %p198
      %p200 = scmp.ne.s32.totalorder %s189, %s192
      %p201 = scmp.eq.s32.totalorder %s36, 11
      %p202 = por %p200, %p201
      %p203 = scmp.ne.s32.totalorder %s192, %s193
      %p204 = scmp.eq.s32.totalorder %s36, 0
      %p205 = por %p203, %p204
      %p206 = scmp.ne.s32.totalorder %s192, %s193
      %p207 = scmp.eq.s32.totalorder %s37, 11
      %p208 = por %p206, %p207
      %p210 = scmp.ne.s32.totalorder %s193, %s209
      %p211 = scmp.eq.s32.totalorder %s37, 0
      %p212 = por %p210, %p211
      %s213 = ssub.s32 %s39, %s46
      %p214 = scmp.eq.s32.totalorder %s213, 0
      %s216 = sadd.s32 %s215, 1
      %s217 = scalar_select %p214, %s215, %s216
      %p220 = pneg %p214
      %p221 = scmp.eq.s32.totalorder %s31, 11
      %p222 = por %p220, %p221
      %p223 = scmp.ne.s32.totalorder %s215, %s218
      %p224 = scmp.eq.s32.totalorder %s31, 0
      %p225 = por %p223, %p224
      %p226 = scmp.ne.s32.totalorder %s215, %s218
      %p227 = scmp.eq.s32.totalorder %s36, 11
      %p228 = por %p226, %p227
      %p229 = scmp.ne.s32.totalorder %s218, %s219
      %p230 = scmp.eq.s32.totalorder %s36, 0
      %p231 = por %p229, %p230
      %p232 = scmp.ne.s32.totalorder %s218, %s219
      %p233 = scmp.eq.s32.totalorder %s37, 11
      %p234 = por %p232, %p233
      %p236 = scmp.ne.s32.totalorder %s219, %s235
      %p237 = scmp.eq.s32.totalorder %s37, 0
      %p238 = por %p236, %p237
      %s239 = ssub.s32 %s39, %s46
      %p240 = scmp.eq.s32.totalorder %s239, 0
      %s242 = sadd.s32 %s241, 1
      %s243 = scalar_select %p240, %s241, %s242
      %p246 = pneg %p240
      %p247 = scmp.eq.s32.totalorder %s31, 11
      %p248 = por %p246, %p247
      %p249 = scmp.ne.s32.totalorder %s241, %s244
      %p250 = scmp.eq.s32.totalorder %s31, 0
      %p251 = por %p249, %p250
      %p252 = scmp.ne.s32.totalorder %s241, %s244
      %p253 = scmp.eq.s32.totalorder %s36, 11
      %p254 = por %p252, %p253
      %p255 = scmp.ne.s32.totalorder %s244, %s245
      %p256 = scmp.eq.s32.totalorder %s36, 0
      %p257 = por %p255, %p256
      %p258 = scmp.ne.s32.totalorder %s244, %s245
      %p259 = scmp.eq.s32.totalorder %s37, 11
      %p260 = por %p258, %p259
      %p262 = scmp.ne.s32.totalorder %s245, %s261
      %p263 = scmp.eq.s32.totalorder %s37, 0
      %p264 = por %p262, %p263
      %s265 = ssub.s32 %s39, %s46
      %p266 = scmp.eq.s32.totalorder %s265, 0
      %s268 = sadd.s32 %s267, 1
      %s269 = scalar_select %p266, %s267, %s268
      %p272 = pneg %p266
      %p273 = scmp.eq.s32.totalorder %s31, 11
      %p274 = por %p272, %p273
      %p275 = scmp.ne.s32.totalorder %s267, %s270
      %p276 = scmp.eq.s32.totalorder %s31, 0
      %p277 = por %p275, %p276
      %p278 = scmp.ne.s32.totalorder %s267, %s270
      %p279 = scmp.eq.s32.totalorder %s36, 11
      %p280 = por %p278, %p279
      %p281 = scmp.ne.s32.totalorder %s270, %s271
      %p282 = scmp.eq.s32.totalorder %s36, 0
      %p283 = por %p281, %p282
      %p284 = scmp.ne.s32.totalorder %s270, %s271
      %p285 = scmp.eq.s32.totalorder %s37, 11
      %p286 = por %p284, %p285
      %p288 = scmp.ne.s32.totalorder %s271, %s287
      %p289 = scmp.eq.s32.totalorder %s37, 0
      %p290 = por %p288, %p289
      %s292 = sadd.s32 %s291, 1
      %p295 = scmp.eq.s32.totalorder %s31, 11
      %p296 = scmp.ne.s32.totalorder %s291, %s293
      %p297 = scmp.eq.s32.totalorder %s31, 0
      %p298 = por %p296, %p297
      %p299 = scmp.ne.s32.totalorder %s291, %s293
      %p300 = scmp.eq.s32.totalorder %s36, 11
      %p301 = por %p299, %p300
      %p302 = scmp.ne.s32.totalorder %s293, %s294
      %p303 = scmp.eq.s32.totalorder %s36, 0
      %p304 = por %p302, %p303
      %p305 = scmp.ne.s32.totalorder %s293, %s294
      %p306 = scmp.eq.s32.totalorder %s37, 11
      %p307 = por %p305, %p306
      %p309 = scmp.ne.s32.totalorder %s294, %s308
      %p310 = scmp.eq.s32.totalorder %s37, 0
      %p311 = por %p309, %p310
      %s313 = sadd.s32 %s312, 1
      %p316 = scmp.eq.s32.totalorder %s31, 11
      %p317 = scmp.ne.s32.totalorder %s312, %s314
      %p318 = scmp.eq.s32.totalorder %s31, 0
      %p319 = por %p317, %p318
      %p320 = scmp.ne.s32.totalorder %s312, %s314
      %p321 = scmp.eq.s32.totalorder %s36, 11
      %p322 = por %p320, %p321
      %p323 = scmp.ne.s32.totalorder %s314, %s315
      %p324 = scmp.eq.s32.totalorder %s36, 0
      %p325 = por %p323, %p324
      %p326 = scmp.ne.s32.totalorder %s314, %s315
      %p327 = scmp.eq.s32.totalorder %s37, 11
      %p328 = por %p326, %p327
      %p330 = scmp.ne.s32.totalorder %s315, %s329
      %p331 = scmp.eq.s32.totalorder %s37, 0
      %p332 = por %p330, %p331
      %s334 = sadd.s32 %s333, 1
      %p337 = scmp.eq.s32.totalorder %s31, 11
      %p338 = scmp.ne.s32.totalorder %s333, %s335
      %p339 = scmp.eq.s32.totalorder %s31, 0
      %p340 = por %p338, %p339
      %p341 = scmp.ne.s32.totalorder %s333, %s335
      %p342 = scmp.eq.s32.totalorder %s36, 11
      %p343 = por %p341, %p342
      %p344 = scmp.ne.s32.totalorder %s335, %s336
      %p345 = scmp.eq.s32.totalorder %s36, 0
      %p346 = por %p344, %p345
      %p347 = scmp.ne.s32.totalorder %s335, %s336
      %p348 = scmp.eq.s32.totalorder %s37, 11
      %p349 = por %p347, %p348
      %p351 = scmp.ne.s32.totalorder %s336, %s350
      %p352 = scmp.eq.s32.totalorder %s37, 0
      %p353 = por %p351, %p352
      %s355 = sadd.s32 %s354, 1
      %p358 = scmp.eq.s32.totalorder %s31, 11
      %p359 = scmp.ne.s32.totalorder %s354, %s356
      %p360 = scmp.eq.s32.totalorder %s31, 0
      %p361 = por %p359, %p360
      %p362 = scmp.ne.s32.totalorder %s354, %s356
      %p363 = scmp.eq.s32.totalorder %s36, 11
      %p364 = por %p362, %p363
      %p365 = scmp.ne.s32.totalorder %s356, %s357
      %p366 = scmp.eq.s32.totalorder %s36, 0
      %p367 = por %p365, %p366
      %p368 = scmp.ne.s32.totalorder %s356, %s357
      %p369 = scmp.eq.s32.totalorder %s37, 11
      %p370 = por %p368, %p369
      %p372 = scmp.ne.s32.totalorder %s357, %s371
      %p373 = scmp.eq.s32.totalorder %s37, 0
      %p374 = por %p372, %p373
      %s375 = ssub.s32 %s38, %s50
      %p376 = scmp.eq.s32.totalorder %s375, 0
      %s378 = sadd.s32 %s377, 1
      %s379 = scalar_select %p376, %s377, %s378
      %p382 = pneg %p376
      %p383 = scmp.eq.s32.totalorder %s31, 11
      %p384 = por %p382, %p383
      %p385 = scmp.ne.s32.totalorder %s377, %s380
      %p386 = scmp.eq.s32.totalorder %s31, 0
      %p387 = por %p385, %p386
      %p388 = scmp.ne.s32.totalorder %s377, %s380
      %p389 = scmp.eq.s32.totalorder %s36, 11
      %p390 = por %p388, %p389
      %p391 = scmp.ne.s32.totalorder %s380, %s381
      %p392 = scmp.eq.s32.totalorder %s36, 0
      %p393 = por %p391, %p392
      %p394 = scmp.ne.s32.totalorder %s380, %s381
      %p395 = scmp.eq.s32.totalorder %s37, 11
      %p396 = por %p394, %p395
      %p398 = scmp.ne.s32.totalorder %s381, %s397
      %p399 = scmp.eq.s32.totalorder %s37, 0
      %p400 = por %p398, %p399
      %s401 = ssub.s32 %s38, %s50
      %p402 = scmp.eq.s32.totalorder %s401, 0
      %s404 = sadd.s32 %s403, 1
      %s405 = scalar_select %p402, %s403, %s404
      %p408 = pneg %p402
      %p409 = scmp.eq.s32.totalorder %s31, 11
      %p410 = por %p408, %p409
      %p411 = scmp.ne.s32.totalorder %s403, %s406
      %p412 = scmp.eq.s32.totalorder %s31, 0
      %p413 = por %p411, %p412
      %p414 = scmp.ne.s32.totalorder %s403, %s406
      %p415 = scmp.eq.s32.totalorder %s36, 11
      %p416 = por %p414, %p415
      %p417 = scmp.ne.s32.totalorder %s406, %s407
      %p418 = scmp.eq.s32.totalorder %s36, 0
      %p419 = por %p417, %p418
      %p420 = scmp.ne.s32.totalorder %s406, %s407
      %p421 = scmp.eq.s32.totalorder %s37, 11
      %p422 = por %p420, %p421
      %p424 = scmp.ne.s32.totalorder %s407, %s423
      %p425 = scmp.eq.s32.totalorder %s37, 0
      %p426 = por %p424, %p425
      %p427 = scmp.le.s32.totalorder 1, %s31
      %p428 = scmp.lt.s32.totalorder %s31, 13
      %p429 = pnand %p427, %p428
      %p430 = pneg %p429
      // Predicated region
      $region9: #{style_encoder_forward.1} parent=5 // pred_check
        _
      $region10: #{style_encoder_forward.1} parent=5 // pred_check_branch
        %432 = sbr.rel (%p429) target = $region12
      $region11: #{style_encoder_forward.1} parent=5 // pred_region
        %s433 = ssub.s32 %s31, 1
        // Predicated region
        $region13: #{style_encoder_forward.1} parent=11 // pred_check
          %p434 = pneg %p90
        $region14: #{style_encoder_forward.1} parent=11 // pred_check_branch
          %436 = sbr.rel (%p434) target = $region16
        $region15: #{style_encoder_forward.1} parent=11 // pred_region
          %s438 = ssub.s32 12288, 12288
          %439 = vsyncadd [#allocation6], %s438
          %s440 = sshll.u32 [#allocation5], 4
          %s441 = int_to_ptr.vmem [resolvable:$true] %s440
          %446 = dma.hbm_to_vmem [thread:$0]  %s2, 12288, %s441, [#allocation6], 256, 256, 16
        $region16: #{style_encoder_forward.1} parent=11 // pred_fallthru
          _
        // Predicated region
        $region17: #{style_encoder_forward.1} parent=11 // pred_check
          %p447 = pneg %p111
        $region18: #{style_encoder_forward.1} parent=11 // pred_check_branch
          %449 = sbr.rel (%p447) target = $region20
        $region19: #{style_encoder_forward.1} parent=11 // pred_region
          %s451 = ssub.s32 64, 64
          %452 = vsyncadd [#allocation8], %s451
          %s454 = sshll.u32 [#allocation7], 4
          %s455 = int_to_ptr.vmem [resolvable:$true] %s454
          %457 = dma.hbm_to_vmem [thread:$0]  %s3, 64, %s455, [#allocation8]
        $region20: #{style_encoder_forward.1} parent=11 // pred_fallthru
          _
        // Predicated region
        $region21: #{style_encoder_forward.1} parent=11 // pred_check
          %p458 = pneg %p132
        $region22: #{style_encoder_forward.1} parent=11 // pred_check_branch
          %460 = sbr.rel (%p458) target = $region24
        $region23: #{style_encoder_forward.1} parent=11 // pred_region
          %s462 = ssub.s32 128, 128
          %463 = vsyncadd [#allocation8], %s462
          %s465 = sshll.u32 [#allocation9], 4
          %s466 = int_to_ptr.vmem [resolvable:$true] %s465
          %468 = dma.hbm_to_vmem [thread:$0]  %s4, 128, %s466, [#allocation8]
        $region24: #{style_encoder_forward.1} parent=11 // pred_fallthru
          _
        // Predicated region
        $region25: #{style_encoder_forward.1} parent=11 // pred_check
          %p469 = pneg %p153
        $region26: #{style_encoder_forward.1} parent=11 // pred_check_branch
          %471 = sbr.rel (%p469) target = $region28
        $region27: #{style_encoder_forward.1} parent=11 // pred_region
          %s473 = ssub.s32 4096, 4096
          %474 = vsyncadd [#allocation11], %s473
          %s475 = sshll.u32 [#allocation10], 4
          %s476 = int_to_ptr.vmem [resolvable:$true] %s475
          %481 = dma.hbm_to_vmem [thread:$0]  %s5, 4096, %s476, [#allocation11], 512, 512, 32
        $region28: #{style_encoder_forward.1} parent=11 // pred_fallthru
          _
        // Predicated region
        $region29: #{style_encoder_forward.1} parent=11 // pred_check
          %p482 = pneg %p304
        $region30: #{style_encoder_forward.1} parent=11 // pred_check_branch
          %484 = sbr.rel (%p482) target = $region32
        $region31: #{style_encoder_forward.1} parent=11 // pred_region
          %s486 = ssub.s32 64, 64
          %487 = vsyncadd [#allocation8], %s486
          %s489 = sshll.u32 [#allocation17], 4
          %s490 = int_to_ptr.vmem [resolvable:$true] %s489
          %492 = dma.hbm_to_vmem [thread:$0]  %s11, 64, %s490, [#allocation8]
        $region32: #{style_encoder_forward.1} parent=11 // pred_fallthru
          _
        // Predicated region
        $region33: #{style_encoder_forward.1} parent=11 // pred_check
          %p493 = pneg %p325
        $region34: #{style_encoder_forward.1} parent=11 // pred_check_branch
          %495 = sbr.rel (%p493) target = $region36
        $region35: #{style_encoder_forward.1} parent=11 // pred_region
          %s497 = ssub.s32 64, 64
          %498 = vsyncadd [#allocation11], %s497
          %s500 = sshll.u32 [#allocation18], 4
          %s501 = int_to_ptr.vmem [resolvable:$true] %s500
          %503 = dma.hbm_to_vmem [thread:$0]  %s12, 64, %s501, [#allocation11]
        $region36: #{style_encoder_forward.1} parent=11 // pred_fallthru
          _
        // Predicated region
        $region37: #{style_encoder_forward.1} parent=11 // pred_check
          %p504 = pneg %p346
        $region38: #{style_encoder_forward.1} parent=11 // pred_check_branch
          %506 = sbr.rel (%p504) target = $region40
        $region39: #{style_encoder_forward.1} parent=11 // pred_region
          %s508 = ssub.s32 4096, 4096
          %509 = vsyncadd [#allocation20], %s508
          %s510 = sshll.u32 [#allocation19], 4
          %s511 = int_to_ptr.vmem [resolvable:$true] %s510
          %516 = dma.hbm_to_vmem [thread:$0]  %s13, 4096, %s511, [#allocation20], 64, 64, 4
        $region40: #{style_encoder_forward.1} parent=11 // pred_fallthru
          _
        // Predicated region
        $region41: #{style_encoder_forward.1} parent=11 // pred_check
          %p517 = pneg %p367
        $region42: #{style_encoder_forward.1} parent=11 // pred_check_branch
          %519 = sbr.rel (%p517) target = $region44
        $region43: #{style_encoder_forward.1} parent=11 // pred_region
          %s521 = ssub.s32 16, 16
          %522 = vsyncadd [#allocation20], %s521
          %s524 = sshll.u32 [#allocation21], 4
          %s525 = int_to_ptr.vmem [resolvable:$true] %s524
          %527 = dma.hbm_to_vmem [thread:$0]  %s14, 16, %s525, [#allocation20]
        $region44: #{style_encoder_forward.1} parent=11 // pred_fallthru
          _
      $region12: #{style_encoder_forward.1} parent=5 // pred_fallthru
        _
      %p528 = scmp.lt.s32.totalorder %s31, 12
      // Predicated region
      $region45: #{style_encoder_forward.1} parent=5 // pred_check
        %p529 = pneg %p528
      $region46: #{style_encoder_forward.1} parent=5 // pred_check_branch
        %531 = sbr.rel (%p529) target = $region48
      $region47: #{style_encoder_forward.1} parent=5 // pred_region
        // Predicated region
        $region49: #{style_encoder_forward.1} parent=47 // pred_check
          %p532 = pneg %p63
        $region50: #{style_encoder_forward.1} parent=47 // pred_check_branch
          %534 = sbr.rel (%p532) target = $region52
        $region51: #{style_encoder_forward.1} parent=47 // pred_region
          %p535 = scmp.lt.s32.totalorder %s38, 1
          %s536 = scalar_select %p535, %s38, 1
          %s537 = smul.addr %s536, 3
          %s538 = smul.addr %s537, 4
          %s539 = scalar_lea.vmem %s1, %s538
        $region52: #{style_encoder_forward.1} parent=47 // pred_fallthru
          _
        // Predicated region
        $region53: #{style_encoder_forward.1} parent=47 // pred_check
          %p540 = pneg %p173
        $region54: #{style_encoder_forward.1} parent=47 // pred_check_branch
          %542 = sbr.rel (%p540) target = $region56
        $region55: #{style_encoder_forward.1} parent=47 // pred_region
          %s543 = sand.u32 %s31, 1
          %s544 = scalar_lea.sflag [#allocation6], %s543
          %s545 = sand.u32 %s163, 1
          %s546 = smul.addr %s545, 3072
          %s547 = scalar_lea.vmem [#allocation12], %s546
          %s549 = ssub.s32 49152, 49152
          %550 = vsyncadd %s544, %s549
          %s551 = smul.addr %s39, 768
          %s552 = smul.addr %s551, 64
          %s553 = scalar_lea.hbm %s6, %s552
          %s554 = sshll.u32 %s547, 4
          %s555 = int_to_ptr.vmem [resolvable:$true] %s554
          %560 = dma.hbm_to_vmem [thread:$0]  %s553, 49152, %s555, %s544, 768, 768, 48
        $region56: #{style_encoder_forward.1} parent=47 // pred_fallthru
          _
        // Predicated region
        $region57: #{style_encoder_forward.1} parent=47 // pred_check
          %p561 = pneg %p199
        $region58: #{style_encoder_forward.1} parent=47 // pred_check_branch
          %563 = sbr.rel (%p561) target = $region60
        $region59: #{style_encoder_forward.1} parent=47 // pred_region
          %s564 = sand.u32 %s31, 1
          %s565 = scalar_lea.sflag [#allocation6], %s564
          %s566 = sand.u32 %s189, 1
          %s567 = smul.addr %s566, 1024
          %s568 = scalar_lea.vmem [#allocation13], %s567
          %s570 = ssub.s32 16384, 16384
          %571 = vsyncadd %s565, %s570
          %s572 = smul.addr %s39, 256
          %s573 = smul.addr %s572, 64
          %s574 = scalar_lea.hbm %s7, %s573
          %s575 = sshll.u32 %s568, 4
          %s576 = int_to_ptr.vmem [resolvable:$true] %s575
          %581 = dma.hbm_to_vmem [thread:$0]  %s574, 16384, %s576, %s565, 256, 256, 16
        $region60: #{style_encoder_forward.1} parent=47 // pred_fallthru
          _
        // Predicated region
        $region61: #{style_encoder_forward.1} parent=47 // pred_check
          %p582 = pneg %p225
        $region62: #{style_encoder_forward.1} parent=47 // pred_check_branch
          %584 = sbr.rel (%p582) target = $region64
        $region63: #{style_encoder_forward.1} parent=47 // pred_region
          %s585 = sand.u32 %s31, 1
          %s586 = scalar_lea.sflag [#allocation6], %s585
          %s587 = sand.u32 %s215, 1
          %s588 = smul.addr %s587, 2048
          %s589 = scalar_lea.vmem [#allocation14], %s588
          %s591 = ssub.s32 32768, 32768
          %592 = vsyncadd %s586, %s591
          %s593 = smul.addr %s39, 512
          %s594 = smul.addr %s593, 64
          %s595 = scalar_lea.hbm %s8, %s594
          %s596 = sshll.u32 %s589, 4
          %s597 = int_to_ptr.vmem [resolvable:$true] %s596
          %602 = dma.hbm_to_vmem [thread:$0]  %s595, 32768, %s597, %s586, 512, 512, 32
        $region64: #{style_encoder_forward.1} parent=47 // pred_fallthru
          _
        // Predicated region
        $region65: #{style_encoder_forward.1} parent=47 // pred_check
          %p603 = pneg %p251
        $region66: #{style_encoder_forward.1} parent=47 // pred_check_branch
          %605 = sbr.rel (%p603) target = $region68
        $region67: #{style_encoder_forward.1} parent=47 // pred_region
          %s606 = sand.u32 %s31, 1
          %s607 = scalar_lea.sflag [#allocation6], %s606
          %s608 = sand.u32 %s241, 1
          %s609 = smul.addr %s608, 2048
          %s610 = scalar_lea.vmem [#allocation15], %s609
          %s612 = ssub.s32 32768, 32768
          %613 = vsyncadd %s607, %s612
          %s614 = smul.addr %s39, 512
          %s615 = smul.addr %s614, 64
          %s616 = scalar_lea.hbm %s9, %s615
          %s617 = sshll.u32 %s610, 4
          %s618 = int_to_ptr.vmem [resolvable:$true] %s617
          %623 = dma.hbm_to_vmem [thread:$0]  %s616, 32768, %s618, %s607, 256, 256, 16
        $region68: #{style_encoder_forward.1} parent=47 // pred_fallthru
          _
        // Predicated region
        $region69: #{style_encoder_forward.1} parent=47 // pred_check
          %p624 = pneg %p277
        $region70: #{style_encoder_forward.1} parent=47 // pred_check_branch
          %626 = sbr.rel (%p624) target = $region72
        $region71: #{style_encoder_forward.1} parent=47 // pred_region
          %s627 = sand.u32 %s31, 1
          %s628 = scalar_lea.sflag [#allocation6], %s627
          %s629 = sand.u32 %s267, 1
          %s630 = smul.addr %s629, 96
          %s631 = scalar_lea.vmem [#allocation16], %s630
          %s633 = ssub.s32 1536, 1536
          %634 = vsyncadd %s628, %s633
          %s635 = smul.addr %s39, 12
          %s636 = smul.addr %s635, 128
          %s637 = scalar_lea.hbm %s10, %s636
          %s639 = sshll.u32 %s631, 4
          %s640 = int_to_ptr.vmem [resolvable:$true] %s639
          %642 = dma.hbm_to_vmem [thread:$0]  %s637, 1536, %s640, %s628
        $region72: #{style_encoder_forward.1} parent=47 // pred_fallthru
          _
      $region48: #{style_encoder_forward.1} parent=5 // pred_fallthru
        _
      %p643 = scmp.le.s32.totalorder 1, %s31
      %p644 = scmp.lt.s32.totalorder %s31, 13
      %p645 = pnand %p643, %p644
      %p646 = pneg %p645
      // Predicated region
      $region73: #{style_encoder_forward.1} parent=5 // pred_check
        _
      $region74: #{style_encoder_forward.1} parent=5 // pred_check_branch
        %648 = sbr.rel (%p645) target = $region76
      $region75: #{style_encoder_forward.1} parent=5 // pred_region
        %s649 = ssub.s32 %s31, 1
        // Predicated region
        $region77: #{style_encoder_forward.1} parent=75 // pred_check
          %p650 = pneg %p90
        $region78: #{style_encoder_forward.1} parent=75 // pred_check_branch
          %652 = sbr.rel (%p650) target = $region80
        $region79: #{style_encoder_forward.1} parent=75 // pred_region
          %653 = dma.done [#allocation6], 12288
        $region80: #{style_encoder_forward.1} parent=75 // pred_fallthru
          _
        // Predicated region
        $region81: #{style_encoder_forward.1} parent=75 // pred_check
          %p654 = pneg %p111
        $region82: #{style_encoder_forward.1} parent=75 // pred_check_branch
          %656 = sbr.rel (%p654) target = $region84
        $region83: #{style_encoder_forward.1} parent=75 // pred_region
          %657 = dma.done [#allocation8], 64
        $region84: #{style_encoder_forward.1} parent=75 // pred_fallthru
          _
        // Predicated region
        $region85: #{style_encoder_forward.1} parent=75 // pred_check
          %p658 = pneg %p132
        $region86: #{style_encoder_forward.1} parent=75 // pred_check_branch
          %660 = sbr.rel (%p658) target = $region88
        $region87: #{style_encoder_forward.1} parent=75 // pred_region
          %661 = dma.done [#allocation8], 128
        $region88: #{style_encoder_forward.1} parent=75 // pred_fallthru
          _
        // Predicated region
        $region89: #{style_encoder_forward.1} parent=75 // pred_check
          %p662 = pneg %p153
        $region90: #{style_encoder_forward.1} parent=75 // pred_check_branch
          %664 = sbr.rel (%p662) target = $region92
        $region91: #{style_encoder_forward.1} parent=75 // pred_region
          %665 = dma.done [#allocation11], 4096
        $region92: #{style_encoder_forward.1} parent=75 // pred_fallthru
          _
        %s666 = sand.u32 %s36, 1
        %s667 = scalar_lea.sflag [#allocation6], %s666
        %s668 = sand.u32 %s166, 1
        %s669 = smul.addr %s668, 3072
        %s670 = scalar_lea.vmem [#allocation12], %s669
        // Predicated region
        $region93: #{style_encoder_forward.1} parent=75 // pred_check
          %p671 = pneg %p179
        $region94: #{style_encoder_forward.1} parent=75 // pred_check_branch
          %673 = sbr.rel (%p671) target = $region96
        $region95: #{style_encoder_forward.1} parent=75 // pred_region
          %674 = dma.done %s667, 49152
        $region96: #{style_encoder_forward.1} parent=75 // pred_fallthru
          _
        %s675 = sand.u32 %s36, 1
        %s676 = scalar_lea.sflag [#allocation6], %s675
        %s677 = sand.u32 %s192, 1
        %s678 = smul.addr %s677, 1024
        %s679 = scalar_lea.vmem [#allocation13], %s678
        // Predicated region
        $region97: #{style_encoder_forward.1} parent=75 // pred_check
          %p680 = pneg %p205
        $region98: #{style_encoder_forward.1} parent=75 // pred_check_branch
          %682 = sbr.rel (%p680) target = $region100
        $region99: #{style_encoder_forward.1} parent=75 // pred_region
          %683 = dma.done %s676, 16384
        $region100: #{style_encoder_forward.1} parent=75 // pred_fallthru
          _
        %s684 = sand.u32 %s36, 1
        %s685 = scalar_lea.sflag [#allocation6], %s684
        %s686 = sand.u32 %s218, 1
        %s687 = smul.addr %s686, 2048
        %s688 = scalar_lea.vmem [#allocation14], %s687
        // Predicated region
        $region101: #{style_encoder_forward.1} parent=75 // pred_check
          %p689 = pneg %p231
        $region102: #{style_encoder_forward.1} parent=75 // pred_check_branch
          %691 = sbr.rel (%p689) target = $region104
        $region103: #{style_encoder_forward.1} parent=75 // pred_region
          %692 = dma.done %s685, 32768
        $region104: #{style_encoder_forward.1} parent=75 // pred_fallthru
          _
        %s693 = sand.u32 %s36, 1
        %s694 = scalar_lea.sflag [#allocation6], %s693
        %s695 = sand.u32 %s244, 1
        %s696 = smul.addr %s695, 2048
        %s697 = scalar_lea.vmem [#allocation15], %s696
        // Predicated region
        $region105: #{style_encoder_forward.1} parent=75 // pred_check
          %p698 = pneg %p257
        $region106: #{style_encoder_forward.1} parent=75 // pred_check_branch
          %700 = sbr.rel (%p698) target = $region108
        $region107: #{style_encoder_forward.1} parent=75 // pred_region
          %701 = dma.done %s694, 32768
        $region108: #{style_encoder_forward.1} parent=75 // pred_fallthru
          _
        %s702 = sand.u32 %s36, 1
        %s703 = scalar_lea.sflag [#allocation6], %s702
        %s704 = sand.u32 %s270, 1
        %s705 = smul.addr %s704, 96
        %s706 = scalar_lea.vmem [#allocation16], %s705
        // Predicated region
        $region109: #{style_encoder_forward.1} parent=75 // pred_check
          %p707 = pneg %p283
        $region110: #{style_encoder_forward.1} parent=75 // pred_check_branch
          %709 = sbr.rel (%p707) target = $region112
        $region111: #{style_encoder_forward.1} parent=75 // pred_region
          %710 = dma.done %s703, 1536
        $region112: #{style_encoder_forward.1} parent=75 // pred_fallthru
          _
        // Predicated region
        $region113: #{style_encoder_forward.1} parent=75 // pred_check
          %p711 = pneg %p304
        $region114: #{style_encoder_forward.1} parent=75 // pred_check_branch
          %713 = sbr.rel (%p711) target = $region116
        $region115: #{style_encoder_forward.1} parent=75 // pred_region
          %714 = dma.done [#allocation8], 64
        $region116: #{style_encoder_forward.1} parent=75 // pred_fallthru
          _
        // Predicated region
        $region117: #{style_encoder_forward.1} parent=75 // pred_check
          %p715 = pneg %p325
        $region118: #{style_encoder_forward.1} parent=75 // pred_check_branch
          %717 = sbr.rel (%p715) target = $region120
        $region119: #{style_encoder_forward.1} parent=75 // pred_region
          %718 = dma.done [#allocation11], 64
        $region120: #{style_encoder_forward.1} parent=75 // pred_fallthru
          _
        // Predicated region
        $region121: #{style_encoder_forward.1} parent=75 // pred_check
          %p719 = pneg %p346
        $region122: #{style_encoder_forward.1} parent=75 // pred_check_branch
          %721 = sbr.rel (%p719) target = $region124
        $region123: #{style_encoder_forward.1} parent=75 // pred_region
          %722 = dma.done [#allocation20], 4096
        $region124: #{style_encoder_forward.1} parent=75 // pred_fallthru
          _
        // Predicated region
        $region125: #{style_encoder_forward.1} parent=75 // pred_check
          %p723 = pneg %p367
        $region126: #{style_encoder_forward.1} parent=75 // pred_check_branch
          %725 = sbr.rel (%p723) target = $region128
        $region127: #{style_encoder_forward.1} parent=75 // pred_region
          %726 = dma.done [#allocation20], 16
        $region128: #{style_encoder_forward.1} parent=75 // pred_fallthru
          _
        %p727 = scmp.lt.s32.totalorder %s40, 1
        %s728 = scalar_select %p727, %s40, 1
        %s729 = smul.addr %s728, 3
        %s730 = smul.addr %s729, 4
        %s731 = scalar_lea.vmem %s1, %s730
        %p732 = pneg %p69
        %p733 = pneg %p66
        %p734 = pneg %p90
        %p735 = pneg %p87
        %p736 = pneg %p111
        %p737 = pneg %p108
        %p738 = pneg %p132
        %p739 = pneg %p129
        %p740 = pneg %p153
        %p741 = pneg %p150
        %s742 = sand.u32 %s36, 1
        %s743 = scalar_lea.sflag [#allocation6], %s742
        %s744 = sand.u32 %s166, 1
        %s745 = smul.addr %s744, 3072
        %s746 = scalar_lea.vmem [#allocation12], %s745
        %p747 = pneg %p179
        %p748 = pneg %p176
        %s749 = sand.u32 %s36, 1
        %s750 = scalar_lea.sflag [#allocation6], %s749
        %s751 = sand.u32 %s192, 1
        %s752 = smul.addr %s751, 1024
        %s753 = scalar_lea.vmem [#allocation13], %s752
        %p754 = pneg %p205
        %p755 = pneg %p202
        %s756 = sand.u32 %s36, 1
        %s757 = scalar_lea.sflag [#allocation6], %s756
        %s758 = sand.u32 %s218, 1
        %s759 = smul.addr %s758, 2048
        %s760 = scalar_lea.vmem [#allocation14], %s759
        %p761 = pneg %p231
        %p762 = pneg %p228
        %s763 = sand.u32 %s36, 1
        %s764 = scalar_lea.sflag [#allocation6], %s763
        %s765 = sand.u32 %s244, 1
        %s766 = smul.addr %s765, 2048
        %s767 = scalar_lea.vmem [#allocation15], %s766
        %p768 = pneg %p257
        %p769 = pneg %p254
        %s770 = sand.u32 %s36, 1
        %s771 = scalar_lea.sflag [#allocation6], %s770
        %s772 = sand.u32 %s270, 1
        %s773 = smul.addr %s772, 96
        %s774 = scalar_lea.vmem [#allocation16], %s773
        %p775 = pneg %p283
        %p776 = pneg %p280
        %p777 = pneg %p304
        %p778 = pneg %p301
        %p779 = pneg %p325
        %p780 = pneg %p322
        %p781 = pneg %p346
        %p782 = pneg %p343
        %p783 = pneg %p367
        %p784 = pneg %p364
        %p785 = pneg %p393
        %p786 = pneg %p390
        %p787 = scmp.lt.s32.totalorder %s40, 1
        %s788 = scalar_select %p787, %s40, 1
        %s789 = smul.addr %s788, 4
        %s790 = smul.addr %s789, 8
        %s791 = scalar_lea.vmem %s15, %s790
        %p792 = pneg %p419
        %p793 = pneg %p416
        %p794 = scmp.lt.s32.totalorder %s40, 1
        %s795 = scalar_select %p794, %s40, 1
        %s796 = smul.addr %s795, 8
        %s797 = scalar_lea.vmem %s16, %s796
        %p798 = scmp.lt.s32.totalorder %s40, 1
        %s799 = scalar_select %p798, %s40, 1
        %s800 = smul.addr %s799, 3
        %s801 = smul.addr %s800, 4
        %s802 = scalar_lea.vmem %s1, %s801
        %p803 = scmp.lt.s32.totalorder %s40, 1
        %s804 = scalar_select %p803, %s40, 1
        %s805 = smul.addr %s804, 4
        %s806 = smul.addr %s805, 8
        %s807 = scalar_lea.vmem %s15, %s806
        %p808 = scmp.lt.s32.totalorder %s40, 1
        %s809 = scalar_select %p808, %s40, 1
        %s810 = smul.addr %s809, 8
        %s811 = scalar_lea.vmem %s16, %s810
        %p813 = scmp.eq.s32.totalorder %s41, 0
        // Predicated region
        $region129: #{style_encoder_forward.1} parent=75 // pred_check
          %p814 = pneg %p813
        $region130: #{style_encoder_forward.1} parent=75 // pred_check_branch
          %816 = sbr.rel (%p814) target = $region132
        $region131: #{style_encoder_forward.1} parent=75 // pred_region
          %v817 = vld [vmem:[%s802] sm:$0xff]
          %v818 = vld [vmem:[%s802 + $0x8] sm:$0xf]
          %v819 = vld [vmem:[#allocation5] sm:$0xff]
          %v820 = vld [vmem:[#allocation5 + $0x8] sm:$0xff]
          %v821 = vld [vmem:[#allocation5 + $0x10] sm:$0xff]
          %v822 = vld [vmem:[#allocation5 + $0x18] sm:$0xff]
          %v823 = vld [vmem:[#allocation5 + $0x20] sm:$0xff]
          %v824 = vld [vmem:[#allocation5 + $0x28] sm:$0xff]
          %v825 = vld [vmem:[#allocation5 + $0x30] sm:$0xff]
          %v826 = vld [vmem:[#allocation5 + $0x38] sm:$0xff]
          %v827 = vld [vmem:[#allocation5 + $0x40] sm:$0xff]
          %v828 = vld [vmem:[#allocation5 + $0x48] sm:$0xff]
          %v829 = vld [vmem:[#allocation5 + $0x50] sm:$0xff]
          %v830 = vld [vmem:[#allocation5 + $0x58] sm:$0xff]
          %v831 = vld [vmem:[#allocation5 + $0x60] sm:$0xff]
          %v832 = vld [vmem:[#allocation5 + $0x68] sm:$0xff]
          %v833 = vld [vmem:[#allocation5 + $0x70] sm:$0xff]
          %v834 = vld [vmem:[#allocation5 + $0x78] sm:$0xff]
          %v835 = vld [vmem:[#allocation5 + $0x80] sm:$0xff]
          %v836 = vld [vmem:[#allocation5 + $0x88] sm:$0xff]
          %v837 = vld [vmem:[#allocation5 + $0x90] sm:$0xff]
          %v838 = vld [vmem:[#allocation5 + $0x98] sm:$0xff]
          %v839 = vld [vmem:[#allocation5 + $0xa0] sm:$0xff]
          %v840 = vld [vmem:[#allocation5 + $0xa8] sm:$0xff]
          %v841 = vld [vmem:[#allocation5 + $0xb0] sm:$0xff]
          %v842 = vld [vmem:[#allocation5 + $0xb8] sm:$0xff]
          %v843 = vld [vmem:[#allocation5 + $0xc0] sm:$0xff]
          %v844 = vld [vmem:[#allocation5 + $0xc8] sm:$0xff]
          %v845 = vld [vmem:[#allocation5 + $0xd0] sm:$0xff]
          %v846 = vld [vmem:[#allocation5 + $0xd8] sm:$0xff]
          %v847 = vld [vmem:[#allocation5 + $0xe0] sm:$0xff]
          %v848 = vld [vmem:[#allocation5 + $0xe8] sm:$0xff]
          %v849 = vld [vmem:[#allocation5 + $0xf0] sm:$0xff]
          %v850 = vld [vmem:[#allocation5 + $0xf8] sm:$0xff]
          %v851 = vld [vmem:[#allocation5 + $0x100] sm:$0xff]
          %v852 = vld [vmem:[#allocation5 + $0x108] sm:$0xff]
          %v853 = vld [vmem:[#allocation5 + $0x110] sm:$0xff]
          %v854 = vld [vmem:[#allocation5 + $0x118] sm:$0xff]
          %v855 = vld [vmem:[#allocation5 + $0x120] sm:$0xff]
          %v856 = vld [vmem:[#allocation5 + $0x128] sm:$0xff]
          %v857 = vld [vmem:[#allocation5 + $0x130] sm:$0xff]
          %v858 = vld [vmem:[#allocation5 + $0x138] sm:$0xff]
          %v859 = vld [vmem:[#allocation5 + $0x140] sm:$0xff]
          %v860 = vld [vmem:[#allocation5 + $0x148] sm:$0xff]
          %v861 = vld [vmem:[#allocation5 + $0x150] sm:$0xff]
          %v862 = vld [vmem:[#allocation5 + $0x158] sm:$0xff]
          %v863 = vld [vmem:[#allocation5 + $0x160] sm:$0xff]
          %v864 = vld [vmem:[#allocation5 + $0x168] sm:$0xff]
          %v865 = vld [vmem:[#allocation5 + $0x170] sm:$0xff]
          %v866 = vld [vmem:[#allocation5 + $0x178] sm:$0xff]
          %v867 = vld [vmem:[#allocation5 + $0x180] sm:$0xff]
          %v868 = vld [vmem:[#allocation5 + $0x188] sm:$0xff]
          %v869 = vld [vmem:[#allocation5 + $0x190] sm:$0xff]
          %v870 = vld [vmem:[#allocation5 + $0x198] sm:$0xff]
          %v871 = vld [vmem:[#allocation5 + $0x1a0] sm:$0xff]
          %v872 = vld [vmem:[#allocation5 + $0x1a8] sm:$0xff]
          %v873 = vld [vmem:[#allocation5 + $0x1b0] sm:$0xff]
          %v874 = vld [vmem:[#allocation5 + $0x1b8] sm:$0xff]
          %v875 = vld [vmem:[#allocation5 + $0x1c0] sm:$0xff]
          %v876 = vld [vmem:[#allocation5 + $0x1c8] sm:$0xff]
          %v877 = vld [vmem:[#allocation5 + $0x1d0] sm:$0xff]
          %v878 = vld [vmem:[#allocation5 + $0x1d8] sm:$0xff]
          %v879 = vld [vmem:[#allocation5 + $0x1e0] sm:$0xff]
          %v880 = vld [vmem:[#allocation5 + $0x1e8] sm:$0xff]
          %v881 = vld [vmem:[#allocation5 + $0x1f0] sm:$0xff]
          %v882 = vld [vmem:[#allocation5 + $0x1f8] sm:$0xff]
          %v883 = vld [vmem:[#allocation5 + $0x200] sm:$0xff]
          %v884 = vld [vmem:[#allocation5 + $0x208] sm:$0xff]
          %v885 = vld [vmem:[#allocation5 + $0x210] sm:$0xff]
          %v886 = vld [vmem:[#allocation5 + $0x218] sm:$0xff]
          %v887 = vld [vmem:[#allocation5 + $0x220] sm:$0xff]
          %v888 = vld [vmem:[#allocation5 + $0x228] sm:$0xff]
          %v889 = vld [vmem:[#allocation5 + $0x230] sm:$0xff]
          %v890 = vld [vmem:[#allocation5 + $0x238] sm:$0xff]
          %v891 = vld [vmem:[#allocation5 + $0x240] sm:$0xff]
          %v892 = vld [vmem:[#allocation5 + $0x248] sm:$0xff]
          %v893 = vld [vmem:[#allocation5 + $0x250] sm:$0xff]
          %v894 = vld [vmem:[#allocation5 + $0x258] sm:$0xff]
          %v895 = vld [vmem:[#allocation5 + $0x260] sm:$0xff]
          %v896 = vld [vmem:[#allocation5 + $0x268] sm:$0xff]
          %v897 = vld [vmem:[#allocation5 + $0x270] sm:$0xff]
          %v898 = vld [vmem:[#allocation5 + $0x278] sm:$0xff]
          %v899 = vld [vmem:[#allocation5 + $0x280] sm:$0xff]
          %v900 = vld [vmem:[#allocation5 + $0x288] sm:$0xff]
          %v901 = vld [vmem:[#allocation5 + $0x290] sm:$0xff]
          %v902 = vld [vmem:[#allocation5 + $0x298] sm:$0xff]
          %v903 = vld [vmem:[#allocation5 + $0x2a0] sm:$0xff]
          %v904 = vld [vmem:[#allocation5 + $0x2a8] sm:$0xff]
          %v905 = vld [vmem:[#allocation5 + $0x2b0] sm:$0xff]
          %v906 = vld [vmem:[#allocation5 + $0x2b8] sm:$0xff]
          %v907 = vld [vmem:[#allocation5 + $0x2c0] sm:$0xff]
          %v908 = vld [vmem:[#allocation5 + $0x2c8] sm:$0xff]
          %v909 = vld [vmem:[#allocation5 + $0x2d0] sm:$0xff]
          %v910 = vld [vmem:[#allocation5 + $0x2d8] sm:$0xff]
          %v911 = vld [vmem:[#allocation5 + $0x2e0] sm:$0xff]
          %v912 = vld [vmem:[#allocation5 + $0x2e8] sm:$0xff]
          %v913 = vld [vmem:[#allocation5 + $0x2f0] sm:$0xff]
          %v914 = vld [vmem:[#allocation5 + $0x2f8] sm:$0xff]
          %v915 = vld [vmem:[#allocation7] sm:$0xf]
          %v917 = vlaneseq
          %v918 = vshrl.u32 %v917, 7
          %v919 = vsub.s32 0, %v918
          %v920 = vrot.slane %v915, %v919
          %v921 = vlaneseq
          %v922 = vshrl.u32 %v921, 7
          %v923 = vsub.s32 1, %v922
          %v924 = vrot.slane %v915, %v923
          %v925 = vlaneseq
          %v926 = vshrl.u32 %v925, 7
          %v927 = vsub.s32 2, %v926
          %v928 = vrot.slane %v915, %v927
          %v929 = vlaneseq
          %v930 = vshrl.u32 %v929, 7
          %v931 = vsub.s32 3, %v930
          %v932 = vrot.slane %v915, %v931
          %v939 = vunpack.c.l.b16 %v817
          %v940 = vunpack.c.h.b16 %v817
          %v941 = vunpack.c.l.b16 %v818
          %v942 = vpack.c.b16 %v939, %v939
          %v943 = vpack.c.b16 %v940, %v940
          %v944 = vpack.c.b16 %v941, %v941
          %v1044 = vunpack.c.l.b16 %v819
          %v1045 = vunpack.c.h.b16 %v819
          %v1046 = vunpack.c.l.b16 %v820
          %v1047 = vunpack.c.h.b16 %v820
          %v1048 = vunpack.c.l.b16 %v821
          %v1049 = vunpack.c.h.b16 %v821
          %v1050 = vunpack.c.l.b16 %v822
          %v1051 = vunpack.c.h.b16 %v822
          %v1052 = vunpack.c.l.b16 %v823
          %v1053 = vunpack.c.h.b16 %v823
          %v1054 = vunpack.c.l.b16 %v824
          %v1055 = vunpack.c.h.b16 %v824
          %v1056 = vunpack.c.l.b16 %v825
          %v1057 = vunpack.c.h.b16 %v825
          %v1058 = vunpack.c.l.b16 %v826
          %v1059 = vunpack.c.h.b16 %v826
          %v1060 = vunpack.c.l.b16 %v827
          %v1061 = vunpack.c.h.b16 %v827
          %v1062 = vunpack.c.l.b16 %v828
          %v1063 = vunpack.c.h.b16 %v828
          %v1064 = vunpack.c.l.b16 %v829
          %v1065 = vunpack.c.h.b16 %v829
          %v1066 = vunpack.c.l.b16 %v830
          %v1067 = vunpack.c.h.b16 %v830
          %v1068 = vunpack.c.l.b16 %v831
          %v1069 = vunpack.c.h.b16 %v831
          %v1070 = vunpack.c.l.b16 %v832
          %v1071 = vunpack.c.h.b16 %v832
          %v1072 = vunpack.c.l.b16 %v833
          %v1073 = vunpack.c.h.b16 %v833
          %v1074 = vunpack.c.l.b16 %v834
          %v1075 = vunpack.c.h.b16 %v834
          %v1076 = vunpack.c.l.b16 %v835
          %v1077 = vunpack.c.h.b16 %v835
          %v1078 = vunpack.c.l.b16 %v836
          %v1079 = vunpack.c.h.b16 %v836
          %v1080 = vunpack.c.l.b16 %v837
          %v1081 = vunpack.c.h.b16 %v837
          %v1082 = vunpack.c.l.b16 %v838
          %v1083 = vunpack.c.h.b16 %v838
          %v1084 = vunpack.c.l.b16 %v839
          %v1085 = vunpack.c.h.b16 %v839
          %v1086 = vunpack.c.l.b16 %v840
          %v1087 = vunpack.c.h.b16 %v840
          %v1088 = vunpack.c.l.b16 %v841
          %v1089 = vunpack.c.h.b16 %v841
          %v1090 = vunpack.c.l.b16 %v842
          %v1091 = vunpack.c.h.b16 %v842
          %v1092 = vunpack.c.l.b16 %v843
          %v1093 = vunpack.c.h.b16 %v843
          %v1094 = vunpack.c.l.b16 %v844
          %v1095 = vunpack.c.h.b16 %v844
          %v1096 = vunpack.c.l.b16 %v845
          %v1097 = vunpack.c.h.b16 %v845
          %v1098 = vunpack.c.l.b16 %v846
          %v1099 = vunpack.c.h.b16 %v846
          %v1100 = vunpack.c.l.b16 %v847
          %v1101 = vunpack.c.h.b16 %v847
          %v1102 = vunpack.c.l.b16 %v848
          %v1103 = vunpack.c.h.b16 %v848
          %v1104 = vunpack.c.l.b16 %v849
          %v1105 = vunpack.c.h.b16 %v849
          %v1106 = vunpack.c.l.b16 %v850
          %v1107 = vunpack.c.h.b16 %v850
          %v1108 = vunpack.c.l.b16 %v851
          %v1109 = vunpack.c.h.b16 %v851
          %v1110 = vunpack.c.l.b16 %v852
          %v1111 = vunpack.c.h.b16 %v852
          %v1112 = vunpack.c.l.b16 %v853
          %v1113 = vunpack.c.h.b16 %v853
          %v1114 = vunpack.c.l.b16 %v854
          %v1115 = vunpack.c.h.b16 %v854
          %v1116 = vunpack.c.l.b16 %v855
          %v1117 = vunpack.c.h.b16 %v855
          %v1118 = vunpack.c.l.b16 %v856
          %v1119 = vunpack.c.h.b16 %v856
          %v1120 = vunpack.c.l.b16 %v857
          %v1121 = vunpack.c.h.b16 %v857
          %v1122 = vunpack.c.l.b16 %v858
          %v1123 = vunpack.c.h.b16 %v858
          %v1124 = vunpack.c.l.b16 %v859
          %v1125 = vunpack.c.h.b16 %v859
          %v1126 = vunpack.c.l.b16 %v860
          %v1127 = vunpack.c.h.b16 %v860
          %v1128 = vunpack.c.l.b16 %v861
          %v1129 = vunpack.c.h.b16 %v861
          %v1130 = vunpack.c.l.b16 %v862
          %v1131 = vunpack.c.h.b16 %v862
          %v1132 = vunpack.c.l.b16 %v863
          %v1133 = vunpack.c.h.b16 %v863
          %v1134 = vunpack.c.l.b16 %v864
          %v1135 = vunpack.c.h.b16 %v864
          %v1136 = vunpack.c.l.b16 %v865
          %v1137 = vunpack.c.h.b16 %v865
          %v1138 = vunpack.c.l.b16 %v866
          %v1139 = vunpack.c.h.b16 %v866
          %v1140 = vunpack.c.l.b16 %v867
          %v1141 = vunpack.c.h.b16 %v867
          %v1142 = vunpack.c.l.b16 %v868
          %v1143 = vunpack.c.h.b16 %v868
          %v1144 = vunpack.c.l.b16 %v869
          %v1145 = vunpack.c.h.b16 %v869
          %v1146 = vunpack.c.l.b16 %v870
          %v1147 = vunpack.c.h.b16 %v870
          %v1148 = vunpack.c.l.b16 %v871
          %v1149 = vunpack.c.h.b16 %v871
          %v1150 = vunpack.c.l.b16 %v872
          %v1151 = vunpack.c.h.b16 %v872
          %v1152 = vunpack.c.l.b16 %v873
          %v1153 = vunpack.c.h.b16 %v873
          %v1154 = vunpack.c.l.b16 %v874
          %v1155 = vunpack.c.h.b16 %v874
          %v1156 = vunpack.c.l.b16 %v875
          %v1157 = vunpack.c.h.b16 %v875
          %v1158 = vunpack.c.l.b16 %v876
          %v1159 = vunpack.c.h.b16 %v876
          %v1160 = vunpack.c.l.b16 %v877
          %v1161 = vunpack.c.h.b16 %v877
          %v1162 = vunpack.c.l.b16 %v878
          %v1163 = vunpack.c.h.b16 %v878
          %v1164 = vunpack.c.l.b16 %v879
          %v1165 = vunpack.c.h.b16 %v879
          %v1166 = vunpack.c.l.b16 %v880
          %v1167 = vunpack.c.h.b16 %v880
          %v1168 = vunpack.c.l.b16 %v881
          %v1169 = vunpack.c.h.b16 %v881
          %v1170 = vunpack.c.l.b16 %v882
          %v1171 = vunpack.c.h.b16 %v882
          %v1172 = vunpack.c.l.b16 %v883
          %v1173 = vunpack.c.h.b16 %v883
          %v1174 = vunpack.c.l.b16 %v884
          %v1175 = vunpack.c.h.b16 %v884
          %v1176 = vunpack.c.l.b16 %v885
          %v1177 = vunpack.c.h.b16 %v885
          %v1178 = vunpack.c.l.b16 %v886
          %v1179 = vunpack.c.h.b16 %v886
          %v1180 = vunpack.c.l.b16 %v887
          %v1181 = vunpack.c.h.b16 %v887
          %v1182 = vunpack.c.l.b16 %v888
          %v1183 = vunpack.c.h.b16 %v888
          %v1184 = vunpack.c.l.b16 %v889
          %v1185 = vunpack.c.h.b16 %v889
          %v1186 = vunpack.c.l.b16 %v890
          %v1187 = vunpack.c.h.b16 %v890
          %v1188 = vunpack.c.l.b16 %v891
          %v1189 = vunpack.c.h.b16 %v891
          %v1190 = vunpack.c.l.b16 %v892
          %v1191 = vunpack.c.h.b16 %v892
          %v1192 = vunpack.c.l.b16 %v893
          %v1193 = vunpack.c.h.b16 %v893
          %v1194 = vunpack.c.l.b16 %v894
          %v1195 = vunpack.c.h.b16 %v894
          %v1196 = vunpack.c.l.b16 %v895
          %v1197 = vunpack.c.h.b16 %v895
          %v1198 = vunpack.c.l.b16 %v896
          %v1199 = vunpack.c.h.b16 %v896
          %v1200 = vunpack.c.l.b16 %v897
          %v1201 = vunpack.c.h.b16 %v897
          %v1202 = vunpack.c.l.b16 %v898
          %v1203 = vunpack.c.h.b16 %v898
          %v1204 = vunpack.c.l.b16 %v899
          %v1205 = vunpack.c.h.b16 %v899
          %v1206 = vunpack.c.l.b16 %v900
          %v1207 = vunpack.c.h.b16 %v900
          %v1208 = vunpack.c.l.b16 %v901
          %v1209 = vunpack.c.h.b16 %v901
          %v1210 = vunpack.c.l.b16 %v902
          %v1211 = vunpack.c.h.b16 %v902
          %v1212 = vunpack.c.l.b16 %v903
          %v1213 = vunpack.c.h.b16 %v903
          %v1214 = vunpack.c.l.b16 %v904
          %v1215 = vunpack.c.h.b16 %v904
          %v1216 = vunpack.c.l.b16 %v905
          %v1217 = vunpack.c.h.b16 %v905
          %v1218 = vunpack.c.l.b16 %v906
          %v1219 = vunpack.c.h.b16 %v906
          %v1220 = vunpack.c.l.b16 %v907
          %v1221 = vunpack.c.h.b16 %v907
          %v1222 = vunpack.c.l.b16 %v908
          %v1223 = vunpack.c.h.b16 %v908
          %v1224 = vunpack.c.l.b16 %v909
          %v1225 = vunpack.c.h.b16 %v909
          %v1226 = vunpack.c.l.b16 %v910
          %v1227 = vunpack.c.h.b16 %v910
          %v1228 = vunpack.c.l.b16 %v911
          %v1229 = vunpack.c.h.b16 %v911
          %v1230 = vunpack.c.l.b16 %v912
          %v1231 = vunpack.c.h.b16 %v912
          %v1232 = vunpack.c.l.b16 %v913
          %v1233 = vunpack.c.h.b16 %v913
          %v1234 = vunpack.c.l.b16 %v914
          %v1235 = vunpack.c.h.b16 %v914
          %v1236 = vpack.c.b16 %v1048, %v1044
          %v1237 = vpack.c.b16 %v1049, %v1045
          %v1238 = vpack.c.b16 %v1050, %v1046
          %v1239 = vpack.c.b16 %v1051, %v1047
          %v1240 = vpack.c.b16 %v1056, %v1052
          %v1241 = vpack.c.b16 %v1057, %v1053
          %v1242 = vpack.c.b16 %v1058, %v1054
          %v1243 = vpack.c.b16 %v1059, %v1055
          %v1244 = vpack.c.b16 %v1064, %v1060
          %v1245 = vpack.c.b16 %v1065, %v1061
          %v1246 = vpack.c.b16 %v1066, %v1062
          %v1247 = vpack.c.b16 %v1067, %v1063
          %v1248 = vpack.c.b16 %v1072, %v1068
          %v1249 = vpack.c.b16 %v1073, %v1069
          %v1250 = vpack.c.b16 %v1074, %v1070
          %v1251 = vpack.c.b16 %v1075, %v1071
          %v1252 = vpack.c.b16 %v1080, %v1076
          %v1253 = vpack.c.b16 %v1081, %v1077
          %v1254 = vpack.c.b16 %v1082, %v1078
          %v1255 = vpack.c.b16 %v1083, %v1079
          %v1256 = vpack.c.b16 %v1088, %v1084
          %v1257 = vpack.c.b16 %v1089, %v1085
          %v1258 = vpack.c.b16 %v1090, %v1086
          %v1259 = vpack.c.b16 %v1091, %v1087
          %v1260 = vpack.c.b16 %v1096, %v1092
          %v1261 = vpack.c.b16 %v1097, %v1093
          %v1262 = vpack.c.b16 %v1098, %v1094
          %v1263 = vpack.c.b16 %v1099, %v1095
          %v1264 = vpack.c.b16 %v1104, %v1100
          %v1265 = vpack.c.b16 %v1105, %v1101
          %v1266 = vpack.c.b16 %v1106, %v1102
          %v1267 = vpack.c.b16 %v1107, %v1103
          %v1268 = vpack.c.b16 %v1112, %v1108
          %v1269 = vpack.c.b16 %v1113, %v1109
          %v1270 = vpack.c.b16 %v1114, %v1110
          %v1271 = vpack.c.b16 %v1115, %v1111
          %v1272 = vpack.c.b16 %v1120, %v1116
          %v1273 = vpack.c.b16 %v1121, %v1117
          %v1274 = vpack.c.b16 %v1122, %v1118
          %v1275 = vpack.c.b16 %v1123, %v1119
          %v1276 = vpack.c.b16 %v1128, %v1124
          %v1277 = vpack.c.b16 %v1129, %v1125
          %v1278 = vpack.c.b16 %v1130, %v1126
          %v1279 = vpack.c.b16 %v1131, %v1127
          %v1280 = vpack.c.b16 %v1136, %v1132
          %v1281 = vpack.c.b16 %v1137, %v1133
          %v1282 = vpack.c.b16 %v1138, %v1134
          %v1283 = vpack.c.b16 %v1139, %v1135
          %v1284 = vpack.c.b16 %v1144, %v1140
          %v1285 = vpack.c.b16 %v1145, %v1141
          %v1286 = vpack.c.b16 %v1146, %v1142
          %v1287 = vpack.c.b16 %v1147, %v1143
          %v1288 = vpack.c.b16 %v1152, %v1148
          %v1289 = vpack.c.b16 %v1153, %v1149
          %v1290 = vpack.c.b16 %v1154, %v1150
          %v1291 = vpack.c.b16 %v1155, %v1151
          %v1292 = vpack.c.b16 %v1160, %v1156
          %v1293 = vpack.c.b16 %v1161, %v1157
          %v1294 = vpack.c.b16 %v1162, %v1158
          %v1295 = vpack.c.b16 %v1163, %v1159
          %v1296 = vpack.c.b16 %v1168, %v1164
          %v1297 = vpack.c.b16 %v1169, %v1165
          %v1298 = vpack.c.b16 %v1170, %v1166
          %v1299 = vpack.c.b16 %v1171, %v1167
          %v1300 = vpack.c.b16 %v1176, %v1172
          %v1301 = vpack.c.b16 %v1177, %v1173
          %v1302 = vpack.c.b16 %v1178, %v1174
          %v1303 = vpack.c.b16 %v1179, %v1175
          %v1304 = vpack.c.b16 %v1184, %v1180
          %v1305 = vpack.c.b16 %v1185, %v1181
          %v1306 = vpack.c.b16 %v1186, %v1182
          %v1307 = vpack.c.b16 %v1187, %v1183
          %v1308 = vpack.c.b16 %v1192, %v1188
          %v1309 = vpack.c.b16 %v1193, %v1189
          %v1310 = vpack.c.b16 %v1194, %v1190
          %v1311 = vpack.c.b16 %v1195, %v1191
          %v1312 = vpack.c.b16 %v1200, %v1196
          %v1313 = vpack.c.b16 %v1201, %v1197
          %v1314 = vpack.c.b16 %v1202, %v1198
          %v1315 = vpack.c.b16 %v1203, %v1199
          %v1316 = vpack.c.b16 %v1208, %v1204
          %v1317 = vpack.c.b16 %v1209, %v1205
          %v1318 = vpack.c.b16 %v1210, %v1206
          %v1319 = vpack.c.b16 %v1211, %v1207
          %v1320 = vpack.c.b16 %v1216, %v1212
          %v1321 = vpack.c.b16 %v1217, %v1213
          %v1322 = vpack.c.b16 %v1218, %v1214
          %v1323 = vpack.c.b16 %v1219, %v1215
          %v1324 = vpack.c.b16 %v1224, %v1220
          %v1325 = vpack.c.b16 %v1225, %v1221
          %v1326 = vpack.c.b16 %v1226, %v1222
          %v1327 = vpack.c.b16 %v1227, %v1223
          %v1328 = vpack.c.b16 %v1232, %v1228
          %v1329 = vpack.c.b16 %v1233, %v1229
          %v1330 = vpack.c.b16 %v1234, %v1230
          %v1331 = vpack.c.b16 %v1235, %v1231
          %1428 = vmatprep.subr.bf16.mxu0 %v1265
          %1429 = vmatpush1.bf16.msra.mxu0 %v1264
          %1430 = vmatprep.subr.bf16.mxu0 %v1261
          %1431 = vmatpush1.bf16.msra.mxu0 %v1260
          %1432 = vmatprep.subr.bf16.mxu0 %v1257
          %1433 = vmatpush1.bf16.msra.mxu0 %v1256
          %1434 = vmatprep.subr.bf16.mxu0 %v1253
          %1435 = vmatpush1.bf16.msra.mxu0 %v1252
          %1436 = vmatprep.subr.bf16.mxu0 %v1249
          %1437 = vmatpush1.bf16.msra.mxu0 %v1248
          %1438 = vmatprep.subr.bf16.mxu0 %v1245
          %1439 = vmatpush1.bf16.msra.mxu0 %v1244
          %1440 = vmatprep.subr.bf16.mxu0 %v1241
          %1441 = vmatpush1.bf16.msra.mxu0 %v1240
          %1442 = vmatprep.subr.bf16.mxu0 %v1237
          %1443 = vmatpush1.bf16.msra.mxu0 %v1236
          %1444 = vmatprep.subr.bf16.mxu0 %v1297
          %1445 = vmatpush2.bf16.msra.mxu0 %v1296
          %1446 = vmatprep.subr.bf16.mxu0 %v1293
          %1447 = vmatpush2.bf16.msra.mxu0 %v1292
          %1448 = vmatprep.subr.bf16.mxu0 %v1289
          %1449 = vmatpush2.bf16.msra.mxu0 %v1288
          %1450 = vmatprep.subr.bf16.mxu0 %v1285
          %1451 = vmatpush2.bf16.msra.mxu0 %v1284
          %1452 = vmatprep.subr.bf16.mxu0 %v1281
          %1453 = vmatpush2.bf16.msra.mxu0 %v1280
          %1454 = vmatprep.subr.bf16.mxu0 %v1277
          %1455 = vmatpush2.bf16.msra.mxu0 %v1276
          %1456 = vmatprep.subr.bf16.mxu0 %v1273
          %1457 = vmatpush2.bf16.msra.mxu0 %v1272
          %1458 = vmatprep.subr.bf16.mxu0 %v1269
          %1459 = vmatpush2.bf16.msra.mxu0 %v1268
          %1460 = vmatprep.mubr.bf16.mxu0 %v943
          %1461 = vmatmul.mubr.bf16.gmra.mxu0 %v942
          %v1462 = vpop.f32.mrf.mxu0
          %v1463 = vadd.f32 %v920, %v1462
          %v1464 = vpop.f32.mrf.mxu0
          %v1465 = vadd.f32 %v924, %v1464
          %v1466 = vpop.f32.mrf.mxu0
          %v1467 = vpop.f32.mrf.mxu0
          %1468 = vdwg.mxu0
          %1469 = vmatprep.subr.bf16.mxu0 %v1329
          %1470 = vmatpush1.bf16.msra.mxu0 %v1328
          %1471 = vmatprep.subr.bf16.mxu0 %v1325
          %1472 = vmatpush1.bf16.msra.mxu0 %v1324
          %1473 = vmatprep.subr.bf16.mxu0 %v1321
          %1474 = vmatpush1.bf16.msra.mxu0 %v1320
          %1475 = vmatprep.subr.bf16.mxu0 %v1317
          %1476 = vmatpush1.bf16.msra.mxu0 %v1316
          %1477 = vmatprep.subr.bf16.mxu0 %v1313
          %1478 = vmatpush1.bf16.msra.mxu0 %v1312
          %1479 = vmatprep.subr.bf16.mxu0 %v1309
          %1480 = vmatpush1.bf16.msra.mxu0 %v1308
          %1481 = vmatprep.subr.bf16.mxu0 %v1305
          %1482 = vmatpush1.bf16.msra.mxu0 %v1304
          %1483 = vmatprep.subr.bf16.mxu0 %v1301
          %1484 = vmatpush1.bf16.msra.mxu0 %v1300
          %1485 = vmatprep.subr.bf16.mxu0 0
          %1486 = vmatpush2.bf16.msra.mxu0 0
          %1487 = vmatprep.subr.bf16.mxu0 0
          %1488 = vmatpush2.bf16.msra.mxu0 0
          %1489 = vmatprep.subr.bf16.mxu0 0
          %1490 = vmatpush2.bf16.msra.mxu0 0
          %1491 = vmatprep.subr.bf16.mxu0 0
          %1492 = vmatpush2.bf16.msra.mxu0 0
          %1493 = vmatprep.subr.bf16.mxu0 0
          %1494 = vmatpush2.bf16.msra.mxu0 0
          %1495 = vmatprep.subr.bf16.mxu0 0
          %1496 = vmatpush2.bf16.msra.mxu0 0
          %1497 = vmatprep.subr.bf16.mxu0 0
          %1498 = vmatpush2.bf16.msra.mxu0 0
          %1499 = vmatprep.subr.bf16.mxu0 0
          %1500 = vmatpush2.bf16.msra.mxu0 0
          %1501 = vmatprep.mubr.bf16.mxu0 0
          %1502 = vmatmul.mubr.bf16.gmra.mxu0 %v944
          %v1503 = vpop.f32.mrf.mxu0
          %v1504 = vadd.f32 %v1463, %v1503
          %v1505 = vpop.f32.mrf.mxu0
          %v1506 = vadd.f32 %v1465, %v1505
          %v1507 = vpop.f32.mrf.mxu0
          %v1508 = vpop.f32.mrf.mxu0
          %1509 = vdwg.mxu0
          %1510 = vmatprep.subr.bf16.mxu0 %v1267
          %1511 = vmatpush1.bf16.msra.mxu0 %v1266
          %1512 = vmatprep.subr.bf16.mxu0 %v1263
          %1513 = vmatpush1.bf16.msra.mxu0 %v1262
          %1514 = vmatprep.subr.bf16.mxu0 %v1259
          %1515 = vmatpush1.bf16.msra.mxu0 %v1258
          %1516 = vmatprep.subr.bf16.mxu0 %v1255
          %1517 = vmatpush1.bf16.msra.mxu0 %v1254
          %1518 = vmatprep.subr.bf16.mxu0 %v1251
          %1519 = vmatpush1.bf16.msra.mxu0 %v1250
          %1520 = vmatprep.subr.bf16.mxu0 %v1247
          %1521 = vmatpush1.bf16.msra.mxu0 %v1246
          %1522 = vmatprep.subr.bf16.mxu0 %v1243
          %1523 = vmatpush1.bf16.msra.mxu0 %v1242
          %1524 = vmatprep.subr.bf16.mxu0 %v1239
          %1525 = vmatpush1.bf16.msra.mxu0 %v1238
          %1526 = vmatprep.subr.bf16.mxu0 %v1299
          %1527 = vmatpush2.bf16.msra.mxu0 %v1298
          %1528 = vmatprep.subr.bf16.mxu0 %v1295
          %1529 = vmatpush2.bf16.msra.mxu0 %v1294
          %1530 = vmatprep.subr.bf16.mxu0 %v1291
          %1531 = vmatpush2.bf16.msra.mxu0 %v1290
          %1532 = vmatprep.subr.bf16.mxu0 %v1287
          %1533 = vmatpush2.bf16.msra.mxu0 %v1286
          %1534 = vmatprep.subr.bf16.mxu0 %v1283
          %1535 = vmatpush2.bf16.msra.mxu0 %v1282
          %1536 = vmatprep.subr.bf16.mxu0 %v1279
          %1537 = vmatpush2.bf16.msra.mxu0 %v1278
          %1538 = vmatprep.subr.bf16.mxu0 %v1275
          %1539 = vmatpush2.bf16.msra.mxu0 %v1274
          %1540 = vmatprep.subr.bf16.mxu0 %v1271
          %1541 = vmatpush2.bf16.msra.mxu0 %v1270
          %1542 = vmatprep.mubr.bf16.mxu0 %v943
          %1543 = vmatmul.mubr.bf16.gmra.mxu0 %v942
          %v1544 = vpop.f32.mrf.mxu0
          %v1545 = vadd.f32 %v928, %v1544
          %v1546 = vpop.f32.mrf.mxu0
          %v1547 = vadd.f32 %v932, %v1546
          %v1548 = vpop.f32.mrf.mxu0
          %v1549 = vpop.f32.mrf.mxu0
          %1550 = vdwg.mxu0
          %1551 = vmatprep.subr.bf16.mxu0 %v1331
          %1552 = vmatpush1.bf16.msra.mxu0 %v1330
          %1553 = vmatprep.subr.bf16.mxu0 %v1327
          %1554 = vmatpush1.bf16.msra.mxu0 %v1326
          %1555 = vmatprep.subr.bf16.mxu0 %v1323
          %1556 = vmatpush1.bf16.msra.mxu0 %v1322
          %1557 = vmatprep.subr.bf16.mxu0 %v1319
          %1558 = vmatpush1.bf16.msra.mxu0 %v1318
          %1559 = vmatprep.subr.bf16.mxu0 %v1315
          %1560 = vmatpush1.bf16.msra.mxu0 %v1314
          %1561 = vmatprep.subr.bf16.mxu0 %v1311
          %1562 = vmatpush1.bf16.msra.mxu0 %v1310
          %1563 = vmatprep.subr.bf16.mxu0 %v1307
          %1564 = vmatpush1.bf16.msra.mxu0 %v1306
          %1565 = vmatprep.subr.bf16.mxu0 %v1303
          %1566 = vmatpush1.bf16.msra.mxu0 %v1302
          %1567 = vmatprep.subr.bf16.mxu0 0
          %1568 = vmatpush2.bf16.msra.mxu0 0
          %1569 = vmatprep.subr.bf16.mxu0 0
          %1570 = vmatpush2.bf16.msra.mxu0 0
          %1571 = vmatprep.subr.bf16.mxu0 0
          %1572 = vmatpush2.bf16.msra.mxu0 0
          %1573 = vmatprep.subr.bf16.mxu0 0
          %1574 = vmatpush2.bf16.msra.mxu0 0
          %1575 = vmatprep.subr.bf16.mxu0 0
          %1576 = vmatpush2.bf16.msra.mxu0 0
          %1577 = vmatprep.subr.bf16.mxu0 0
          %1578 = vmatpush2.bf16.msra.mxu0 0
          %1579 = vmatprep.subr.bf16.mxu0 0
          %1580 = vmatpush2.bf16.msra.mxu0 0
          %1581 = vmatprep.subr.bf16.mxu0 0
          %1582 = vmatpush2.bf16.msra.mxu0 0
          %1583 = vmatprep.mubr.bf16.mxu0 0
          %1584 = vmatmul.mubr.bf16.gmra.mxu0 %v944
          %v1585 = vpop.f32.mrf.mxu0
          %v1586 = vadd.f32 %v1545, %v1585
          %v1587 = vpop.f32.mrf.mxu0
          %v1588 = vadd.f32 %v1547, %v1587
          %v1589 = vpop.f32.mrf.mxu0
          %v1590 = vpop.f32.mrf.mxu0
          %1591 = vdwg.mxu0
          %v1592 = vld [vmem:[#allocation9] sm:$0xff]
          %v1593 = vld [vmem:[#allocation10] sm:$0x3]
          %v1594 = vld [vmem:[#allocation10 + $0x8] sm:$0x3]
          %v1595 = vld [vmem:[#allocation10 + $0x10] sm:$0x3]
          %v1596 = vld [vmem:[#allocation10 + $0x18] sm:$0x3]
          %v1601 = vcombine.low %v1593, %v1594
          %v1602 = vcombine.low %v1595, %v1596
          %v1604 = vunpack.c.l.s4 1983009808
          %v1605 = vunpack.c.0.s8 %v1604
          %v1606 = vlaneseq
          %v1607 = vshrl.u32 %v1606, 7
          %v1608 = vsub.s32 %v1605, %v1607
          %v1609 = vrot.slane %v1601, %v1608
          %v1611 = vunpack.c.l.s4 1983009808
          %v1612 = vunpack.c.0.s8 %v1611
          %v1613 = vlaneseq
          %v1614 = vshrl.u32 %v1613, 7
          %v1615 = vsub.s32 %v1612, %v1614
          %v1616 = vrot.slane %v1602, %v1615
          %v1617 = vcombine.low %v1609, %v1616
          %v1619 = vadd.f32 %v1592, %v1617
          %v1620 = vld [vmem:[#allocation10] sm:$0xfc]
          %v1621 = vld [vmem:[#allocation10 + $0x8] sm:$0xfc]
          %v1622 = vld [vmem:[#allocation10 + $0x10] sm:$0xfc]
          %v1623 = vld [vmem:[#allocation10 + $0x18] sm:$0xfc]
          %v1624 = vld [vmem:[#allocation10 + $0x20] sm:$0x3]
          %v1625 = vld [vmem:[#allocation10 + $0x28] sm:$0x3]
          %v1626 = vld [vmem:[#allocation10 + $0x30] sm:$0x3]
          %v1627 = vld [vmem:[#allocation10 + $0x38] sm:$0x3]
          %vm1636 = vcmask 1045504
          %v1637 = vrot.slane %v1620, 2
          %v1638 = vrot.slane %v1624, 2
          %v1639 = vsel %vm1636, %v1637, %v1638
          %v1640 = vrot.slane %v1621, 2
          %v1641 = vrot.slane %v1625, 2
          %v1642 = vsel %vm1636, %v1640, %v1641
          %v1643 = vrot.slane %v1622, 2
          %v1644 = vrot.slane %v1626, 2
          %v1645 = vsel %vm1636, %v1643, %v1644
          %v1646 = vrot.slane %v1623, 2
          %v1647 = vrot.slane %v1627, 2
          %v1648 = vsel %vm1636, %v1646, %v1647
          %v1653 = vadd.f32 %v1504, %v1639
          %v1654 = vadd.f32 %v1506, %v1642
          %v1655 = vadd.f32 %v1586, %v1645
          %v1656 = vadd.f32 %v1588, %v1648
          %v1658 = vcombine.high %v1619, %v1619
          %v1660 = vunpack.c.l.s4 1983009808
          %v1661 = vunpack.c.0.s8 %v1660
          %v1662 = vlaneseq
          %v1663 = vshrl.u32 %v1662, 7
          %v1664 = vsub.s32 %v1661, %v1663
          %v1665 = vrot.slane %v1619, %v1664
          %v1667 = vunpack.c.l.s4 1983009808
          %v1668 = vunpack.c.0.s8 %v1667
          %v1669 = vlaneseq
          %v1670 = vshrl.u32 %v1669, 7
          %v1671 = vsub.s32 %v1668, %v1670
          %v1672 = vrot.slane %v1658, %v1671
          %v1673 = vcombine.high %v1665, %v1665
          %v1674 = vcombine.high %v1672, %v1672
          %v1683 = vrot.slane %v1653, 6
          %v1684 = vrot.slane %v1654, 6
          %v1685 = vrot.slane %v1655, 6
          %v1686 = vrot.slane %v1656, 6
          %vm1691 = vcmask 1041408
          %v1692 = vsel %vm1691, %v1665, %v1683
          %v1693 = vsel %vm1691, %v1673, %v1684
          %v1694 = vsel %vm1691, %v1672, %v1685
          %v1695 = vsel %vm1691, %v1674, %v1686
          %v1696 = vsel %vm1691, %v1683, 0.0
          %v1697 = vsel %vm1691, %v1684, 0.0
          %v1698 = vsel %vm1691, %v1685, 0.0
          %v1699 = vsel %vm1691, %v1686, 0.0
          %1700 = vst [vmem:[#allocation2] sm:$0xff] %v1692
          %1701 = vst [vmem:[#allocation2 + $0x8] sm:$0xff] %v1693
          %1702 = vst [vmem:[#allocation2 + $0x10] sm:$0xff] %v1694
          %1703 = vst [vmem:[#allocation2 + $0x18] sm:$0xff] %v1695
          %1704 = vst [vmem:[#allocation2 + $0x20] sm:$0xff] %v1696
          %1705 = vst [vmem:[#allocation2 + $0x28] sm:$0xff] %v1697
          %1706 = vst [vmem:[#allocation2 + $0x30] sm:$0xff] %v1698
          %1707 = vst [vmem:[#allocation2 + $0x38] sm:$0xff] %v1699
        $region132: #{style_encoder_forward.1} parent=75 // pred_fallthru
          _
        %v1708 = vld [vmem:[#allocation2] sm:$0xff]
        %v1709 = vld [vmem:[#allocation2 + $0x8] sm:$0xff]
        %v1710 = vld [vmem:[#allocation2 + $0x10] sm:$0xff]
        %v1711 = vld [vmem:[#allocation2 + $0x18] sm:$0xff]
        %v1712 = vld [vmem:[#allocation2 + $0x20] sm:$0xff]
        %v1713 = vld [vmem:[#allocation2 + $0x28] sm:$0xff]
        %v1714 = vld [vmem:[#allocation2 + $0x30] sm:$0xff]
        %v1715 = vld [vmem:[#allocation2 + $0x38] sm:$0xff]
        %v1716 = vpack.c.bf16 %v1712, %v1708
        %v1717 = vpack.c.bf16 %v1713, %v1709
        %v1718 = vpack.c.bf16 %v1714, %v1710
        %v1719 = vpack.c.bf16 %v1715, %v1711
        %v1720 = vld [vmem:[%s706] sm:$0xff]
        %v1721 = vld [vmem:[%s706 + $0x8] sm:$0xff]
        %v1722 = vld [vmem:[%s706 + $0x10] sm:$0xff]
        %v1723 = vld [vmem:[%s706 + $0x18] sm:$0xff]
        %v1724 = vld [vmem:[%s706 + $0x20] sm:$0xff]
        %v1725 = vld [vmem:[%s706 + $0x28] sm:$0xff]
        %v1726 = vld [vmem:[%s706 + $0x30] sm:$0xff]
        %v1727 = vld [vmem:[%s706 + $0x38] sm:$0xff]
        %v1728 = vld [vmem:[%s706 + $0x40] sm:$0xff]
        %v1729 = vld [vmem:[%s706 + $0x48] sm:$0xff]
        %v1730 = vld [vmem:[%s706 + $0x50] sm:$0xff]
        %v1731 = vld [vmem:[%s706 + $0x58] sm:$0xff]
        %s1732 = sld [smem:[#allocation4 + %s40]]
        %v1733 = vlaneseq
        %v1734 = vand.u32 %v1733, 127
        %vm1735 = vcmp.lt.s32.totalorder %v1734, 2
        %vm1736 = vcmp.lt.s32.totalorder %v1734, 10
        %v1737 = vsub.s32 %v1734, 2
        %v1738 = vstv %s1732
        %vm1739 = vcmp.lt.s32.totalorder %v1737, %v1738
        %vm1740 = vmand %vm1736, %vm1739
        %vm1741 = vmor %vm1735, %vm1740
        %v1742 = vsel %vm1741, 0.0, -1e+09
        %v1743 = vld [vmem:[%s670] sm:$0xff]
        %v1744 = vld [vmem:[%s670 + $0x8] sm:$0xff]
        %v1745 = vld [vmem:[%s670 + $0x10] sm:$0xff]
        %v1746 = vld [vmem:[%s670 + $0x18] sm:$0xff]
        %v1747 = vld [vmem:[%s670 + $0x20] sm:$0xff]
        %v1748 = vld [vmem:[%s670 + $0x28] sm:$0xff]
        %v1749 = vld [vmem:[%s670 + $0x30] sm:$0xff]
        %v1750 = vld [vmem:[%s670 + $0x38] sm:$0xff]
        %v1751 = vld [vmem:[%s670 + $0x40] sm:$0xff]
        %v1752 = vld [vmem:[%s670 + $0x48] sm:$0xff]
        %v1753 = vld [vmem:[%s670 + $0x50] sm:$0xff]
        %v1754 = vld [vmem:[%s670 + $0x58] sm:$0xff]
        %v1755 = vld [vmem:[%s670 + $0x60] sm:$0xff]
        %v1756 = vld [vmem:[%s670 + $0x68] sm:$0xff]
        %v1757 = vld [vmem:[%s670 + $0x70] sm:$0xff]
        %v1758 = vld [vmem:[%s670 + $0x78] sm:$0xff]
        %v1759 = vld [vmem:[%s670 + $0x80] sm:$0xff]
        %v1760 = vld [vmem:[%s670 + $0x88] sm:$0xff]
        %v1761 = vld [vmem:[%s670 + $0x90] sm:$0xff]
        %v1762 = vld [vmem:[%s670 + $0x98] sm:$0xff]
        %v1763 = vld [vmem:[%s670 + $0xa0] sm:$0xff]
        %v1764 = vld [vmem:[%s670 + $0xa8] sm:$0xff]
        %v1765 = vld [vmem:[%s670 + $0xb0] sm:$0xff]
        %v1766 = vld [vmem:[%s670 + $0xb8] sm:$0xff]
        %v1767 = vld [vmem:[%s670 + $0xc0] sm:$0xff]
        %v1768 = vld [vmem:[%s670 + $0xc8] sm:$0xff]
        %v1769 = vld [vmem:[%s670 + $0xd0] sm:$0xff]
        %v1770 = vld [vmem:[%s670 + $0xd8] sm:$0xff]
        %v1771 = vld [vmem:[%s670 + $0xe0] sm:$0xff]
        %v1772 = vld [vmem:[%s670 + $0xe8] sm:$0xff]
        %v1773 = vld [vmem:[%s670 + $0xf0] sm:$0xff]
        %v1774 = vld [vmem:[%s670 + $0xf8] sm:$0xff]
        %v1775 = vld [vmem:[%s670 + $0x100] sm:$0xff]
        %v1776 = vld [vmem:[%s670 + $0x108] sm:$0xff]
        %v1777 = vld [vmem:[%s670 + $0x110] sm:$0xff]
        %v1778 = vld [vmem:[%s670 + $0x118] sm:$0xff]
        %v1779 = vld [vmem:[%s670 + $0x120] sm:$0xff]
        %v1780 = vld [vmem:[%s670 + $0x128] sm:$0xff]
        %v1781 = vld [vmem:[%s670 + $0x130] sm:$0xff]
        %v1782 = vld [vmem:[%s670 + $0x138] sm:$0xff]
        %v1783 = vld [vmem:[%s670 + $0x140] sm:$0xff]
        %v1784 = vld [vmem:[%s670 + $0x148] sm:$0xff]
        %v1785 = vld [vmem:[%s670 + $0x150] sm:$0xff]
        %v1786 = vld [vmem:[%s670 + $0x158] sm:$0xff]
        %v1787 = vld [vmem:[%s670 + $0x160] sm:$0xff]
        %v1788 = vld [vmem:[%s670 + $0x168] sm:$0xff]
        %v1789 = vld [vmem:[%s670 + $0x170] sm:$0xff]
        %v1790 = vld [vmem:[%s670 + $0x178] sm:$0xff]
        %v1791 = vld [vmem:[%s670 + $0x180] sm:$0xff]
        %v1792 = vld [vmem:[%s670 + $0x188] sm:$0xff]
        %v1793 = vld [vmem:[%s670 + $0x190] sm:$0xff]
        %v1794 = vld [vmem:[%s670 + $0x198] sm:$0xff]
        %v1795 = vld [vmem:[%s670 + $0x1a0] sm:$0xff]
        %v1796 = vld [vmem:[%s670 + $0x1a8] sm:$0xff]
        %v1797 = vld [vmem:[%s670 + $0x1b0] sm:$0xff]
        %v1798 = vld [vmem:[%s670 + $0x1b8] sm:$0xff]
        %v1799 = vld [vmem:[%s670 + $0x1c0] sm:$0xff]
        %v1800 = vld [vmem:[%s670 + $0x1c8] sm:$0xff]
        %v1801 = vld [vmem:[%s670 + $0x1d0] sm:$0xff]
        %v1802 = vld [vmem:[%s670 + $0x1d8] sm:$0xff]
        %v1803 = vld [vmem:[%s670 + $0x1e0] sm:$0xff]
        %v1804 = vld [vmem:[%s670 + $0x1e8] sm:$0xff]
        %v1805 = vld [vmem:[%s670 + $0x1f0] sm:$0xff]
        %v1806 = vld [vmem:[%s670 + $0x1f8] sm:$0xff]
        %v1807 = vld [vmem:[%s670 + $0x200] sm:$0xff]
        %v1808 = vld [vmem:[%s670 + $0x208] sm:$0xff]
        %v1809 = vld [vmem:[%s670 + $0x210] sm:$0xff]
        %v1810 = vld [vmem:[%s670 + $0x218] sm:$0xff]
        %v1811 = vld [vmem:[%s670 + $0x220] sm:$0xff]
        %v1812 = vld [vmem:[%s670 + $0x228] sm:$0xff]
        %v1813 = vld [vmem:[%s670 + $0x230] sm:$0xff]
        %v1814 = vld [vmem:[%s670 + $0x238] sm:$0xff]
        %v1815 = vld [vmem:[%s670 + $0x240] sm:$0xff]
        %v1816 = vld [vmem:[%s670 + $0x248] sm:$0xff]
        %v1817 = vld [vmem:[%s670 + $0x250] sm:$0xff]
        %v1818 = vld [vmem:[%s670 + $0x258] sm:$0xff]
        %v1819 = vld [vmem:[%s670 + $0x260] sm:$0xff]
        %v1820 = vld [vmem:[%s670 + $0x268] sm:$0xff]
        %v1821 = vld [vmem:[%s670 + $0x270] sm:$0xff]
        %v1822 = vld [vmem:[%s670 + $0x278] sm:$0xff]
        %v1823 = vld [vmem:[%s670 + $0x280] sm:$0xff]
        %v1824 = vld [vmem:[%s670 + $0x288] sm:$0xff]
        %v1825 = vld [vmem:[%s670 + $0x290] sm:$0xff]
        %v1826 = vld [vmem:[%s670 + $0x298] sm:$0xff]
        %v1827 = vld [vmem:[%s670 + $0x2a0] sm:$0xff]
        %v1828 = vld [vmem:[%s670 + $0x2a8] sm:$0xff]
        %v1829 = vld [vmem:[%s670 + $0x2b0] sm:$0xff]
        %v1830 = vld [vmem:[%s670 + $0x2b8] sm:$0xff]
        %v1831 = vld [vmem:[%s670 + $0x2c0] sm:$0xff]
        %v1832 = vld [vmem:[%s670 + $0x2c8] sm:$0xff]
        %v1833 = vld [vmem:[%s670 + $0x2d0] sm:$0xff]
        %v1834 = vld [vmem:[%s670 + $0x2d8] sm:$0xff]
        %v1835 = vld [vmem:[%s670 + $0x2e0] sm:$0xff]
        %v1836 = vld [vmem:[%s670 + $0x2e8] sm:$0xff]
        %v1837 = vld [vmem:[%s670 + $0x2f0] sm:$0xff]
        %v1838 = vld [vmem:[%s670 + $0x2f8] sm:$0xff]
        %v1839 = vld [vmem:[%s670 + $0x300] sm:$0xff]
        %v1840 = vld [vmem:[%s670 + $0x308] sm:$0xff]
        %v1841 = vld [vmem:[%s670 + $0x310] sm:$0xff]
        %v1842 = vld [vmem:[%s670 + $0x318] sm:$0xff]
        %v1843 = vld [vmem:[%s670 + $0x320] sm:$0xff]
        %v1844 = vld [vmem:[%s670 + $0x328] sm:$0xff]
        %v1845 = vld [vmem:[%s670 + $0x330] sm:$0xff]
        %v1846 = vld [vmem:[%s670 + $0x338] sm:$0xff]
        %v1847 = vld [vmem:[%s670 + $0x340] sm:$0xff]
        %v1848 = vld [vmem:[%s670 + $0x348] sm:$0xff]
        %v1849 = vld [vmem:[%s670 + $0x350] sm:$0xff]
        %v1850 = vld [vmem:[%s670 + $0x358] sm:$0xff]
        %v1851 = vld [vmem:[%s670 + $0x360] sm:$0xff]
        %v1852 = vld [vmem:[%s670 + $0x368] sm:$0xff]
        %v1853 = vld [vmem:[%s670 + $0x370] sm:$0xff]
        %v1854 = vld [vmem:[%s670 + $0x378] sm:$0xff]
        %v1855 = vld [vmem:[%s670 + $0x380] sm:$0xff]
        %v1856 = vld [vmem:[%s670 + $0x388] sm:$0xff]
        %v1857 = vld [vmem:[%s670 + $0x390] sm:$0xff]
        %v1858 = vld [vmem:[%s670 + $0x398] sm:$0xff]
        %v1859 = vld [vmem:[%s670 + $0x3a0] sm:$0xff]
        %v1860 = vld [vmem:[%s670 + $0x3a8] sm:$0xff]
        %v1861 = vld [vmem:[%s670 + $0x3b0] sm:$0xff]
        %v1862 = vld [vmem:[%s670 + $0x3b8] sm:$0xff]
        %v1863 = vld [vmem:[%s670 + $0x3c0] sm:$0xff]
        %v1864 = vld [vmem:[%s670 + $0x3c8] sm:$0xff]
        %v1865 = vld [vmem:[%s670 + $0x3d0] sm:$0xff]
        %v1866 = vld [vmem:[%s670 + $0x3d8] sm:$0xff]
        %v1867 = vld [vmem:[%s670 + $0x3e0] sm:$0xff]
        %v1868 = vld [vmem:[%s670 + $0x3e8] sm:$0xff]
        %v1869 = vld [vmem:[%s670 + $0x3f0] sm:$0xff]
        %v1870 = vld [vmem:[%s670 + $0x3f8] sm:$0xff]
        %v1871 = vld [vmem:[%s670 + $0x400] sm:$0xff]
        %v1872 = vld [vmem:[%s670 + $0x408] sm:$0xff]
        %v1873 = vld [vmem:[%s670 + $0x410] sm:$0xff]
        %v1874 = vld [vmem:[%s670 + $0x418] sm:$0xff]
        %v1875 = vld [vmem:[%s670 + $0x420] sm:$0xff]
        %v1876 = vld [vmem:[%s670 + $0x428] sm:$0xff]
        %v1877 = vld [vmem:[%s670 + $0x430] sm:$0xff]
        %v1878 = vld [vmem:[%s670 + $0x438] sm:$0xff]
        %v1879 = vld [vmem:[%s670 + $0x440] sm:$0xff]
        %v1880 = vld [vmem:[%s670 + $0x448] sm:$0xff]
        %v1881 = vld [vmem:[%s670 + $0x450] sm:$0xff]
        %v1882 = vld [vmem:[%s670 + $0x458] sm:$0xff]
        %v1883 = vld [vmem:[%s670 + $0x460] sm:$0xff]
        %v1884 = vld [vmem:[%s670 + $0x468] sm:$0xff]
        %v1885 = vld [vmem:[%s670 + $0x470] sm:$0xff]
        %v1886 = vld [vmem:[%s670 + $0x478] sm:$0xff]
        %v1887 = vld [vmem:[%s670 + $0x480] sm:$0xff]
        %v1888 = vld [vmem:[%s670 + $0x488] sm:$0xff]
        %v1889 = vld [vmem:[%s670 + $0x490] sm:$0xff]
        %v1890 = vld [vmem:[%s670 + $0x498] sm:$0xff]
        %v1891 = vld [vmem:[%s670 + $0x4a0] sm:$0xff]
        %v1892 = vld [vmem:[%s670 + $0x4a8] sm:$0xff]
        %v1893 = vld [vmem:[%s670 + $0x4b0] sm:$0xff]
        %v1894 = vld [vmem:[%s670 + $0x4b8] sm:$0xff]
        %v1895 = vld [vmem:[%s670 + $0x4c0] sm:$0xff]
        %v1896 = vld [vmem:[%s670 + $0x4c8] sm:$0xff]
        %v1897 = vld [vmem:[%s670 + $0x4d0] sm:$0xff]
        %v1898 = vld [vmem:[%s670 + $0x4d8] sm:$0xff]
        %v1899 = vld [vmem:[%s670 + $0x4e0] sm:$0xff]
        %v1900 = vld [vmem:[%s670 + $0x4e8] sm:$0xff]
        %v1901 = vld [vmem:[%s670 + $0x4f0] sm:$0xff]
        %v1902 = vld [vmem:[%s670 + $0x4f8] sm:$0xff]
        %v1903 = vld [vmem:[%s670 + $0x500] sm:$0xff]
        %v1904 = vld [vmem:[%s670 + $0x508] sm:$0xff]
        %v1905 = vld [vmem:[%s670 + $0x510] sm:$0xff]
        %v1906 = vld [vmem:[%s670 + $0x518] sm:$0xff]
        %v1907 = vld [vmem:[%s670 + $0x520] sm:$0xff]
        %v1908 = vld [vmem:[%s670 + $0x528] sm:$0xff]
        %v1909 = vld [vmem:[%s670 + $0x530] sm:$0xff]
        %v1910 = vld [vmem:[%s670 + $0x538] sm:$0xff]
        %v1911 = vld [vmem:[%s670 + $0x540] sm:$0xff]
        %v1912 = vld [vmem:[%s670 + $0x548] sm:$0xff]
        %v1913 = vld [vmem:[%s670 + $0x550] sm:$0xff]
        %v1914 = vld [vmem:[%s670 + $0x558] sm:$0xff]
        %v1915 = vld [vmem:[%s670 + $0x560] sm:$0xff]
        %v1916 = vld [vmem:[%s670 + $0x568] sm:$0xff]
        %v1917 = vld [vmem:[%s670 + $0x570] sm:$0xff]
        %v1918 = vld [vmem:[%s670 + $0x578] sm:$0xff]
        %v1919 = vld [vmem:[%s670 + $0x580] sm:$0xff]
        %v1920 = vld [vmem:[%s670 + $0x588] sm:$0xff]
        %v1921 = vld [vmem:[%s670 + $0x590] sm:$0xff]
        %v1922 = vld [vmem:[%s670 + $0x598] sm:$0xff]
        %v1923 = vld [vmem:[%s670 + $0x5a0] sm:$0xff]
        %v1924 = vld [vmem:[%s670 + $0x5a8] sm:$0xff]
        %v1925 = vld [vmem:[%s670 + $0x5b0] sm:$0xff]
        %v1926 = vld [vmem:[%s670 + $0x5b8] sm:$0xff]
        %v1927 = vld [vmem:[%s670 + $0x5c0] sm:$0xff]
        %v1928 = vld [vmem:[%s670 + $0x5c8] sm:$0xff]
        %v1929 = vld [vmem:[%s670 + $0x5d0] sm:$0xff]
        %v1930 = vld [vmem:[%s670 + $0x5d8] sm:$0xff]
        %v1931 = vld [vmem:[%s670 + $0x5e0] sm:$0xff]
        %v1932 = vld [vmem:[%s670 + $0x5e8] sm:$0xff]
        %v1933 = vld [vmem:[%s670 + $0x5f0] sm:$0xff]
        %v1934 = vld [vmem:[%s670 + $0x5f8] sm:$0xff]
        %v1935 = vld [vmem:[%s670 + $0x600] sm:$0xff]
        %v1936 = vld [vmem:[%s670 + $0x608] sm:$0xff]
        %v1937 = vld [vmem:[%s670 + $0x610] sm:$0xff]
        %v1938 = vld [vmem:[%s670 + $0x618] sm:$0xff]
        %v1939 = vld [vmem:[%s670 + $0x620] sm:$0xff]
        %v1940 = vld [vmem:[%s670 + $0x628] sm:$0xff]
        %v1941 = vld [vmem:[%s670 + $0x630] sm:$0xff]
        %v1942 = vld [vmem:[%s670 + $0x638] sm:$0xff]
        %v1943 = vld [vmem:[%s670 + $0x640] sm:$0xff]
        %v1944 = vld [vmem:[%s670 + $0x648] sm:$0xff]
        %v1945 = vld [vmem:[%s670 + $0x650] sm:$0xff]
        %v1946 = vld [vmem:[%s670 + $0x658] sm:$0xff]
        %v1947 = vld [vmem:[%s670 + $0x660] sm:$0xff]
        %v1948 = vld [vmem:[%s670 + $0x668] sm:$0xff]
        %v1949 = vld [vmem:[%s670 + $0x670] sm:$0xff]
        %v1950 = vld [vmem:[%s670 + $0x678] sm:$0xff]
        %v1951 = vld [vmem:[%s670 + $0x680] sm:$0xff]
        %v1952 = vld [vmem:[%s670 + $0x688] sm:$0xff]
        %v1953 = vld [vmem:[%s670 + $0x690] sm:$0xff]
        %v1954 = vld [vmem:[%s670 + $0x698] sm:$0xff]
        %v1955 = vld [vmem:[%s670 + $0x6a0] sm:$0xff]
        %v1956 = vld [vmem:[%s670 + $0x6a8] sm:$0xff]
        %v1957 = vld [vmem:[%s670 + $0x6b0] sm:$0xff]
        %v1958 = vld [vmem:[%s670 + $0x6b8] sm:$0xff]
        %v1959 = vld [vmem:[%s670 + $0x6c0] sm:$0xff]
        %v1960 = vld [vmem:[%s670 + $0x6c8] sm:$0xff]
        %v1961 = vld [vmem:[%s670 + $0x6d0] sm:$0xff]
        %v1962 = vld [vmem:[%s670 + $0x6d8] sm:$0xff]
        %v1963 = vld [vmem:[%s670 + $0x6e0] sm:$0xff]
        %v1964 = vld [vmem:[%s670 + $0x6e8] sm:$0xff]
        %v1965 = vld [vmem:[%s670 + $0x6f0] sm:$0xff]
        %v1966 = vld [vmem:[%s670 + $0x6f8] sm:$0xff]
        %v1967 = vld [vmem:[%s670 + $0x700] sm:$0xff]
        %v1968 = vld [vmem:[%s670 + $0x708] sm:$0xff]
        %v1969 = vld [vmem:[%s670 + $0x710] sm:$0xff]
        %v1970 = vld [vmem:[%s670 + $0x718] sm:$0xff]
        %v1971 = vld [vmem:[%s670 + $0x720] sm:$0xff]
        %v1972 = vld [vmem:[%s670 + $0x728] sm:$0xff]
        %v1973 = vld [vmem:[%s670 + $0x730] sm:$0xff]
        %v1974 = vld [vmem:[%s670 + $0x738] sm:$0xff]
        %v1975 = vld [vmem:[%s670 + $0x740] sm:$0xff]
        %v1976 = vld [vmem:[%s670 + $0x748] sm:$0xff]
        %v1977 = vld [vmem:[%s670 + $0x750] sm:$0xff]
        %v1978 = vld [vmem:[%s670 + $0x758] sm:$0xff]
        %v1979 = vld [vmem:[%s670 + $0x760] sm:$0xff]
        %v1980 = vld [vmem:[%s670 + $0x768] sm:$0xff]
        %v1981 = vld [vmem:[%s670 + $0x770] sm:$0xff]
        %v1982 = vld [vmem:[%s670 + $0x778] sm:$0xff]
        %v1983 = vld [vmem:[%s670 + $0x780] sm:$0xff]
        %v1984 = vld [vmem:[%s670 + $0x788] sm:$0xff]
        %v1985 = vld [vmem:[%s670 + $0x790] sm:$0xff]
        %v1986 = vld [vmem:[%s670 + $0x798] sm:$0xff]
        %v1987 = vld [vmem:[%s670 + $0x7a0] sm:$0xff]
        %v1988 = vld [vmem:[%s670 + $0x7a8] sm:$0xff]
        %v1989 = vld [vmem:[%s670 + $0x7b0] sm:$0xff]
        %v1990 = vld [vmem:[%s670 + $0x7b8] sm:$0xff]
        %v1991 = vld [vmem:[%s670 + $0x7c0] sm:$0xff]
        %v1992 = vld [vmem:[%s670 + $0x7c8] sm:$0xff]
        %v1993 = vld [vmem:[%s670 + $0x7d0] sm:$0xff]
        %v1994 = vld [vmem:[%s670 + $0x7d8] sm:$0xff]
        %v1995 = vld [vmem:[%s670 + $0x7e0] sm:$0xff]
        %v1996 = vld [vmem:[%s670 + $0x7e8] sm:$0xff]
        %v1997 = vld [vmem:[%s670 + $0x7f0] sm:$0xff]
        %v1998 = vld [vmem:[%s670 + $0x7f8] sm:$0xff]
        %v1999 = vld [vmem:[%s670 + $0x800] sm:$0xff]
        %v2000 = vld [vmem:[%s670 + $0x808] sm:$0xff]
        %v2001 = vld [vmem:[%s670 + $0x810] sm:$0xff]
        %v2002 = vld [vmem:[%s670 + $0x818] sm:$0xff]
        %v2003 = vld [vmem:[%s670 + $0x820] sm:$0xff]
        %v2004 = vld [vmem:[%s670 + $0x828] sm:$0xff]
        %v2005 = vld [vmem:[%s670 + $0x830] sm:$0xff]
        %v2006 = vld [vmem:[%s670 + $0x838] sm:$0xff]
        %v2007 = vld [vmem:[%s670 + $0x840] sm:$0xff]
        %v2008 = vld [vmem:[%s670 + $0x848] sm:$0xff]
        %v2009 = vld [vmem:[%s670 + $0x850] sm:$0xff]
        %v2010 = vld [vmem:[%s670 + $0x858] sm:$0xff]
        %v2011 = vld [vmem:[%s670 + $0x860] sm:$0xff]
        %v2012 = vld [vmem:[%s670 + $0x868] sm:$0xff]
        %v2013 = vld [vmem:[%s670 + $0x870] sm:$0xff]
        %v2014 = vld [vmem:[%s670 + $0x878] sm:$0xff]
        %v2015 = vld [vmem:[%s670 + $0x880] sm:$0xff]
        %v2016 = vld [vmem:[%s670 + $0x888] sm:$0xff]
        %v2017 = vld [vmem:[%s670 + $0x890] sm:$0xff]
        %v2018 = vld [vmem:[%s670 + $0x898] sm:$0xff]
        %v2019 = vld [vmem:[%s670 + $0x8a0] sm:$0xff]
        %v2020 = vld [vmem:[%s670 + $0x8a8] sm:$0xff]
        %v2021 = vld [vmem:[%s670 + $0x8b0] sm:$0xff]
        %v2022 = vld [vmem:[%s670 + $0x8b8] sm:$0xff]
        %v2023 = vld [vmem:[%s670 + $0x8c0] sm:$0xff]
        %v2024 = vld [vmem:[%s670 + $0x8c8] sm:$0xff]
        %v2025 = vld [vmem:[%s670 + $0x8d0] sm:$0xff]
        %v2026 = vld [vmem:[%s670 + $0x8d8] sm:$0xff]
        %v2027 = vld [vmem:[%s670 + $0x8e0] sm:$0xff]
        %v2028 = vld [vmem:[%s670 + $0x8e8] sm:$0xff]
        %v2029 = vld [vmem:[%s670 + $0x8f0] sm:$0xff]
        %v2030 = vld [vmem:[%s670 + $0x8f8] sm:$0xff]
        %v2031 = vld [vmem:[%s670 + $0x900] sm:$0xff]
        %v2032 = vld [vmem:[%s670 + $0x908] sm:$0xff]
        %v2033 = vld [vmem:[%s670 + $0x910] sm:$0xff]
        %v2034 = vld [vmem:[%s670 + $0x918] sm:$0xff]
        %v2035 = vld [vmem:[%s670 + $0x920] sm:$0xff]
        %v2036 = vld [vmem:[%s670 + $0x928] sm:$0xff]
        %v2037 = vld [vmem:[%s670 + $0x930] sm:$0xff]
        %v2038 = vld [vmem:[%s670 + $0x938] sm:$0xff]
        %v2039 = vld [vmem:[%s670 + $0x940] sm:$0xff]
        %v2040 = vld [vmem:[%s670 + $0x948] sm:$0xff]
        %v2041 = vld [vmem:[%s670 + $0x950] sm:$0xff]
        %v2042 = vld [vmem:[%s670 + $0x958] sm:$0xff]
        %v2043 = vld [vmem:[%s670 + $0x960] sm:$0xff]
        %v2044 = vld [vmem:[%s670 + $0x968] sm:$0xff]
        %v2045 = vld [vmem:[%s670 + $0x970] sm:$0xff]
        %v2046 = vld [vmem:[%s670 + $0x978] sm:$0xff]
        %v2047 = vld [vmem:[%s670 + $0x980] sm:$0xff]
        %v2048 = vld [vmem:[%s670 + $0x988] sm:$0xff]
        %v2049 = vld [vmem:[%s670 + $0x990] sm:$0xff]
        %v2050 = vld [vmem:[%s670 + $0x998] sm:$0xff]
        %v2051 = vld [vmem:[%s670 + $0x9a0] sm:$0xff]
        %v2052 = vld [vmem:[%s670 + $0x9a8] sm:$0xff]
        %v2053 = vld [vmem:[%s670 + $0x9b0] sm:$0xff]
        %v2054 = vld [vmem:[%s670 + $0x9b8] sm:$0xff]
        %v2055 = vld [vmem:[%s670 + $0x9c0] sm:$0xff]
        %v2056 = vld [vmem:[%s670 + $0x9c8] sm:$0xff]
        %v2057 = vld [vmem:[%s670 + $0x9d0] sm:$0xff]
        %v2058 = vld [vmem:[%s670 + $0x9d8] sm:$0xff]
        %v2059 = vld [vmem:[%s670 + $0x9e0] sm:$0xff]
        %v2060 = vld [vmem:[%s670 + $0x9e8] sm:$0xff]
        %v2061 = vld [vmem:[%s670 + $0x9f0] sm:$0xff]
        %v2062 = vld [vmem:[%s670 + $0x9f8] sm:$0xff]
        %v2063 = vld [vmem:[%s670 + $0xa00] sm:$0xff]
        %v2064 = vld [vmem:[%s670 + $0xa08] sm:$0xff]
        %v2065 = vld [vmem:[%s670 + $0xa10] sm:$0xff]
        %v2066 = vld [vmem:[%s670 + $0xa18] sm:$0xff]
        %v2067 = vld [vmem:[%s670 + $0xa20] sm:$0xff]
        %v2068 = vld [vmem:[%s670 + $0xa28] sm:$0xff]
        %v2069 = vld [vmem:[%s670 + $0xa30] sm:$0xff]
        %v2070 = vld [vmem:[%s670 + $0xa38] sm:$0xff]
        %v2071 = vld [vmem:[%s670 + $0xa40] sm:$0xff]
        %v2072 = vld [vmem:[%s670 + $0xa48] sm:$0xff]
        %v2073 = vld [vmem:[%s670 + $0xa50] sm:$0xff]
        %v2074 = vld [vmem:[%s670 + $0xa58] sm:$0xff]
        %v2075 = vld [vmem:[%s670 + $0xa60] sm:$0xff]
        %v2076 = vld [vmem:[%s670 + $0xa68] sm:$0xff]
        %v2077 = vld [vmem:[%s670 + $0xa70] sm:$0xff]
        %v2078 = vld [vmem:[%s670 + $0xa78] sm:$0xff]
        %v2079 = vld [vmem:[%s670 + $0xa80] sm:$0xff]
        %v2080 = vld [vmem:[%s670 + $0xa88] sm:$0xff]
        %v2081 = vld [vmem:[%s670 + $0xa90] sm:$0xff]
        %v2082 = vld [vmem:[%s670 + $0xa98] sm:$0xff]
        %v2083 = vld [vmem:[%s670 + $0xaa0] sm:$0xff]
        %v2084 = vld [vmem:[%s670 + $0xaa8] sm:$0xff]
        %v2085 = vld [vmem:[%s670 + $0xab0] sm:$0xff]
        %v2086 = vld [vmem:[%s670 + $0xab8] sm:$0xff]
        %v2087 = vld [vmem:[%s670 + $0xac0] sm:$0xff]
        %v2088 = vld [vmem:[%s670 + $0xac8] sm:$0xff]
        %v2089 = vld [vmem:[%s670 + $0xad0] sm:$0xff]
        %v2090 = vld [vmem:[%s670 + $0xad8] sm:$0xff]
        %v2091 = vld [vmem:[%s670 + $0xae0] sm:$0xff]
        %v2092 = vld [vmem:[%s670 + $0xae8] sm:$0xff]
        %v2093 = vld [vmem:[%s670 + $0xaf0] sm:$0xff]
        %v2094 = vld [vmem:[%s670 + $0xaf8] sm:$0xff]
        %v2095 = vld [vmem:[%s670 + $0xb00] sm:$0xff]
        %v2096 = vld [vmem:[%s670 + $0xb08] sm:$0xff]
        %v2097 = vld [vmem:[%s670 + $0xb10] sm:$0xff]
        %v2098 = vld [vmem:[%s670 + $0xb18] sm:$0xff]
        %v2099 = vld [vmem:[%s670 + $0xb20] sm:$0xff]
        %v2100 = vld [vmem:[%s670 + $0xb28] sm:$0xff]
        %v2101 = vld [vmem:[%s670 + $0xb30] sm:$0xff]
        %v2102 = vld [vmem:[%s670 + $0xb38] sm:$0xff]
        %v2103 = vld [vmem:[%s670 + $0xb40] sm:$0xff]
        %v2104 = vld [vmem:[%s670 + $0xb48] sm:$0xff]
        %v2105 = vld [vmem:[%s670 + $0xb50] sm:$0xff]
        %v2106 = vld [vmem:[%s670 + $0xb58] sm:$0xff]
        %v2107 = vld [vmem:[%s670 + $0xb60] sm:$0xff]
        %v2108 = vld [vmem:[%s670 + $0xb68] sm:$0xff]
        %v2109 = vld [vmem:[%s670 + $0xb70] sm:$0xff]
        %v2110 = vld [vmem:[%s670 + $0xb78] sm:$0xff]
        %v2111 = vld [vmem:[%s670 + $0xb80] sm:$0xff]
        %v2112 = vld [vmem:[%s670 + $0xb88] sm:$0xff]
        %v2113 = vld [vmem:[%s670 + $0xb90] sm:$0xff]
        %v2114 = vld [vmem:[%s670 + $0xb98] sm:$0xff]
        %v2115 = vld [vmem:[%s670 + $0xba0] sm:$0xff]
        %v2116 = vld [vmem:[%s670 + $0xba8] sm:$0xff]
        %v2117 = vld [vmem:[%s670 + $0xbb0] sm:$0xff]
        %v2118 = vld [vmem:[%s670 + $0xbb8] sm:$0xff]
        %v2119 = vld [vmem:[%s670 + $0xbc0] sm:$0xff]
        %v2120 = vld [vmem:[%s670 + $0xbc8] sm:$0xff]
        %v2121 = vld [vmem:[%s670 + $0xbd0] sm:$0xff]
        %v2122 = vld [vmem:[%s670 + $0xbd8] sm:$0xff]
        %v2123 = vld [vmem:[%s670 + $0xbe0] sm:$0xff]
        %v2124 = vld [vmem:[%s670 + $0xbe8] sm:$0xff]
        %v2125 = vld [vmem:[%s670 + $0xbf0] sm:$0xff]
        %v2126 = vld [vmem:[%s670 + $0xbf8] sm:$0xff]
        %v2127 = vlaneseq
        %v2128 = vshrl.u32 %v2127, 7
        %v2129 = vsub.s32 0, %v2128
        %v2130 = vrot.slane %v1720, %v2129
        %v2131 = vlaneseq
        %v2132 = vshrl.u32 %v2131, 7
        %v2133 = vsub.s32 0, %v2132
        %v2134 = vrot.slane %v1721, %v2133
        %v2135 = vlaneseq
        %v2136 = vshrl.u32 %v2135, 7
        %v2137 = vsub.s32 0, %v2136
        %v2138 = vrot.slane %v1722, %v2137
        %v2139 = vlaneseq
        %v2140 = vshrl.u32 %v2139, 7
        %v2141 = vsub.s32 0, %v2140
        %v2142 = vrot.slane %v1723, %v2141
        %v2143 = vlaneseq
        %v2144 = vshrl.u32 %v2143, 7
        %v2145 = vsub.s32 0, %v2144
        %v2146 = vrot.slane %v1724, %v2145
        %v2147 = vlaneseq
        %v2148 = vshrl.u32 %v2147, 7
        %v2149 = vsub.s32 0, %v2148
        %v2150 = vrot.slane %v1725, %v2149
        %v2151 = vlaneseq
        %v2152 = vshrl.u32 %v2151, 7
        %v2153 = vsub.s32 0, %v2152
        %v2154 = vrot.slane %v1726, %v2153
        %v2155 = vlaneseq
        %v2156 = vshrl.u32 %v2155, 7
        %v2157 = vsub.s32 0, %v2156
        %v2158 = vrot.slane %v1727, %v2157
        %v2159 = vlaneseq
        %v2160 = vshrl.u32 %v2159, 7
        %v2161 = vsub.s32 0, %v2160
        %v2162 = vrot.slane %v1728, %v2161
        %v2163 = vlaneseq
        %v2164 = vshrl.u32 %v2163, 7
        %v2165 = vsub.s32 0, %v2164
        %v2166 = vrot.slane %v1729, %v2165
        %v2167 = vlaneseq
        %v2168 = vshrl.u32 %v2167, 7
        %v2169 = vsub.s32 0, %v2168
        %v2170 = vrot.slane %v1730, %v2169
        %v2171 = vlaneseq
        %v2172 = vshrl.u32 %v2171, 7
        %v2173 = vsub.s32 0, %v2172
        %v2174 = vrot.slane %v1731, %v2173
        %v2559 = vunpack.c.l.b16 %v1743
        %v2560 = vunpack.c.h.b16 %v1743
        %v2561 = vunpack.c.l.b16 %v1744
        %v2562 = vunpack.c.h.b16 %v1744
        %v2563 = vunpack.c.l.b16 %v1745
        %v2564 = vunpack.c.h.b16 %v1745
        %v2565 = vunpack.c.l.b16 %v1746
        %v2566 = vunpack.c.h.b16 %v1746
        %v2567 = vunpack.c.l.b16 %v1747
        %v2568 = vunpack.c.h.b16 %v1747
        %v2569 = vunpack.c.l.b16 %v1748
        %v2570 = vunpack.c.h.b16 %v1748
        %v2571 = vunpack.c.l.b16 %v1749
        %v2572 = vunpack.c.h.b16 %v1749
        %v2573 = vunpack.c.l.b16 %v1750
        %v2574 = vunpack.c.h.b16 %v1750
        %v2575 = vunpack.c.l.b16 %v1751
        %v2576 = vunpack.c.h.b16 %v1751
        %v2577 = vunpack.c.l.b16 %v1752
        %v2578 = vunpack.c.h.b16 %v1752
        %v2579 = vunpack.c.l.b16 %v1753
        %v2580 = vunpack.c.h.b16 %v1753
        %v2581 = vunpack.c.l.b16 %v1754
        %v2582 = vunpack.c.h.b16 %v1754
        %v2583 = vunpack.c.l.b16 %v1755
        %v2584 = vunpack.c.h.b16 %v1755
        %v2585 = vunpack.c.l.b16 %v1756
        %v2586 = vunpack.c.h.b16 %v1756
        %v2587 = vunpack.c.l.b16 %v1757
        %v2588 = vunpack.c.h.b16 %v1757
        %v2589 = vunpack.c.l.b16 %v1758
        %v2590 = vunpack.c.h.b16 %v1758
        %v2591 = vunpack.c.l.b16 %v1759
        %v2592 = vunpack.c.h.b16 %v1759
        %v2593 = vunpack.c.l.b16 %v1760
        %v2594 = vunpack.c.h.b16 %v1760
        %v2595 = vunpack.c.l.b16 %v1761
        %v2596 = vunpack.c.h.b16 %v1761
        %v2597 = vunpack.c.l.b16 %v1762
        %v2598 = vunpack.c.h.b16 %v1762
        %v2599 = vunpack.c.l.b16 %v1763
        %v2600 = vunpack.c.h.b16 %v1763
        %v2601 = vunpack.c.l.b16 %v1764
        %v2602 = vunpack.c.h.b16 %v1764
        %v2603 = vunpack.c.l.b16 %v1765
        %v2604 = vunpack.c.h.b16 %v1765
        %v2605 = vunpack.c.l.b16 %v1766
        %v2606 = vunpack.c.h.b16 %v1766
        %v2607 = vunpack.c.l.b16 %v1767
        %v2608 = vunpack.c.h.b16 %v1767
        %v2609 = vunpack.c.l.b16 %v1768
        %v2610 = vunpack.c.h.b16 %v1768
        %v2611 = vunpack.c.l.b16 %v1769
        %v2612 = vunpack.c.h.b16 %v1769
        %v2613 = vunpack.c.l.b16 %v1770
        %v2614 = vunpack.c.h.b16 %v1770
        %v2615 = vunpack.c.l.b16 %v1771
        %v2616 = vunpack.c.h.b16 %v1771
        %v2617 = vunpack.c.l.b16 %v1772
        %v2618 = vunpack.c.h.b16 %v1772
        %v2619 = vunpack.c.l.b16 %v1773
        %v2620 = vunpack.c.h.b16 %v1773
        %v2621 = vunpack.c.l.b16 %v1774
        %v2622 = vunpack.c.h.b16 %v1774
        %v2623 = vunpack.c.l.b16 %v1775
        %v2624 = vunpack.c.h.b16 %v1775
        %v2625 = vunpack.c.l.b16 %v1776
        %v2626 = vunpack.c.h.b16 %v1776
        %v2627 = vunpack.c.l.b16 %v1777
        %v2628 = vunpack.c.h.b16 %v1777
        %v2629 = vunpack.c.l.b16 %v1778
        %v2630 = vunpack.c.h.b16 %v1778
        %v2631 = vunpack.c.l.b16 %v1779
        %v2632 = vunpack.c.h.b16 %v1779
        %v2633 = vunpack.c.l.b16 %v1780
        %v2634 = vunpack.c.h.b16 %v1780
        %v2635 = vunpack.c.l.b16 %v1781
        %v2636 = vunpack.c.h.b16 %v1781
        %v2637 = vunpack.c.l.b16 %v1782
        %v2638 = vunpack.c.h.b16 %v1782
        %v2639 = vunpack.c.l.b16 %v1783
        %v2640 = vunpack.c.h.b16 %v1783
        %v2641 = vunpack.c.l.b16 %v1784
        %v2642 = vunpack.c.h.b16 %v1784
        %v2643 = vunpack.c.l.b16 %v1785
        %v2644 = vunpack.c.h.b16 %v1785
        %v2645 = vunpack.c.l.b16 %v1786
        %v2646 = vunpack.c.h.b16 %v1786
        %v2647 = vunpack.c.l.b16 %v1787
        %v2648 = vunpack.c.h.b16 %v1787
        %v2649 = vunpack.c.l.b16 %v1788
        %v2650 = vunpack.c.h.b16 %v1788
        %v2651 = vunpack.c.l.b16 %v1789
        %v2652 = vunpack.c.h.b16 %v1789
        %v2653 = vunpack.c.l.b16 %v1790
        %v2654 = vunpack.c.h.b16 %v1790
        %v2655 = vunpack.c.l.b16 %v1791
        %v2656 = vunpack.c.h.b16 %v1791
        %v2657 = vunpack.c.l.b16 %v1792
        %v2658 = vunpack.c.h.b16 %v1792
        %v2659 = vunpack.c.l.b16 %v1793
        %v2660 = vunpack.c.h.b16 %v1793
        %v2661 = vunpack.c.l.b16 %v1794
        %v2662 = vunpack.c.h.b16 %v1794
        %v2663 = vunpack.c.l.b16 %v1795
        %v2664 = vunpack.c.h.b16 %v1795
        %v2665 = vunpack.c.l.b16 %v1796
        %v2666 = vunpack.c.h.b16 %v1796
        %v2667 = vunpack.c.l.b16 %v1797
        %v2668 = vunpack.c.h.b16 %v1797
        %v2669 = vunpack.c.l.b16 %v1798
        %v2670 = vunpack.c.h.b16 %v1798
        %v2671 = vunpack.c.l.b16 %v1799
        %v2672 = vunpack.c.h.b16 %v1799
        %v2673 = vunpack.c.l.b16 %v1800
        %v2674 = vunpack.c.h.b16 %v1800
        %v2675 = vunpack.c.l.b16 %v1801
        %v2676 = vunpack.c.h.b16 %v1801
        %v2677 = vunpack.c.l.b16 %v1802
        %v2678 = vunpack.c.h.b16 %v1802
        %v2679 = vunpack.c.l.b16 %v1803
        %v2680 = vunpack.c.h.b16 %v1803
        %v2681 = vunpack.c.l.b16 %v1804
        %v2682 = vunpack.c.h.b16 %v1804
        %v2683 = vunpack.c.l.b16 %v1805
        %v2684 = vunpack.c.h.b16 %v1805
        %v2685 = vunpack.c.l.b16 %v1806
        %v2686 = vunpack.c.h.b16 %v1806
        %v2687 = vunpack.c.l.b16 %v1807
        %v2688 = vunpack.c.h.b16 %v1807
        %v2689 = vunpack.c.l.b16 %v1808
        %v2690 = vunpack.c.h.b16 %v1808
        %v2691 = vunpack.c.l.b16 %v1809
        %v2692 = vunpack.c.h.b16 %v1809
        %v2693 = vunpack.c.l.b16 %v1810
        %v2694 = vunpack.c.h.b16 %v1810
        %v2695 = vunpack.c.l.b16 %v1811
        %v2696 = vunpack.c.h.b16 %v1811
        %v2697 = vunpack.c.l.b16 %v1812
        %v2698 = vunpack.c.h.b16 %v1812
        %v2699 = vunpack.c.l.b16 %v1813
        %v2700 = vunpack.c.h.b16 %v1813
        %v2701 = vunpack.c.l.b16 %v1814
        %v2702 = vunpack.c.h.b16 %v1814
        %v2703 = vunpack.c.l.b16 %v1815
        %v2704 = vunpack.c.h.b16 %v1815
        %v2705 = vunpack.c.l.b16 %v1816
        %v2706 = vunpack.c.h.b16 %v1816
        %v2707 = vunpack.c.l.b16 %v1817
        %v2708 = vunpack.c.h.b16 %v1817
        %v2709 = vunpack.c.l.b16 %v1818
        %v2710 = vunpack.c.h.b16 %v1818
        %v2711 = vunpack.c.l.b16 %v1819
        %v2712 = vunpack.c.h.b16 %v1819
        %v2713 = vunpack.c.l.b16 %v1820
        %v2714 = vunpack.c.h.b16 %v1820
        %v2715 = vunpack.c.l.b16 %v1821
        %v2716 = vunpack.c.h.b16 %v1821
        %v2717 = vunpack.c.l.b16 %v1822
        %v2718 = vunpack.c.h.b16 %v1822
        %v2719 = vunpack.c.l.b16 %v1823
        %v2720 = vunpack.c.h.b16 %v1823
        %v2721 = vunpack.c.l.b16 %v1824
        %v2722 = vunpack.c.h.b16 %v1824
        %v2723 = vunpack.c.l.b16 %v1825
        %v2724 = vunpack.c.h.b16 %v1825
        %v2725 = vunpack.c.l.b16 %v1826
        %v2726 = vunpack.c.h.b16 %v1826
        %v2727 = vunpack.c.l.b16 %v1827
        %v2728 = vunpack.c.h.b16 %v1827
        %v2729 = vunpack.c.l.b16 %v1828
        %v2730 = vunpack.c.h.b16 %v1828
        %v2731 = vunpack.c.l.b16 %v1829
        %v2732 = vunpack.c.h.b16 %v1829
        %v2733 = vunpack.c.l.b16 %v1830
        %v2734 = vunpack.c.h.b16 %v1830
        %v2735 = vunpack.c.l.b16 %v1831
        %v2736 = vunpack.c.h.b16 %v1831
        %v2737 = vunpack.c.l.b16 %v1832
        %v2738 = vunpack.c.h.b16 %v1832
        %v2739 = vunpack.c.l.b16 %v1833
        %v2740 = vunpack.c.h.b16 %v1833
        %v2741 = vunpack.c.l.b16 %v1834
        %v2742 = vunpack.c.h.b16 %v1834
        %v2743 = vunpack.c.l.b16 %v1835
        %v2744 = vunpack.c.h.b16 %v1835
        %v2745 = vunpack.c.l.b16 %v1836
        %v2746 = vunpack.c.h.b16 %v1836
        %v2747 = vunpack.c.l.b16 %v1837
        %v2748 = vunpack.c.h.b16 %v1837
        %v2749 = vunpack.c.l.b16 %v1838
        %v2750 = vunpack.c.h.b16 %v1838
        %v2751 = vunpack.c.l.b16 %v1839
        %v2752 = vunpack.c.h.b16 %v1839
        %v2753 = vunpack.c.l.b16 %v1840
        %v2754 = vunpack.c.h.b16 %v1840
        %v2755 = vunpack.c.l.b16 %v1841
        %v2756 = vunpack.c.h.b16 %v1841
        %v2757 = vunpack.c.l.b16 %v1842
        %v2758 = vunpack.c.h.b16 %v1842
        %v2759 = vunpack.c.l.b16 %v1843
        %v2760 = vunpack.c.h.b16 %v1843
        %v2761 = vunpack.c.l.b16 %v1844
        %v2762 = vunpack.c.h.b16 %v1844
        %v2763 = vunpack.c.l.b16 %v1845
        %v2764 = vunpack.c.h.b16 %v1845
        %v2765 = vunpack.c.l.b16 %v1846
        %v2766 = vunpack.c.h.b16 %v1846
        %v2767 = vunpack.c.l.b16 %v1847
        %v2768 = vunpack.c.h.b16 %v1847
        %v2769 = vunpack.c.l.b16 %v1848
        %v2770 = vunpack.c.h.b16 %v1848
        %v2771 = vunpack.c.l.b16 %v1849
        %v2772 = vunpack.c.h.b16 %v1849
        %v2773 = vunpack.c.l.b16 %v1850
        %v2774 = vunpack.c.h.b16 %v1850
        %v2775 = vunpack.c.l.b16 %v1851
        %v2776 = vunpack.c.h.b16 %v1851
        %v2777 = vunpack.c.l.b16 %v1852
        %v2778 = vunpack.c.h.b16 %v1852
        %v2779 = vunpack.c.l.b16 %v1853
        %v2780 = vunpack.c.h.b16 %v1853
        %v2781 = vunpack.c.l.b16 %v1854
        %v2782 = vunpack.c.h.b16 %v1854
        %v2783 = vunpack.c.l.b16 %v1855
        %v2784 = vunpack.c.h.b16 %v1855
        %v2785 = vunpack.c.l.b16 %v1856
        %v2786 = vunpack.c.h.b16 %v1856
        %v2787 = vunpack.c.l.b16 %v1857
        %v2788 = vunpack.c.h.b16 %v1857
        %v2789 = vunpack.c.l.b16 %v1858
        %v2790 = vunpack.c.h.b16 %v1858
        %v2791 = vunpack.c.l.b16 %v1859
        %v2792 = vunpack.c.h.b16 %v1859
        %v2793 = vunpack.c.l.b16 %v1860
        %v2794 = vunpack.c.h.b16 %v1860
        %v2795 = vunpack.c.l.b16 %v1861
        %v2796 = vunpack.c.h.b16 %v1861
        %v2797 = vunpack.c.l.b16 %v1862
        %v2798 = vunpack.c.h.b16 %v1862
        %v2799 = vunpack.c.l.b16 %v1863
        %v2800 = vunpack.c.h.b16 %v1863
        %v2801 = vunpack.c.l.b16 %v1864
        %v2802 = vunpack.c.h.b16 %v1864
        %v2803 = vunpack.c.l.b16 %v1865
        %v2804 = vunpack.c.h.b16 %v1865
        %v2805 = vunpack.c.l.b16 %v1866
        %v2806 = vunpack.c.h.b16 %v1866
        %v2807 = vunpack.c.l.b16 %v1867
        %v2808 = vunpack.c.h.b16 %v1867
        %v2809 = vunpack.c.l.b16 %v1868
        %v2810 = vunpack.c.h.b16 %v1868
        %v2811 = vunpack.c.l.b16 %v1869
        %v2812 = vunpack.c.h.b16 %v1869
        %v2813 = vunpack.c.l.b16 %v1870
        %v2814 = vunpack.c.h.b16 %v1870
        %v2815 = vunpack.c.l.b16 %v1871
        %v2816 = vunpack.c.h.b16 %v1871
        %v2817 = vunpack.c.l.b16 %v1872
        %v2818 = vunpack.c.h.b16 %v1872
        %v2819 = vunpack.c.l.b16 %v1873
        %v2820 = vunpack.c.h.b16 %v1873
        %v2821 = vunpack.c.l.b16 %v1874
        %v2822 = vunpack.c.h.b16 %v1874
        %v2823 = vunpack.c.l.b16 %v1875
        %v2824 = vunpack.c.h.b16 %v1875
        %v2825 = vunpack.c.l.b16 %v1876
        %v2826 = vunpack.c.h.b16 %v1876
        %v2827 = vunpack.c.l.b16 %v1877
        %v2828 = vunpack.c.h.b16 %v1877
        %v2829 = vunpack.c.l.b16 %v1878
        %v2830 = vunpack.c.h.b16 %v1878
        %v2831 = vunpack.c.l.b16 %v1879
        %v2832 = vunpack.c.h.b16 %v1879
        %v2833 = vunpack.c.l.b16 %v1880
        %v2834 = vunpack.c.h.b16 %v1880
        %v2835 = vunpack.c.l.b16 %v1881
        %v2836 = vunpack.c.h.b16 %v1881
        %v2837 = vunpack.c.l.b16 %v1882
        %v2838 = vunpack.c.h.b16 %v1882
        %v2839 = vunpack.c.l.b16 %v1883
        %v2840 = vunpack.c.h.b16 %v1883
        %v2841 = vunpack.c.l.b16 %v1884
        %v2842 = vunpack.c.h.b16 %v1884
        %v2843 = vunpack.c.l.b16 %v1885
        %v2844 = vunpack.c.h.b16 %v1885
        %v2845 = vunpack.c.l.b16 %v1886
        %v2846 = vunpack.c.h.b16 %v1886
        %v2847 = vunpack.c.l.b16 %v1887
        %v2848 = vunpack.c.h.b16 %v1887
        %v2849 = vunpack.c.l.b16 %v1888
        %v2850 = vunpack.c.h.b16 %v1888
        %v2851 = vunpack.c.l.b16 %v1889
        %v2852 = vunpack.c.h.b16 %v1889
        %v2853 = vunpack.c.l.b16 %v1890
        %v2854 = vunpack.c.h.b16 %v1890
        %v2855 = vunpack.c.l.b16 %v1891
        %v2856 = vunpack.c.h.b16 %v1891
        %v2857 = vunpack.c.l.b16 %v1892
        %v2858 = vunpack.c.h.b16 %v1892
        %v2859 = vunpack.c.l.b16 %v1893
        %v2860 = vunpack.c.h.b16 %v1893
        %v2861 = vunpack.c.l.b16 %v1894
        %v2862 = vunpack.c.h.b16 %v1894
        %v2863 = vunpack.c.l.b16 %v1895
        %v2864 = vunpack.c.h.b16 %v1895
        %v2865 = vunpack.c.l.b16 %v1896
        %v2866 = vunpack.c.h.b16 %v1896
        %v2867 = vunpack.c.l.b16 %v1897
        %v2868 = vunpack.c.h.b16 %v1897
        %v2869 = vunpack.c.l.b16 %v1898
        %v2870 = vunpack.c.h.b16 %v1898
        %v2871 = vunpack.c.l.b16 %v1899
        %v2872 = vunpack.c.h.b16 %v1899
        %v2873 = vunpack.c.l.b16 %v1900
        %v2874 = vunpack.c.h.b16 %v1900
        %v2875 = vunpack.c.l.b16 %v1901
        %v2876 = vunpack.c.h.b16 %v1901
        %v2877 = vunpack.c.l.b16 %v1902
        %v2878 = vunpack.c.h.b16 %v1902
        %v2879 = vunpack.c.l.b16 %v1903
        %v2880 = vunpack.c.h.b16 %v1903
        %v2881 = vunpack.c.l.b16 %v1904
        %v2882 = vunpack.c.h.b16 %v1904
        %v2883 = vunpack.c.l.b16 %v1905
        %v2884 = vunpack.c.h.b16 %v1905
        %v2885 = vunpack.c.l.b16 %v1906
        %v2886 = vunpack.c.h.b16 %v1906
        %v2887 = vunpack.c.l.b16 %v1907
        %v2888 = vunpack.c.h.b16 %v1907
        %v2889 = vunpack.c.l.b16 %v1908
        %v2890 = vunpack.c.h.b16 %v1908
        %v2891 = vunpack.c.l.b16 %v1909
        %v2892 = vunpack.c.h.b16 %v1909
        %v2893 = vunpack.c.l.b16 %v1910
        %v2894 = vunpack.c.h.b16 %v1910
        %v2895 = vunpack.c.l.b16 %v1911
        %v2896 = vunpack.c.h.b16 %v1911
        %v2897 = vunpack.c.l.b16 %v1912
        %v2898 = vunpack.c.h.b16 %v1912
        %v2899 = vunpack.c.l.b16 %v1913
        %v2900 = vunpack.c.h.b16 %v1913
        %v2901 = vunpack.c.l.b16 %v1914
        %v2902 = vunpack.c.h.b16 %v1914
        %v2903 = vunpack.c.l.b16 %v1915
        %v2904 = vunpack.c.h.b16 %v1915
        %v2905 = vunpack.c.l.b16 %v1916
        %v2906 = vunpack.c.h.b16 %v1916
        %v2907 = vunpack.c.l.b16 %v1917
        %v2908 = vunpack.c.h.b16 %v1917
        %v2909 = vunpack.c.l.b16 %v1918
        %v2910 = vunpack.c.h.b16 %v1918
        %v2911 = vunpack.c.l.b16 %v1919
        %v2912 = vunpack.c.h.b16 %v1919
        %v2913 = vunpack.c.l.b16 %v1920
        %v2914 = vunpack.c.h.b16 %v1920
        %v2915 = vunpack.c.l.b16 %v1921
        %v2916 = vunpack.c.h.b16 %v1921
        %v2917 = vunpack.c.l.b16 %v1922
        %v2918 = vunpack.c.h.b16 %v1922
        %v2919 = vunpack.c.l.b16 %v1923
        %v2920 = vunpack.c.h.b16 %v1923
        %v2921 = vunpack.c.l.b16 %v1924
        %v2922 = vunpack.c.h.b16 %v1924
        %v2923 = vunpack.c.l.b16 %v1925
        %v2924 = vunpack.c.h.b16 %v1925
        %v2925 = vunpack.c.l.b16 %v1926
        %v2926 = vunpack.c.h.b16 %v1926
        %v2927 = vunpack.c.l.b16 %v1927
        %v2928 = vunpack.c.h.b16 %v1927
        %v2929 = vunpack.c.l.b16 %v1928
        %v2930 = vunpack.c.h.b16 %v1928
        %v2931 = vunpack.c.l.b16 %v1929
        %v2932 = vunpack.c.h.b16 %v1929
        %v2933 = vunpack.c.l.b16 %v1930
        %v2934 = vunpack.c.h.b16 %v1930
        %v2935 = vunpack.c.l.b16 %v1931
        %v2936 = vunpack.c.h.b16 %v1931
        %v2937 = vunpack.c.l.b16 %v1932
        %v2938 = vunpack.c.h.b16 %v1932
        %v2939 = vunpack.c.l.b16 %v1933
        %v2940 = vunpack.c.h.b16 %v1933
        %v2941 = vunpack.c.l.b16 %v1934
        %v2942 = vunpack.c.h.b16 %v1934
        %v2943 = vunpack.c.l.b16 %v1935
        %v2944 = vunpack.c.h.b16 %v1935
        %v2945 = vunpack.c.l.b16 %v1936
        %v2946 = vunpack.c.h.b16 %v1936
        %v2947 = vunpack.c.l.b16 %v1937
        %v2948 = vunpack.c.h.b16 %v1937
        %v2949 = vunpack.c.l.b16 %v1938
        %v2950 = vunpack.c.h.b16 %v1938
        %v2951 = vunpack.c.l.b16 %v1939
        %v2952 = vunpack.c.h.b16 %v1939
        %v2953 = vunpack.c.l.b16 %v1940
        %v2954 = vunpack.c.h.b16 %v1940
        %v2955 = vunpack.c.l.b16 %v1941
        %v2956 = vunpack.c.h.b16 %v1941
        %v2957 = vunpack.c.l.b16 %v1942
        %v2958 = vunpack.c.h.b16 %v1942
        %v2959 = vunpack.c.l.b16 %v1943
        %v2960 = vunpack.c.h.b16 %v1943
        %v2961 = vunpack.c.l.b16 %v1944
        %v2962 = vunpack.c.h.b16 %v1944
        %v2963 = vunpack.c.l.b16 %v1945
        %v2964 = vunpack.c.h.b16 %v1945
        %v2965 = vunpack.c.l.b16 %v1946
        %v2966 = vunpack.c.h.b16 %v1946
        %v2967 = vunpack.c.l.b16 %v1947
        %v2968 = vunpack.c.h.b16 %v1947
        %v2969 = vunpack.c.l.b16 %v1948
        %v2970 = vunpack.c.h.b16 %v1948
        %v2971 = vunpack.c.l.b16 %v1949
        %v2972 = vunpack.c.h.b16 %v1949
        %v2973 = vunpack.c.l.b16 %v1950
        %v2974 = vunpack.c.h.b16 %v1950
        %v2975 = vunpack.c.l.b16 %v1951
        %v2976 = vunpack.c.h.b16 %v1951
        %v2977 = vunpack.c.l.b16 %v1952
        %v2978 = vunpack.c.h.b16 %v1952
        %v2979 = vunpack.c.l.b16 %v1953
        %v2980 = vunpack.c.h.b16 %v1953
        %v2981 = vunpack.c.l.b16 %v1954
        %v2982 = vunpack.c.h.b16 %v1954
        %v2983 = vunpack.c.l.b16 %v1955
        %v2984 = vunpack.c.h.b16 %v1955
        %v2985 = vunpack.c.l.b16 %v1956
        %v2986 = vunpack.c.h.b16 %v1956
        %v2987 = vunpack.c.l.b16 %v1957
        %v2988 = vunpack.c.h.b16 %v1957
        %v2989 = vunpack.c.l.b16 %v1958
        %v2990 = vunpack.c.h.b16 %v1958
        %v2991 = vunpack.c.l.b16 %v1959
        %v2992 = vunpack.c.h.b16 %v1959
        %v2993 = vunpack.c.l.b16 %v1960
        %v2994 = vunpack.c.h.b16 %v1960
        %v2995 = vunpack.c.l.b16 %v1961
        %v2996 = vunpack.c.h.b16 %v1961
        %v2997 = vunpack.c.l.b16 %v1962
        %v2998 = vunpack.c.h.b16 %v1962
        %v2999 = vunpack.c.l.b16 %v1963
        %v3000 = vunpack.c.h.b16 %v1963
        %v3001 = vunpack.c.l.b16 %v1964
        %v3002 = vunpack.c.h.b16 %v1964
        %v3003 = vunpack.c.l.b16 %v1965
        %v3004 = vunpack.c.h.b16 %v1965
        %v3005 = vunpack.c.l.b16 %v1966
        %v3006 = vunpack.c.h.b16 %v1966
        %v3007 = vunpack.c.l.b16 %v1967
        %v3008 = vunpack.c.h.b16 %v1967
        %v3009 = vunpack.c.l.b16 %v1968
        %v3010 = vunpack.c.h.b16 %v1968
        %v3011 = vunpack.c.l.b16 %v1969
        %v3012 = vunpack.c.h.b16 %v1969
        %v3013 = vunpack.c.l.b16 %v1970
        %v3014 = vunpack.c.h.b16 %v1970
        %v3015 = vunpack.c.l.b16 %v1971
        %v3016 = vunpack.c.h.b16 %v1971
        %v3017 = vunpack.c.l.b16 %v1972
        %v3018 = vunpack.c.h.b16 %v1972
        %v3019 = vunpack.c.l.b16 %v1973
        %v3020 = vunpack.c.h.b16 %v1973
        %v3021 = vunpack.c.l.b16 %v1974
        %v3022 = vunpack.c.h.b16 %v1974
        %v3023 = vunpack.c.l.b16 %v1975
        %v3024 = vunpack.c.h.b16 %v1975
        %v3025 = vunpack.c.l.b16 %v1976
        %v3026 = vunpack.c.h.b16 %v1976
        %v3027 = vunpack.c.l.b16 %v1977
        %v3028 = vunpack.c.h.b16 %v1977
        %v3029 = vunpack.c.l.b16 %v1978
        %v3030 = vunpack.c.h.b16 %v1978
        %v3031 = vunpack.c.l.b16 %v1979
        %v3032 = vunpack.c.h.b16 %v1979
        %v3033 = vunpack.c.l.b16 %v1980
        %v3034 = vunpack.c.h.b16 %v1980
        %v3035 = vunpack.c.l.b16 %v1981
        %v3036 = vunpack.c.h.b16 %v1981
        %v3037 = vunpack.c.l.b16 %v1982
        %v3038 = vunpack.c.h.b16 %v1982
        %v3039 = vunpack.c.l.b16 %v1983
        %v3040 = vunpack.c.h.b16 %v1983
        %v3041 = vunpack.c.l.b16 %v1984
        %v3042 = vunpack.c.h.b16 %v1984
        %v3043 = vunpack.c.l.b16 %v1985
        %v3044 = vunpack.c.h.b16 %v1985
        %v3045 = vunpack.c.l.b16 %v1986
        %v3046 = vunpack.c.h.b16 %v1986
        %v3047 = vunpack.c.l.b16 %v1987
        %v3048 = vunpack.c.h.b16 %v1987
        %v3049 = vunpack.c.l.b16 %v1988
        %v3050 = vunpack.c.h.b16 %v1988
        %v3051 = vunpack.c.l.b16 %v1989
        %v3052 = vunpack.c.h.b16 %v1989
        %v3053 = vunpack.c.l.b16 %v1990
        %v3054 = vunpack.c.h.b16 %v1990
        %v3055 = vunpack.c.l.b16 %v1991
        %v3056 = vunpack.c.h.b16 %v1991
        %v3057 = vunpack.c.l.b16 %v1992
        %v3058 = vunpack.c.h.b16 %v1992
        %v3059 = vunpack.c.l.b16 %v1993
        %v3060 = vunpack.c.h.b16 %v1993
        %v3061 = vunpack.c.l.b16 %v1994
        %v3062 = vunpack.c.h.b16 %v1994
        %v3063 = vunpack.c.l.b16 %v1995
        %v3064 = vunpack.c.h.b16 %v1995
        %v3065 = vunpack.c.l.b16 %v1996
        %v3066 = vunpack.c.h.b16 %v1996
        %v3067 = vunpack.c.l.b16 %v1997
        %v3068 = vunpack.c.h.b16 %v1997
        %v3069 = vunpack.c.l.b16 %v1998
        %v3070 = vunpack.c.h.b16 %v1998
        %v3071 = vunpack.c.l.b16 %v1999
        %v3072 = vunpack.c.h.b16 %v1999
        %v3073 = vunpack.c.l.b16 %v2000
        %v3074 = vunpack.c.h.b16 %v2000
        %v3075 = vunpack.c.l.b16 %v2001
        %v3076 = vunpack.c.h.b16 %v2001
        %v3077 = vunpack.c.l.b16 %v2002
        %v3078 = vunpack.c.h.b16 %v2002
        %v3079 = vunpack.c.l.b16 %v2003
        %v3080 = vunpack.c.h.b16 %v2003
        %v3081 = vunpack.c.l.b16 %v2004
        %v3082 = vunpack.c.h.b16 %v2004
        %v3083 = vunpack.c.l.b16 %v2005
        %v3084 = vunpack.c.h.b16 %v2005
        %v3085 = vunpack.c.l.b16 %v2006
        %v3086 = vunpack.c.h.b16 %v2006
        %v3087 = vunpack.c.l.b16 %v2007
        %v3088 = vunpack.c.h.b16 %v2007
        %v3089 = vunpack.c.l.b16 %v2008
        %v3090 = vunpack.c.h.b16 %v2008
        %v3091 = vunpack.c.l.b16 %v2009
        %v3092 = vunpack.c.h.b16 %v2009
        %v3093 = vunpack.c.l.b16 %v2010
        %v3094 = vunpack.c.h.b16 %v2010
        %v3095 = vunpack.c.l.b16 %v2011
        %v3096 = vunpack.c.h.b16 %v2011
        %v3097 = vunpack.c.l.b16 %v2012
        %v3098 = vunpack.c.h.b16 %v2012
        %v3099 = vunpack.c.l.b16 %v2013
        %v3100 = vunpack.c.h.b16 %v2013
        %v3101 = vunpack.c.l.b16 %v2014
        %v3102 = vunpack.c.h.b16 %v2014
        %v3103 = vunpack.c.l.b16 %v2015
        %v3104 = vunpack.c.h.b16 %v2015
        %v3105 = vunpack.c.l.b16 %v2016
        %v3106 = vunpack.c.h.b16 %v2016
        %v3107 = vunpack.c.l.b16 %v2017
        %v3108 = vunpack.c.h.b16 %v2017
        %v3109 = vunpack.c.l.b16 %v2018
        %v3110 = vunpack.c.h.b16 %v2018
        %v3111 = vunpack.c.l.b16 %v2019
        %v3112 = vunpack.c.h.b16 %v2019
        %v3113 = vunpack.c.l.b16 %v2020
        %v3114 = vunpack.c.h.b16 %v2020
        %v3115 = vunpack.c.l.b16 %v2021
        %v3116 = vunpack.c.h.b16 %v2021
        %v3117 = vunpack.c.l.b16 %v2022
        %v3118 = vunpack.c.h.b16 %v2022
        %v3119 = vunpack.c.l.b16 %v2023
        %v3120 = vunpack.c.h.b16 %v2023
        %v3121 = vunpack.c.l.b16 %v2024
        %v3122 = vunpack.c.h.b16 %v2024
        %v3123 = vunpack.c.l.b16 %v2025
        %v3124 = vunpack.c.h.b16 %v2025
        %v3125 = vunpack.c.l.b16 %v2026
        %v3126 = vunpack.c.h.b16 %v2026
        %v3127 = vunpack.c.l.b16 %v2027
        %v3128 = vunpack.c.h.b16 %v2027
        %v3129 = vunpack.c.l.b16 %v2028
        %v3130 = vunpack.c.h.b16 %v2028
        %v3131 = vunpack.c.l.b16 %v2029
        %v3132 = vunpack.c.h.b16 %v2029
        %v3133 = vunpack.c.l.b16 %v2030
        %v3134 = vunpack.c.h.b16 %v2030
        %v3135 = vunpack.c.l.b16 %v2031
        %v3136 = vunpack.c.h.b16 %v2031
        %v3137 = vunpack.c.l.b16 %v2032
        %v3138 = vunpack.c.h.b16 %v2032
        %v3139 = vunpack.c.l.b16 %v2033
        %v3140 = vunpack.c.h.b16 %v2033
        %v3141 = vunpack.c.l.b16 %v2034
        %v3142 = vunpack.c.h.b16 %v2034
        %v3143 = vunpack.c.l.b16 %v2035
        %v3144 = vunpack.c.h.b16 %v2035
        %v3145 = vunpack.c.l.b16 %v2036
        %v3146 = vunpack.c.h.b16 %v2036
        %v3147 = vunpack.c.l.b16 %v2037
        %v3148 = vunpack.c.h.b16 %v2037
        %v3149 = vunpack.c.l.b16 %v2038
        %v3150 = vunpack.c.h.b16 %v2038
        %v3151 = vunpack.c.l.b16 %v2039
        %v3152 = vunpack.c.h.b16 %v2039
        %v3153 = vunpack.c.l.b16 %v2040
        %v3154 = vunpack.c.h.b16 %v2040
        %v3155 = vunpack.c.l.b16 %v2041
        %v3156 = vunpack.c.h.b16 %v2041
        %v3157 = vunpack.c.l.b16 %v2042
        %v3158 = vunpack.c.h.b16 %v2042
        %v3159 = vunpack.c.l.b16 %v2043
        %v3160 = vunpack.c.h.b16 %v2043
        %v3161 = vunpack.c.l.b16 %v2044
        %v3162 = vunpack.c.h.b16 %v2044
        %v3163 = vunpack.c.l.b16 %v2045
        %v3164 = vunpack.c.h.b16 %v2045
        %v3165 = vunpack.c.l.b16 %v2046
        %v3166 = vunpack.c.h.b16 %v2046
        %v3167 = vunpack.c.l.b16 %v2047
        %v3168 = vunpack.c.h.b16 %v2047
        %v3169 = vunpack.c.l.b16 %v2048
        %v3170 = vunpack.c.h.b16 %v2048
        %v3171 = vunpack.c.l.b16 %v2049
        %v3172 = vunpack.c.h.b16 %v2049
        %v3173 = vunpack.c.l.b16 %v2050
        %v3174 = vunpack.c.h.b16 %v2050
        %v3175 = vunpack.c.l.b16 %v2051
        %v3176 = vunpack.c.h.b16 %v2051
        %v3177 = vunpack.c.l.b16 %v2052
        %v3178 = vunpack.c.h.b16 %v2052
        %v3179 = vunpack.c.l.b16 %v2053
        %v3180 = vunpack.c.h.b16 %v2053
        %v3181 = vunpack.c.l.b16 %v2054
        %v3182 = vunpack.c.h.b16 %v2054
        %v3183 = vunpack.c.l.b16 %v2055
        %v3184 = vunpack.c.h.b16 %v2055
        %v3185 = vunpack.c.l.b16 %v2056
        %v3186 = vunpack.c.h.b16 %v2056
        %v3187 = vunpack.c.l.b16 %v2057
        %v3188 = vunpack.c.h.b16 %v2057
        %v3189 = vunpack.c.l.b16 %v2058
        %v3190 = vunpack.c.h.b16 %v2058
        %v3191 = vunpack.c.l.b16 %v2059
        %v3192 = vunpack.c.h.b16 %v2059
        %v3193 = vunpack.c.l.b16 %v2060
        %v3194 = vunpack.c.h.b16 %v2060
        %v3195 = vunpack.c.l.b16 %v2061
        %v3196 = vunpack.c.h.b16 %v2061
        %v3197 = vunpack.c.l.b16 %v2062
        %v3198 = vunpack.c.h.b16 %v2062
        %v3199 = vunpack.c.l.b16 %v2063
        %v3200 = vunpack.c.h.b16 %v2063
        %v3201 = vunpack.c.l.b16 %v2064
        %v3202 = vunpack.c.h.b16 %v2064
        %v3203 = vunpack.c.l.b16 %v2065
        %v3204 = vunpack.c.h.b16 %v2065
        %v3205 = vunpack.c.l.b16 %v2066
        %v3206 = vunpack.c.h.b16 %v2066
        %v3207 = vunpack.c.l.b16 %v2067
        %v3208 = vunpack.c.h.b16 %v2067
        %v3209 = vunpack.c.l.b16 %v2068
        %v3210 = vunpack.c.h.b16 %v2068
        %v3211 = vunpack.c.l.b16 %v2069
        %v3212 = vunpack.c.h.b16 %v2069
        %v3213 = vunpack.c.l.b16 %v2070
        %v3214 = vunpack.c.h.b16 %v2070
        %v3215 = vunpack.c.l.b16 %v2071
        %v3216 = vunpack.c.h.b16 %v2071
        %v3217 = vunpack.c.l.b16 %v2072
        %v3218 = vunpack.c.h.b16 %v2072
        %v3219 = vunpack.c.l.b16 %v2073
        %v3220 = vunpack.c.h.b16 %v2073
        %v3221 = vunpack.c.l.b16 %v2074
        %v3222 = vunpack.c.h.b16 %v2074
        %v3223 = vunpack.c.l.b16 %v2075
        %v3224 = vunpack.c.h.b16 %v2075
        %v3225 = vunpack.c.l.b16 %v2076
        %v3226 = vunpack.c.h.b16 %v2076
        %v3227 = vunpack.c.l.b16 %v2077
        %v3228 = vunpack.c.h.b16 %v2077
        %v3229 = vunpack.c.l.b16 %v2078
        %v3230 = vunpack.c.h.b16 %v2078
        %v3231 = vunpack.c.l.b16 %v2079
        %v3232 = vunpack.c.h.b16 %v2079
        %v3233 = vunpack.c.l.b16 %v2080
        %v3234 = vunpack.c.h.b16 %v2080
        %v3235 = vunpack.c.l.b16 %v2081
        %v3236 = vunpack.c.h.b16 %v2081
        %v3237 = vunpack.c.l.b16 %v2082
        %v3238 = vunpack.c.h.b16 %v2082
        %v3239 = vunpack.c.l.b16 %v2083
        %v3240 = vunpack.c.h.b16 %v2083
        %v3241 = vunpack.c.l.b16 %v2084
        %v3242 = vunpack.c.h.b16 %v2084
        %v3243 = vunpack.c.l.b16 %v2085
        %v3244 = vunpack.c.h.b16 %v2085
        %v3245 = vunpack.c.l.b16 %v2086
        %v3246 = vunpack.c.h.b16 %v2086
        %v3247 = vunpack.c.l.b16 %v2087
        %v3248 = vunpack.c.h.b16 %v2087
        %v3249 = vunpack.c.l.b16 %v2088
        %v3250 = vunpack.c.h.b16 %v2088
        %v3251 = vunpack.c.l.b16 %v2089
        %v3252 = vunpack.c.h.b16 %v2089
        %v3253 = vunpack.c.l.b16 %v2090
        %v3254 = vunpack.c.h.b16 %v2090
        %v3255 = vunpack.c.l.b16 %v2091
        %v3256 = vunpack.c.h.b16 %v2091
        %v3257 = vunpack.c.l.b16 %v2092
        %v3258 = vunpack.c.h.b16 %v2092
        %v3259 = vunpack.c.l.b16 %v2093
        %v3260 = vunpack.c.h.b16 %v2093
        %v3261 = vunpack.c.l.b16 %v2094
        %v3262 = vunpack.c.h.b16 %v2094
        %v3263 = vunpack.c.l.b16 %v2095
        %v3264 = vunpack.c.h.b16 %v2095
        %v3265 = vunpack.c.l.b16 %v2096
        %v3266 = vunpack.c.h.b16 %v2096
        %v3267 = vunpack.c.l.b16 %v2097
        %v3268 = vunpack.c.h.b16 %v2097
        %v3269 = vunpack.c.l.b16 %v2098
        %v3270 = vunpack.c.h.b16 %v2098
        %v3271 = vunpack.c.l.b16 %v2099
        %v3272 = vunpack.c.h.b16 %v2099
        %v3273 = vunpack.c.l.b16 %v2100
        %v3274 = vunpack.c.h.b16 %v2100
        %v3275 = vunpack.c.l.b16 %v2101
        %v3276 = vunpack.c.h.b16 %v2101
        %v3277 = vunpack.c.l.b16 %v2102
        %v3278 = vunpack.c.h.b16 %v2102
        %v3279 = vunpack.c.l.b16 %v2103
        %v3280 = vunpack.c.h.b16 %v2103
        %v3281 = vunpack.c.l.b16 %v2104
        %v3282 = vunpack.c.h.b16 %v2104
        %v3283 = vunpack.c.l.b16 %v2105
        %v3284 = vunpack.c.h.b16 %v2105
        %v3285 = vunpack.c.l.b16 %v2106
        %v3286 = vunpack.c.h.b16 %v2106
        %v3287 = vunpack.c.l.b16 %v2107
        %v3288 = vunpack.c.h.b16 %v2107
        %v3289 = vunpack.c.l.b16 %v2108
        %v3290 = vunpack.c.h.b16 %v2108
        %v3291 = vunpack.c.l.b16 %v2109
        %v3292 = vunpack.c.h.b16 %v2109
        %v3293 = vunpack.c.l.b16 %v2110
        %v3294 = vunpack.c.h.b16 %v2110
        %v3295 = vunpack.c.l.b16 %v2111
        %v3296 = vunpack.c.h.b16 %v2111
        %v3297 = vunpack.c.l.b16 %v2112
        %v3298 = vunpack.c.h.b16 %v2112
        %v3299 = vunpack.c.l.b16 %v2113
        %v3300 = vunpack.c.h.b16 %v2113
        %v3301 = vunpack.c.l.b16 %v2114
        %v3302 = vunpack.c.h.b16 %v2114
        %v3303 = vunpack.c.l.b16 %v2115
        %v3304 = vunpack.c.h.b16 %v2115
        %v3305 = vunpack.c.l.b16 %v2116
        %v3306 = vunpack.c.h.b16 %v2116
        %v3307 = vunpack.c.l.b16 %v2117
        %v3308 = vunpack.c.h.b16 %v2117
        %v3309 = vunpack.c.l.b16 %v2118
        %v3310 = vunpack.c.h.b16 %v2118
        %v3311 = vunpack.c.l.b16 %v2119
        %v3312 = vunpack.c.h.b16 %v2119
        %v3313 = vunpack.c.l.b16 %v2120
        %v3314 = vunpack.c.h.b16 %v2120
        %v3315 = vunpack.c.l.b16 %v2121
        %v3316 = vunpack.c.h.b16 %v2121
        %v3317 = vunpack.c.l.b16 %v2122
        %v3318 = vunpack.c.h.b16 %v2122
        %v3319 = vunpack.c.l.b16 %v2123
        %v3320 = vunpack.c.h.b16 %v2123
        %v3321 = vunpack.c.l.b16 %v2124
        %v3322 = vunpack.c.h.b16 %v2124
        %v3323 = vunpack.c.l.b16 %v2125
        %v3324 = vunpack.c.h.b16 %v2125
        %v3325 = vunpack.c.l.b16 %v2126
        %v3326 = vunpack.c.h.b16 %v2126
        %v3327 = vpack.c.b16 %v2571, %v2559
        %v3328 = vpack.c.b16 %v2572, %v2560
        %v3329 = vpack.c.b16 %v2573, %v2561
        %v3330 = vpack.c.b16 %v2574, %v2562
        %v3331 = vpack.c.b16 %v2575, %v2563
        %v3332 = vpack.c.b16 %v2576, %v2564
        %v3333 = vpack.c.b16 %v2577, %v2565
        %v3334 = vpack.c.b16 %v2578, %v2566
        %v3335 = vpack.c.b16 %v2579, %v2567
        %v3336 = vpack.c.b16 %v2580, %v2568
        %v3337 = vpack.c.b16 %v2581, %v2569
        %v3338 = vpack.c.b16 %v2582, %v2570
        %v3339 = vpack.c.b16 %v2595, %v2583
        %v3340 = vpack.c.b16 %v2596, %v2584
        %v3341 = vpack.c.b16 %v2597, %v2585
        %v3342 = vpack.c.b16 %v2598, %v2586
        %v3343 = vpack.c.b16 %v2599, %v2587
        %v3344 = vpack.c.b16 %v2600, %v2588
        %v3345 = vpack.c.b16 %v2601, %v2589
        %v3346 = vpack.c.b16 %v2602, %v2590
        %v3347 = vpack.c.b16 %v2603, %v2591
        %v3348 = vpack.c.b16 %v2604, %v2592
        %v3349 = vpack.c.b16 %v2605, %v2593
        %v3350 = vpack.c.b16 %v2606, %v2594
        %v3351 = vpack.c.b16 %v2619, %v2607
        %v3352 = vpack.c.b16 %v2620, %v2608
        %v3353 = vpack.c.b16 %v2621, %v2609
        %v3354 = vpack.c.b16 %v2622, %v2610
        %v3355 = vpack.c.b16 %v2623, %v2611
        %v3356 = vpack.c.b16 %v2624, %v2612
        %v3357 = vpack.c.b16 %v2625, %v2613
        %v3358 = vpack.c.b16 %v2626, %v2614
        %v3359 = vpack.c.b16 %v2627, %v2615
        %v3360 = vpack.c.b16 %v2628, %v2616
        %v3361 = vpack.c.b16 %v2629, %v2617
        %v3362 = vpack.c.b16 %v2630, %v2618
        %v3363 = vpack.c.b16 %v2643, %v2631
        %v3364 = vpack.c.b16 %v2644, %v2632
        %v3365 = vpack.c.b16 %v2645, %v2633
        %v3366 = vpack.c.b16 %v2646, %v2634
        %v3367 = vpack.c.b16 %v2647, %v2635
        %v3368 = vpack.c.b16 %v2648, %v2636
        %v3369 = vpack.c.b16 %v2649, %v2637
        %v3370 = vpack.c.b16 %v2650, %v2638
        %v3371 = vpack.c.b16 %v2651, %v2639
        %v3372 = vpack.c.b16 %v2652, %v2640
        %v3373 = vpack.c.b16 %v2653, %v2641
        %v3374 = vpack.c.b16 %v2654, %v2642
        %v3375 = vpack.c.b16 %v2667, %v2655
        %v3376 = vpack.c.b16 %v2668, %v2656
        %v3377 = vpack.c.b16 %v2669, %v2657
        %v3378 = vpack.c.b16 %v2670, %v2658
        %v3379 = vpack.c.b16 %v2671, %v2659
        %v3380 = vpack.c.b16 %v2672, %v2660
        %v3381 = vpack.c.b16 %v2673, %v2661
        %v3382 = vpack.c.b16 %v2674, %v2662
        %v3383 = vpack.c.b16 %v2675, %v2663
        %v3384 = vpack.c.b16 %v2676, %v2664
        %v3385 = vpack.c.b16 %v2677, %v2665
        %v3386 = vpack.c.b16 %v2678, %v2666
        %v3387 = vpack.c.b16 %v2691, %v2679
        %v3388 = vpack.c.b16 %v2692, %v2680
        %v3389 = vpack.c.b16 %v2693, %v2681
        %v3390 = vpack.c.b16 %v2694, %v2682
        %v3391 = vpack.c.b16 %v2695, %v2683
        %v3392 = vpack.c.b16 %v2696, %v2684
        %v3393 = vpack.c.b16 %v2697, %v2685
        %v3394 = vpack.c.b16 %v2698, %v2686
        %v3395 = vpack.c.b16 %v2699, %v2687
        %v3396 = vpack.c.b16 %v2700, %v2688
        %v3397 = vpack.c.b16 %v2701, %v2689
        %v3398 = vpack.c.b16 %v2702, %v2690
        %v3399 = vpack.c.b16 %v2715, %v2703
        %v3400 = vpack.c.b16 %v2716, %v2704
        %v3401 = vpack.c.b16 %v2717, %v2705
        %v3402 = vpack.c.b16 %v2718, %v2706
        %v3403 = vpack.c.b16 %v2719, %v2707
        %v3404 = vpack.c.b16 %v2720, %v2708
        %v3405 = vpack.c.b16 %v2721, %v2709
        %v3406 = vpack.c.b16 %v2722, %v2710
        %v3407 = vpack.c.b16 %v2723, %v2711
        %v3408 = vpack.c.b16 %v2724, %v2712
        %v3409 = vpack.c.b16 %v2725, %v2713
        %v3410 = vpack.c.b16 %v2726, %v2714
        %v3411 = vpack.c.b16 %v2739, %v2727
        %v3412 = vpack.c.b16 %v2740, %v2728
        %v3413 = vpack.c.b16 %v2741, %v2729
        %v3414 = vpack.c.b16 %v2742, %v2730
        %v3415 = vpack.c.b16 %v2743, %v2731
        %v3416 = vpack.c.b16 %v2744, %v2732
        %v3417 = vpack.c.b16 %v2745, %v2733
        %v3418 = vpack.c.b16 %v2746, %v2734
        %v3419 = vpack.c.b16 %v2747, %v2735
        %v3420 = vpack.c.b16 %v2748, %v2736
        %v3421 = vpack.c.b16 %v2749, %v2737
        %v3422 = vpack.c.b16 %v2750, %v2738
        %v3423 = vpack.c.b16 %v2763, %v2751
        %v3424 = vpack.c.b16 %v2764, %v2752
        %v3425 = vpack.c.b16 %v2765, %v2753
        %v3426 = vpack.c.b16 %v2766, %v2754
        %v3427 = vpack.c.b16 %v2767, %v2755
        %v3428 = vpack.c.b16 %v2768, %v2756
        %v3429 = vpack.c.b16 %v2769, %v2757
        %v3430 = vpack.c.b16 %v2770, %v2758
        %v3431 = vpack.c.b16 %v2771, %v2759
        %v3432 = vpack.c.b16 %v2772, %v2760
        %v3433 = vpack.c.b16 %v2773, %v2761
        %v3434 = vpack.c.b16 %v2774, %v2762
        %v3435 = vpack.c.b16 %v2787, %v2775
        %v3436 = vpack.c.b16 %v2788, %v2776
        %v3437 = vpack.c.b16 %v2789, %v2777
        %v3438 = vpack.c.b16 %v2790, %v2778
        %v3439 = vpack.c.b16 %v2791, %v2779
        %v3440 = vpack.c.b16 %v2792, %v2780
        %v3441 = vpack.c.b16 %v2793, %v2781
        %v3442 = vpack.c.b16 %v2794, %v2782
        %v3443 = vpack.c.b16 %v2795, %v2783
        %v3444 = vpack.c.b16 %v2796, %v2784
        %v3445 = vpack.c.b16 %v2797, %v2785
        %v3446 = vpack.c.b16 %v2798, %v2786
        %v3447 = vpack.c.b16 %v2811, %v2799
        %v3448 = vpack.c.b16 %v2812, %v2800
        %v3449 = vpack.c.b16 %v2813, %v2801
        %v3450 = vpack.c.b16 %v2814, %v2802
        %v3451 = vpack.c.b16 %v2815, %v2803
        %v3452 = vpack.c.b16 %v2816, %v2804
        %v3453 = vpack.c.b16 %v2817, %v2805
        %v3454 = vpack.c.b16 %v2818, %v2806
        %v3455 = vpack.c.b16 %v2819, %v2807
        %v3456 = vpack.c.b16 %v2820, %v2808
        %v3457 = vpack.c.b16 %v2821, %v2809
        %v3458 = vpack.c.b16 %v2822, %v2810
        %v3459 = vpack.c.b16 %v2835, %v2823
        %v3460 = vpack.c.b16 %v2836, %v2824
        %v3461 = vpack.c.b16 %v2837, %v2825
        %v3462 = vpack.c.b16 %v2838, %v2826
        %v3463 = vpack.c.b16 %v2839, %v2827
        %v3464 = vpack.c.b16 %v2840, %v2828
        %v3465 = vpack.c.b16 %v2841, %v2829
        %v3466 = vpack.c.b16 %v2842, %v2830
        %v3467 = vpack.c.b16 %v2843, %v2831
        %v3468 = vpack.c.b16 %v2844, %v2832
        %v3469 = vpack.c.b16 %v2845, %v2833
        %v3470 = vpack.c.b16 %v2846, %v2834
        %v3471 = vpack.c.b16 %v2859, %v2847
        %v3472 = vpack.c.b16 %v2860, %v2848
        %v3473 = vpack.c.b16 %v2861, %v2849
        %v3474 = vpack.c.b16 %v2862, %v2850
        %v3475 = vpack.c.b16 %v2863, %v2851
        %v3476 = vpack.c.b16 %v2864, %v2852
        %v3477 = vpack.c.b16 %v2865, %v2853
        %v3478 = vpack.c.b16 %v2866, %v2854
        %v3479 = vpack.c.b16 %v2867, %v2855
        %v3480 = vpack.c.b16 %v2868, %v2856
        %v3481 = vpack.c.b16 %v2869, %v2857
        %v3482 = vpack.c.b16 %v2870, %v2858
        %v3483 = vpack.c.b16 %v2883, %v2871
        %v3484 = vpack.c.b16 %v2884, %v2872
        %v3485 = vpack.c.b16 %v2885, %v2873
        %v3486 = vpack.c.b16 %v2886, %v2874
        %v3487 = vpack.c.b16 %v2887, %v2875
        %v3488 = vpack.c.b16 %v2888, %v2876
        %v3489 = vpack.c.b16 %v2889, %v2877
        %v3490 = vpack.c.b16 %v2890, %v2878
        %v3491 = vpack.c.b16 %v2891, %v2879
        %v3492 = vpack.c.b16 %v2892, %v2880
        %v3493 = vpack.c.b16 %v2893, %v2881
        %v3494 = vpack.c.b16 %v2894, %v2882
        %v3495 = vpack.c.b16 %v2907, %v2895
        %v3496 = vpack.c.b16 %v2908, %v2896
        %v3497 = vpack.c.b16 %v2909, %v2897
        %v3498 = vpack.c.b16 %v2910, %v2898
        %v3499 = vpack.c.b16 %v2911, %v2899
        %v3500 = vpack.c.b16 %v2912, %v2900
        %v3501 = vpack.c.b16 %v2913, %v2901
        %v3502 = vpack.c.b16 %v2914, %v2902
        %v3503 = vpack.c.b16 %v2915, %v2903
        %v3504 = vpack.c.b16 %v2916, %v2904
        %v3505 = vpack.c.b16 %v2917, %v2905
        %v3506 = vpack.c.b16 %v2918, %v2906
        %v3507 = vpack.c.b16 %v2931, %v2919
        %v3508 = vpack.c.b16 %v2932, %v2920
        %v3509 = vpack.c.b16 %v2933, %v2921
        %v3510 = vpack.c.b16 %v2934, %v2922
        %v3511 = vpack.c.b16 %v2935, %v2923
        %v3512 = vpack.c.b16 %v2936, %v2924
        %v3513 = vpack.c.b16 %v2937, %v2925
        %v3514 = vpack.c.b16 %v2938, %v2926
        %v3515 = vpack.c.b16 %v2939, %v2927
        %v3516 = vpack.c.b16 %v2940, %v2928
        %v3517 = vpack.c.b16 %v2941, %v2929
        %v3518 = vpack.c.b16 %v2942, %v2930
        %v3519 = vpack.c.b16 %v2955, %v2943
        %v3520 = vpack.c.b16 %v2956, %v2944
        %v3521 = vpack.c.b16 %v2957, %v2945
        %v3522 = vpack.c.b16 %v2958, %v2946
        %v3523 = vpack.c.b16 %v2959, %v2947
        %v3524 = vpack.c.b16 %v2960, %v2948
        %v3525 = vpack.c.b16 %v2961, %v2949
        %v3526 = vpack.c.b16 %v2962, %v2950
        %v3527 = vpack.c.b16 %v2963, %v2951
        %v3528 = vpack.c.b16 %v2964, %v2952
        %v3529 = vpack.c.b16 %v2965, %v2953
        %v3530 = vpack.c.b16 %v2966, %v2954
        %v3531 = vpack.c.b16 %v2979, %v2967
        %v3532 = vpack.c.b16 %v2980, %v2968
        %v3533 = vpack.c.b16 %v2981, %v2969
        %v3534 = vpack.c.b16 %v2982, %v2970
        %v3535 = vpack.c.b16 %v2983, %v2971
        %v3536 = vpack.c.b16 %v2984, %v2972
        %v3537 = vpack.c.b16 %v2985, %v2973
        %v3538 = vpack.c.b16 %v2986, %v2974
        %v3539 = vpack.c.b16 %v2987, %v2975
        %v3540 = vpack.c.b16 %v2988, %v2976
        %v3541 = vpack.c.b16 %v2989, %v2977
        %v3542 = vpack.c.b16 %v2990, %v2978
        %v3543 = vpack.c.b16 %v3003, %v2991
        %v3544 = vpack.c.b16 %v3004, %v2992
        %v3545 = vpack.c.b16 %v3005, %v2993
        %v3546 = vpack.c.b16 %v3006, %v2994
        %v3547 = vpack.c.b16 %v3007, %v2995
        %v3548 = vpack.c.b16 %v3008, %v2996
        %v3549 = vpack.c.b16 %v3009, %v2997
        %v3550 = vpack.c.b16 %v3010, %v2998
        %v3551 = vpack.c.b16 %v3011, %v2999
        %v3552 = vpack.c.b16 %v3012, %v3000
        %v3553 = vpack.c.b16 %v3013, %v3001
        %v3554 = vpack.c.b16 %v3014, %v3002
        %v3555 = vpack.c.b16 %v3027, %v3015
        %v3556 = vpack.c.b16 %v3028, %v3016
        %v3557 = vpack.c.b16 %v3029, %v3017
        %v3558 = vpack.c.b16 %v3030, %v3018
        %v3559 = vpack.c.b16 %v3031, %v3019
        %v3560 = vpack.c.b16 %v3032, %v3020
        %v3561 = vpack.c.b16 %v3033, %v3021
        %v3562 = vpack.c.b16 %v3034, %v3022
        %v3563 = vpack.c.b16 %v3035, %v3023
        %v3564 = vpack.c.b16 %v3036, %v3024
        %v3565 = vpack.c.b16 %v3037, %v3025
        %v3566 = vpack.c.b16 %v3038, %v3026
        %v3567 = vpack.c.b16 %v3051, %v3039
        %v3568 = vpack.c.b16 %v3052, %v3040
        %v3569 = vpack.c.b16 %v3053, %v3041
        %v3570 = vpack.c.b16 %v3054, %v3042
        %v3571 = vpack.c.b16 %v3055, %v3043
        %v3572 = vpack.c.b16 %v3056, %v3044
        %v3573 = vpack.c.b16 %v3057, %v3045
        %v3574 = vpack.c.b16 %v3058, %v3046
        %v3575 = vpack.c.b16 %v3059, %v3047
        %v3576 = vpack.c.b16 %v3060, %v3048
        %v3577 = vpack.c.b16 %v3061, %v3049
        %v3578 = vpack.c.b16 %v3062, %v3050
        %v3579 = vpack.c.b16 %v3075, %v3063
        %v3580 = vpack.c.b16 %v3076, %v3064
        %v3581 = vpack.c.b16 %v3077, %v3065
        %v3582 = vpack.c.b16 %v3078, %v3066
        %v3583 = vpack.c.b16 %v3079, %v3067
        %v3584 = vpack.c.b16 %v3080, %v3068
        %v3585 = vpack.c.b16 %v3081, %v3069
        %v3586 = vpack.c.b16 %v3082, %v3070
        %v3587 = vpack.c.b16 %v3083, %v3071
        %v3588 = vpack.c.b16 %v3084, %v3072
        %v3589 = vpack.c.b16 %v3085, %v3073
        %v3590 = vpack.c.b16 %v3086, %v3074
        %v3591 = vpack.c.b16 %v3099, %v3087
        %v3592 = vpack.c.b16 %v3100, %v3088
        %v3593 = vpack.c.b16 %v3101, %v3089
        %v3594 = vpack.c.b16 %v3102, %v3090
        %v3595 = vpack.c.b16 %v3103, %v3091
        %v3596 = vpack.c.b16 %v3104, %v3092
        %v3597 = vpack.c.b16 %v3105, %v3093
        %v3598 = vpack.c.b16 %v3106, %v3094
        %v3599 = vpack.c.b16 %v3107, %v3095
        %v3600 = vpack.c.b16 %v3108, %v3096
        %v3601 = vpack.c.b16 %v3109, %v3097
        %v3602 = vpack.c.b16 %v3110, %v3098
        %v3603 = vpack.c.b16 %v3123, %v3111
        %v3604 = vpack.c.b16 %v3124, %v3112
        %v3605 = vpack.c.b16 %v3125, %v3113
        %v3606 = vpack.c.b16 %v3126, %v3114
        %v3607 = vpack.c.b16 %v3127, %v3115
        %v3608 = vpack.c.b16 %v3128, %v3116
        %v3609 = vpack.c.b16 %v3129, %v3117
        %v3610 = vpack.c.b16 %v3130, %v3118
        %v3611 = vpack.c.b16 %v3131, %v3119
        %v3612 = vpack.c.b16 %v3132, %v3120
        %v3613 = vpack.c.b16 %v3133, %v3121
        %v3614 = vpack.c.b16 %v3134, %v3122
        %v3615 = vpack.c.b16 %v3147, %v3135
        %v3616 = vpack.c.b16 %v3148, %v3136
        %v3617 = vpack.c.b16 %v3149, %v3137
        %v3618 = vpack.c.b16 %v3150, %v3138
        %v3619 = vpack.c.b16 %v3151, %v3139
        %v3620 = vpack.c.b16 %v3152, %v3140
        %v3621 = vpack.c.b16 %v3153, %v3141
        %v3622 = vpack.c.b16 %v3154, %v3142
        %v3623 = vpack.c.b16 %v3155, %v3143
        %v3624 = vpack.c.b16 %v3156, %v3144
        %v3625 = vpack.c.b16 %v3157, %v3145
        %v3626 = vpack.c.b16 %v3158, %v3146
        %v3627 = vpack.c.b16 %v3171, %v3159
        %v3628 = vpack.c.b16 %v3172, %v3160
        %v3629 = vpack.c.b16 %v3173, %v3161
        %v3630 = vpack.c.b16 %v3174, %v3162
        %v3631 = vpack.c.b16 %v3175, %v3163
        %v3632 = vpack.c.b16 %v3176, %v3164
        %v3633 = vpack.c.b16 %v3177, %v3165
        %v3634 = vpack.c.b16 %v3178, %v3166
        %v3635 = vpack.c.b16 %v3179, %v3167
        %v3636 = vpack.c.b16 %v3180, %v3168
        %v3637 = vpack.c.b16 %v3181, %v3169
        %v3638 = vpack.c.b16 %v3182, %v3170
        %v3639 = vpack.c.b16 %v3195, %v3183
        %v3640 = vpack.c.b16 %v3196, %v3184
        %v3641 = vpack.c.b16 %v3197, %v3185
        %v3642 = vpack.c.b16 %v3198, %v3186
        %v3643 = vpack.c.b16 %v3199, %v3187
        %v3644 = vpack.c.b16 %v3200, %v3188
        %v3645 = vpack.c.b16 %v3201, %v3189
        %v3646 = vpack.c.b16 %v3202, %v3190
        %v3647 = vpack.c.b16 %v3203, %v3191
        %v3648 = vpack.c.b16 %v3204, %v3192
        %v3649 = vpack.c.b16 %v3205, %v3193
        %v3650 = vpack.c.b16 %v3206, %v3194
        %v3651 = vpack.c.b16 %v3219, %v3207
        %v3652 = vpack.c.b16 %v3220, %v3208
        %v3653 = vpack.c.b16 %v3221, %v3209
        %v3654 = vpack.c.b16 %v3222, %v3210
        %v3655 = vpack.c.b16 %v3223, %v3211
        %v3656 = vpack.c.b16 %v3224, %v3212
        %v3657 = vpack.c.b16 %v3225, %v3213
        %v3658 = vpack.c.b16 %v3226, %v3214
        %v3659 = vpack.c.b16 %v3227, %v3215
        %v3660 = vpack.c.b16 %v3228, %v3216
        %v3661 = vpack.c.b16 %v3229, %v3217
        %v3662 = vpack.c.b16 %v3230, %v3218
        %v3663 = vpack.c.b16 %v3243, %v3231
        %v3664 = vpack.c.b16 %v3244, %v3232
        %v3665 = vpack.c.b16 %v3245, %v3233
        %v3666 = vpack.c.b16 %v3246, %v3234
        %v3667 = vpack.c.b16 %v3247, %v3235
        %v3668 = vpack.c.b16 %v3248, %v3236
        %v3669 = vpack.c.b16 %v3249, %v3237
        %v3670 = vpack.c.b16 %v3250, %v3238
        %v3671 = vpack.c.b16 %v3251, %v3239
        %v3672 = vpack.c.b16 %v3252, %v3240
        %v3673 = vpack.c.b16 %v3253, %v3241
        %v3674 = vpack.c.b16 %v3254, %v3242
        %v3675 = vpack.c.b16 %v3267, %v3255
        %v3676 = vpack.c.b16 %v3268, %v3256
        %v3677 = vpack.c.b16 %v3269, %v3257
        %v3678 = vpack.c.b16 %v3270, %v3258
        %v3679 = vpack.c.b16 %v3271, %v3259
        %v3680 = vpack.c.b16 %v3272, %v3260
        %v3681 = vpack.c.b16 %v3273, %v3261
        %v3682 = vpack.c.b16 %v3274, %v3262
        %v3683 = vpack.c.b16 %v3275, %v3263
        %v3684 = vpack.c.b16 %v3276, %v3264
        %v3685 = vpack.c.b16 %v3277, %v3265
        %v3686 = vpack.c.b16 %v3278, %v3266
        %v3687 = vpack.c.b16 %v3291, %v3279
        %v3688 = vpack.c.b16 %v3292, %v3280
        %v3689 = vpack.c.b16 %v3293, %v3281
        %v3690 = vpack.c.b16 %v3294, %v3282
        %v3691 = vpack.c.b16 %v3295, %v3283
        %v3692 = vpack.c.b16 %v3296, %v3284
        %v3693 = vpack.c.b16 %v3297, %v3285
        %v3694 = vpack.c.b16 %v3298, %v3286
        %v3695 = vpack.c.b16 %v3299, %v3287
        %v3696 = vpack.c.b16 %v3300, %v3288
        %v3697 = vpack.c.b16 %v3301, %v3289
        %v3698 = vpack.c.b16 %v3302, %v3290
        %v3699 = vpack.c.b16 %v3315, %v3303
        %v3700 = vpack.c.b16 %v3316, %v3304
        %v3701 = vpack.c.b16 %v3317, %v3305
        %v3702 = vpack.c.b16 %v3318, %v3306
        %v3703 = vpack.c.b16 %v3319, %v3307
        %v3704 = vpack.c.b16 %v3320, %v3308
        %v3705 = vpack.c.b16 %v3321, %v3309
        %v3706 = vpack.c.b16 %v3322, %v3310
        %v3707 = vpack.c.b16 %v3323, %v3311
        %v3708 = vpack.c.b16 %v3324, %v3312
        %v3709 = vpack.c.b16 %v3325, %v3313
        %v3710 = vpack.c.b16 %v3326, %v3314
        %4095 = vmatprep.subr.bf16.mxu0 %v3412
        %4096 = vmatpush1.bf16.msra.mxu0 %v3411
        %4097 = vmatprep.subr.bf16.mxu0 %v3400
        %4098 = vmatpush1.bf16.msra.mxu0 %v3399
        %4099 = vmatprep.subr.bf16.mxu0 %v3388
        %4100 = vmatpush1.bf16.msra.mxu0 %v3387
        %4101 = vmatprep.subr.bf16.mxu0 %v3376
        %4102 = vmatpush1.bf16.msra.mxu0 %v3375
        %4103 = vmatprep.subr.bf16.mxu0 %v3364
        %4104 = vmatpush1.bf16.msra.mxu0 %v3363
        %4105 = vmatprep.subr.bf16.mxu0 %v3352
        %4106 = vmatpush1.bf16.msra.mxu0 %v3351
        %4107 = vmatprep.subr.bf16.mxu0 %v3340
        %4108 = vmatpush1.bf16.msra.mxu0 %v3339
        %4109 = vmatprep.subr.bf16.mxu0 %v3328
        %4110 = vmatpush1.bf16.msra.mxu0 %v3327
        %4111 = vmatprep.subr.bf16.mxu0 %v3508
        %4112 = vmatpush2.bf16.msra.mxu0 %v3507
        %4113 = vmatprep.subr.bf16.mxu0 %v3496
        %4114 = vmatpush2.bf16.msra.mxu0 %v3495
        %4115 = vmatprep.subr.bf16.mxu0 %v3484
        %4116 = vmatpush2.bf16.msra.mxu0 %v3483
        %4117 = vmatprep.subr.bf16.mxu0 %v3472
        %4118 = vmatpush2.bf16.msra.mxu0 %v3471
        %4119 = vmatprep.subr.bf16.mxu0 %v3460
        %4120 = vmatpush2.bf16.msra.mxu0 %v3459
        %4121 = vmatprep.subr.bf16.mxu0 %v3448
        %4122 = vmatpush2.bf16.msra.mxu0 %v3447
        %4123 = vmatprep.subr.bf16.mxu0 %v3436
        %4124 = vmatpush2.bf16.msra.mxu0 %v3435
        %4125 = vmatprep.subr.bf16.mxu0 %v3424
        %4126 = vmatpush2.bf16.msra.mxu0 %v3423
        %4127 = vmatprep.mubr.bf16.mxu0 %v1717
        %4128 = vmatmul.mubr.bf16.gmra.mxu0 %v1716
        %v4129 = vpop.f32.mrf.mxu0
        %v4130 = vadd.f32 %v2130, %v4129
        %v4131 = vpop.f32.mrf.mxu0
        %v4132 = vadd.f32 %v2134, %v4131
        %v4133 = vpop.f32.mrf.mxu0
        %v4134 = vadd.f32 %v2130, %v4133
        %v4135 = vpop.f32.mrf.mxu0
        %v4136 = vadd.f32 %v2134, %v4135
        %4137 = vdwg.mxu0
        %4138 = vmatprep.subr.bf16.mxu0 %v3604
        %4139 = vmatpush1.bf16.msra.mxu0 %v3603
        %4140 = vmatprep.subr.bf16.mxu0 %v3592
        %4141 = vmatpush1.bf16.msra.mxu0 %v3591
        %4142 = vmatprep.subr.bf16.mxu0 %v3580
        %4143 = vmatpush1.bf16.msra.mxu0 %v3579
        %4144 = vmatprep.subr.bf16.mxu0 %v3568
        %4145 = vmatpush1.bf16.msra.mxu0 %v3567
        %4146 = vmatprep.subr.bf16.mxu0 %v3556
        %4147 = vmatpush1.bf16.msra.mxu0 %v3555
        %4148 = vmatprep.subr.bf16.mxu0 %v3544
        %4149 = vmatpush1.bf16.msra.mxu0 %v3543
        %4150 = vmatprep.subr.bf16.mxu0 %v3532
        %4151 = vmatpush1.bf16.msra.mxu0 %v3531
        %4152 = vmatprep.subr.bf16.mxu0 %v3520
        %4153 = vmatpush1.bf16.msra.mxu0 %v3519
        %4154 = vmatprep.subr.bf16.mxu0 %v3700
        %4155 = vmatpush2.bf16.msra.mxu0 %v3699
        %4156 = vmatprep.subr.bf16.mxu0 %v3688
        %4157 = vmatpush2.bf16.msra.mxu0 %v3687
        %4158 = vmatprep.subr.bf16.mxu0 %v3676
        %4159 = vmatpush2.bf16.msra.mxu0 %v3675
        %4160 = vmatprep.subr.bf16.mxu0 %v3664
        %4161 = vmatpush2.bf16.msra.mxu0 %v3663
        %4162 = vmatprep.subr.bf16.mxu0 %v3652
        %4163 = vmatpush2.bf16.msra.mxu0 %v3651
        %4164 = vmatprep.subr.bf16.mxu0 %v3640
        %4165 = vmatpush2.bf16.msra.mxu0 %v3639
        %4166 = vmatprep.subr.bf16.mxu0 %v3628
        %4167 = vmatpush2.bf16.msra.mxu0 %v3627
        %4168 = vmatprep.subr.bf16.mxu0 %v3616
        %4169 = vmatpush2.bf16.msra.mxu0 %v3615
        %4170 = vmatprep.mubr.bf16.mxu0 %v1719
        %4171 = vmatmul.mubr.bf16.gmra.mxu0 %v1718
        %v4172 = vpop.f32.mrf.mxu0
        %v4173 = vadd.f32 %v4130, %v4172
        %v4174 = vpop.f32.mrf.mxu0
        %v4175 = vadd.f32 %v4132, %v4174
        %v4176 = vpop.f32.mrf.mxu0
        %v4177 = vadd.f32 %v4134, %v4176
        %v4178 = vpop.f32.mrf.mxu0
        %v4179 = vadd.f32 %v4136, %v4178
        %4180 = vdwg.mxu0
        %4181 = vmatprep.subr.bf16.mxu0 %v3414
        %4182 = vmatpush1.bf16.msra.mxu0 %v3413
        %4183 = vmatprep.subr.bf16.mxu0 %v3402
        %4184 = vmatpush1.bf16.msra.mxu0 %v3401
        %4185 = vmatprep.subr.bf16.mxu0 %v3390
        %4186 = vmatpush1.bf16.msra.mxu0 %v3389
        %4187 = vmatprep.subr.bf16.mxu0 %v3378
        %4188 = vmatpush1.bf16.msra.mxu0 %v3377
        %4189 = vmatprep.subr.bf16.mxu0 %v3366
        %4190 = vmatpush1.bf16.msra.mxu0 %v3365
        %4191 = vmatprep.subr.bf16.mxu0 %v3354
        %4192 = vmatpush1.bf16.msra.mxu0 %v3353
        %4193 = vmatprep.subr.bf16.mxu0 %v3342
        %4194 = vmatpush1.bf16.msra.mxu0 %v3341
        %4195 = vmatprep.subr.bf16.mxu0 %v3330
        %4196 = vmatpush1.bf16.msra.mxu0 %v3329
        %4197 = vmatprep.subr.bf16.mxu0 %v3510
        %4198 = vmatpush2.bf16.msra.mxu0 %v3509
        %4199 = vmatprep.subr.bf16.mxu0 %v3498
        %4200 = vmatpush2.bf16.msra.mxu0 %v3497
        %4201 = vmatprep.subr.bf16.mxu0 %v3486
        %4202 = vmatpush2.bf16.msra.mxu0 %v3485
        %4203 = vmatprep.subr.bf16.mxu0 %v3474
        %4204 = vmatpush2.bf16.msra.mxu0 %v3473
        %4205 = vmatprep.subr.bf16.mxu0 %v3462
        %4206 = vmatpush2.bf16.msra.mxu0 %v3461
        %4207 = vmatprep.subr.bf16.mxu0 %v3450
        %4208 = vmatpush2.bf16.msra.mxu0 %v3449
        %4209 = vmatprep.subr.bf16.mxu0 %v3438
        %4210 = vmatpush2.bf16.msra.mxu0 %v3437
        %4211 = vmatprep.subr.bf16.mxu0 %v3426
        %4212 = vmatpush2.bf16.msra.mxu0 %v3425
        %4213 = vmatprep.mubr.bf16.mxu0 %v1717
        %4214 = vmatmul.mubr.bf16.gmra.mxu0 %v1716
        %v4215 = vpop.f32.mrf.mxu0
        %v4216 = vadd.f32 %v2138, %v4215
        %v4217 = vpop.f32.mrf.mxu0
        %v4218 = vadd.f32 %v2142, %v4217
        %v4219 = vpop.f32.mrf.mxu0
        %v4220 = vadd.f32 %v2138, %v4219
        %v4221 = vpop.f32.mrf.mxu0
        %v4222 = vadd.f32 %v2142, %v4221
        %4223 = vdwg.mxu0
        %4224 = vmatprep.subr.bf16.mxu0 %v3606
        %4225 = vmatpush1.bf16.msra.mxu0 %v3605
        %4226 = vmatprep.subr.bf16.mxu0 %v3594
        %4227 = vmatpush1.bf16.msra.mxu0 %v3593
        %4228 = vmatprep.subr.bf16.mxu0 %v3582
        %4229 = vmatpush1.bf16.msra.mxu0 %v3581
        %4230 = vmatprep.subr.bf16.mxu0 %v3570
        %4231 = vmatpush1.bf16.msra.mxu0 %v3569
        %4232 = vmatprep.subr.bf16.mxu0 %v3558
        %4233 = vmatpush1.bf16.msra.mxu0 %v3557
        %4234 = vmatprep.subr.bf16.mxu0 %v3546
        %4235 = vmatpush1.bf16.msra.mxu0 %v3545
        %4236 = vmatprep.subr.bf16.mxu0 %v3534
        %4237 = vmatpush1.bf16.msra.mxu0 %v3533
        %4238 = vmatprep.subr.bf16.mxu0 %v3522
        %4239 = vmatpush1.bf16.msra.mxu0 %v3521
        %4240 = vmatprep.subr.bf16.mxu0 %v3702
        %4241 = vmatpush2.bf16.msra.mxu0 %v3701
        %4242 = vmatprep.subr.bf16.mxu0 %v3690
        %4243 = vmatpush2.bf16.msra.mxu0 %v3689
        %4244 = vmatprep.subr.bf16.mxu0 %v3678
        %4245 = vmatpush2.bf16.msra.mxu0 %v3677
        %4246 = vmatprep.subr.bf16.mxu0 %v3666
        %4247 = vmatpush2.bf16.msra.mxu0 %v3665
        %4248 = vmatprep.subr.bf16.mxu0 %v3654
        %4249 = vmatpush2.bf16.msra.mxu0 %v3653
        %4250 = vmatprep.subr.bf16.mxu0 %v3642
        %4251 = vmatpush2.bf16.msra.mxu0 %v3641
        %4252 = vmatprep.subr.bf16.mxu0 %v3630
        %4253 = vmatpush2.bf16.msra.mxu0 %v3629
        %4254 = vmatprep.subr.bf16.mxu0 %v3618
        %4255 = vmatpush2.bf16.msra.mxu0 %v3617
        %4256 = vmatprep.mubr.bf16.mxu0 %v1719
        %4257 = vmatmul.mubr.bf16.gmra.mxu0 %v1718
        %v4258 = vpop.f32.mrf.mxu0
        %v4259 = vadd.f32 %v4216, %v4258
        %v4260 = vpop.f32.mrf.mxu0
        %v4261 = vadd.f32 %v4218, %v4260
        %v4262 = vpop.f32.mrf.mxu0
        %v4263 = vadd.f32 %v4220, %v4262
        %v4264 = vpop.f32.mrf.mxu0
        %v4265 = vadd.f32 %v4222, %v4264
        %4266 = vdwg.mxu0
        %4267 = vmatprep.subr.bf16.mxu0 %v3416
        %4268 = vmatpush1.bf16.msra.mxu0 %v3415
        %4269 = vmatprep.subr.bf16.mxu0 %v3404
        %4270 = vmatpush1.bf16.msra.mxu0 %v3403
        %4271 = vmatprep.subr.bf16.mxu0 %v3392
        %4272 = vmatpush1.bf16.msra.mxu0 %v3391
        %4273 = vmatprep.subr.bf16.mxu0 %v3380
        %4274 = vmatpush1.bf16.msra.mxu0 %v3379
        %4275 = vmatprep.subr.bf16.mxu0 %v3368
        %4276 = vmatpush1.bf16.msra.mxu0 %v3367
        %4277 = vmatprep.subr.bf16.mxu0 %v3356
        %4278 = vmatpush1.bf16.msra.mxu0 %v3355
        %4279 = vmatprep.subr.bf16.mxu0 %v3344
        %4280 = vmatpush1.bf16.msra.mxu0 %v3343
        %4281 = vmatprep.subr.bf16.mxu0 %v3332
        %4282 = vmatpush1.bf16.msra.mxu0 %v3331
        %4283 = vmatprep.subr.bf16.mxu0 %v3512
        %4284 = vmatpush2.bf16.msra.mxu0 %v3511
        %4285 = vmatprep.subr.bf16.mxu0 %v3500
        %4286 = vmatpush2.bf16.msra.mxu0 %v3499
        %4287 = vmatprep.subr.bf16.mxu0 %v3488
        %4288 = vmatpush2.bf16.msra.mxu0 %v3487
        %4289 = vmatprep.subr.bf16.mxu0 %v3476
        %4290 = vmatpush2.bf16.msra.mxu0 %v3475
        %4291 = vmatprep.subr.bf16.mxu0 %v3464
        %4292 = vmatpush2.bf16.msra.mxu0 %v3463
        %4293 = vmatprep.subr.bf16.mxu0 %v3452
        %4294 = vmatpush2.bf16.msra.mxu0 %v3451
        %4295 = vmatprep.subr.bf16.mxu0 %v3440
        %4296 = vmatpush2.bf16.msra.mxu0 %v3439
        %4297 = vmatprep.subr.bf16.mxu0 %v3428
        %4298 = vmatpush2.bf16.msra.mxu0 %v3427
        %4299 = vmatprep.mubr.bf16.mxu0 %v1717
        %4300 = vmatmul.mubr.bf16.gmra.mxu0 %v1716
        %v4301 = vpop.f32.mrf.mxu0
        %v4302 = vadd.f32 %v2146, %v4301
        %v4303 = vpop.f32.mrf.mxu0
        %v4304 = vadd.f32 %v2150, %v4303
        %v4305 = vpop.f32.mrf.mxu0
        %v4306 = vadd.f32 %v2146, %v4305
        %v4307 = vpop.f32.mrf.mxu0
        %v4308 = vadd.f32 %v2150, %v4307
        %4309 = vdwg.mxu0
        %4310 = vmatprep.subr.bf16.mxu0 %v3608
        %4311 = vmatpush1.bf16.msra.mxu0 %v3607
        %4312 = vmatprep.subr.bf16.mxu0 %v3596
        %4313 = vmatpush1.bf16.msra.mxu0 %v3595
        %4314 = vmatprep.subr.bf16.mxu0 %v3584
        %4315 = vmatpush1.bf16.msra.mxu0 %v3583
        %4316 = vmatprep.subr.bf16.mxu0 %v3572
        %4317 = vmatpush1.bf16.msra.mxu0 %v3571
        %4318 = vmatprep.subr.bf16.mxu0 %v3560
        %4319 = vmatpush1.bf16.msra.mxu0 %v3559
        %4320 = vmatprep.subr.bf16.mxu0 %v3548
        %4321 = vmatpush1.bf16.msra.mxu0 %v3547
        %4322 = vmatprep.subr.bf16.mxu0 %v3536
        %4323 = vmatpush1.bf16.msra.mxu0 %v3535
        %4324 = vmatprep.subr.bf16.mxu0 %v3524
        %4325 = vmatpush1.bf16.msra.mxu0 %v3523
        %4326 = vmatprep.subr.bf16.mxu0 %v3704
        %4327 = vmatpush2.bf16.msra.mxu0 %v3703
        %4328 = vmatprep.subr.bf16.mxu0 %v3692
        %4329 = vmatpush2.bf16.msra.mxu0 %v3691
        %4330 = vmatprep.subr.bf16.mxu0 %v3680
        %4331 = vmatpush2.bf16.msra.mxu0 %v3679
        %4332 = vmatprep.subr.bf16.mxu0 %v3668
        %4333 = vmatpush2.bf16.msra.mxu0 %v3667
        %4334 = vmatprep.subr.bf16.mxu0 %v3656
        %4335 = vmatpush2.bf16.msra.mxu0 %v3655
        %4336 = vmatprep.subr.bf16.mxu0 %v3644
        %4337 = vmatpush2.bf16.msra.mxu0 %v3643
        %4338 = vmatprep.subr.bf16.mxu0 %v3632
        %4339 = vmatpush2.bf16.msra.mxu0 %v3631
        %4340 = vmatprep.subr.bf16.mxu0 %v3620
        %4341 = vmatpush2.bf16.msra.mxu0 %v3619
        %4342 = vmatprep.mubr.bf16.mxu0 %v1719
        %4343 = vmatmul.mubr.bf16.gmra.mxu0 %v1718
        %v4344 = vpop.f32.mrf.mxu0
        %v4345 = vadd.f32 %v4302, %v4344
        %v4346 = vpop.f32.mrf.mxu0
        %v4347 = vadd.f32 %v4304, %v4346
        %v4348 = vpop.f32.mrf.mxu0
        %v4349 = vadd.f32 %v4306, %v4348
        %v4350 = vpop.f32.mrf.mxu0
        %v4351 = vadd.f32 %v4308, %v4350
        %4352 = vdwg.mxu0
        %4353 = vmatprep.subr.bf16.mxu0 %v3418
        %4354 = vmatpush1.bf16.msra.mxu0 %v3417
        %4355 = vmatprep.subr.bf16.mxu0 %v3406
        %4356 = vmatpush1.bf16.msra.mxu0 %v3405
        %4357 = vmatprep.subr.bf16.mxu0 %v3394
        %4358 = vmatpush1.bf16.msra.mxu0 %v3393
        %4359 = vmatprep.subr.bf16.mxu0 %v3382
        %4360 = vmatpush1.bf16.msra.mxu0 %v3381
        %4361 = vmatprep.subr.bf16.mxu0 %v3370
        %4362 = vmatpush1.bf16.msra.mxu0 %v3369
        %4363 = vmatprep.subr.bf16.mxu0 %v3358
        %4364 = vmatpush1.bf16.msra.mxu0 %v3357
        %4365 = vmatprep.subr.bf16.mxu0 %v3346
        %4366 = vmatpush1.bf16.msra.mxu0 %v3345
        %4367 = vmatprep.subr.bf16.mxu0 %v3334
        %4368 = vmatpush1.bf16.msra.mxu0 %v3333
        %4369 = vmatprep.subr.bf16.mxu0 %v3514
        %4370 = vmatpush2.bf16.msra.mxu0 %v3513
        %4371 = vmatprep.subr.bf16.mxu0 %v3502
        %4372 = vmatpush2.bf16.msra.mxu0 %v3501
        %4373 = vmatprep.subr.bf16.mxu0 %v3490
        %4374 = vmatpush2.bf16.msra.mxu0 %v3489
        %4375 = vmatprep.subr.bf16.mxu0 %v3478
        %4376 = vmatpush2.bf16.msra.mxu0 %v3477
        %4377 = vmatprep.subr.bf16.mxu0 %v3466
        %4378 = vmatpush2.bf16.msra.mxu0 %v3465
        %4379 = vmatprep.subr.bf16.mxu0 %v3454
        %4380 = vmatpush2.bf16.msra.mxu0 %v3453
        %4381 = vmatprep.subr.bf16.mxu0 %v3442
        %4382 = vmatpush2.bf16.msra.mxu0 %v3441
        %4383 = vmatprep.subr.bf16.mxu0 %v3430
        %4384 = vmatpush2.bf16.msra.mxu0 %v3429
        %4385 = vmatprep.mubr.bf16.mxu0 %v1717
        %4386 = vmatmul.mubr.bf16.gmra.mxu0 %v1716
        %v4387 = vpop.f32.mrf.mxu0
        %v4388 = vadd.f32 %v2154, %v4387
        %v4389 = vpop.f32.mrf.mxu0
        %v4390 = vadd.f32 %v2158, %v4389
        %v4391 = vpop.f32.mrf.mxu0
        %v4392 = vadd.f32 %v2154, %v4391
        %v4393 = vpop.f32.mrf.mxu0
        %v4394 = vadd.f32 %v2158, %v4393
        %4395 = vdwg.mxu0
        %4396 = vmatprep.subr.bf16.mxu0 %v3610
        %4397 = vmatpush1.bf16.msra.mxu0 %v3609
        %4398 = vmatprep.subr.bf16.mxu0 %v3598
        %4399 = vmatpush1.bf16.msra.mxu0 %v3597
        %4400 = vmatprep.subr.bf16.mxu0 %v3586
        %4401 = vmatpush1.bf16.msra.mxu0 %v3585
        %4402 = vmatprep.subr.bf16.mxu0 %v3574
        %4403 = vmatpush1.bf16.msra.mxu0 %v3573
        %4404 = vmatprep.subr.bf16.mxu0 %v3562
        %4405 = vmatpush1.bf16.msra.mxu0 %v3561
        %4406 = vmatprep.subr.bf16.mxu0 %v3550
        %4407 = vmatpush1.bf16.msra.mxu0 %v3549
        %4408 = vmatprep.subr.bf16.mxu0 %v3538
        %4409 = vmatpush1.bf16.msra.mxu0 %v3537
        %4410 = vmatprep.subr.bf16.mxu0 %v3526
        %4411 = vmatpush1.bf16.msra.mxu0 %v3525
        %4412 = vmatprep.subr.bf16.mxu0 %v3706
        %4413 = vmatpush2.bf16.msra.mxu0 %v3705
        %4414 = vmatprep.subr.bf16.mxu0 %v3694
        %4415 = vmatpush2.bf16.msra.mxu0 %v3693
        %4416 = vmatprep.subr.bf16.mxu0 %v3682
        %4417 = vmatpush2.bf16.msra.mxu0 %v3681
        %4418 = vmatprep.subr.bf16.mxu0 %v3670
        %4419 = vmatpush2.bf16.msra.mxu0 %v3669
        %4420 = vmatprep.subr.bf16.mxu0 %v3658
        %4421 = vmatpush2.bf16.msra.mxu0 %v3657
        %4422 = vmatprep.subr.bf16.mxu0 %v3646
        %4423 = vmatpush2.bf16.msra.mxu0 %v3645
        %4424 = vmatprep.subr.bf16.mxu0 %v3634
        %4425 = vmatpush2.bf16.msra.mxu0 %v3633
        %4426 = vmatprep.subr.bf16.mxu0 %v3622
        %4427 = vmatpush2.bf16.msra.mxu0 %v3621
        %4428 = vmatprep.mubr.bf16.mxu0 %v1719
        %4429 = vmatmul.mubr.bf16.gmra.mxu0 %v1718
        %v4430 = vpop.f32.mrf.mxu0
        %v4431 = vadd.f32 %v4388, %v4430
        %v4432 = vpop.f32.mrf.mxu0
        %v4433 = vadd.f32 %v4390, %v4432
        %v4434 = vpop.f32.mrf.mxu0
        %v4435 = vadd.f32 %v4392, %v4434
        %v4436 = vpop.f32.mrf.mxu0
        %v4437 = vadd.f32 %v4394, %v4436
        %4438 = vdwg.mxu0
        %4439 = vmatprep.subr.bf16.mxu0 %v3420
        %4440 = vmatpush1.bf16.msra.mxu0 %v3419
        %4441 = vmatprep.subr.bf16.mxu0 %v3408
        %4442 = vmatpush1.bf16.msra.mxu0 %v3407
        %4443 = vmatprep.subr.bf16.mxu0 %v3396
        %4444 = vmatpush1.bf16.msra.mxu0 %v3395
        %4445 = vmatprep.subr.bf16.mxu0 %v3384
        %4446 = vmatpush1.bf16.msra.mxu0 %v3383
        %4447 = vmatprep.subr.bf16.mxu0 %v3372
        %4448 = vmatpush1.bf16.msra.mxu0 %v3371
        %4449 = vmatprep.subr.bf16.mxu0 %v3360
        %4450 = vmatpush1.bf16.msra.mxu0 %v3359
        %4451 = vmatprep.subr.bf16.mxu0 %v3348
        %4452 = vmatpush1.bf16.msra.mxu0 %v3347
        %4453 = vmatprep.subr.bf16.mxu0 %v3336
        %4454 = vmatpush1.bf16.msra.mxu0 %v3335
        %4455 = vmatprep.subr.bf16.mxu0 %v3516
        %4456 = vmatpush2.bf16.msra.mxu0 %v3515
        %4457 = vmatprep.subr.bf16.mxu0 %v3504
        %4458 = vmatpush2.bf16.msra.mxu0 %v3503
        %4459 = vmatprep.subr.bf16.mxu0 %v3492
        %4460 = vmatpush2.bf16.msra.mxu0 %v3491
        %4461 = vmatprep.subr.bf16.mxu0 %v3480
        %4462 = vmatpush2.bf16.msra.mxu0 %v3479
        %4463 = vmatprep.subr.bf16.mxu0 %v3468
        %4464 = vmatpush2.bf16.msra.mxu0 %v3467
        %4465 = vmatprep.subr.bf16.mxu0 %v3456
        %4466 = vmatpush2.bf16.msra.mxu0 %v3455
        %4467 = vmatprep.subr.bf16.mxu0 %v3444
        %4468 = vmatpush2.bf16.msra.mxu0 %v3443
        %4469 = vmatprep.subr.bf16.mxu0 %v3432
        %4470 = vmatpush2.bf16.msra.mxu0 %v3431
        %4471 = vmatprep.mubr.bf16.mxu0 %v1717
        %4472 = vmatmul.mubr.bf16.gmra.mxu0 %v1716
        %v4473 = vpop.f32.mrf.mxu0
        %v4474 = vadd.f32 %v2162, %v4473
        %v4475 = vpop.f32.mrf.mxu0
        %v4476 = vadd.f32 %v2166, %v4475
        %v4477 = vpop.f32.mrf.mxu0
        %v4478 = vadd.f32 %v2162, %v4477
        %v4479 = vpop.f32.mrf.mxu0
        %v4480 = vadd.f32 %v2166, %v4479
        %4481 = vdwg.mxu0
        %4482 = vmatprep.subr.bf16.mxu0 %v3612
        %4483 = vmatpush1.bf16.msra.mxu0 %v3611
        %4484 = vmatprep.subr.bf16.mxu0 %v3600
        %4485 = vmatpush1.bf16.msra.mxu0 %v3599
        %4486 = vmatprep.subr.bf16.mxu0 %v3588
        %4487 = vmatpush1.bf16.msra.mxu0 %v3587
        %4488 = vmatprep.subr.bf16.mxu0 %v3576
        %4489 = vmatpush1.bf16.msra.mxu0 %v3575
        %4490 = vmatprep.subr.bf16.mxu0 %v3564
        %4491 = vmatpush1.bf16.msra.mxu0 %v3563
        %4492 = vmatprep.subr.bf16.mxu0 %v3552
        %4493 = vmatpush1.bf16.msra.mxu0 %v3551
        %4494 = vmatprep.subr.bf16.mxu0 %v3540
        %4495 = vmatpush1.bf16.msra.mxu0 %v3539
        %4496 = vmatprep.subr.bf16.mxu0 %v3528
        %4497 = vmatpush1.bf16.msra.mxu0 %v3527
        %4498 = vmatprep.subr.bf16.mxu0 %v3708
        %4499 = vmatpush2.bf16.msra.mxu0 %v3707
        %4500 = vmatprep.subr.bf16.mxu0 %v3696
        %4501 = vmatpush2.bf16.msra.mxu0 %v3695
        %4502 = vmatprep.subr.bf16.mxu0 %v3684
        %4503 = vmatpush2.bf16.msra.mxu0 %v3683
        %4504 = vmatprep.subr.bf16.mxu0 %v3672
        %4505 = vmatpush2.bf16.msra.mxu0 %v3671
        %4506 = vmatprep.subr.bf16.mxu0 %v3660
        %4507 = vmatpush2.bf16.msra.mxu0 %v3659
        %4508 = vmatprep.subr.bf16.mxu0 %v3648
        %4509 = vmatpush2.bf16.msra.mxu0 %v3647
        %4510 = vmatprep.subr.bf16.mxu0 %v3636
        %4511 = vmatpush2.bf16.msra.mxu0 %v3635
        %4512 = vmatprep.subr.bf16.mxu0 %v3624
        %4513 = vmatpush2.bf16.msra.mxu0 %v3623
        %4514 = vmatprep.mubr.bf16.mxu0 %v1719
        %4515 = vmatmul.mubr.bf16.gmra.mxu0 %v1718
        %v4516 = vpop.f32.mrf.mxu0
        %v4517 = vadd.f32 %v4474, %v4516
        %v4518 = vpop.f32.mrf.mxu0
        %v4519 = vadd.f32 %v4476, %v4518
        %v4520 = vpop.f32.mrf.mxu0
        %v4521 = vadd.f32 %v4478, %v4520
        %v4522 = vpop.f32.mrf.mxu0
        %v4523 = vadd.f32 %v4480, %v4522
        %4524 = vdwg.mxu0
        %4525 = vmatprep.subr.bf16.mxu0 %v3422
        %4526 = vmatpush1.bf16.msra.mxu0 %v3421
        %4527 = vmatprep.subr.bf16.mxu0 %v3410
        %4528 = vmatpush1.bf16.msra.mxu0 %v3409
        %4529 = vmatprep.subr.bf16.mxu0 %v3398
        %4530 = vmatpush1.bf16.msra.mxu0 %v3397
        %4531 = vmatprep.subr.bf16.mxu0 %v3386
        %4532 = vmatpush1.bf16.msra.mxu0 %v3385
        %4533 = vmatprep.subr.bf16.mxu0 %v3374
        %4534 = vmatpush1.bf16.msra.mxu0 %v3373
        %4535 = vmatprep.subr.bf16.mxu0 %v3362
        %4536 = vmatpush1.bf16.msra.mxu0 %v3361
        %4537 = vmatprep.subr.bf16.mxu0 %v3350
        %4538 = vmatpush1.bf16.msra.mxu0 %v3349
        %4539 = vmatprep.subr.bf16.mxu0 %v3338
        %4540 = vmatpush1.bf16.msra.mxu0 %v3337
        %4541 = vmatprep.subr.bf16.mxu0 %v3518
        %4542 = vmatpush2.bf16.msra.mxu0 %v3517
        %4543 = vmatprep.subr.bf16.mxu0 %v3506
        %4544 = vmatpush2.bf16.msra.mxu0 %v3505
        %4545 = vmatprep.subr.bf16.mxu0 %v3494
        %4546 = vmatpush2.bf16.msra.mxu0 %v3493
        %4547 = vmatprep.subr.bf16.mxu0 %v3482
        %4548 = vmatpush2.bf16.msra.mxu0 %v3481
        %4549 = vmatprep.subr.bf16.mxu0 %v3470
        %4550 = vmatpush2.bf16.msra.mxu0 %v3469
        %4551 = vmatprep.subr.bf16.mxu0 %v3458
        %4552 = vmatpush2.bf16.msra.mxu0 %v3457
        %4553 = vmatprep.subr.bf16.mxu0 %v3446
        %4554 = vmatpush2.bf16.msra.mxu0 %v3445
        %4555 = vmatprep.subr.bf16.mxu0 %v3434
        %4556 = vmatpush2.bf16.msra.mxu0 %v3433
        %4557 = vmatprep.mubr.bf16.mxu0 %v1717
        %4558 = vmatmul.mubr.bf16.gmra.mxu0 %v1716
        %v4559 = vpop.f32.mrf.mxu0
        %v4560 = vadd.f32 %v2170, %v4559
        %v4561 = vpop.f32.mrf.mxu0
        %v4562 = vadd.f32 %v2174, %v4561
        %v4563 = vpop.f32.mrf.mxu0
        %v4564 = vadd.f32 %v2170, %v4563
        %v4565 = vpop.f32.mrf.mxu0
        %v4566 = vadd.f32 %v2174, %v4565
        %4567 = vdwg.mxu0
        %4568 = vmatprep.subr.bf16.mxu0 %v3614
        %4569 = vmatpush1.bf16.msra.mxu0 %v3613
        %4570 = vmatprep.subr.bf16.mxu0 %v3602
        %4571 = vmatpush1.bf16.msra.mxu0 %v3601
        %4572 = vmatprep.subr.bf16.mxu0 %v3590
        %4573 = vmatpush1.bf16.msra.mxu0 %v3589
        %4574 = vmatprep.subr.bf16.mxu0 %v3578
        %4575 = vmatpush1.bf16.msra.mxu0 %v3577
        %4576 = vmatprep.subr.bf16.mxu0 %v3566
        %4577 = vmatpush1.bf16.msra.mxu0 %v3565
        %4578 = vmatprep.subr.bf16.mxu0 %v3554
        %4579 = vmatpush1.bf16.msra.mxu0 %v3553
        %4580 = vmatprep.subr.bf16.mxu0 %v3542
        %4581 = vmatpush1.bf16.msra.mxu0 %v3541
        %4582 = vmatprep.subr.bf16.mxu0 %v3530
        %4583 = vmatpush1.bf16.msra.mxu0 %v3529
        %4584 = vmatprep.subr.bf16.mxu0 %v3710
        %4585 = vmatpush2.bf16.msra.mxu0 %v3709
        %4586 = vmatprep.subr.bf16.mxu0 %v3698
        %4587 = vmatpush2.bf16.msra.mxu0 %v3697
        %4588 = vmatprep.subr.bf16.mxu0 %v3686
        %4589 = vmatpush2.bf16.msra.mxu0 %v3685
        %4590 = vmatprep.subr.bf16.mxu0 %v3674
        %4591 = vmatpush2.bf16.msra.mxu0 %v3673
        %4592 = vmatprep.subr.bf16.mxu0 %v3662
        %4593 = vmatpush2.bf16.msra.mxu0 %v3661
        %4594 = vmatprep.subr.bf16.mxu0 %v3650
        %4595 = vmatpush2.bf16.msra.mxu0 %v3649
        %4596 = vmatprep.subr.bf16.mxu0 %v3638
        %4597 = vmatpush2.bf16.msra.mxu0 %v3637
        %4598 = vmatprep.subr.bf16.mxu0 %v3626
        %4599 = vmatpush2.bf16.msra.mxu0 %v3625
        %4600 = vmatprep.mubr.bf16.mxu0 %v1719
        %4601 = vmatmul.mubr.bf16.gmra.mxu0 %v1718
        %v4602 = vpop.f32.mrf.mxu0
        %v4603 = vadd.f32 %v4560, %v4602
        %v4604 = vpop.f32.mrf.mxu0
        %v4605 = vadd.f32 %v4562, %v4604
        %v4606 = vpop.f32.mrf.mxu0
        %v4607 = vadd.f32 %v4564, %v4606
        %v4608 = vpop.f32.mrf.mxu0
        %v4609 = vadd.f32 %v4566, %v4608
        %4610 = vdwg.mxu0
        %v4611 = vpack.c.bf16 %v4177, %v4173
        %v4612 = vpack.c.bf16 %v4179, %v4175
        %v4613 = vpack.c.bf16 %v4263, %v4259
        %v4614 = vpack.c.bf16 %v4265, %v4261
        %v4615 = vpack.c.bf16 %v4349, %v4345
        %v4616 = vpack.c.bf16 %v4351, %v4347
        %v4617 = vpack.c.bf16 %v4435, %v4431
        %v4618 = vpack.c.bf16 %v4437, %v4433
        %v4619 = vpack.c.bf16 %v4521, %v4517
        %v4620 = vpack.c.bf16 %v4523, %v4519
        %v4621 = vpack.c.bf16 %v4607, %v4603
        %v4622 = vpack.c.bf16 %v4609, %v4605
        %4623 = vmatprep.subr.bf16.mxu0 0
        %4624 = vmatpush1.bf16.xpose.msra.mxu0 0
        %4625 = vmatprep.subr.bf16.mxu0 0
        %4626 = vmatpush1.bf16.xpose.msra.mxu0 0
        %4627 = vmatprep.subr.bf16.mxu0 0
        %4628 = vmatpush1.bf16.xpose.msra.mxu0 0
        %4629 = vmatprep.subr.bf16.mxu0 0
        %4630 = vmatpush1.bf16.xpose.msra.mxu0 0
        %4631 = vmatprep.subr.bf16.mxu0 0
        %4632 = vmatpush1.bf16.xpose.msra.mxu0 0
        %4633 = vmatprep.subr.bf16.mxu0 0
        %4634 = vmatpush1.bf16.xpose.msra.mxu0 0
        %4635 = vmatprep.subr.bf16.mxu0 0
        %4636 = vmatpush1.bf16.xpose.msra.mxu0 0
        %4637 = vmatprep.subr.bf16.mxu0 0
        %4638 = vmatpush1.bf16.xpose.msra.mxu0 %v4615
        %4639 = vmatprep.subr.bf16.mxu0 0
        %4640 = vmatpush2.bf16.xpose.msra.mxu0 0
        %4641 = vmatprep.subr.bf16.mxu0 0
        %4642 = vmatpush2.bf16.xpose.msra.mxu0 0
        %4643 = vmatprep.subr.bf16.mxu0 0
        %4644 = vmatpush2.bf16.xpose.msra.mxu0 0
        %4645 = vmatprep.subr.bf16.mxu0 0
        %4646 = vmatpush2.bf16.xpose.msra.mxu0 0
        %4647 = vmatprep.subr.bf16.mxu0 0
        %4648 = vmatpush2.bf16.xpose.msra.mxu0 0
        %4649 = vmatprep.subr.bf16.mxu0 0
        %4650 = vmatpush2.bf16.xpose.msra.mxu0 0
        %4651 = vmatprep.subr.bf16.mxu0 0
        %4652 = vmatpush2.bf16.xpose.msra.mxu0 0
        %4653 = vmatprep.subr.bf16.mxu0 0
        %4654 = vmatpush2.bf16.xpose.msra.mxu0 0
        %4655 = vmatprep.mubr.bf16.mxu0 0
        %4656 = vmatmul.mubr.bf16.gmra.mxu0 %v4611
        %v4657 = vpop.f32.mrf.mxu0
        %v4658 = vadd.f32 %v1742, %v4657
        %v4659 = vpop.f32.mrf.mxu0
        %v4660 = vpop.f32.mrf.mxu0
        %v4661 = vadd.f32 %v1742, %v4660
        %v4662 = vpop.f32.mrf.mxu0
        %4663 = vdwg.mxu0
        %vm4664 = vcmask 130048
        %v4665 = vsel %vm4664, %v4658, -inf
        %4666 = vmax.xlane.f32.xlu0 %v4665
        %v4667 = vpop.xlane.xlu0 %4666
        %v4668 = vsel %vm4664, %v4661, -inf
        %4669 = vmax.xlane.f32.xlu0 %v4668
        %v4670 = vpop.xlane.xlu0 %4669
        %v4671 = vsub.f32 %v4658, %v4667
        %v4672 = vsub.f32 %v4661, %v4670
        %v4673 = vmul.f32 %v4671, 1.442695
        %v4674 = vpow.pop %v4673
        %v4675 = vmul.f32 %v4672, 1.442695
        %v4676 = vpow.pop %v4675
        %v4677 = vsel %vm4664, %v4674, 0.0
        %4678 = vadd.xlane.f32.xlu0 %v4677
        %v4679 = vpop.xlane.xlu0 %4678
        %v4680 = vsel %vm4664, %v4676, 0.0
        %4681 = vadd.xlane.f32.xlu0 %v4680
        %v4682 = vpop.xlane.xlu0 %4681
        %v4683 = vrcp.pop %v4679
        %v4684 = vrcp.pop %v4682
        %v4685 = vmul.f32 %v4674, %v4683
        %v4686 = vmul.f32 %v4676, %v4684
        %v4687 = vpack.c.bf16 %v4686, %v4685
        %v4689 = vsel %vm4664, %v4687, 0
        %4691 = vmatprep.subr.bf16.mxu0 0
        %4692 = vmatpush1.bf16.msra.mxu0 0
        %4693 = vmatprep.subr.bf16.mxu0 0
        %4694 = vmatpush1.bf16.msra.mxu0 0
        %4695 = vmatprep.subr.bf16.mxu0 0
        %4696 = vmatpush1.bf16.msra.mxu0 0
        %4697 = vmatprep.subr.bf16.mxu0 0
        %4698 = vmatpush1.bf16.msra.mxu0 0
        %4699 = vmatprep.subr.bf16.mxu0 0
        %4700 = vmatpush1.bf16.msra.mxu0 0
        %4701 = vmatprep.subr.bf16.mxu0 0
        %4702 = vmatpush1.bf16.msra.mxu0 0
        %4703 = vmatprep.subr.bf16.mxu0 0
        %4704 = vmatpush1.bf16.msra.mxu0 0
        %4705 = vmatprep.subr.bf16.mxu0 0
        %4706 = vmatpush1.bf16.msra.mxu0 %v4619
        %4707 = vmatprep.subr.bf16.mxu0 0
        %4708 = vmatpush2.bf16.msra.mxu0 0
        %4709 = vmatprep.subr.bf16.mxu0 0
        %4710 = vmatpush2.bf16.msra.mxu0 0
        %4711 = vmatprep.subr.bf16.mxu0 0
        %4712 = vmatpush2.bf16.msra.mxu0 0
        %4713 = vmatprep.subr.bf16.mxu0 0
        %4714 = vmatpush2.bf16.msra.mxu0 0
        %4715 = vmatprep.subr.bf16.mxu0 0
        %4716 = vmatpush2.bf16.msra.mxu0 0
        %4717 = vmatprep.subr.bf16.mxu0 0
        %4718 = vmatpush2.bf16.msra.mxu0 0
        %4719 = vmatprep.subr.bf16.mxu0 0
        %4720 = vmatpush2.bf16.msra.mxu0 0
        %4721 = vmatprep.subr.bf16.mxu0 0
        %4722 = vmatpush2.bf16.msra.mxu0 0
        %4723 = vmatprep.mubr.bf16.mxu0 0
        %4724 = vmatmul.mubr.bf16.gmra.mxu0 %v4689
        %v4725 = vpop.f32.mrf.mxu0
        %v4726 = vadd.f32 0.0, %v4725
        %v4727 = vpop.f32.mrf.mxu0
        %v4728 = vpop.f32.mrf.mxu0
        %v4729 = vadd.f32 0.0, %v4728
        %v4730 = vpop.f32.mrf.mxu0
        %4731 = vdwg.mxu0
        %4732 = vmatprep.subr.bf16.mxu0 0
        %4733 = vmatpush1.bf16.xpose.msra.mxu0 0
        %4734 = vmatprep.subr.bf16.mxu0 0
        %4735 = vmatpush1.bf16.xpose.msra.mxu0 0
        %4736 = vmatprep.subr.bf16.mxu0 0
        %4737 = vmatpush1.bf16.xpose.msra.mxu0 0
        %4738 = vmatprep.subr.bf16.mxu0 0
        %4739 = vmatpush1.bf16.xpose.msra.mxu0 0
        %4740 = vmatprep.subr.bf16.mxu0 0
        %4741 = vmatpush1.bf16.xpose.msra.mxu0 0
        %4742 = vmatprep.subr.bf16.mxu0 0
        %4743 = vmatpush1.bf16.xpose.msra.mxu0 0
        %4744 = vmatprep.subr.bf16.mxu0 0
        %4745 = vmatpush1.bf16.xpose.msra.mxu0 0
        %4746 = vmatprep.subr.bf16.mxu0 0
        %4747 = vmatpush1.bf16.xpose.msra.mxu0 %v4616
        %4748 = vmatprep.subr.bf16.mxu0 0
        %4749 = vmatpush2.bf16.xpose.msra.mxu0 0
        %4750 = vmatprep.subr.bf16.mxu0 0
        %4751 = vmatpush2.bf16.xpose.msra.mxu0 0
        %4752 = vmatprep.subr.bf16.mxu0 0
        %4753 = vmatpush2.bf16.xpose.msra.mxu0 0
        %4754 = vmatprep.subr.bf16.mxu0 0
        %4755 = vmatpush2.bf16.xpose.msra.mxu0 0
        %4756 = vmatprep.subr.bf16.mxu0 0
        %4757 = vmatpush2.bf16.xpose.msra.mxu0 0
        %4758 = vmatprep.subr.bf16.mxu0 0
        %4759 = vmatpush2.bf16.xpose.msra.mxu0 0
        %4760 = vmatprep.subr.bf16.mxu0 0
        %4761 = vmatpush2.bf16.xpose.msra.mxu0 0
        %4762 = vmatprep.subr.bf16.mxu0 0
        %4763 = vmatpush2.bf16.xpose.msra.mxu0 0
        %4764 = vmatprep.mubr.bf16.mxu0 0
        %4765 = vmatmul.mubr.bf16.gmra.mxu0 %v4612
        %v4766 = vpop.f32.mrf.mxu0
        %v4767 = vadd.f32 %v1742, %v4766
        %v4768 = vpop.f32.mrf.mxu0
        %v4769 = vpop.f32.mrf.mxu0
        %v4770 = vadd.f32 %v1742, %v4769
        %v4771 = vpop.f32.mrf.mxu0
        %4772 = vdwg.mxu0
        %v4773 = vsel %vm4664, %v4767, -inf
        %4774 = vmax.xlane.f32.xlu0 %v4773
        %v4775 = vpop.xlane.xlu0 %4774
        %v4776 = vsel %vm4664, %v4770, -inf
        %4777 = vmax.xlane.f32.xlu0 %v4776
        %v4778 = vpop.xlane.xlu0 %4777
        %v4779 = vsub.f32 %v4767, %v4775
        %v4780 = vsub.f32 %v4770, %v4778
        %v4781 = vmul.f32 %v4779, 1.442695
        %v4782 = vpow.pop %v4781
        %v4783 = vmul.f32 %v4780, 1.442695
        %v4784 = vpow.pop %v4783
        %v4785 = vsel %vm4664, %v4782, 0.0
        %4786 = vadd.xlane.f32.xlu0 %v4785
        %v4787 = vpop.xlane.xlu0 %4786
        %v4788 = vsel %vm4664, %v4784, 0.0
        %4789 = vadd.xlane.f32.xlu0 %v4788
        %v4790 = vpop.xlane.xlu0 %4789
        %v4791 = vrcp.pop %v4787
        %v4792 = vrcp.pop %v4790
        %v4793 = vmul.f32 %v4782, %v4791
        %v4794 = vmul.f32 %v4784, %v4792
        %v4795 = vpack.c.bf16 %v4794, %v4793
        %v4797 = vsel %vm4664, %v4795, 0
        %4799 = vmatprep.subr.bf16.mxu0 0
        %4800 = vmatpush1.bf16.msra.mxu0 0
        %4801 = vmatprep.subr.bf16.mxu0 0
        %4802 = vmatpush1.bf16.msra.mxu0 0
        %4803 = vmatprep.subr.bf16.mxu0 0
        %4804 = vmatpush1.bf16.msra.mxu0 0
        %4805 = vmatprep.subr.bf16.mxu0 0
        %4806 = vmatpush1.bf16.msra.mxu0 0
        %4807 = vmatprep.subr.bf16.mxu0 0
        %4808 = vmatpush1.bf16.msra.mxu0 0
        %4809 = vmatprep.subr.bf16.mxu0 0
        %4810 = vmatpush1.bf16.msra.mxu0 0
        %4811 = vmatprep.subr.bf16.mxu0 0
        %4812 = vmatpush1.bf16.msra.mxu0 0
        %4813 = vmatprep.subr.bf16.mxu0 0
        %4814 = vmatpush1.bf16.msra.mxu0 %v4620
        %4815 = vmatprep.subr.bf16.mxu0 0
        %4816 = vmatpush2.bf16.msra.mxu0 0
        %4817 = vmatprep.subr.bf16.mxu0 0
        %4818 = vmatpush2.bf16.msra.mxu0 0
        %4819 = vmatprep.subr.bf16.mxu0 0
        %4820 = vmatpush2.bf16.msra.mxu0 0
        %4821 = vmatprep.subr.bf16.mxu0 0
        %4822 = vmatpush2.bf16.msra.mxu0 0
        %4823 = vmatprep.subr.bf16.mxu0 0
        %4824 = vmatpush2.bf16.msra.mxu0 0
        %4825 = vmatprep.subr.bf16.mxu0 0
        %4826 = vmatpush2.bf16.msra.mxu0 0
        %4827 = vmatprep.subr.bf16.mxu0 0
        %4828 = vmatpush2.bf16.msra.mxu0 0
        %4829 = vmatprep.subr.bf16.mxu0 0
        %4830 = vmatpush2.bf16.msra.mxu0 0
        %4831 = vmatprep.mubr.bf16.mxu0 0
        %4832 = vmatmul.mubr.bf16.gmra.mxu0 %v4797
        %v4833 = vpop.f32.mrf.mxu0
        %v4834 = vadd.f32 0.0, %v4833
        %v4835 = vpop.f32.mrf.mxu0
        %v4836 = vpop.f32.mrf.mxu0
        %v4837 = vadd.f32 0.0, %v4836
        %v4838 = vpop.f32.mrf.mxu0
        %4839 = vdwg.mxu0
        %4840 = vmatprep.subr.bf16.mxu0 0
        %4841 = vmatpush1.bf16.xpose.msra.mxu0 0
        %4842 = vmatprep.subr.bf16.mxu0 0
        %4843 = vmatpush1.bf16.xpose.msra.mxu0 0
        %4844 = vmatprep.subr.bf16.mxu0 0
        %4845 = vmatpush1.bf16.xpose.msra.mxu0 0
        %4846 = vmatprep.subr.bf16.mxu0 0
        %4847 = vmatpush1.bf16.xpose.msra.mxu0 0
        %4848 = vmatprep.subr.bf16.mxu0 0
        %4849 = vmatpush1.bf16.xpose.msra.mxu0 0
        %4850 = vmatprep.subr.bf16.mxu0 0
        %4851 = vmatpush1.bf16.xpose.msra.mxu0 0
        %4852 = vmatprep.subr.bf16.mxu0 0
        %4853 = vmatpush1.bf16.xpose.msra.mxu0 0
        %4854 = vmatprep.subr.bf16.mxu0 0
        %4855 = vmatpush1.bf16.xpose.msra.mxu0 %v4617
        %4856 = vmatprep.subr.bf16.mxu0 0
        %4857 = vmatpush2.bf16.xpose.msra.mxu0 0
        %4858 = vmatprep.subr.bf16.mxu0 0
        %4859 = vmatpush2.bf16.xpose.msra.mxu0 0
        %4860 = vmatprep.subr.bf16.mxu0 0
        %4861 = vmatpush2.bf16.xpose.msra.mxu0 0
        %4862 = vmatprep.subr.bf16.mxu0 0
        %4863 = vmatpush2.bf16.xpose.msra.mxu0 0
        %4864 = vmatprep.subr.bf16.mxu0 0
        %4865 = vmatpush2.bf16.xpose.msra.mxu0 0
        %4866 = vmatprep.subr.bf16.mxu0 0
        %4867 = vmatpush2.bf16.xpose.msra.mxu0 0
        %4868 = vmatprep.subr.bf16.mxu0 0
        %4869 = vmatpush2.bf16.xpose.msra.mxu0 0
        %4870 = vmatprep.subr.bf16.mxu0 0
        %4871 = vmatpush2.bf16.xpose.msra.mxu0 0
        %4872 = vmatprep.mubr.bf16.mxu0 0
        %4873 = vmatmul.mubr.bf16.gmra.mxu0 %v4613
        %v4874 = vpop.f32.mrf.mxu0
        %v4875 = vadd.f32 %v1742, %v4874
        %v4876 = vpop.f32.mrf.mxu0
        %v4877 = vpop.f32.mrf.mxu0
        %v4878 = vadd.f32 %v1742, %v4877
        %v4879 = vpop.f32.mrf.mxu0
        %4880 = vdwg.mxu0
        %v4881 = vsel %vm4664, %v4875, -inf
        %4882 = vmax.xlane.f32.xlu0 %v4881
        %v4883 = vpop.xlane.xlu0 %4882
        %v4884 = vsel %vm4664, %v4878, -inf
        %4885 = vmax.xlane.f32.xlu0 %v4884
        %v4886 = vpop.xlane.xlu0 %4885
        %v4887 = vsub.f32 %v4875, %v4883
        %v4888 = vsub.f32 %v4878, %v4886
        %v4889 = vmul.f32 %v4887, 1.442695
        %v4890 = vpow.pop %v4889
        %v4891 = vmul.f32 %v4888, 1.442695
        %v4892 = vpow.pop %v4891
        %v4893 = vsel %vm4664, %v4890, 0.0
        %4894 = vadd.xlane.f32.xlu0 %v4893
        %v4895 = vpop.xlane.xlu0 %4894
        %v4896 = vsel %vm4664, %v4892, 0.0
        %4897 = vadd.xlane.f32.xlu0 %v4896
        %v4898 = vpop.xlane.xlu0 %4897
        %v4899 = vrcp.pop %v4895
        %v4900 = vrcp.pop %v4898
        %v4901 = vmul.f32 %v4890, %v4899
        %v4902 = vmul.f32 %v4892, %v4900
        %v4903 = vpack.c.bf16 %v4902, %v4901
        %v4905 = vsel %vm4664, %v4903, 0
        %4907 = vmatprep.subr.bf16.mxu0 0
        %4908 = vmatpush1.bf16.msra.mxu0 0
        %4909 = vmatprep.subr.bf16.mxu0 0
        %4910 = vmatpush1.bf16.msra.mxu0 0
        %4911 = vmatprep.subr.bf16.mxu0 0
        %4912 = vmatpush1.bf16.msra.mxu0 0
        %4913 = vmatprep.subr.bf16.mxu0 0
        %4914 = vmatpush1.bf16.msra.mxu0 0
        %4915 = vmatprep.subr.bf16.mxu0 0
        %4916 = vmatpush1.bf16.msra.mxu0 0
        %4917 = vmatprep.subr.bf16.mxu0 0
        %4918 = vmatpush1.bf16.msra.mxu0 0
        %4919 = vmatprep.subr.bf16.mxu0 0
        %4920 = vmatpush1.bf16.msra.mxu0 0
        %4921 = vmatprep.subr.bf16.mxu0 0
        %4922 = vmatpush1.bf16.msra.mxu0 %v4621
        %4923 = vmatprep.subr.bf16.mxu0 0
        %4924 = vmatpush2.bf16.msra.mxu0 0
        %4925 = vmatprep.subr.bf16.mxu0 0
        %4926 = vmatpush2.bf16.msra.mxu0 0
        %4927 = vmatprep.subr.bf16.mxu0 0
        %4928 = vmatpush2.bf16.msra.mxu0 0
        %4929 = vmatprep.subr.bf16.mxu0 0
        %4930 = vmatpush2.bf16.msra.mxu0 0
        %4931 = vmatprep.subr.bf16.mxu0 0
        %4932 = vmatpush2.bf16.msra.mxu0 0
        %4933 = vmatprep.subr.bf16.mxu0 0
        %4934 = vmatpush2.bf16.msra.mxu0 0
        %4935 = vmatprep.subr.bf16.mxu0 0
        %4936 = vmatpush2.bf16.msra.mxu0 0
        %4937 = vmatprep.subr.bf16.mxu0 0
        %4938 = vmatpush2.bf16.msra.mxu0 0
        %4939 = vmatprep.mubr.bf16.mxu0 0
        %4940 = vmatmul.mubr.bf16.gmra.mxu0 %v4905
        %v4941 = vpop.f32.mrf.mxu0
        %v4942 = vadd.f32 0.0, %v4941
        %v4943 = vpop.f32.mrf.mxu0
        %v4944 = vpop.f32.mrf.mxu0
        %v4945 = vadd.f32 0.0, %v4944
        %v4946 = vpop.f32.mrf.mxu0
        %4947 = vdwg.mxu0
        %4948 = vmatprep.subr.bf16.mxu0 0
        %4949 = vmatpush1.bf16.xpose.msra.mxu0 0
        %4950 = vmatprep.subr.bf16.mxu0 0
        %4951 = vmatpush1.bf16.xpose.msra.mxu0 0
        %4952 = vmatprep.subr.bf16.mxu0 0
        %4953 = vmatpush1.bf16.xpose.msra.mxu0 0
        %4954 = vmatprep.subr.bf16.mxu0 0
        %4955 = vmatpush1.bf16.xpose.msra.mxu0 0
        %4956 = vmatprep.subr.bf16.mxu0 0
        %4957 = vmatpush1.bf16.xpose.msra.mxu0 0
        %4958 = vmatprep.subr.bf16.mxu0 0
        %4959 = vmatpush1.bf16.xpose.msra.mxu0 0
        %4960 = vmatprep.subr.bf16.mxu0 0
        %4961 = vmatpush1.bf16.xpose.msra.mxu0 0
        %4962 = vmatprep.subr.bf16.mxu0 0
        %4963 = vmatpush1.bf16.xpose.msra.mxu0 %v4618
        %4964 = vmatprep.subr.bf16.mxu0 0
        %4965 = vmatpush2.bf16.xpose.msra.mxu0 0
        %4966 = vmatprep.subr.bf16.mxu0 0
        %4967 = vmatpush2.bf16.xpose.msra.mxu0 0
        %4968 = vmatprep.subr.bf16.mxu0 0
        %4969 = vmatpush2.bf16.xpose.msra.mxu0 0
        %4970 = vmatprep.subr.bf16.mxu0 0
        %4971 = vmatpush2.bf16.xpose.msra.mxu0 0
        %4972 = vmatprep.subr.bf16.mxu0 0
        %4973 = vmatpush2.bf16.xpose.msra.mxu0 0
        %4974 = vmatprep.subr.bf16.mxu0 0
        %4975 = vmatpush2.bf16.xpose.msra.mxu0 0
        %4976 = vmatprep.subr.bf16.mxu0 0
        %4977 = vmatpush2.bf16.xpose.msra.mxu0 0
        %4978 = vmatprep.subr.bf16.mxu0 0
        %4979 = vmatpush2.bf16.xpose.msra.mxu0 0
        %4980 = vmatprep.mubr.bf16.mxu0 0
        %4981 = vmatmul.mubr.bf16.gmra.mxu0 %v4614
        %v4982 = vpop.f32.mrf.mxu0
        %v4983 = vadd.f32 %v1742, %v4982
        %v4984 = vpop.f32.mrf.mxu0
        %v4985 = vpop.f32.mrf.mxu0
        %v4986 = vadd.f32 %v1742, %v4985
        %v4987 = vpop.f32.mrf.mxu0
        %4988 = vdwg.mxu0
        %v4989 = vsel %vm4664, %v4983, -inf
        %4990 = vmax.xlane.f32.xlu0 %v4989
        %v4991 = vpop.xlane.xlu0 %4990
        %v4992 = vsel %vm4664, %v4986, -inf
        %4993 = vmax.xlane.f32.xlu0 %v4992
        %v4994 = vpop.xlane.xlu0 %4993
        %v4995 = vsub.f32 %v4983, %v4991
        %v4996 = vsub.f32 %v4986, %v4994
        %v4997 = vmul.f32 %v4995, 1.442695
        %v4998 = vpow.pop %v4997
        %v4999 = vmul.f32 %v4996, 1.442695
        %v5000 = vpow.pop %v4999
        %v5001 = vsel %vm4664, %v4998, 0.0
        %5002 = vadd.xlane.f32.xlu0 %v5001
        %v5003 = vpop.xlane.xlu0 %5002
        %v5004 = vsel %vm4664, %v5000, 0.0
        %5005 = vadd.xlane.f32.xlu0 %v5004
        %v5006 = vpop.xlane.xlu0 %5005
        %v5007 = vrcp.pop %v5003
        %v5008 = vrcp.pop %v5006
        %v5009 = vmul.f32 %v4998, %v5007
        %v5010 = vmul.f32 %v5000, %v5008
        %v5011 = vpack.c.bf16 %v5010, %v5009
        %v5013 = vsel %vm4664, %v5011, 0
        %5015 = vmatprep.subr.bf16.mxu0 0
        %5016 = vmatpush1.bf16.msra.mxu0 0
        %5017 = vmatprep.subr.bf16.mxu0 0
        %5018 = vmatpush1.bf16.msra.mxu0 0
        %5019 = vmatprep.subr.bf16.mxu0 0
        %5020 = vmatpush1.bf16.msra.mxu0 0
        %5021 = vmatprep.subr.bf16.mxu0 0
        %5022 = vmatpush1.bf16.msra.mxu0 0
        %5023 = vmatprep.subr.bf16.mxu0 0
        %5024 = vmatpush1.bf16.msra.mxu0 0
        %5025 = vmatprep.subr.bf16.mxu0 0
        %5026 = vmatpush1.bf16.msra.mxu0 0
        %5027 = vmatprep.subr.bf16.mxu0 0
        %5028 = vmatpush1.bf16.msra.mxu0 0
        %5029 = vmatprep.subr.bf16.mxu0 0
        %5030 = vmatpush1.bf16.msra.mxu0 %v4622
        %5031 = vmatprep.subr.bf16.mxu0 0
        %5032 = vmatpush2.bf16.msra.mxu0 0
        %5033 = vmatprep.subr.bf16.mxu0 0
        %5034 = vmatpush2.bf16.msra.mxu0 0
        %5035 = vmatprep.subr.bf16.mxu0 0
        %5036 = vmatpush2.bf16.msra.mxu0 0
        %5037 = vmatprep.subr.bf16.mxu0 0
        %5038 = vmatpush2.bf16.msra.mxu0 0
        %5039 = vmatprep.subr.bf16.mxu0 0
        %5040 = vmatpush2.bf16.msra.mxu0 0
        %5041 = vmatprep.subr.bf16.mxu0 0
        %5042 = vmatpush2.bf16.msra.mxu0 0
        %5043 = vmatprep.subr.bf16.mxu0 0
        %5044 = vmatpush2.bf16.msra.mxu0 0
        %5045 = vmatprep.subr.bf16.mxu0 0
        %5046 = vmatpush2.bf16.msra.mxu0 0
        %5047 = vmatprep.mubr.bf16.mxu0 0
        %5048 = vmatmul.mubr.bf16.gmra.mxu0 %v5013
        %v5049 = vpop.f32.mrf.mxu0
        %v5050 = vadd.f32 0.0, %v5049
        %v5051 = vpop.f32.mrf.mxu0
        %v5052 = vpop.f32.mrf.mxu0
        %v5053 = vadd.f32 0.0, %v5052
        %v5054 = vpop.f32.mrf.mxu0
        %5055 = vdwg.mxu0
        %v5056 = vpack.c.bf16 %v4729, %v4726
        %v5057 = vpack.c.bf16 %v4837, %v4834
        %v5058 = vpack.c.bf16 %v4945, %v4942
        %v5059 = vpack.c.bf16 %v5053, %v5050
        %v5060 = vld [vmem:[%s679] sm:$0xff]
        %v5061 = vld [vmem:[%s679 + $0x8] sm:$0xff]
        %v5062 = vld [vmem:[%s679 + $0x10] sm:$0xff]
        %v5063 = vld [vmem:[%s679 + $0x18] sm:$0xff]
        %v5064 = vld [vmem:[%s679 + $0x20] sm:$0xff]
        %v5065 = vld [vmem:[%s679 + $0x28] sm:$0xff]
        %v5066 = vld [vmem:[%s679 + $0x30] sm:$0xff]
        %v5067 = vld [vmem:[%s679 + $0x38] sm:$0xff]
        %v5068 = vld [vmem:[%s679 + $0x40] sm:$0xff]
        %v5069 = vld [vmem:[%s679 + $0x48] sm:$0xff]
        %v5070 = vld [vmem:[%s679 + $0x50] sm:$0xff]
        %v5071 = vld [vmem:[%s679 + $0x58] sm:$0xff]
        %v5072 = vld [vmem:[%s679 + $0x60] sm:$0xff]
        %v5073 = vld [vmem:[%s679 + $0x68] sm:$0xff]
        %v5074 = vld [vmem:[%s679 + $0x70] sm:$0xff]
        %v5075 = vld [vmem:[%s679 + $0x78] sm:$0xff]
        %v5076 = vld [vmem:[%s679 + $0x80] sm:$0xff]
        %v5077 = vld [vmem:[%s679 + $0x88] sm:$0xff]
        %v5078 = vld [vmem:[%s679 + $0x90] sm:$0xff]
        %v5079 = vld [vmem:[%s679 + $0x98] sm:$0xff]
        %v5080 = vld [vmem:[%s679 + $0xa0] sm:$0xff]
        %v5081 = vld [vmem:[%s679 + $0xa8] sm:$0xff]
        %v5082 = vld [vmem:[%s679 + $0xb0] sm:$0xff]
        %v5083 = vld [vmem:[%s679 + $0xb8] sm:$0xff]
        %v5084 = vld [vmem:[%s679 + $0xc0] sm:$0xff]
        %v5085 = vld [vmem:[%s679 + $0xc8] sm:$0xff]
        %v5086 = vld [vmem:[%s679 + $0xd0] sm:$0xff]
        %v5087 = vld [vmem:[%s679 + $0xd8] sm:$0xff]
        %v5088 = vld [vmem:[%s679 + $0xe0] sm:$0xff]
        %v5089 = vld [vmem:[%s679 + $0xe8] sm:$0xff]
        %v5090 = vld [vmem:[%s679 + $0xf0] sm:$0xff]
        %v5091 = vld [vmem:[%s679 + $0xf8] sm:$0xff]
        %v5092 = vld [vmem:[%s679 + $0x100] sm:$0xff]
        %v5093 = vld [vmem:[%s679 + $0x108] sm:$0xff]
        %v5094 = vld [vmem:[%s679 + $0x110] sm:$0xff]
        %v5095 = vld [vmem:[%s679 + $0x118] sm:$0xff]
        %v5096 = vld [vmem:[%s679 + $0x120] sm:$0xff]
        %v5097 = vld [vmem:[%s679 + $0x128] sm:$0xff]
        %v5098 = vld [vmem:[%s679 + $0x130] sm:$0xff]
        %v5099 = vld [vmem:[%s679 + $0x138] sm:$0xff]
        %v5100 = vld [vmem:[%s679 + $0x140] sm:$0xff]
        %v5101 = vld [vmem:[%s679 + $0x148] sm:$0xff]
        %v5102 = vld [vmem:[%s679 + $0x150] sm:$0xff]
        %v5103 = vld [vmem:[%s679 + $0x158] sm:$0xff]
        %v5104 = vld [vmem:[%s679 + $0x160] sm:$0xff]
        %v5105 = vld [vmem:[%s679 + $0x168] sm:$0xff]
        %v5106 = vld [vmem:[%s679 + $0x170] sm:$0xff]
        %v5107 = vld [vmem:[%s679 + $0x178] sm:$0xff]
        %v5108 = vld [vmem:[%s679 + $0x180] sm:$0xff]
        %v5109 = vld [vmem:[%s679 + $0x188] sm:$0xff]
        %v5110 = vld [vmem:[%s679 + $0x190] sm:$0xff]
        %v5111 = vld [vmem:[%s679 + $0x198] sm:$0xff]
        %v5112 = vld [vmem:[%s679 + $0x1a0] sm:$0xff]
        %v5113 = vld [vmem:[%s679 + $0x1a8] sm:$0xff]
        %v5114 = vld [vmem:[%s679 + $0x1b0] sm:$0xff]
        %v5115 = vld [vmem:[%s679 + $0x1b8] sm:$0xff]
        %v5116 = vld [vmem:[%s679 + $0x1c0] sm:$0xff]
        %v5117 = vld [vmem:[%s679 + $0x1c8] sm:$0xff]
        %v5118 = vld [vmem:[%s679 + $0x1d0] sm:$0xff]
        %v5119 = vld [vmem:[%s679 + $0x1d8] sm:$0xff]
        %v5120 = vld [vmem:[%s679 + $0x1e0] sm:$0xff]
        %v5121 = vld [vmem:[%s679 + $0x1e8] sm:$0xff]
        %v5122 = vld [vmem:[%s679 + $0x1f0] sm:$0xff]
        %v5123 = vld [vmem:[%s679 + $0x1f8] sm:$0xff]
        %v5124 = vld [vmem:[%s679 + $0x200] sm:$0xff]
        %v5125 = vld [vmem:[%s679 + $0x208] sm:$0xff]
        %v5126 = vld [vmem:[%s679 + $0x210] sm:$0xff]
        %v5127 = vld [vmem:[%s679 + $0x218] sm:$0xff]
        %v5128 = vld [vmem:[%s679 + $0x220] sm:$0xff]
        %v5129 = vld [vmem:[%s679 + $0x228] sm:$0xff]
        %v5130 = vld [vmem:[%s679 + $0x230] sm:$0xff]
        %v5131 = vld [vmem:[%s679 + $0x238] sm:$0xff]
        %v5132 = vld [vmem:[%s679 + $0x240] sm:$0xff]
        %v5133 = vld [vmem:[%s679 + $0x248] sm:$0xff]
        %v5134 = vld [vmem:[%s679 + $0x250] sm:$0xff]
        %v5135 = vld [vmem:[%s679 + $0x258] sm:$0xff]
        %v5136 = vld [vmem:[%s679 + $0x260] sm:$0xff]
        %v5137 = vld [vmem:[%s679 + $0x268] sm:$0xff]
        %v5138 = vld [vmem:[%s679 + $0x270] sm:$0xff]
        %v5139 = vld [vmem:[%s679 + $0x278] sm:$0xff]
        %v5140 = vld [vmem:[%s679 + $0x280] sm:$0xff]
        %v5141 = vld [vmem:[%s679 + $0x288] sm:$0xff]
        %v5142 = vld [vmem:[%s679 + $0x290] sm:$0xff]
        %v5143 = vld [vmem:[%s679 + $0x298] sm:$0xff]
        %v5144 = vld [vmem:[%s679 + $0x2a0] sm:$0xff]
        %v5145 = vld [vmem:[%s679 + $0x2a8] sm:$0xff]
        %v5146 = vld [vmem:[%s679 + $0x2b0] sm:$0xff]
        %v5147 = vld [vmem:[%s679 + $0x2b8] sm:$0xff]
        %v5148 = vld [vmem:[%s679 + $0x2c0] sm:$0xff]
        %v5149 = vld [vmem:[%s679 + $0x2c8] sm:$0xff]
        %v5150 = vld [vmem:[%s679 + $0x2d0] sm:$0xff]
        %v5151 = vld [vmem:[%s679 + $0x2d8] sm:$0xff]
        %v5152 = vld [vmem:[%s679 + $0x2e0] sm:$0xff]
        %v5153 = vld [vmem:[%s679 + $0x2e8] sm:$0xff]
        %v5154 = vld [vmem:[%s679 + $0x2f0] sm:$0xff]
        %v5155 = vld [vmem:[%s679 + $0x2f8] sm:$0xff]
        %v5156 = vld [vmem:[%s679 + $0x300] sm:$0xff]
        %v5157 = vld [vmem:[%s679 + $0x308] sm:$0xff]
        %v5158 = vld [vmem:[%s679 + $0x310] sm:$0xff]
        %v5159 = vld [vmem:[%s679 + $0x318] sm:$0xff]
        %v5160 = vld [vmem:[%s679 + $0x320] sm:$0xff]
        %v5161 = vld [vmem:[%s679 + $0x328] sm:$0xff]
        %v5162 = vld [vmem:[%s679 + $0x330] sm:$0xff]
        %v5163 = vld [vmem:[%s679 + $0x338] sm:$0xff]
        %v5164 = vld [vmem:[%s679 + $0x340] sm:$0xff]
        %v5165 = vld [vmem:[%s679 + $0x348] sm:$0xff]
        %v5166 = vld [vmem:[%s679 + $0x350] sm:$0xff]
        %v5167 = vld [vmem:[%s679 + $0x358] sm:$0xff]
        %v5168 = vld [vmem:[%s679 + $0x360] sm:$0xff]
        %v5169 = vld [vmem:[%s679 + $0x368] sm:$0xff]
        %v5170 = vld [vmem:[%s679 + $0x370] sm:$0xff]
        %v5171 = vld [vmem:[%s679 + $0x378] sm:$0xff]
        %v5172 = vld [vmem:[%s679 + $0x380] sm:$0xff]
        %v5173 = vld [vmem:[%s679 + $0x388] sm:$0xff]
        %v5174 = vld [vmem:[%s679 + $0x390] sm:$0xff]
        %v5175 = vld [vmem:[%s679 + $0x398] sm:$0xff]
        %v5176 = vld [vmem:[%s679 + $0x3a0] sm:$0xff]
        %v5177 = vld [vmem:[%s679 + $0x3a8] sm:$0xff]
        %v5178 = vld [vmem:[%s679 + $0x3b0] sm:$0xff]
        %v5179 = vld [vmem:[%s679 + $0x3b8] sm:$0xff]
        %v5180 = vld [vmem:[%s679 + $0x3c0] sm:$0xff]
        %v5181 = vld [vmem:[%s679 + $0x3c8] sm:$0xff]
        %v5182 = vld [vmem:[%s679 + $0x3d0] sm:$0xff]
        %v5183 = vld [vmem:[%s679 + $0x3d8] sm:$0xff]
        %v5184 = vld [vmem:[%s679 + $0x3e0] sm:$0xff]
        %v5185 = vld [vmem:[%s679 + $0x3e8] sm:$0xff]
        %v5186 = vld [vmem:[%s679 + $0x3f0] sm:$0xff]
        %v5187 = vld [vmem:[%s679 + $0x3f8] sm:$0xff]
        %v5188 = vlaneseq
        %v5189 = vshrl.u32 %v5188, 7
        %v5190 = vsub.s32 2, %v5189
        %v5191 = vrot.slane %v1720, %v5190
        %v5192 = vlaneseq
        %v5193 = vshrl.u32 %v5192, 7
        %v5194 = vsub.s32 2, %v5193
        %v5195 = vrot.slane %v1721, %v5194
        %v5196 = vlaneseq
        %v5197 = vshrl.u32 %v5196, 7
        %v5198 = vsub.s32 2, %v5197
        %v5199 = vrot.slane %v1722, %v5198
        %v5200 = vlaneseq
        %v5201 = vshrl.u32 %v5200, 7
        %v5202 = vsub.s32 2, %v5201
        %v5203 = vrot.slane %v1723, %v5202
        %v5332 = vunpack.c.l.b16 %v5060
        %v5333 = vunpack.c.h.b16 %v5060
        %v5334 = vunpack.c.l.b16 %v5061
        %v5335 = vunpack.c.h.b16 %v5061
        %v5336 = vunpack.c.l.b16 %v5062
        %v5337 = vunpack.c.h.b16 %v5062
        %v5338 = vunpack.c.l.b16 %v5063
        %v5339 = vunpack.c.h.b16 %v5063
        %v5340 = vunpack.c.l.b16 %v5064
        %v5341 = vunpack.c.h.b16 %v5064
        %v5342 = vunpack.c.l.b16 %v5065
        %v5343 = vunpack.c.h.b16 %v5065
        %v5344 = vunpack.c.l.b16 %v5066
        %v5345 = vunpack.c.h.b16 %v5066
        %v5346 = vunpack.c.l.b16 %v5067
        %v5347 = vunpack.c.h.b16 %v5067
        %v5348 = vunpack.c.l.b16 %v5068
        %v5349 = vunpack.c.h.b16 %v5068
        %v5350 = vunpack.c.l.b16 %v5069
        %v5351 = vunpack.c.h.b16 %v5069
        %v5352 = vunpack.c.l.b16 %v5070
        %v5353 = vunpack.c.h.b16 %v5070
        %v5354 = vunpack.c.l.b16 %v5071
        %v5355 = vunpack.c.h.b16 %v5071
        %v5356 = vunpack.c.l.b16 %v5072
        %v5357 = vunpack.c.h.b16 %v5072
        %v5358 = vunpack.c.l.b16 %v5073
        %v5359 = vunpack.c.h.b16 %v5073
        %v5360 = vunpack.c.l.b16 %v5074
        %v5361 = vunpack.c.h.b16 %v5074
        %v5362 = vunpack.c.l.b16 %v5075
        %v5363 = vunpack.c.h.b16 %v5075
        %v5364 = vunpack.c.l.b16 %v5076
        %v5365 = vunpack.c.h.b16 %v5076
        %v5366 = vunpack.c.l.b16 %v5077
        %v5367 = vunpack.c.h.b16 %v5077
        %v5368 = vunpack.c.l.b16 %v5078
        %v5369 = vunpack.c.h.b16 %v5078
        %v5370 = vunpack.c.l.b16 %v5079
        %v5371 = vunpack.c.h.b16 %v5079
        %v5372 = vunpack.c.l.b16 %v5080
        %v5373 = vunpack.c.h.b16 %v5080
        %v5374 = vunpack.c.l.b16 %v5081
        %v5375 = vunpack.c.h.b16 %v5081
        %v5376 = vunpack.c.l.b16 %v5082
        %v5377 = vunpack.c.h.b16 %v5082
        %v5378 = vunpack.c.l.b16 %v5083
        %v5379 = vunpack.c.h.b16 %v5083
        %v5380 = vunpack.c.l.b16 %v5084
        %v5381 = vunpack.c.h.b16 %v5084
        %v5382 = vunpack.c.l.b16 %v5085
        %v5383 = vunpack.c.h.b16 %v5085
        %v5384 = vunpack.c.l.b16 %v5086
        %v5385 = vunpack.c.h.b16 %v5086
        %v5386 = vunpack.c.l.b16 %v5087
        %v5387 = vunpack.c.h.b16 %v5087
        %v5388 = vunpack.c.l.b16 %v5088
        %v5389 = vunpack.c.h.b16 %v5088
        %v5390 = vunpack.c.l.b16 %v5089
        %v5391 = vunpack.c.h.b16 %v5089
        %v5392 = vunpack.c.l.b16 %v5090
        %v5393 = vunpack.c.h.b16 %v5090
        %v5394 = vunpack.c.l.b16 %v5091
        %v5395 = vunpack.c.h.b16 %v5091
        %v5396 = vunpack.c.l.b16 %v5092
        %v5397 = vunpack.c.h.b16 %v5092
        %v5398 = vunpack.c.l.b16 %v5093
        %v5399 = vunpack.c.h.b16 %v5093
        %v5400 = vunpack.c.l.b16 %v5094
        %v5401 = vunpack.c.h.b16 %v5094
        %v5402 = vunpack.c.l.b16 %v5095
        %v5403 = vunpack.c.h.b16 %v5095
        %v5404 = vunpack.c.l.b16 %v5096
        %v5405 = vunpack.c.h.b16 %v5096
        %v5406 = vunpack.c.l.b16 %v5097
        %v5407 = vunpack.c.h.b16 %v5097
        %v5408 = vunpack.c.l.b16 %v5098
        %v5409 = vunpack.c.h.b16 %v5098
        %v5410 = vunpack.c.l.b16 %v5099
        %v5411 = vunpack.c.h.b16 %v5099
        %v5412 = vunpack.c.l.b16 %v5100
        %v5413 = vunpack.c.h.b16 %v5100
        %v5414 = vunpack.c.l.b16 %v5101
        %v5415 = vunpack.c.h.b16 %v5101
        %v5416 = vunpack.c.l.b16 %v5102
        %v5417 = vunpack.c.h.b16 %v5102
        %v5418 = vunpack.c.l.b16 %v5103
        %v5419 = vunpack.c.h.b16 %v5103
        %v5420 = vunpack.c.l.b16 %v5104
        %v5421 = vunpack.c.h.b16 %v5104
        %v5422 = vunpack.c.l.b16 %v5105
        %v5423 = vunpack.c.h.b16 %v5105
        %v5424 = vunpack.c.l.b16 %v5106
        %v5425 = vunpack.c.h.b16 %v5106
        %v5426 = vunpack.c.l.b16 %v5107
        %v5427 = vunpack.c.h.b16 %v5107
        %v5428 = vunpack.c.l.b16 %v5108
        %v5429 = vunpack.c.h.b16 %v5108
        %v5430 = vunpack.c.l.b16 %v5109
        %v5431 = vunpack.c.h.b16 %v5109
        %v5432 = vunpack.c.l.b16 %v5110
        %v5433 = vunpack.c.h.b16 %v5110
        %v5434 = vunpack.c.l.b16 %v5111
        %v5435 = vunpack.c.h.b16 %v5111
        %v5436 = vunpack.c.l.b16 %v5112
        %v5437 = vunpack.c.h.b16 %v5112
        %v5438 = vunpack.c.l.b16 %v5113
        %v5439 = vunpack.c.h.b16 %v5113
        %v5440 = vunpack.c.l.b16 %v5114
        %v5441 = vunpack.c.h.b16 %v5114
        %v5442 = vunpack.c.l.b16 %v5115
        %v5443 = vunpack.c.h.b16 %v5115
        %v5444 = vunpack.c.l.b16 %v5116
        %v5445 = vunpack.c.h.b16 %v5116
        %v5446 = vunpack.c.l.b16 %v5117
        %v5447 = vunpack.c.h.b16 %v5117
        %v5448 = vunpack.c.l.b16 %v5118
        %v5449 = vunpack.c.h.b16 %v5118
        %v5450 = vunpack.c.l.b16 %v5119
        %v5451 = vunpack.c.h.b16 %v5119
        %v5452 = vunpack.c.l.b16 %v5120
        %v5453 = vunpack.c.h.b16 %v5120
        %v5454 = vunpack.c.l.b16 %v5121
        %v5455 = vunpack.c.h.b16 %v5121
        %v5456 = vunpack.c.l.b16 %v5122
        %v5457 = vunpack.c.h.b16 %v5122
        %v5458 = vunpack.c.l.b16 %v5123
        %v5459 = vunpack.c.h.b16 %v5123
        %v5460 = vunpack.c.l.b16 %v5124
        %v5461 = vunpack.c.h.b16 %v5124
        %v5462 = vunpack.c.l.b16 %v5125
        %v5463 = vunpack.c.h.b16 %v5125
        %v5464 = vunpack.c.l.b16 %v5126
        %v5465 = vunpack.c.h.b16 %v5126
        %v5466 = vunpack.c.l.b16 %v5127
        %v5467 = vunpack.c.h.b16 %v5127
        %v5468 = vunpack.c.l.b16 %v5128
        %v5469 = vunpack.c.h.b16 %v5128
        %v5470 = vunpack.c.l.b16 %v5129
        %v5471 = vunpack.c.h.b16 %v5129
        %v5472 = vunpack.c.l.b16 %v5130
        %v5473 = vunpack.c.h.b16 %v5130
        %v5474 = vunpack.c.l.b16 %v5131
        %v5475 = vunpack.c.h.b16 %v5131
        %v5476 = vunpack.c.l.b16 %v5132
        %v5477 = vunpack.c.h.b16 %v5132
        %v5478 = vunpack.c.l.b16 %v5133
        %v5479 = vunpack.c.h.b16 %v5133
        %v5480 = vunpack.c.l.b16 %v5134
        %v5481 = vunpack.c.h.b16 %v5134
        %v5482 = vunpack.c.l.b16 %v5135
        %v5483 = vunpack.c.h.b16 %v5135
        %v5484 = vunpack.c.l.b16 %v5136
        %v5485 = vunpack.c.h.b16 %v5136
        %v5486 = vunpack.c.l.b16 %v5137
        %v5487 = vunpack.c.h.b16 %v5137
        %v5488 = vunpack.c.l.b16 %v5138
        %v5489 = vunpack.c.h.b16 %v5138
        %v5490 = vunpack.c.l.b16 %v5139
        %v5491 = vunpack.c.h.b16 %v5139
        %v5492 = vunpack.c.l.b16 %v5140
        %v5493 = vunpack.c.h.b16 %v5140
        %v5494 = vunpack.c.l.b16 %v5141
        %v5495 = vunpack.c.h.b16 %v5141
        %v5496 = vunpack.c.l.b16 %v5142
        %v5497 = vunpack.c.h.b16 %v5142
        %v5498 = vunpack.c.l.b16 %v5143
        %v5499 = vunpack.c.h.b16 %v5143
        %v5500 = vunpack.c.l.b16 %v5144
        %v5501 = vunpack.c.h.b16 %v5144
        %v5502 = vunpack.c.l.b16 %v5145
        %v5503 = vunpack.c.h.b16 %v5145
        %v5504 = vunpack.c.l.b16 %v5146
        %v5505 = vunpack.c.h.b16 %v5146
        %v5506 = vunpack.c.l.b16 %v5147
        %v5507 = vunpack.c.h.b16 %v5147
        %v5508 = vunpack.c.l.b16 %v5148
        %v5509 = vunpack.c.h.b16 %v5148
        %v5510 = vunpack.c.l.b16 %v5149
        %v5511 = vunpack.c.h.b16 %v5149
        %v5512 = vunpack.c.l.b16 %v5150
        %v5513 = vunpack.c.h.b16 %v5150
        %v5514 = vunpack.c.l.b16 %v5151
        %v5515 = vunpack.c.h.b16 %v5151
        %v5516 = vunpack.c.l.b16 %v5152
        %v5517 = vunpack.c.h.b16 %v5152
        %v5518 = vunpack.c.l.b16 %v5153
        %v5519 = vunpack.c.h.b16 %v5153
        %v5520 = vunpack.c.l.b16 %v5154
        %v5521 = vunpack.c.h.b16 %v5154
        %v5522 = vunpack.c.l.b16 %v5155
        %v5523 = vunpack.c.h.b16 %v5155
        %v5524 = vunpack.c.l.b16 %v5156
        %v5525 = vunpack.c.h.b16 %v5156
        %v5526 = vunpack.c.l.b16 %v5157
        %v5527 = vunpack.c.h.b16 %v5157
        %v5528 = vunpack.c.l.b16 %v5158
        %v5529 = vunpack.c.h.b16 %v5158
        %v5530 = vunpack.c.l.b16 %v5159
        %v5531 = vunpack.c.h.b16 %v5159
        %v5532 = vunpack.c.l.b16 %v5160
        %v5533 = vunpack.c.h.b16 %v5160
        %v5534 = vunpack.c.l.b16 %v5161
        %v5535 = vunpack.c.h.b16 %v5161
        %v5536 = vunpack.c.l.b16 %v5162
        %v5537 = vunpack.c.h.b16 %v5162
        %v5538 = vunpack.c.l.b16 %v5163
        %v5539 = vunpack.c.h.b16 %v5163
        %v5540 = vunpack.c.l.b16 %v5164
        %v5541 = vunpack.c.h.b16 %v5164
        %v5542 = vunpack.c.l.b16 %v5165
        %v5543 = vunpack.c.h.b16 %v5165
        %v5544 = vunpack.c.l.b16 %v5166
        %v5545 = vunpack.c.h.b16 %v5166
        %v5546 = vunpack.c.l.b16 %v5167
        %v5547 = vunpack.c.h.b16 %v5167
        %v5548 = vunpack.c.l.b16 %v5168
        %v5549 = vunpack.c.h.b16 %v5168
        %v5550 = vunpack.c.l.b16 %v5169
        %v5551 = vunpack.c.h.b16 %v5169
        %v5552 = vunpack.c.l.b16 %v5170
        %v5553 = vunpack.c.h.b16 %v5170
        %v5554 = vunpack.c.l.b16 %v5171
        %v5555 = vunpack.c.h.b16 %v5171
        %v5556 = vunpack.c.l.b16 %v5172
        %v5557 = vunpack.c.h.b16 %v5172
        %v5558 = vunpack.c.l.b16 %v5173
        %v5559 = vunpack.c.h.b16 %v5173
        %v5560 = vunpack.c.l.b16 %v5174
        %v5561 = vunpack.c.h.b16 %v5174
        %v5562 = vunpack.c.l.b16 %v5175
        %v5563 = vunpack.c.h.b16 %v5175
        %v5564 = vunpack.c.l.b16 %v5176
        %v5565 = vunpack.c.h.b16 %v5176
        %v5566 = vunpack.c.l.b16 %v5177
        %v5567 = vunpack.c.h.b16 %v5177
        %v5568 = vunpack.c.l.b16 %v5178
        %v5569 = vunpack.c.h.b16 %v5178
        %v5570 = vunpack.c.l.b16 %v5179
        %v5571 = vunpack.c.h.b16 %v5179
        %v5572 = vunpack.c.l.b16 %v5180
        %v5573 = vunpack.c.h.b16 %v5180
        %v5574 = vunpack.c.l.b16 %v5181
        %v5575 = vunpack.c.h.b16 %v5181
        %v5576 = vunpack.c.l.b16 %v5182
        %v5577 = vunpack.c.h.b16 %v5182
        %v5578 = vunpack.c.l.b16 %v5183
        %v5579 = vunpack.c.h.b16 %v5183
        %v5580 = vunpack.c.l.b16 %v5184
        %v5581 = vunpack.c.h.b16 %v5184
        %v5582 = vunpack.c.l.b16 %v5185
        %v5583 = vunpack.c.h.b16 %v5185
        %v5584 = vunpack.c.l.b16 %v5186
        %v5585 = vunpack.c.h.b16 %v5186
        %v5586 = vunpack.c.l.b16 %v5187
        %v5587 = vunpack.c.h.b16 %v5187
        %v5588 = vpack.c.b16 %v5336, %v5332
        %v5589 = vpack.c.b16 %v5337, %v5333
        %v5590 = vpack.c.b16 %v5338, %v5334
        %v5591 = vpack.c.b16 %v5339, %v5335
        %v5592 = vpack.c.b16 %v5344, %v5340
        %v5593 = vpack.c.b16 %v5345, %v5341
        %v5594 = vpack.c.b16 %v5346, %v5342
        %v5595 = vpack.c.b16 %v5347, %v5343
        %v5596 = vpack.c.b16 %v5352, %v5348
        %v5597 = vpack.c.b16 %v5353, %v5349
        %v5598 = vpack.c.b16 %v5354, %v5350
        %v5599 = vpack.c.b16 %v5355, %v5351
        %v5600 = vpack.c.b16 %v5360, %v5356
        %v5601 = vpack.c.b16 %v5361, %v5357
        %v5602 = vpack.c.b16 %v5362, %v5358
        %v5603 = vpack.c.b16 %v5363, %v5359
        %v5604 = vpack.c.b16 %v5368, %v5364
        %v5605 = vpack.c.b16 %v5369, %v5365
        %v5606 = vpack.c.b16 %v5370, %v5366
        %v5607 = vpack.c.b16 %v5371, %v5367
        %v5608 = vpack.c.b16 %v5376, %v5372
        %v5609 = vpack.c.b16 %v5377, %v5373
        %v5610 = vpack.c.b16 %v5378, %v5374
        %v5611 = vpack.c.b16 %v5379, %v5375
        %v5612 = vpack.c.b16 %v5384, %v5380
        %v5613 = vpack.c.b16 %v5385, %v5381
        %v5614 = vpack.c.b16 %v5386, %v5382
        %v5615 = vpack.c.b16 %v5387, %v5383
        %v5616 = vpack.c.b16 %v5392, %v5388
        %v5617 = vpack.c.b16 %v5393, %v5389
        %v5618 = vpack.c.b16 %v5394, %v5390
        %v5619 = vpack.c.b16 %v5395, %v5391
        %v5620 = vpack.c.b16 %v5400, %v5396
        %v5621 = vpack.c.b16 %v5401, %v5397
        %v5622 = vpack.c.b16 %v5402, %v5398
        %v5623 = vpack.c.b16 %v5403, %v5399
        %v5624 = vpack.c.b16 %v5408, %v5404
        %v5625 = vpack.c.b16 %v5409, %v5405
        %v5626 = vpack.c.b16 %v5410, %v5406
        %v5627 = vpack.c.b16 %v5411, %v5407
        %v5628 = vpack.c.b16 %v5416, %v5412
        %v5629 = vpack.c.b16 %v5417, %v5413
        %v5630 = vpack.c.b16 %v5418, %v5414
        %v5631 = vpack.c.b16 %v5419, %v5415
        %v5632 = vpack.c.b16 %v5424, %v5420
        %v5633 = vpack.c.b16 %v5425, %v5421
        %v5634 = vpack.c.b16 %v5426, %v5422
        %v5635 = vpack.c.b16 %v5427, %v5423
        %v5636 = vpack.c.b16 %v5432, %v5428
        %v5637 = vpack.c.b16 %v5433, %v5429
        %v5638 = vpack.c.b16 %v5434, %v5430
        %v5639 = vpack.c.b16 %v5435, %v5431
        %v5640 = vpack.c.b16 %v5440, %v5436
        %v5641 = vpack.c.b16 %v5441, %v5437
        %v5642 = vpack.c.b16 %v5442, %v5438
        %v5643 = vpack.c.b16 %v5443, %v5439
        %v5644 = vpack.c.b16 %v5448, %v5444
        %v5645 = vpack.c.b16 %v5449, %v5445
        %v5646 = vpack.c.b16 %v5450, %v5446
        %v5647 = vpack.c.b16 %v5451, %v5447
        %v5648 = vpack.c.b16 %v5456, %v5452
        %v5649 = vpack.c.b16 %v5457, %v5453
        %v5650 = vpack.c.b16 %v5458, %v5454
        %v5651 = vpack.c.b16 %v5459, %v5455
        %v5652 = vpack.c.b16 %v5464, %v5460
        %v5653 = vpack.c.b16 %v5465, %v5461
        %v5654 = vpack.c.b16 %v5466, %v5462
        %v5655 = vpack.c.b16 %v5467, %v5463
        %v5656 = vpack.c.b16 %v5472, %v5468
        %v5657 = vpack.c.b16 %v5473, %v5469
        %v5658 = vpack.c.b16 %v5474, %v5470
        %v5659 = vpack.c.b16 %v5475, %v5471
        %v5660 = vpack.c.b16 %v5480, %v5476
        %v5661 = vpack.c.b16 %v5481, %v5477
        %v5662 = vpack.c.b16 %v5482, %v5478
        %v5663 = vpack.c.b16 %v5483, %v5479
        %v5664 = vpack.c.b16 %v5488, %v5484
        %v5665 = vpack.c.b16 %v5489, %v5485
        %v5666 = vpack.c.b16 %v5490, %v5486
        %v5667 = vpack.c.b16 %v5491, %v5487
        %v5668 = vpack.c.b16 %v5496, %v5492
        %v5669 = vpack.c.b16 %v5497, %v5493
        %v5670 = vpack.c.b16 %v5498, %v5494
        %v5671 = vpack.c.b16 %v5499, %v5495
        %v5672 = vpack.c.b16 %v5504, %v5500
        %v5673 = vpack.c.b16 %v5505, %v5501
        %v5674 = vpack.c.b16 %v5506, %v5502
        %v5675 = vpack.c.b16 %v5507, %v5503
        %v5676 = vpack.c.b16 %v5512, %v5508
        %v5677 = vpack.c.b16 %v5513, %v5509
        %v5678 = vpack.c.b16 %v5514, %v5510
        %v5679 = vpack.c.b16 %v5515, %v5511
        %v5680 = vpack.c.b16 %v5520, %v5516
        %v5681 = vpack.c.b16 %v5521, %v5517
        %v5682 = vpack.c.b16 %v5522, %v5518
        %v5683 = vpack.c.b16 %v5523, %v5519
        %v5684 = vpack.c.b16 %v5528, %v5524
        %v5685 = vpack.c.b16 %v5529, %v5525
        %v5686 = vpack.c.b16 %v5530, %v5526
        %v5687 = vpack.c.b16 %v5531, %v5527
        %v5688 = vpack.c.b16 %v5536, %v5532
        %v5689 = vpack.c.b16 %v5537, %v5533
        %v5690 = vpack.c.b16 %v5538, %v5534
        %v5691 = vpack.c.b16 %v5539, %v5535
        %v5692 = vpack.c.b16 %v5544, %v5540
        %v5693 = vpack.c.b16 %v5545, %v5541
        %v5694 = vpack.c.b16 %v5546, %v5542
        %v5695 = vpack.c.b16 %v5547, %v5543
        %v5696 = vpack.c.b16 %v5552, %v5548
        %v5697 = vpack.c.b16 %v5553, %v5549
        %v5698 = vpack.c.b16 %v5554, %v5550
        %v5699 = vpack.c.b16 %v5555, %v5551
        %v5700 = vpack.c.b16 %v5560, %v5556
        %v5701 = vpack.c.b16 %v5561, %v5557
        %v5702 = vpack.c.b16 %v5562, %v5558
        %v5703 = vpack.c.b16 %v5563, %v5559
        %v5704 = vpack.c.b16 %v5568, %v5564
        %v5705 = vpack.c.b16 %v5569, %v5565
        %v5706 = vpack.c.b16 %v5570, %v5566
        %v5707 = vpack.c.b16 %v5571, %v5567
        %v5708 = vpack.c.b16 %v5576, %v5572
        %v5709 = vpack.c.b16 %v5577, %v5573
        %v5710 = vpack.c.b16 %v5578, %v5574
        %v5711 = vpack.c.b16 %v5579, %v5575
        %v5712 = vpack.c.b16 %v5584, %v5580
        %v5713 = vpack.c.b16 %v5585, %v5581
        %v5714 = vpack.c.b16 %v5586, %v5582
        %v5715 = vpack.c.b16 %v5587, %v5583
        %5844 = vmatprep.subr.bf16.mxu0 %v5617
        %5845 = vmatpush1.bf16.msra.mxu0 %v5616
        %5846 = vmatprep.subr.bf16.mxu0 %v5613
        %5847 = vmatpush1.bf16.msra.mxu0 %v5612
        %5848 = vmatprep.subr.bf16.mxu0 %v5609
        %5849 = vmatpush1.bf16.msra.mxu0 %v5608
        %5850 = vmatprep.subr.bf16.mxu0 %v5605
        %5851 = vmatpush1.bf16.msra.mxu0 %v5604
        %5852 = vmatprep.subr.bf16.mxu0 %v5601
        %5853 = vmatpush1.bf16.msra.mxu0 %v5600
        %5854 = vmatprep.subr.bf16.mxu0 %v5597
        %5855 = vmatpush1.bf16.msra.mxu0 %v5596
        %5856 = vmatprep.subr.bf16.mxu0 %v5593
        %5857 = vmatpush1.bf16.msra.mxu0 %v5592
        %5858 = vmatprep.subr.bf16.mxu0 %v5589
        %5859 = vmatpush1.bf16.msra.mxu0 %v5588
        %5860 = vmatprep.subr.bf16.mxu0 %v5649
        %5861 = vmatpush2.bf16.msra.mxu0 %v5648
        %5862 = vmatprep.subr.bf16.mxu0 %v5645
        %5863 = vmatpush2.bf16.msra.mxu0 %v5644
        %5864 = vmatprep.subr.bf16.mxu0 %v5641
        %5865 = vmatpush2.bf16.msra.mxu0 %v5640
        %5866 = vmatprep.subr.bf16.mxu0 %v5637
        %5867 = vmatpush2.bf16.msra.mxu0 %v5636
        %5868 = vmatprep.subr.bf16.mxu0 %v5633
        %5869 = vmatpush2.bf16.msra.mxu0 %v5632
        %5870 = vmatprep.subr.bf16.mxu0 %v5629
        %5871 = vmatpush2.bf16.msra.mxu0 %v5628
        %5872 = vmatprep.subr.bf16.mxu0 %v5625
        %5873 = vmatpush2.bf16.msra.mxu0 %v5624
        %5874 = vmatprep.subr.bf16.mxu0 %v5621
        %5875 = vmatpush2.bf16.msra.mxu0 %v5620
        %5876 = vmatprep.mubr.bf16.mxu0 %v5057
        %5877 = vmatmul.mubr.bf16.gmra.mxu0 %v5056
        %v5878 = vpop.f32.mrf.mxu0
        %v5879 = vadd.f32 %v5191, %v5878
        %v5880 = vpop.f32.mrf.mxu0
        %v5881 = vadd.f32 %v5195, %v5880
        %v5882 = vpop.f32.mrf.mxu0
        %v5883 = vadd.f32 %v5191, %v5882
        %v5884 = vpop.f32.mrf.mxu0
        %v5885 = vadd.f32 %v5195, %v5884
        %5886 = vdwg.mxu0
        %5887 = vmatprep.subr.bf16.mxu0 %v5681
        %5888 = vmatpush1.bf16.msra.mxu0 %v5680
        %5889 = vmatprep.subr.bf16.mxu0 %v5677
        %5890 = vmatpush1.bf16.msra.mxu0 %v5676
        %5891 = vmatprep.subr.bf16.mxu0 %v5673
        %5892 = vmatpush1.bf16.msra.mxu0 %v5672
        %5893 = vmatprep.subr.bf16.mxu0 %v5669
        %5894 = vmatpush1.bf16.msra.mxu0 %v5668
        %5895 = vmatprep.subr.bf16.mxu0 %v5665
        %5896 = vmatpush1.bf16.msra.mxu0 %v5664
        %5897 = vmatprep.subr.bf16.mxu0 %v5661
        %5898 = vmatpush1.bf16.msra.mxu0 %v5660
        %5899 = vmatprep.subr.bf16.mxu0 %v5657
        %5900 = vmatpush1.bf16.msra.mxu0 %v5656
        %5901 = vmatprep.subr.bf16.mxu0 %v5653
        %5902 = vmatpush1.bf16.msra.mxu0 %v5652
        %5903 = vmatprep.subr.bf16.mxu0 %v5713
        %5904 = vmatpush2.bf16.msra.mxu0 %v5712
        %5905 = vmatprep.subr.bf16.mxu0 %v5709
        %5906 = vmatpush2.bf16.msra.mxu0 %v5708
        %5907 = vmatprep.subr.bf16.mxu0 %v5705
        %5908 = vmatpush2.bf16.msra.mxu0 %v5704
        %5909 = vmatprep.subr.bf16.mxu0 %v5701
        %5910 = vmatpush2.bf16.msra.mxu0 %v5700
        %5911 = vmatprep.subr.bf16.mxu0 %v5697
        %5912 = vmatpush2.bf16.msra.mxu0 %v5696
        %5913 = vmatprep.subr.bf16.mxu0 %v5693
        %5914 = vmatpush2.bf16.msra.mxu0 %v5692
        %5915 = vmatprep.subr.bf16.mxu0 %v5689
        %5916 = vmatpush2.bf16.msra.mxu0 %v5688
        %5917 = vmatprep.subr.bf16.mxu0 %v5685
        %5918 = vmatpush2.bf16.msra.mxu0 %v5684
        %5919 = vmatprep.mubr.bf16.mxu0 %v5059
        %5920 = vmatmul.mubr.bf16.gmra.mxu0 %v5058
        %v5921 = vpop.f32.mrf.mxu0
        %v5922 = vadd.f32 %v5879, %v5921
        %v5923 = vpop.f32.mrf.mxu0
        %v5924 = vadd.f32 %v5881, %v5923
        %v5925 = vpop.f32.mrf.mxu0
        %v5926 = vadd.f32 %v5883, %v5925
        %v5927 = vpop.f32.mrf.mxu0
        %v5928 = vadd.f32 %v5885, %v5927
        %5929 = vdwg.mxu0
        %5930 = vmatprep.subr.bf16.mxu0 %v5619
        %5931 = vmatpush1.bf16.msra.mxu0 %v5618
        %5932 = vmatprep.subr.bf16.mxu0 %v5615
        %5933 = vmatpush1.bf16.msra.mxu0 %v5614
        %5934 = vmatprep.subr.bf16.mxu0 %v5611
        %5935 = vmatpush1.bf16.msra.mxu0 %v5610
        %5936 = vmatprep.subr.bf16.mxu0 %v5607
        %5937 = vmatpush1.bf16.msra.mxu0 %v5606
        %5938 = vmatprep.subr.bf16.mxu0 %v5603
        %5939 = vmatpush1.bf16.msra.mxu0 %v5602
        %5940 = vmatprep.subr.bf16.mxu0 %v5599
        %5941 = vmatpush1.bf16.msra.mxu0 %v5598
        %5942 = vmatprep.subr.bf16.mxu0 %v5595
        %5943 = vmatpush1.bf16.msra.mxu0 %v5594
        %5944 = vmatprep.subr.bf16.mxu0 %v5591
        %5945 = vmatpush1.bf16.msra.mxu0 %v5590
        %5946 = vmatprep.subr.bf16.mxu0 %v5651
        %5947 = vmatpush2.bf16.msra.mxu0 %v5650
        %5948 = vmatprep.subr.bf16.mxu0 %v5647
        %5949 = vmatpush2.bf16.msra.mxu0 %v5646
        %5950 = vmatprep.subr.bf16.mxu0 %v5643
        %5951 = vmatpush2.bf16.msra.mxu0 %v5642
        %5952 = vmatprep.subr.bf16.mxu0 %v5639
        %5953 = vmatpush2.bf16.msra.mxu0 %v5638
        %5954 = vmatprep.subr.bf16.mxu0 %v5635
        %5955 = vmatpush2.bf16.msra.mxu0 %v5634
        %5956 = vmatprep.subr.bf16.mxu0 %v5631
        %5957 = vmatpush2.bf16.msra.mxu0 %v5630
        %5958 = vmatprep.subr.bf16.mxu0 %v5627
        %5959 = vmatpush2.bf16.msra.mxu0 %v5626
        %5960 = vmatprep.subr.bf16.mxu0 %v5623
        %5961 = vmatpush2.bf16.msra.mxu0 %v5622
        %5962 = vmatprep.mubr.bf16.mxu0 %v5057
        %5963 = vmatmul.mubr.bf16.gmra.mxu0 %v5056
        %v5964 = vpop.f32.mrf.mxu0
        %v5965 = vadd.f32 %v5199, %v5964
        %v5966 = vpop.f32.mrf.mxu0
        %v5967 = vadd.f32 %v5203, %v5966
        %v5968 = vpop.f32.mrf.mxu0
        %v5969 = vadd.f32 %v5199, %v5968
        %v5970 = vpop.f32.mrf.mxu0
        %v5971 = vadd.f32 %v5203, %v5970
        %5972 = vdwg.mxu0
        %5973 = vmatprep.subr.bf16.mxu0 %v5683
        %5974 = vmatpush1.bf16.msra.mxu0 %v5682
        %5975 = vmatprep.subr.bf16.mxu0 %v5679
        %5976 = vmatpush1.bf16.msra.mxu0 %v5678
        %5977 = vmatprep.subr.bf16.mxu0 %v5675
        %5978 = vmatpush1.bf16.msra.mxu0 %v5674
        %5979 = vmatprep.subr.bf16.mxu0 %v5671
        %5980 = vmatpush1.bf16.msra.mxu0 %v5670
        %5981 = vmatprep.subr.bf16.mxu0 %v5667
        %5982 = vmatpush1.bf16.msra.mxu0 %v5666
        %5983 = vmatprep.subr.bf16.mxu0 %v5663
        %5984 = vmatpush1.bf16.msra.mxu0 %v5662
        %5985 = vmatprep.subr.bf16.mxu0 %v5659
        %5986 = vmatpush1.bf16.msra.mxu0 %v5658
        %5987 = vmatprep.subr.bf16.mxu0 %v5655
        %5988 = vmatpush1.bf16.msra.mxu0 %v5654
        %5989 = vmatprep.subr.bf16.mxu0 %v5715
        %5990 = vmatpush2.bf16.msra.mxu0 %v5714
        %5991 = vmatprep.subr.bf16.mxu0 %v5711
        %5992 = vmatpush2.bf16.msra.mxu0 %v5710
        %5993 = vmatprep.subr.bf16.mxu0 %v5707
        %5994 = vmatpush2.bf16.msra.mxu0 %v5706
        %5995 = vmatprep.subr.bf16.mxu0 %v5703
        %5996 = vmatpush2.bf16.msra.mxu0 %v5702
        %5997 = vmatprep.subr.bf16.mxu0 %v5699
        %5998 = vmatpush2.bf16.msra.mxu0 %v5698
        %5999 = vmatprep.subr.bf16.mxu0 %v5695
        %6000 = vmatpush2.bf16.msra.mxu0 %v5694
        %6001 = vmatprep.subr.bf16.mxu0 %v5691
        %6002 = vmatpush2.bf16.msra.mxu0 %v5690
        %6003 = vmatprep.subr.bf16.mxu0 %v5687
        %6004 = vmatpush2.bf16.msra.mxu0 %v5686
        %6005 = vmatprep.mubr.bf16.mxu0 %v5059
        %6006 = vmatmul.mubr.bf16.gmra.mxu0 %v5058
        %v6007 = vpop.f32.mrf.mxu0
        %v6008 = vadd.f32 %v5965, %v6007
        %v6009 = vpop.f32.mrf.mxu0
        %v6010 = vadd.f32 %v5967, %v6009
        %v6011 = vpop.f32.mrf.mxu0
        %v6012 = vadd.f32 %v5969, %v6011
        %v6013 = vpop.f32.mrf.mxu0
        %v6014 = vadd.f32 %v5971, %v6013
        %6015 = vdwg.mxu0
        %v6016 = vadd.f32 %v1708, %v5922
        %v6017 = vadd.f32 %v1709, %v5924
        %v6018 = vadd.f32 %v1710, %v6008
        %v6019 = vadd.f32 %v1711, %v6010
        %v6020 = vadd.f32 %v1712, %v5926
        %v6021 = vadd.f32 %v1713, %v5928
        %v6022 = vadd.f32 %v1714, %v6012
        %v6023 = vadd.f32 %v1715, %v6014
        %v6024 = vadd.f32 %v6016, %v6017
        %v6025 = vadd.f32 %v6024, %v6018
        %v6026 = vadd.f32 %v6025, %v6019
        %6027 = vadd.xlane.f32.xlu0 %v6026
        %v6028 = vpop.xlane.xlu0 %6027
        %v6029 = vadd.f32 %v6020, %v6021
        %v6030 = vadd.f32 %v6029, %v6022
        %v6031 = vadd.f32 %v6030, %v6023
        %6032 = vadd.xlane.f32.xlu0 %v6031
        %v6033 = vpop.xlane.xlu0 %6032
        %v6034 = vrcp.pop 512.0
        %v6035 = vmul.f32 %v6028, %v6034
        %v6036 = vmul.f32 %v6033, %v6034
        %v6037 = vsub.f32 %v6016, %v6035
        %v6038 = vsub.f32 %v6017, %v6035
        %v6039 = vsub.f32 %v6018, %v6035
        %v6040 = vsub.f32 %v6019, %v6035
        %v6041 = vsub.f32 %v6020, %v6036
        %v6042 = vsub.f32 %v6021, %v6036
        %v6043 = vsub.f32 %v6022, %v6036
        %v6044 = vsub.f32 %v6023, %v6036
        %v6045 = vmul.f32 %v6037, %v6037
        %v6046 = vmul.f32 %v6038, %v6038
        %v6047 = vmul.f32 %v6039, %v6039
        %v6048 = vmul.f32 %v6040, %v6040
        %v6049 = vmul.f32 %v6041, %v6041
        %v6050 = vmul.f32 %v6042, %v6042
        %v6051 = vmul.f32 %v6043, %v6043
        %v6052 = vmul.f32 %v6044, %v6044
        %v6053 = vadd.f32 %v6045, %v6046
        %v6054 = vadd.f32 %v6053, %v6047
        %v6055 = vadd.f32 %v6054, %v6048
        %6056 = vadd.xlane.f32.xlu0 %v6055
        %v6057 = vpop.xlane.xlu0 %6056
        %v6058 = vadd.f32 %v6049, %v6050
        %v6059 = vadd.f32 %v6058, %v6051
        %v6060 = vadd.f32 %v6059, %v6052
        %6061 = vadd.xlane.f32.xlu0 %v6060
        %v6062 = vpop.xlane.xlu0 %6061
        %v6063 = vmul.f32 %v6057, %v6034
        %v6064 = vmul.f32 %v6062, %v6034
        %v6065 = vadd.f32 %v6063, 1e-05
        %v6066 = vadd.f32 %v6064, 1e-05
        %v6067 = vrsqrt.pop %v6065
        %v6068 = vrsqrt.pop %v6066
        %v6069 = vmul.f32 %v6037, %v6067
        %v6070 = vmul.f32 %v6038, %v6067
        %v6071 = vmul.f32 %v6039, %v6067
        %v6072 = vmul.f32 %v6040, %v6067
        %v6073 = vmul.f32 %v6041, %v6068
        %v6074 = vmul.f32 %v6042, %v6068
        %v6075 = vmul.f32 %v6043, %v6068
        %v6076 = vmul.f32 %v6044, %v6068
        %v6077 = vlaneseq
        %v6078 = vshrl.u32 %v6077, 7
        %v6079 = vsub.s32 3, %v6078
        %v6080 = vrot.slane %v1720, %v6079
        %v6081 = vlaneseq
        %v6082 = vshrl.u32 %v6081, 7
        %v6083 = vsub.s32 3, %v6082
        %v6084 = vrot.slane %v1721, %v6083
        %v6085 = vlaneseq
        %v6086 = vshrl.u32 %v6085, 7
        %v6087 = vsub.s32 3, %v6086
        %v6088 = vrot.slane %v1722, %v6087
        %v6089 = vlaneseq
        %v6090 = vshrl.u32 %v6089, 7
        %v6091 = vsub.s32 3, %v6090
        %v6092 = vrot.slane %v1723, %v6091
        %v6093 = vmul.f32 %v6069, %v6080
        %v6094 = vmul.f32 %v6070, %v6084
        %v6095 = vmul.f32 %v6071, %v6088
        %v6096 = vmul.f32 %v6072, %v6092
        %v6097 = vmul.f32 %v6073, %v6080
        %v6098 = vmul.f32 %v6074, %v6084
        %v6099 = vmul.f32 %v6075, %v6088
        %v6100 = vmul.f32 %v6076, %v6092
        %v6101 = vlaneseq
        %v6102 = vshrl.u32 %v6101, 7
        %v6103 = vsub.s32 3, %v6102
        %v6104 = vrot.slane %v1724, %v6103
        %v6105 = vlaneseq
        %v6106 = vshrl.u32 %v6105, 7
        %v6107 = vsub.s32 3, %v6106
        %v6108 = vrot.slane %v1725, %v6107
        %v6109 = vlaneseq
        %v6110 = vshrl.u32 %v6109, 7
        %v6111 = vsub.s32 3, %v6110
        %v6112 = vrot.slane %v1726, %v6111
        %v6113 = vlaneseq
        %v6114 = vshrl.u32 %v6113, 7
        %v6115 = vsub.s32 3, %v6114
        %v6116 = vrot.slane %v1727, %v6115
        %v6117 = vadd.f32 %v6093, %v6104
        %v6118 = vadd.f32 %v6094, %v6108
        %v6119 = vadd.f32 %v6095, %v6112
        %v6120 = vadd.f32 %v6096, %v6116
        %v6121 = vadd.f32 %v6097, %v6104
        %v6122 = vadd.f32 %v6098, %v6108
        %v6123 = vadd.f32 %v6099, %v6112
        %v6124 = vadd.f32 %v6100, %v6116
        %v6125 = vpack.c.bf16 %v6121, %v6117
        %v6126 = vpack.c.bf16 %v6122, %v6118
        %v6127 = vpack.c.bf16 %v6123, %v6119
        %v6128 = vpack.c.bf16 %v6124, %v6120
        %v6129 = vld [vmem:[%s688] sm:$0xff]
        %v6130 = vld [vmem:[%s688 + $0x8] sm:$0xff]
        %v6131 = vld [vmem:[%s688 + $0x10] sm:$0xff]
        %v6132 = vld [vmem:[%s688 + $0x18] sm:$0xff]
        %v6133 = vld [vmem:[%s688 + $0x20] sm:$0xff]
        %v6134 = vld [vmem:[%s688 + $0x28] sm:$0xff]
        %v6135 = vld [vmem:[%s688 + $0x30] sm:$0xff]
        %v6136 = vld [vmem:[%s688 + $0x38] sm:$0xff]
        %v6137 = vld [vmem:[%s688 + $0x40] sm:$0xff]
        %v6138 = vld [vmem:[%s688 + $0x48] sm:$0xff]
        %v6139 = vld [vmem:[%s688 + $0x50] sm:$0xff]
        %v6140 = vld [vmem:[%s688 + $0x58] sm:$0xff]
        %v6141 = vld [vmem:[%s688 + $0x60] sm:$0xff]
        %v6142 = vld [vmem:[%s688 + $0x68] sm:$0xff]
        %v6143 = vld [vmem:[%s688 + $0x70] sm:$0xff]
        %v6144 = vld [vmem:[%s688 + $0x78] sm:$0xff]
        %v6145 = vld [vmem:[%s688 + $0x80] sm:$0xff]
        %v6146 = vld [vmem:[%s688 + $0x88] sm:$0xff]
        %v6147 = vld [vmem:[%s688 + $0x90] sm:$0xff]
        %v6148 = vld [vmem:[%s688 + $0x98] sm:$0xff]
        %v6149 = vld [vmem:[%s688 + $0xa0] sm:$0xff]
        %v6150 = vld [vmem:[%s688 + $0xa8] sm:$0xff]
        %v6151 = vld [vmem:[%s688 + $0xb0] sm:$0xff]
        %v6152 = vld [vmem:[%s688 + $0xb8] sm:$0xff]
        %v6153 = vld [vmem:[%s688 + $0xc0] sm:$0xff]
        %v6154 = vld [vmem:[%s688 + $0xc8] sm:$0xff]
        %v6155 = vld [vmem:[%s688 + $0xd0] sm:$0xff]
        %v6156 = vld [vmem:[%s688 + $0xd8] sm:$0xff]
        %v6157 = vld [vmem:[%s688 + $0xe0] sm:$0xff]
        %v6158 = vld [vmem:[%s688 + $0xe8] sm:$0xff]
        %v6159 = vld [vmem:[%s688 + $0xf0] sm:$0xff]
        %v6160 = vld [vmem:[%s688 + $0xf8] sm:$0xff]
        %v6161 = vld [vmem:[%s688 + $0x100] sm:$0xff]
        %v6162 = vld [vmem:[%s688 + $0x108] sm:$0xff]
        %v6163 = vld [vmem:[%s688 + $0x110] sm:$0xff]
        %v6164 = vld [vmem:[%s688 + $0x118] sm:$0xff]
        %v6165 = vld [vmem:[%s688 + $0x120] sm:$0xff]
        %v6166 = vld [vmem:[%s688 + $0x128] sm:$0xff]
        %v6167 = vld [vmem:[%s688 + $0x130] sm:$0xff]
        %v6168 = vld [vmem:[%s688 + $0x138] sm:$0xff]
        %v6169 = vld [vmem:[%s688 + $0x140] sm:$0xff]
        %v6170 = vld [vmem:[%s688 + $0x148] sm:$0xff]
        %v6171 = vld [vmem:[%s688 + $0x150] sm:$0xff]
        %v6172 = vld [vmem:[%s688 + $0x158] sm:$0xff]
        %v6173 = vld [vmem:[%s688 + $0x160] sm:$0xff]
        %v6174 = vld [vmem:[%s688 + $0x168] sm:$0xff]
        %v6175 = vld [vmem:[%s688 + $0x170] sm:$0xff]
        %v6176 = vld [vmem:[%s688 + $0x178] sm:$0xff]
        %v6177 = vld [vmem:[%s688 + $0x180] sm:$0xff]
        %v6178 = vld [vmem:[%s688 + $0x188] sm:$0xff]
        %v6179 = vld [vmem:[%s688 + $0x190] sm:$0xff]
        %v6180 = vld [vmem:[%s688 + $0x198] sm:$0xff]
        %v6181 = vld [vmem:[%s688 + $0x1a0] sm:$0xff]
        %v6182 = vld [vmem:[%s688 + $0x1a8] sm:$0xff]
        %v6183 = vld [vmem:[%s688 + $0x1b0] sm:$0xff]
        %v6184 = vld [vmem:[%s688 + $0x1b8] sm:$0xff]
        %v6185 = vld [vmem:[%s688 + $0x1c0] sm:$0xff]
        %v6186 = vld [vmem:[%s688 + $0x1c8] sm:$0xff]
        %v6187 = vld [vmem:[%s688 + $0x1d0] sm:$0xff]
        %v6188 = vld [vmem:[%s688 + $0x1d8] sm:$0xff]
        %v6189 = vld [vmem:[%s688 + $0x1e0] sm:$0xff]
        %v6190 = vld [vmem:[%s688 + $0x1e8] sm:$0xff]
        %v6191 = vld [vmem:[%s688 + $0x1f0] sm:$0xff]
        %v6192 = vld [vmem:[%s688 + $0x1f8] sm:$0xff]
        %v6193 = vld [vmem:[%s688 + $0x200] sm:$0xff]
        %v6194 = vld [vmem:[%s688 + $0x208] sm:$0xff]
        %v6195 = vld [vmem:[%s688 + $0x210] sm:$0xff]
        %v6196 = vld [vmem:[%s688 + $0x218] sm:$0xff]
        %v6197 = vld [vmem:[%s688 + $0x220] sm:$0xff]
        %v6198 = vld [vmem:[%s688 + $0x228] sm:$0xff]
        %v6199 = vld [vmem:[%s688 + $0x230] sm:$0xff]
        %v6200 = vld [vmem:[%s688 + $0x238] sm:$0xff]
        %v6201 = vld [vmem:[%s688 + $0x240] sm:$0xff]
        %v6202 = vld [vmem:[%s688 + $0x248] sm:$0xff]
        %v6203 = vld [vmem:[%s688 + $0x250] sm:$0xff]
        %v6204 = vld [vmem:[%s688 + $0x258] sm:$0xff]
        %v6205 = vld [vmem:[%s688 + $0x260] sm:$0xff]
        %v6206 = vld [vmem:[%s688 + $0x268] sm:$0xff]
        %v6207 = vld [vmem:[%s688 + $0x270] sm:$0xff]
        %v6208 = vld [vmem:[%s688 + $0x278] sm:$0xff]
        %v6209 = vld [vmem:[%s688 + $0x280] sm:$0xff]
        %v6210 = vld [vmem:[%s688 + $0x288] sm:$0xff]
        %v6211 = vld [vmem:[%s688 + $0x290] sm:$0xff]
        %v6212 = vld [vmem:[%s688 + $0x298] sm:$0xff]
        %v6213 = vld [vmem:[%s688 + $0x2a0] sm:$0xff]
        %v6214 = vld [vmem:[%s688 + $0x2a8] sm:$0xff]
        %v6215 = vld [vmem:[%s688 + $0x2b0] sm:$0xff]
        %v6216 = vld [vmem:[%s688 + $0x2b8] sm:$0xff]
        %v6217 = vld [vmem:[%s688 + $0x2c0] sm:$0xff]
        %v6218 = vld [vmem:[%s688 + $0x2c8] sm:$0xff]
        %v6219 = vld [vmem:[%s688 + $0x2d0] sm:$0xff]
        %v6220 = vld [vmem:[%s688 + $0x2d8] sm:$0xff]
        %v6221 = vld [vmem:[%s688 + $0x2e0] sm:$0xff]
        %v6222 = vld [vmem:[%s688 + $0x2e8] sm:$0xff]
        %v6223 = vld [vmem:[%s688 + $0x2f0] sm:$0xff]
        %v6224 = vld [vmem:[%s688 + $0x2f8] sm:$0xff]
        %v6225 = vld [vmem:[%s688 + $0x300] sm:$0xff]
        %v6226 = vld [vmem:[%s688 + $0x308] sm:$0xff]
        %v6227 = vld [vmem:[%s688 + $0x310] sm:$0xff]
        %v6228 = vld [vmem:[%s688 + $0x318] sm:$0xff]
        %v6229 = vld [vmem:[%s688 + $0x320] sm:$0xff]
        %v6230 = vld [vmem:[%s688 + $0x328] sm:$0xff]
        %v6231 = vld [vmem:[%s688 + $0x330] sm:$0xff]
        %v6232 = vld [vmem:[%s688 + $0x338] sm:$0xff]
        %v6233 = vld [vmem:[%s688 + $0x340] sm:$0xff]
        %v6234 = vld [vmem:[%s688 + $0x348] sm:$0xff]
        %v6235 = vld [vmem:[%s688 + $0x350] sm:$0xff]
        %v6236 = vld [vmem:[%s688 + $0x358] sm:$0xff]
        %v6237 = vld [vmem:[%s688 + $0x360] sm:$0xff]
        %v6238 = vld [vmem:[%s688 + $0x368] sm:$0xff]
        %v6239 = vld [vmem:[%s688 + $0x370] sm:$0xff]
        %v6240 = vld [vmem:[%s688 + $0x378] sm:$0xff]
        %v6241 = vld [vmem:[%s688 + $0x380] sm:$0xff]
        %v6242 = vld [vmem:[%s688 + $0x388] sm:$0xff]
        %v6243 = vld [vmem:[%s688 + $0x390] sm:$0xff]
        %v6244 = vld [vmem:[%s688 + $0x398] sm:$0xff]
        %v6245 = vld [vmem:[%s688 + $0x3a0] sm:$0xff]
        %v6246 = vld [vmem:[%s688 + $0x3a8] sm:$0xff]
        %v6247 = vld [vmem:[%s688 + $0x3b0] sm:$0xff]
        %v6248 = vld [vmem:[%s688 + $0x3b8] sm:$0xff]
        %v6249 = vld [vmem:[%s688 + $0x3c0] sm:$0xff]
        %v6250 = vld [vmem:[%s688 + $0x3c8] sm:$0xff]
        %v6251 = vld [vmem:[%s688 + $0x3d0] sm:$0xff]
        %v6252 = vld [vmem:[%s688 + $0x3d8] sm:$0xff]
        %v6253 = vld [vmem:[%s688 + $0x3e0] sm:$0xff]
        %v6254 = vld [vmem:[%s688 + $0x3e8] sm:$0xff]
        %v6255 = vld [vmem:[%s688 + $0x3f0] sm:$0xff]
        %v6256 = vld [vmem:[%s688 + $0x3f8] sm:$0xff]
        %v6257 = vld [vmem:[%s688 + $0x400] sm:$0xff]
        %v6258 = vld [vmem:[%s688 + $0x408] sm:$0xff]
        %v6259 = vld [vmem:[%s688 + $0x410] sm:$0xff]
        %v6260 = vld [vmem:[%s688 + $0x418] sm:$0xff]
        %v6261 = vld [vmem:[%s688 + $0x420] sm:$0xff]
        %v6262 = vld [vmem:[%s688 + $0x428] sm:$0xff]
        %v6263 = vld [vmem:[%s688 + $0x430] sm:$0xff]
        %v6264 = vld [vmem:[%s688 + $0x438] sm:$0xff]
        %v6265 = vld [vmem:[%s688 + $0x440] sm:$0xff]
        %v6266 = vld [vmem:[%s688 + $0x448] sm:$0xff]
        %v6267 = vld [vmem:[%s688 + $0x450] sm:$0xff]
        %v6268 = vld [vmem:[%s688 + $0x458] sm:$0xff]
        %v6269 = vld [vmem:[%s688 + $0x460] sm:$0xff]
        %v6270 = vld [vmem:[%s688 + $0x468] sm:$0xff]
        %v6271 = vld [vmem:[%s688 + $0x470] sm:$0xff]
        %v6272 = vld [vmem:[%s688 + $0x478] sm:$0xff]
        %v6273 = vld [vmem:[%s688 + $0x480] sm:$0xff]
        %v6274 = vld [vmem:[%s688 + $0x488] sm:$0xff]
        %v6275 = vld [vmem:[%s688 + $0x490] sm:$0xff]
        %v6276 = vld [vmem:[%s688 + $0x498] sm:$0xff]
        %v6277 = vld [vmem:[%s688 + $0x4a0] sm:$0xff]
        %v6278 = vld [vmem:[%s688 + $0x4a8] sm:$0xff]
        %v6279 = vld [vmem:[%s688 + $0x4b0] sm:$0xff]
        %v6280 = vld [vmem:[%s688 + $0x4b8] sm:$0xff]
        %v6281 = vld [vmem:[%s688 + $0x4c0] sm:$0xff]
        %v6282 = vld [vmem:[%s688 + $0x4c8] sm:$0xff]
        %v6283 = vld [vmem:[%s688 + $0x4d0] sm:$0xff]
        %v6284 = vld [vmem:[%s688 + $0x4d8] sm:$0xff]
        %v6285 = vld [vmem:[%s688 + $0x4e0] sm:$0xff]
        %v6286 = vld [vmem:[%s688 + $0x4e8] sm:$0xff]
        %v6287 = vld [vmem:[%s688 + $0x4f0] sm:$0xff]
        %v6288 = vld [vmem:[%s688 + $0x4f8] sm:$0xff]
        %v6289 = vld [vmem:[%s688 + $0x500] sm:$0xff]
        %v6290 = vld [vmem:[%s688 + $0x508] sm:$0xff]
        %v6291 = vld [vmem:[%s688 + $0x510] sm:$0xff]
        %v6292 = vld [vmem:[%s688 + $0x518] sm:$0xff]
        %v6293 = vld [vmem:[%s688 + $0x520] sm:$0xff]
        %v6294 = vld [vmem:[%s688 + $0x528] sm:$0xff]
        %v6295 = vld [vmem:[%s688 + $0x530] sm:$0xff]
        %v6296 = vld [vmem:[%s688 + $0x538] sm:$0xff]
        %v6297 = vld [vmem:[%s688 + $0x540] sm:$0xff]
        %v6298 = vld [vmem:[%s688 + $0x548] sm:$0xff]
        %v6299 = vld [vmem:[%s688 + $0x550] sm:$0xff]
        %v6300 = vld [vmem:[%s688 + $0x558] sm:$0xff]
        %v6301 = vld [vmem:[%s688 + $0x560] sm:$0xff]
        %v6302 = vld [vmem:[%s688 + $0x568] sm:$0xff]
        %v6303 = vld [vmem:[%s688 + $0x570] sm:$0xff]
        %v6304 = vld [vmem:[%s688 + $0x578] sm:$0xff]
        %v6305 = vld [vmem:[%s688 + $0x580] sm:$0xff]
        %v6306 = vld [vmem:[%s688 + $0x588] sm:$0xff]
        %v6307 = vld [vmem:[%s688 + $0x590] sm:$0xff]
        %v6308 = vld [vmem:[%s688 + $0x598] sm:$0xff]
        %v6309 = vld [vmem:[%s688 + $0x5a0] sm:$0xff]
        %v6310 = vld [vmem:[%s688 + $0x5a8] sm:$0xff]
        %v6311 = vld [vmem:[%s688 + $0x5b0] sm:$0xff]
        %v6312 = vld [vmem:[%s688 + $0x5b8] sm:$0xff]
        %v6313 = vld [vmem:[%s688 + $0x5c0] sm:$0xff]
        %v6314 = vld [vmem:[%s688 + $0x5c8] sm:$0xff]
        %v6315 = vld [vmem:[%s688 + $0x5d0] sm:$0xff]
        %v6316 = vld [vmem:[%s688 + $0x5d8] sm:$0xff]
        %v6317 = vld [vmem:[%s688 + $0x5e0] sm:$0xff]
        %v6318 = vld [vmem:[%s688 + $0x5e8] sm:$0xff]
        %v6319 = vld [vmem:[%s688 + $0x5f0] sm:$0xff]
        %v6320 = vld [vmem:[%s688 + $0x5f8] sm:$0xff]
        %v6321 = vld [vmem:[%s688 + $0x600] sm:$0xff]
        %v6322 = vld [vmem:[%s688 + $0x608] sm:$0xff]
        %v6323 = vld [vmem:[%s688 + $0x610] sm:$0xff]
        %v6324 = vld [vmem:[%s688 + $0x618] sm:$0xff]
        %v6325 = vld [vmem:[%s688 + $0x620] sm:$0xff]
        %v6326 = vld [vmem:[%s688 + $0x628] sm:$0xff]
        %v6327 = vld [vmem:[%s688 + $0x630] sm:$0xff]
        %v6328 = vld [vmem:[%s688 + $0x638] sm:$0xff]
        %v6329 = vld [vmem:[%s688 + $0x640] sm:$0xff]
        %v6330 = vld [vmem:[%s688 + $0x648] sm:$0xff]
        %v6331 = vld [vmem:[%s688 + $0x650] sm:$0xff]
        %v6332 = vld [vmem:[%s688 + $0x658] sm:$0xff]
        %v6333 = vld [vmem:[%s688 + $0x660] sm:$0xff]
        %v6334 = vld [vmem:[%s688 + $0x668] sm:$0xff]
        %v6335 = vld [vmem:[%s688 + $0x670] sm:$0xff]
        %v6336 = vld [vmem:[%s688 + $0x678] sm:$0xff]
        %v6337 = vld [vmem:[%s688 + $0x680] sm:$0xff]
        %v6338 = vld [vmem:[%s688 + $0x688] sm:$0xff]
        %v6339 = vld [vmem:[%s688 + $0x690] sm:$0xff]
        %v6340 = vld [vmem:[%s688 + $0x698] sm:$0xff]
        %v6341 = vld [vmem:[%s688 + $0x6a0] sm:$0xff]
        %v6342 = vld [vmem:[%s688 + $0x6a8] sm:$0xff]
        %v6343 = vld [vmem:[%s688 + $0x6b0] sm:$0xff]
        %v6344 = vld [vmem:[%s688 + $0x6b8] sm:$0xff]
        %v6345 = vld [vmem:[%s688 + $0x6c0] sm:$0xff]
        %v6346 = vld [vmem:[%s688 + $0x6c8] sm:$0xff]
        %v6347 = vld [vmem:[%s688 + $0x6d0] sm:$0xff]
        %v6348 = vld [vmem:[%s688 + $0x6d8] sm:$0xff]
        %v6349 = vld [vmem:[%s688 + $0x6e0] sm:$0xff]
        %v6350 = vld [vmem:[%s688 + $0x6e8] sm:$0xff]
        %v6351 = vld [vmem:[%s688 + $0x6f0] sm:$0xff]
        %v6352 = vld [vmem:[%s688 + $0x6f8] sm:$0xff]
        %v6353 = vld [vmem:[%s688 + $0x700] sm:$0xff]
        %v6354 = vld [vmem:[%s688 + $0x708] sm:$0xff]
        %v6355 = vld [vmem:[%s688 + $0x710] sm:$0xff]
        %v6356 = vld [vmem:[%s688 + $0x718] sm:$0xff]
        %v6357 = vld [vmem:[%s688 + $0x720] sm:$0xff]
        %v6358 = vld [vmem:[%s688 + $0x728] sm:$0xff]
        %v6359 = vld [vmem:[%s688 + $0x730] sm:$0xff]
        %v6360 = vld [vmem:[%s688 + $0x738] sm:$0xff]
        %v6361 = vld [vmem:[%s688 + $0x740] sm:$0xff]
        %v6362 = vld [vmem:[%s688 + $0x748] sm:$0xff]
        %v6363 = vld [vmem:[%s688 + $0x750] sm:$0xff]
        %v6364 = vld [vmem:[%s688 + $0x758] sm:$0xff]
        %v6365 = vld [vmem:[%s688 + $0x760] sm:$0xff]
        %v6366 = vld [vmem:[%s688 + $0x768] sm:$0xff]
        %v6367 = vld [vmem:[%s688 + $0x770] sm:$0xff]
        %v6368 = vld [vmem:[%s688 + $0x778] sm:$0xff]
        %v6369 = vld [vmem:[%s688 + $0x780] sm:$0xff]
        %v6370 = vld [vmem:[%s688 + $0x788] sm:$0xff]
        %v6371 = vld [vmem:[%s688 + $0x790] sm:$0xff]
        %v6372 = vld [vmem:[%s688 + $0x798] sm:$0xff]
        %v6373 = vld [vmem:[%s688 + $0x7a0] sm:$0xff]
        %v6374 = vld [vmem:[%s688 + $0x7a8] sm:$0xff]
        %v6375 = vld [vmem:[%s688 + $0x7b0] sm:$0xff]
        %v6376 = vld [vmem:[%s688 + $0x7b8] sm:$0xff]
        %v6377 = vld [vmem:[%s688 + $0x7c0] sm:$0xff]
        %v6378 = vld [vmem:[%s688 + $0x7c8] sm:$0xff]
        %v6379 = vld [vmem:[%s688 + $0x7d0] sm:$0xff]
        %v6380 = vld [vmem:[%s688 + $0x7d8] sm:$0xff]
        %v6381 = vld [vmem:[%s688 + $0x7e0] sm:$0xff]
        %v6382 = vld [vmem:[%s688 + $0x7e8] sm:$0xff]
        %v6383 = vld [vmem:[%s688 + $0x7f0] sm:$0xff]
        %v6384 = vld [vmem:[%s688 + $0x7f8] sm:$0xff]
        %v6385 = vlaneseq
        %v6386 = vshrl.u32 %v6385, 7
        %v6387 = vsub.s32 1, %v6386
        %v6388 = vrot.slane %v1720, %v6387
        %v6389 = vlaneseq
        %v6390 = vshrl.u32 %v6389, 7
        %v6391 = vsub.s32 1, %v6390
        %v6392 = vrot.slane %v1721, %v6391
        %v6393 = vlaneseq
        %v6394 = vshrl.u32 %v6393, 7
        %v6395 = vsub.s32 1, %v6394
        %v6396 = vrot.slane %v1722, %v6395
        %v6397 = vlaneseq
        %v6398 = vshrl.u32 %v6397, 7
        %v6399 = vsub.s32 1, %v6398
        %v6400 = vrot.slane %v1723, %v6399
        %v6401 = vlaneseq
        %v6402 = vshrl.u32 %v6401, 7
        %v6403 = vsub.s32 1, %v6402
        %v6404 = vrot.slane %v1724, %v6403
        %v6405 = vlaneseq
        %v6406 = vshrl.u32 %v6405, 7
        %v6407 = vsub.s32 1, %v6406
        %v6408 = vrot.slane %v1725, %v6407
        %v6409 = vlaneseq
        %v6410 = vshrl.u32 %v6409, 7
        %v6411 = vsub.s32 1, %v6410
        %v6412 = vrot.slane %v1726, %v6411
        %v6413 = vlaneseq
        %v6414 = vshrl.u32 %v6413, 7
        %v6415 = vsub.s32 1, %v6414
        %v6416 = vrot.slane %v1727, %v6415
        %v6673 = vunpack.c.l.b16 %v6129
        %v6674 = vunpack.c.h.b16 %v6129
        %v6675 = vunpack.c.l.b16 %v6130
        %v6676 = vunpack.c.h.b16 %v6130
        %v6677 = vunpack.c.l.b16 %v6131
        %v6678 = vunpack.c.h.b16 %v6131
        %v6679 = vunpack.c.l.b16 %v6132
        %v6680 = vunpack.c.h.b16 %v6132
        %v6681 = vunpack.c.l.b16 %v6133
        %v6682 = vunpack.c.h.b16 %v6133
        %v6683 = vunpack.c.l.b16 %v6134
        %v6684 = vunpack.c.h.b16 %v6134
        %v6685 = vunpack.c.l.b16 %v6135
        %v6686 = vunpack.c.h.b16 %v6135
        %v6687 = vunpack.c.l.b16 %v6136
        %v6688 = vunpack.c.h.b16 %v6136
        %v6689 = vunpack.c.l.b16 %v6137
        %v6690 = vunpack.c.h.b16 %v6137
        %v6691 = vunpack.c.l.b16 %v6138
        %v6692 = vunpack.c.h.b16 %v6138
        %v6693 = vunpack.c.l.b16 %v6139
        %v6694 = vunpack.c.h.b16 %v6139
        %v6695 = vunpack.c.l.b16 %v6140
        %v6696 = vunpack.c.h.b16 %v6140
        %v6697 = vunpack.c.l.b16 %v6141
        %v6698 = vunpack.c.h.b16 %v6141
        %v6699 = vunpack.c.l.b16 %v6142
        %v6700 = vunpack.c.h.b16 %v6142
        %v6701 = vunpack.c.l.b16 %v6143
        %v6702 = vunpack.c.h.b16 %v6143
        %v6703 = vunpack.c.l.b16 %v6144
        %v6704 = vunpack.c.h.b16 %v6144
        %v6705 = vunpack.c.l.b16 %v6145
        %v6706 = vunpack.c.h.b16 %v6145
        %v6707 = vunpack.c.l.b16 %v6146
        %v6708 = vunpack.c.h.b16 %v6146
        %v6709 = vunpack.c.l.b16 %v6147
        %v6710 = vunpack.c.h.b16 %v6147
        %v6711 = vunpack.c.l.b16 %v6148
        %v6712 = vunpack.c.h.b16 %v6148
        %v6713 = vunpack.c.l.b16 %v6149
        %v6714 = vunpack.c.h.b16 %v6149
        %v6715 = vunpack.c.l.b16 %v6150
        %v6716 = vunpack.c.h.b16 %v6150
        %v6717 = vunpack.c.l.b16 %v6151
        %v6718 = vunpack.c.h.b16 %v6151
        %v6719 = vunpack.c.l.b16 %v6152
        %v6720 = vunpack.c.h.b16 %v6152
        %v6721 = vunpack.c.l.b16 %v6153
        %v6722 = vunpack.c.h.b16 %v6153
        %v6723 = vunpack.c.l.b16 %v6154
        %v6724 = vunpack.c.h.b16 %v6154
        %v6725 = vunpack.c.l.b16 %v6155
        %v6726 = vunpack.c.h.b16 %v6155
        %v6727 = vunpack.c.l.b16 %v6156
        %v6728 = vunpack.c.h.b16 %v6156
        %v6729 = vunpack.c.l.b16 %v6157
        %v6730 = vunpack.c.h.b16 %v6157
        %v6731 = vunpack.c.l.b16 %v6158
        %v6732 = vunpack.c.h.b16 %v6158
        %v6733 = vunpack.c.l.b16 %v6159
        %v6734 = vunpack.c.h.b16 %v6159
        %v6735 = vunpack.c.l.b16 %v6160
        %v6736 = vunpack.c.h.b16 %v6160
        %v6737 = vunpack.c.l.b16 %v6161
        %v6738 = vunpack.c.h.b16 %v6161
        %v6739 = vunpack.c.l.b16 %v6162
        %v6740 = vunpack.c.h.b16 %v6162
        %v6741 = vunpack.c.l.b16 %v6163
        %v6742 = vunpack.c.h.b16 %v6163
        %v6743 = vunpack.c.l.b16 %v6164
        %v6744 = vunpack.c.h.b16 %v6164
        %v6745 = vunpack.c.l.b16 %v6165
        %v6746 = vunpack.c.h.b16 %v6165
        %v6747 = vunpack.c.l.b16 %v6166
        %v6748 = vunpack.c.h.b16 %v6166
        %v6749 = vunpack.c.l.b16 %v6167
        %v6750 = vunpack.c.h.b16 %v6167
        %v6751 = vunpack.c.l.b16 %v6168
        %v6752 = vunpack.c.h.b16 %v6168
        %v6753 = vunpack.c.l.b16 %v6169
        %v6754 = vunpack.c.h.b16 %v6169
        %v6755 = vunpack.c.l.b16 %v6170
        %v6756 = vunpack.c.h.b16 %v6170
        %v6757 = vunpack.c.l.b16 %v6171
        %v6758 = vunpack.c.h.b16 %v6171
        %v6759 = vunpack.c.l.b16 %v6172
        %v6760 = vunpack.c.h.b16 %v6172
        %v6761 = vunpack.c.l.b16 %v6173
        %v6762 = vunpack.c.h.b16 %v6173
        %v6763 = vunpack.c.l.b16 %v6174
        %v6764 = vunpack.c.h.b16 %v6174
        %v6765 = vunpack.c.l.b16 %v6175
        %v6766 = vunpack.c.h.b16 %v6175
        %v6767 = vunpack.c.l.b16 %v6176
        %v6768 = vunpack.c.h.b16 %v6176
        %v6769 = vunpack.c.l.b16 %v6177
        %v6770 = vunpack.c.h.b16 %v6177
        %v6771 = vunpack.c.l.b16 %v6178
        %v6772 = vunpack.c.h.b16 %v6178
        %v6773 = vunpack.c.l.b16 %v6179
        %v6774 = vunpack.c.h.b16 %v6179
        %v6775 = vunpack.c.l.b16 %v6180
        %v6776 = vunpack.c.h.b16 %v6180
        %v6777 = vunpack.c.l.b16 %v6181
        %v6778 = vunpack.c.h.b16 %v6181
        %v6779 = vunpack.c.l.b16 %v6182
        %v6780 = vunpack.c.h.b16 %v6182
        %v6781 = vunpack.c.l.b16 %v6183
        %v6782 = vunpack.c.h.b16 %v6183
        %v6783 = vunpack.c.l.b16 %v6184
        %v6784 = vunpack.c.h.b16 %v6184
        %v6785 = vunpack.c.l.b16 %v6185
        %v6786 = vunpack.c.h.b16 %v6185
        %v6787 = vunpack.c.l.b16 %v6186
        %v6788 = vunpack.c.h.b16 %v6186
        %v6789 = vunpack.c.l.b16 %v6187
        %v6790 = vunpack.c.h.b16 %v6187
        %v6791 = vunpack.c.l.b16 %v6188
        %v6792 = vunpack.c.h.b16 %v6188
        %v6793 = vunpack.c.l.b16 %v6189
        %v6794 = vunpack.c.h.b16 %v6189
        %v6795 = vunpack.c.l.b16 %v6190
        %v6796 = vunpack.c.h.b16 %v6190
        %v6797 = vunpack.c.l.b16 %v6191
        %v6798 = vunpack.c.h.b16 %v6191
        %v6799 = vunpack.c.l.b16 %v6192
        %v6800 = vunpack.c.h.b16 %v6192
        %v6801 = vunpack.c.l.b16 %v6193
        %v6802 = vunpack.c.h.b16 %v6193
        %v6803 = vunpack.c.l.b16 %v6194
        %v6804 = vunpack.c.h.b16 %v6194
        %v6805 = vunpack.c.l.b16 %v6195
        %v6806 = vunpack.c.h.b16 %v6195
        %v6807 = vunpack.c.l.b16 %v6196
        %v6808 = vunpack.c.h.b16 %v6196
        %v6809 = vunpack.c.l.b16 %v6197
        %v6810 = vunpack.c.h.b16 %v6197
        %v6811 = vunpack.c.l.b16 %v6198
        %v6812 = vunpack.c.h.b16 %v6198
        %v6813 = vunpack.c.l.b16 %v6199
        %v6814 = vunpack.c.h.b16 %v6199
        %v6815 = vunpack.c.l.b16 %v6200
        %v6816 = vunpack.c.h.b16 %v6200
        %v6817 = vunpack.c.l.b16 %v6201
        %v6818 = vunpack.c.h.b16 %v6201
        %v6819 = vunpack.c.l.b16 %v6202
        %v6820 = vunpack.c.h.b16 %v6202
        %v6821 = vunpack.c.l.b16 %v6203
        %v6822 = vunpack.c.h.b16 %v6203
        %v6823 = vunpack.c.l.b16 %v6204
        %v6824 = vunpack.c.h.b16 %v6204
        %v6825 = vunpack.c.l.b16 %v6205
        %v6826 = vunpack.c.h.b16 %v6205
        %v6827 = vunpack.c.l.b16 %v6206
        %v6828 = vunpack.c.h.b16 %v6206
        %v6829 = vunpack.c.l.b16 %v6207
        %v6830 = vunpack.c.h.b16 %v6207
        %v6831 = vunpack.c.l.b16 %v6208
        %v6832 = vunpack.c.h.b16 %v6208
        %v6833 = vunpack.c.l.b16 %v6209
        %v6834 = vunpack.c.h.b16 %v6209
        %v6835 = vunpack.c.l.b16 %v6210
        %v6836 = vunpack.c.h.b16 %v6210
        %v6837 = vunpack.c.l.b16 %v6211
        %v6838 = vunpack.c.h.b16 %v6211
        %v6839 = vunpack.c.l.b16 %v6212
        %v6840 = vunpack.c.h.b16 %v6212
        %v6841 = vunpack.c.l.b16 %v6213
        %v6842 = vunpack.c.h.b16 %v6213
        %v6843 = vunpack.c.l.b16 %v6214
        %v6844 = vunpack.c.h.b16 %v6214
        %v6845 = vunpack.c.l.b16 %v6215
        %v6846 = vunpack.c.h.b16 %v6215
        %v6847 = vunpack.c.l.b16 %v6216
        %v6848 = vunpack.c.h.b16 %v6216
        %v6849 = vunpack.c.l.b16 %v6217
        %v6850 = vunpack.c.h.b16 %v6217
        %v6851 = vunpack.c.l.b16 %v6218
        %v6852 = vunpack.c.h.b16 %v6218
        %v6853 = vunpack.c.l.b16 %v6219
        %v6854 = vunpack.c.h.b16 %v6219
        %v6855 = vunpack.c.l.b16 %v6220
        %v6856 = vunpack.c.h.b16 %v6220
        %v6857 = vunpack.c.l.b16 %v6221
        %v6858 = vunpack.c.h.b16 %v6221
        %v6859 = vunpack.c.l.b16 %v6222
        %v6860 = vunpack.c.h.b16 %v6222
        %v6861 = vunpack.c.l.b16 %v6223
        %v6862 = vunpack.c.h.b16 %v6223
        %v6863 = vunpack.c.l.b16 %v6224
        %v6864 = vunpack.c.h.b16 %v6224
        %v6865 = vunpack.c.l.b16 %v6225
        %v6866 = vunpack.c.h.b16 %v6225
        %v6867 = vunpack.c.l.b16 %v6226
        %v6868 = vunpack.c.h.b16 %v6226
        %v6869 = vunpack.c.l.b16 %v6227
        %v6870 = vunpack.c.h.b16 %v6227
        %v6871 = vunpack.c.l.b16 %v6228
        %v6872 = vunpack.c.h.b16 %v6228
        %v6873 = vunpack.c.l.b16 %v6229
        %v6874 = vunpack.c.h.b16 %v6229
        %v6875 = vunpack.c.l.b16 %v6230
        %v6876 = vunpack.c.h.b16 %v6230
        %v6877 = vunpack.c.l.b16 %v6231
        %v6878 = vunpack.c.h.b16 %v6231
        %v6879 = vunpack.c.l.b16 %v6232
        %v6880 = vunpack.c.h.b16 %v6232
        %v6881 = vunpack.c.l.b16 %v6233
        %v6882 = vunpack.c.h.b16 %v6233
        %v6883 = vunpack.c.l.b16 %v6234
        %v6884 = vunpack.c.h.b16 %v6234
        %v6885 = vunpack.c.l.b16 %v6235
        %v6886 = vunpack.c.h.b16 %v6235
        %v6887 = vunpack.c.l.b16 %v6236
        %v6888 = vunpack.c.h.b16 %v6236
        %v6889 = vunpack.c.l.b16 %v6237
        %v6890 = vunpack.c.h.b16 %v6237
        %v6891 = vunpack.c.l.b16 %v6238
        %v6892 = vunpack.c.h.b16 %v6238
        %v6893 = vunpack.c.l.b16 %v6239
        %v6894 = vunpack.c.h.b16 %v6239
        %v6895 = vunpack.c.l.b16 %v6240
        %v6896 = vunpack.c.h.b16 %v6240
        %v6897 = vunpack.c.l.b16 %v6241
        %v6898 = vunpack.c.h.b16 %v6241
        %v6899 = vunpack.c.l.b16 %v6242
        %v6900 = vunpack.c.h.b16 %v6242
        %v6901 = vunpack.c.l.b16 %v6243
        %v6902 = vunpack.c.h.b16 %v6243
        %v6903 = vunpack.c.l.b16 %v6244
        %v6904 = vunpack.c.h.b16 %v6244
        %v6905 = vunpack.c.l.b16 %v6245
        %v6906 = vunpack.c.h.b16 %v6245
        %v6907 = vunpack.c.l.b16 %v6246
        %v6908 = vunpack.c.h.b16 %v6246
        %v6909 = vunpack.c.l.b16 %v6247
        %v6910 = vunpack.c.h.b16 %v6247
        %v6911 = vunpack.c.l.b16 %v6248
        %v6912 = vunpack.c.h.b16 %v6248
        %v6913 = vunpack.c.l.b16 %v6249
        %v6914 = vunpack.c.h.b16 %v6249
        %v6915 = vunpack.c.l.b16 %v6250
        %v6916 = vunpack.c.h.b16 %v6250
        %v6917 = vunpack.c.l.b16 %v6251
        %v6918 = vunpack.c.h.b16 %v6251
        %v6919 = vunpack.c.l.b16 %v6252
        %v6920 = vunpack.c.h.b16 %v6252
        %v6921 = vunpack.c.l.b16 %v6253
        %v6922 = vunpack.c.h.b16 %v6253
        %v6923 = vunpack.c.l.b16 %v6254
        %v6924 = vunpack.c.h.b16 %v6254
        %v6925 = vunpack.c.l.b16 %v6255
        %v6926 = vunpack.c.h.b16 %v6255
        %v6927 = vunpack.c.l.b16 %v6256
        %v6928 = vunpack.c.h.b16 %v6256
        %v6929 = vunpack.c.l.b16 %v6257
        %v6930 = vunpack.c.h.b16 %v6257
        %v6931 = vunpack.c.l.b16 %v6258
        %v6932 = vunpack.c.h.b16 %v6258
        %v6933 = vunpack.c.l.b16 %v6259
        %v6934 = vunpack.c.h.b16 %v6259
        %v6935 = vunpack.c.l.b16 %v6260
        %v6936 = vunpack.c.h.b16 %v6260
        %v6937 = vunpack.c.l.b16 %v6261
        %v6938 = vunpack.c.h.b16 %v6261
        %v6939 = vunpack.c.l.b16 %v6262
        %v6940 = vunpack.c.h.b16 %v6262
        %v6941 = vunpack.c.l.b16 %v6263
        %v6942 = vunpack.c.h.b16 %v6263
        %v6943 = vunpack.c.l.b16 %v6264
        %v6944 = vunpack.c.h.b16 %v6264
        %v6945 = vunpack.c.l.b16 %v6265
        %v6946 = vunpack.c.h.b16 %v6265
        %v6947 = vunpack.c.l.b16 %v6266
        %v6948 = vunpack.c.h.b16 %v6266
        %v6949 = vunpack.c.l.b16 %v6267
        %v6950 = vunpack.c.h.b16 %v6267
        %v6951 = vunpack.c.l.b16 %v6268
        %v6952 = vunpack.c.h.b16 %v6268
        %v6953 = vunpack.c.l.b16 %v6269
        %v6954 = vunpack.c.h.b16 %v6269
        %v6955 = vunpack.c.l.b16 %v6270
        %v6956 = vunpack.c.h.b16 %v6270
        %v6957 = vunpack.c.l.b16 %v6271
        %v6958 = vunpack.c.h.b16 %v6271
        %v6959 = vunpack.c.l.b16 %v6272
        %v6960 = vunpack.c.h.b16 %v6272
        %v6961 = vunpack.c.l.b16 %v6273
        %v6962 = vunpack.c.h.b16 %v6273
        %v6963 = vunpack.c.l.b16 %v6274
        %v6964 = vunpack.c.h.b16 %v6274
        %v6965 = vunpack.c.l.b16 %v6275
        %v6966 = vunpack.c.h.b16 %v6275
        %v6967 = vunpack.c.l.b16 %v6276
        %v6968 = vunpack.c.h.b16 %v6276
        %v6969 = vunpack.c.l.b16 %v6277
        %v6970 = vunpack.c.h.b16 %v6277
        %v6971 = vunpack.c.l.b16 %v6278
        %v6972 = vunpack.c.h.b16 %v6278
        %v6973 = vunpack.c.l.b16 %v6279
        %v6974 = vunpack.c.h.b16 %v6279
        %v6975 = vunpack.c.l.b16 %v6280
        %v6976 = vunpack.c.h.b16 %v6280
        %v6977 = vunpack.c.l.b16 %v6281
        %v6978 = vunpack.c.h.b16 %v6281
        %v6979 = vunpack.c.l.b16 %v6282
        %v6980 = vunpack.c.h.b16 %v6282
        %v6981 = vunpack.c.l.b16 %v6283
        %v6982 = vunpack.c.h.b16 %v6283
        %v6983 = vunpack.c.l.b16 %v6284
        %v6984 = vunpack.c.h.b16 %v6284
        %v6985 = vunpack.c.l.b16 %v6285
        %v6986 = vunpack.c.h.b16 %v6285
        %v6987 = vunpack.c.l.b16 %v6286
        %v6988 = vunpack.c.h.b16 %v6286
        %v6989 = vunpack.c.l.b16 %v6287
        %v6990 = vunpack.c.h.b16 %v6287
        %v6991 = vunpack.c.l.b16 %v6288
        %v6992 = vunpack.c.h.b16 %v6288
        %v6993 = vunpack.c.l.b16 %v6289
        %v6994 = vunpack.c.h.b16 %v6289
        %v6995 = vunpack.c.l.b16 %v6290
        %v6996 = vunpack.c.h.b16 %v6290
        %v6997 = vunpack.c.l.b16 %v6291
        %v6998 = vunpack.c.h.b16 %v6291
        %v6999 = vunpack.c.l.b16 %v6292
        %v7000 = vunpack.c.h.b16 %v6292
        %v7001 = vunpack.c.l.b16 %v6293
        %v7002 = vunpack.c.h.b16 %v6293
        %v7003 = vunpack.c.l.b16 %v6294
        %v7004 = vunpack.c.h.b16 %v6294
        %v7005 = vunpack.c.l.b16 %v6295
        %v7006 = vunpack.c.h.b16 %v6295
        %v7007 = vunpack.c.l.b16 %v6296
        %v7008 = vunpack.c.h.b16 %v6296
        %v7009 = vunpack.c.l.b16 %v6297
        %v7010 = vunpack.c.h.b16 %v6297
        %v7011 = vunpack.c.l.b16 %v6298
        %v7012 = vunpack.c.h.b16 %v6298
        %v7013 = vunpack.c.l.b16 %v6299
        %v7014 = vunpack.c.h.b16 %v6299
        %v7015 = vunpack.c.l.b16 %v6300
        %v7016 = vunpack.c.h.b16 %v6300
        %v7017 = vunpack.c.l.b16 %v6301
        %v7018 = vunpack.c.h.b16 %v6301
        %v7019 = vunpack.c.l.b16 %v6302
        %v7020 = vunpack.c.h.b16 %v6302
        %v7021 = vunpack.c.l.b16 %v6303
        %v7022 = vunpack.c.h.b16 %v6303
        %v7023 = vunpack.c.l.b16 %v6304
        %v7024 = vunpack.c.h.b16 %v6304
        %v7025 = vunpack.c.l.b16 %v6305
        %v7026 = vunpack.c.h.b16 %v6305
        %v7027 = vunpack.c.l.b16 %v6306
        %v7028 = vunpack.c.h.b16 %v6306
        %v7029 = vunpack.c.l.b16 %v6307
        %v7030 = vunpack.c.h.b16 %v6307
        %v7031 = vunpack.c.l.b16 %v6308
        %v7032 = vunpack.c.h.b16 %v6308
        %v7033 = vunpack.c.l.b16 %v6309
        %v7034 = vunpack.c.h.b16 %v6309
        %v7035 = vunpack.c.l.b16 %v6310
        %v7036 = vunpack.c.h.b16 %v6310
        %v7037 = vunpack.c.l.b16 %v6311
        %v7038 = vunpack.c.h.b16 %v6311
        %v7039 = vunpack.c.l.b16 %v6312
        %v7040 = vunpack.c.h.b16 %v6312
        %v7041 = vunpack.c.l.b16 %v6313
        %v7042 = vunpack.c.h.b16 %v6313
        %v7043 = vunpack.c.l.b16 %v6314
        %v7044 = vunpack.c.h.b16 %v6314
        %v7045 = vunpack.c.l.b16 %v6315
        %v7046 = vunpack.c.h.b16 %v6315
        %v7047 = vunpack.c.l.b16 %v6316
        %v7048 = vunpack.c.h.b16 %v6316
        %v7049 = vunpack.c.l.b16 %v6317
        %v7050 = vunpack.c.h.b16 %v6317
        %v7051 = vunpack.c.l.b16 %v6318
        %v7052 = vunpack.c.h.b16 %v6318
        %v7053 = vunpack.c.l.b16 %v6319
        %v7054 = vunpack.c.h.b16 %v6319
        %v7055 = vunpack.c.l.b16 %v6320
        %v7056 = vunpack.c.h.b16 %v6320
        %v7057 = vunpack.c.l.b16 %v6321
        %v7058 = vunpack.c.h.b16 %v6321
        %v7059 = vunpack.c.l.b16 %v6322
        %v7060 = vunpack.c.h.b16 %v6322
        %v7061 = vunpack.c.l.b16 %v6323
        %v7062 = vunpack.c.h.b16 %v6323
        %v7063 = vunpack.c.l.b16 %v6324
        %v7064 = vunpack.c.h.b16 %v6324
        %v7065 = vunpack.c.l.b16 %v6325
        %v7066 = vunpack.c.h.b16 %v6325
        %v7067 = vunpack.c.l.b16 %v6326
        %v7068 = vunpack.c.h.b16 %v6326
        %v7069 = vunpack.c.l.b16 %v6327
        %v7070 = vunpack.c.h.b16 %v6327
        %v7071 = vunpack.c.l.b16 %v6328
        %v7072 = vunpack.c.h.b16 %v6328
        %v7073 = vunpack.c.l.b16 %v6329
        %v7074 = vunpack.c.h.b16 %v6329
        %v7075 = vunpack.c.l.b16 %v6330
        %v7076 = vunpack.c.h.b16 %v6330
        %v7077 = vunpack.c.l.b16 %v6331
        %v7078 = vunpack.c.h.b16 %v6331
        %v7079 = vunpack.c.l.b16 %v6332
        %v7080 = vunpack.c.h.b16 %v6332
        %v7081 = vunpack.c.l.b16 %v6333
        %v7082 = vunpack.c.h.b16 %v6333
        %v7083 = vunpack.c.l.b16 %v6334
        %v7084 = vunpack.c.h.b16 %v6334
        %v7085 = vunpack.c.l.b16 %v6335
        %v7086 = vunpack.c.h.b16 %v6335
        %v7087 = vunpack.c.l.b16 %v6336
        %v7088 = vunpack.c.h.b16 %v6336
        %v7089 = vunpack.c.l.b16 %v6337
        %v7090 = vunpack.c.h.b16 %v6337
        %v7091 = vunpack.c.l.b16 %v6338
        %v7092 = vunpack.c.h.b16 %v6338
        %v7093 = vunpack.c.l.b16 %v6339
        %v7094 = vunpack.c.h.b16 %v6339
        %v7095 = vunpack.c.l.b16 %v6340
        %v7096 = vunpack.c.h.b16 %v6340
        %v7097 = vunpack.c.l.b16 %v6341
        %v7098 = vunpack.c.h.b16 %v6341
        %v7099 = vunpack.c.l.b16 %v6342
        %v7100 = vunpack.c.h.b16 %v6342
        %v7101 = vunpack.c.l.b16 %v6343
        %v7102 = vunpack.c.h.b16 %v6343
        %v7103 = vunpack.c.l.b16 %v6344
        %v7104 = vunpack.c.h.b16 %v6344
        %v7105 = vunpack.c.l.b16 %v6345
        %v7106 = vunpack.c.h.b16 %v6345
        %v7107 = vunpack.c.l.b16 %v6346
        %v7108 = vunpack.c.h.b16 %v6346
        %v7109 = vunpack.c.l.b16 %v6347
        %v7110 = vunpack.c.h.b16 %v6347
        %v7111 = vunpack.c.l.b16 %v6348
        %v7112 = vunpack.c.h.b16 %v6348
        %v7113 = vunpack.c.l.b16 %v6349
        %v7114 = vunpack.c.h.b16 %v6349
        %v7115 = vunpack.c.l.b16 %v6350
        %v7116 = vunpack.c.h.b16 %v6350
        %v7117 = vunpack.c.l.b16 %v6351
        %v7118 = vunpack.c.h.b16 %v6351
        %v7119 = vunpack.c.l.b16 %v6352
        %v7120 = vunpack.c.h.b16 %v6352
        %v7121 = vunpack.c.l.b16 %v6353
        %v7122 = vunpack.c.h.b16 %v6353
        %v7123 = vunpack.c.l.b16 %v6354
        %v7124 = vunpack.c.h.b16 %v6354
        %v7125 = vunpack.c.l.b16 %v6355
        %v7126 = vunpack.c.h.b16 %v6355
        %v7127 = vunpack.c.l.b16 %v6356
        %v7128 = vunpack.c.h.b16 %v6356
        %v7129 = vunpack.c.l.b16 %v6357
        %v7130 = vunpack.c.h.b16 %v6357
        %v7131 = vunpack.c.l.b16 %v6358
        %v7132 = vunpack.c.h.b16 %v6358
        %v7133 = vunpack.c.l.b16 %v6359
        %v7134 = vunpack.c.h.b16 %v6359
        %v7135 = vunpack.c.l.b16 %v6360
        %v7136 = vunpack.c.h.b16 %v6360
        %v7137 = vunpack.c.l.b16 %v6361
        %v7138 = vunpack.c.h.b16 %v6361
        %v7139 = vunpack.c.l.b16 %v6362
        %v7140 = vunpack.c.h.b16 %v6362
        %v7141 = vunpack.c.l.b16 %v6363
        %v7142 = vunpack.c.h.b16 %v6363
        %v7143 = vunpack.c.l.b16 %v6364
        %v7144 = vunpack.c.h.b16 %v6364
        %v7145 = vunpack.c.l.b16 %v6365
        %v7146 = vunpack.c.h.b16 %v6365
        %v7147 = vunpack.c.l.b16 %v6366
        %v7148 = vunpack.c.h.b16 %v6366
        %v7149 = vunpack.c.l.b16 %v6367
        %v7150 = vunpack.c.h.b16 %v6367
        %v7151 = vunpack.c.l.b16 %v6368
        %v7152 = vunpack.c.h.b16 %v6368
        %v7153 = vunpack.c.l.b16 %v6369
        %v7154 = vunpack.c.h.b16 %v6369
        %v7155 = vunpack.c.l.b16 %v6370
        %v7156 = vunpack.c.h.b16 %v6370
        %v7157 = vunpack.c.l.b16 %v6371
        %v7158 = vunpack.c.h.b16 %v6371
        %v7159 = vunpack.c.l.b16 %v6372
        %v7160 = vunpack.c.h.b16 %v6372
        %v7161 = vunpack.c.l.b16 %v6373
        %v7162 = vunpack.c.h.b16 %v6373
        %v7163 = vunpack.c.l.b16 %v6374
        %v7164 = vunpack.c.h.b16 %v6374
        %v7165 = vunpack.c.l.b16 %v6375
        %v7166 = vunpack.c.h.b16 %v6375
        %v7167 = vunpack.c.l.b16 %v6376
        %v7168 = vunpack.c.h.b16 %v6376
        %v7169 = vunpack.c.l.b16 %v6377
        %v7170 = vunpack.c.h.b16 %v6377
        %v7171 = vunpack.c.l.b16 %v6378
        %v7172 = vunpack.c.h.b16 %v6378
        %v7173 = vunpack.c.l.b16 %v6379
        %v7174 = vunpack.c.h.b16 %v6379
        %v7175 = vunpack.c.l.b16 %v6380
        %v7176 = vunpack.c.h.b16 %v6380
        %v7177 = vunpack.c.l.b16 %v6381
        %v7178 = vunpack.c.h.b16 %v6381
        %v7179 = vunpack.c.l.b16 %v6382
        %v7180 = vunpack.c.h.b16 %v6382
        %v7181 = vunpack.c.l.b16 %v6383
        %v7182 = vunpack.c.h.b16 %v6383
        %v7183 = vunpack.c.l.b16 %v6384
        %v7184 = vunpack.c.h.b16 %v6384
        %v7185 = vpack.c.b16 %v6681, %v6673
        %v7186 = vpack.c.b16 %v6682, %v6674
        %v7187 = vpack.c.b16 %v6683, %v6675
        %v7188 = vpack.c.b16 %v6684, %v6676
        %v7189 = vpack.c.b16 %v6685, %v6677
        %v7190 = vpack.c.b16 %v6686, %v6678
        %v7191 = vpack.c.b16 %v6687, %v6679
        %v7192 = vpack.c.b16 %v6688, %v6680
        %v7193 = vpack.c.b16 %v6697, %v6689
        %v7194 = vpack.c.b16 %v6698, %v6690
        %v7195 = vpack.c.b16 %v6699, %v6691
        %v7196 = vpack.c.b16 %v6700, %v6692
        %v7197 = vpack.c.b16 %v6701, %v6693
        %v7198 = vpack.c.b16 %v6702, %v6694
        %v7199 = vpack.c.b16 %v6703, %v6695
        %v7200 = vpack.c.b16 %v6704, %v6696
        %v7201 = vpack.c.b16 %v6713, %v6705
        %v7202 = vpack.c.b16 %v6714, %v6706
        %v7203 = vpack.c.b16 %v6715, %v6707
        %v7204 = vpack.c.b16 %v6716, %v6708
        %v7205 = vpack.c.b16 %v6717, %v6709
        %v7206 = vpack.c.b16 %v6718, %v6710
        %v7207 = vpack.c.b16 %v6719, %v6711
        %v7208 = vpack.c.b16 %v6720, %v6712
        %v7209 = vpack.c.b16 %v6729, %v6721
        %v7210 = vpack.c.b16 %v6730, %v6722
        %v7211 = vpack.c.b16 %v6731, %v6723
        %v7212 = vpack.c.b16 %v6732, %v6724
        %v7213 = vpack.c.b16 %v6733, %v6725
        %v7214 = vpack.c.b16 %v6734, %v6726
        %v7215 = vpack.c.b16 %v6735, %v6727
        %v7216 = vpack.c.b16 %v6736, %v6728
        %v7217 = vpack.c.b16 %v6745, %v6737
        %v7218 = vpack.c.b16 %v6746, %v6738
        %v7219 = vpack.c.b16 %v6747, %v6739
        %v7220 = vpack.c.b16 %v6748, %v6740
        %v7221 = vpack.c.b16 %v6749, %v6741
        %v7222 = vpack.c.b16 %v6750, %v6742
        %v7223 = vpack.c.b16 %v6751, %v6743
        %v7224 = vpack.c.b16 %v6752, %v6744
        %v7225 = vpack.c.b16 %v6761, %v6753
        %v7226 = vpack.c.b16 %v6762, %v6754
        %v7227 = vpack.c.b16 %v6763, %v6755
        %v7228 = vpack.c.b16 %v6764, %v6756
        %v7229 = vpack.c.b16 %v6765, %v6757
        %v7230 = vpack.c.b16 %v6766, %v6758
        %v7231 = vpack.c.b16 %v6767, %v6759
        %v7232 = vpack.c.b16 %v6768, %v6760
        %v7233 = vpack.c.b16 %v6777, %v6769
        %v7234 = vpack.c.b16 %v6778, %v6770
        %v7235 = vpack.c.b16 %v6779, %v6771
        %v7236 = vpack.c.b16 %v6780, %v6772
        %v7237 = vpack.c.b16 %v6781, %v6773
        %v7238 = vpack.c.b16 %v6782, %v6774
        %v7239 = vpack.c.b16 %v6783, %v6775
        %v7240 = vpack.c.b16 %v6784, %v6776
        %v7241 = vpack.c.b16 %v6793, %v6785
        %v7242 = vpack.c.b16 %v6794, %v6786
        %v7243 = vpack.c.b16 %v6795, %v6787
        %v7244 = vpack.c.b16 %v6796, %v6788
        %v7245 = vpack.c.b16 %v6797, %v6789
        %v7246 = vpack.c.b16 %v6798, %v6790
        %v7247 = vpack.c.b16 %v6799, %v6791
        %v7248 = vpack.c.b16 %v6800, %v6792
        %v7249 = vpack.c.b16 %v6809, %v6801
        %v7250 = vpack.c.b16 %v6810, %v6802
        %v7251 = vpack.c.b16 %v6811, %v6803
        %v7252 = vpack.c.b16 %v6812, %v6804
        %v7253 = vpack.c.b16 %v6813, %v6805
        %v7254 = vpack.c.b16 %v6814, %v6806
        %v7255 = vpack.c.b16 %v6815, %v6807
        %v7256 = vpack.c.b16 %v6816, %v6808
        %v7257 = vpack.c.b16 %v6825, %v6817
        %v7258 = vpack.c.b16 %v6826, %v6818
        %v7259 = vpack.c.b16 %v6827, %v6819
        %v7260 = vpack.c.b16 %v6828, %v6820
        %v7261 = vpack.c.b16 %v6829, %v6821
        %v7262 = vpack.c.b16 %v6830, %v6822
        %v7263 = vpack.c.b16 %v6831, %v6823
        %v7264 = vpack.c.b16 %v6832, %v6824
        %v7265 = vpack.c.b16 %v6841, %v6833
        %v7266 = vpack.c.b16 %v6842, %v6834
        %v7267 = vpack.c.b16 %v6843, %v6835
        %v7268 = vpack.c.b16 %v6844, %v6836
        %v7269 = vpack.c.b16 %v6845, %v6837
        %v7270 = vpack.c.b16 %v6846, %v6838
        %v7271 = vpack.c.b16 %v6847, %v6839
        %v7272 = vpack.c.b16 %v6848, %v6840
        %v7273 = vpack.c.b16 %v6857, %v6849
        %v7274 = vpack.c.b16 %v6858, %v6850
        %v7275 = vpack.c.b16 %v6859, %v6851
        %v7276 = vpack.c.b16 %v6860, %v6852
        %v7277 = vpack.c.b16 %v6861, %v6853
        %v7278 = vpack.c.b16 %v6862, %v6854
        %v7279 = vpack.c.b16 %v6863, %v6855
        %v7280 = vpack.c.b16 %v6864, %v6856
        %v7281 = vpack.c.b16 %v6873, %v6865
        %v7282 = vpack.c.b16 %v6874, %v6866
        %v7283 = vpack.c.b16 %v6875, %v6867
        %v7284 = vpack.c.b16 %v6876, %v6868
        %v7285 = vpack.c.b16 %v6877, %v6869
        %v7286 = vpack.c.b16 %v6878, %v6870
        %v7287 = vpack.c.b16 %v6879, %v6871
        %v7288 = vpack.c.b16 %v6880, %v6872
        %v7289 = vpack.c.b16 %v6889, %v6881
        %v7290 = vpack.c.b16 %v6890, %v6882
        %v7291 = vpack.c.b16 %v6891, %v6883
        %v7292 = vpack.c.b16 %v6892, %v6884
        %v7293 = vpack.c.b16 %v6893, %v6885
        %v7294 = vpack.c.b16 %v6894, %v6886
        %v7295 = vpack.c.b16 %v6895, %v6887
        %v7296 = vpack.c.b16 %v6896, %v6888
        %v7297 = vpack.c.b16 %v6905, %v6897
        %v7298 = vpack.c.b16 %v6906, %v6898
        %v7299 = vpack.c.b16 %v6907, %v6899
        %v7300 = vpack.c.b16 %v6908, %v6900
        %v7301 = vpack.c.b16 %v6909, %v6901
        %v7302 = vpack.c.b16 %v6910, %v6902
        %v7303 = vpack.c.b16 %v6911, %v6903
        %v7304 = vpack.c.b16 %v6912, %v6904
        %v7305 = vpack.c.b16 %v6921, %v6913
        %v7306 = vpack.c.b16 %v6922, %v6914
        %v7307 = vpack.c.b16 %v6923, %v6915
        %v7308 = vpack.c.b16 %v6924, %v6916
        %v7309 = vpack.c.b16 %v6925, %v6917
        %v7310 = vpack.c.b16 %v6926, %v6918
        %v7311 = vpack.c.b16 %v6927, %v6919
        %v7312 = vpack.c.b16 %v6928, %v6920
        %v7313 = vpack.c.b16 %v6937, %v6929
        %v7314 = vpack.c.b16 %v6938, %v6930
        %v7315 = vpack.c.b16 %v6939, %v6931
        %v7316 = vpack.c.b16 %v6940, %v6932
        %v7317 = vpack.c.b16 %v6941, %v6933
        %v7318 = vpack.c.b16 %v6942, %v6934
        %v7319 = vpack.c.b16 %v6943, %v6935
        %v7320 = vpack.c.b16 %v6944, %v6936
        %v7321 = vpack.c.b16 %v6953, %v6945
        %v7322 = vpack.c.b16 %v6954, %v6946
        %v7323 = vpack.c.b16 %v6955, %v6947
        %v7324 = vpack.c.b16 %v6956, %v6948
        %v7325 = vpack.c.b16 %v6957, %v6949
        %v7326 = vpack.c.b16 %v6958, %v6950
        %v7327 = vpack.c.b16 %v6959, %v6951
        %v7328 = vpack.c.b16 %v6960, %v6952
        %v7329 = vpack.c.b16 %v6969, %v6961
        %v7330 = vpack.c.b16 %v6970, %v6962
        %v7331 = vpack.c.b16 %v6971, %v6963
        %v7332 = vpack.c.b16 %v6972, %v6964
        %v7333 = vpack.c.b16 %v6973, %v6965
        %v7334 = vpack.c.b16 %v6974, %v6966
        %v7335 = vpack.c.b16 %v6975, %v6967
        %v7336 = vpack.c.b16 %v6976, %v6968
        %v7337 = vpack.c.b16 %v6985, %v6977
        %v7338 = vpack.c.b16 %v6986, %v6978
        %v7339 = vpack.c.b16 %v6987, %v6979
        %v7340 = vpack.c.b16 %v6988, %v6980
        %v7341 = vpack.c.b16 %v6989, %v6981
        %v7342 = vpack.c.b16 %v6990, %v6982
        %v7343 = vpack.c.b16 %v6991, %v6983
        %v7344 = vpack.c.b16 %v6992, %v6984
        %v7345 = vpack.c.b16 %v7001, %v6993
        %v7346 = vpack.c.b16 %v7002, %v6994
        %v7347 = vpack.c.b16 %v7003, %v6995
        %v7348 = vpack.c.b16 %v7004, %v6996
        %v7349 = vpack.c.b16 %v7005, %v6997
        %v7350 = vpack.c.b16 %v7006, %v6998
        %v7351 = vpack.c.b16 %v7007, %v6999
        %v7352 = vpack.c.b16 %v7008, %v7000
        %v7353 = vpack.c.b16 %v7017, %v7009
        %v7354 = vpack.c.b16 %v7018, %v7010
        %v7355 = vpack.c.b16 %v7019, %v7011
        %v7356 = vpack.c.b16 %v7020, %v7012
        %v7357 = vpack.c.b16 %v7021, %v7013
        %v7358 = vpack.c.b16 %v7022, %v7014
        %v7359 = vpack.c.b16 %v7023, %v7015
        %v7360 = vpack.c.b16 %v7024, %v7016
        %v7361 = vpack.c.b16 %v7033, %v7025
        %v7362 = vpack.c.b16 %v7034, %v7026
        %v7363 = vpack.c.b16 %v7035, %v7027
        %v7364 = vpack.c.b16 %v7036, %v7028
        %v7365 = vpack.c.b16 %v7037, %v7029
        %v7366 = vpack.c.b16 %v7038, %v7030
        %v7367 = vpack.c.b16 %v7039, %v7031
        %v7368 = vpack.c.b16 %v7040, %v7032
        %v7369 = vpack.c.b16 %v7049, %v7041
        %v7370 = vpack.c.b16 %v7050, %v7042
        %v7371 = vpack.c.b16 %v7051, %v7043
        %v7372 = vpack.c.b16 %v7052, %v7044
        %v7373 = vpack.c.b16 %v7053, %v7045
        %v7374 = vpack.c.b16 %v7054, %v7046
        %v7375 = vpack.c.b16 %v7055, %v7047
        %v7376 = vpack.c.b16 %v7056, %v7048
        %v7377 = vpack.c.b16 %v7065, %v7057
        %v7378 = vpack.c.b16 %v7066, %v7058
        %v7379 = vpack.c.b16 %v7067, %v7059
        %v7380 = vpack.c.b16 %v7068, %v7060
        %v7381 = vpack.c.b16 %v7069, %v7061
        %v7382 = vpack.c.b16 %v7070, %v7062
        %v7383 = vpack.c.b16 %v7071, %v7063
        %v7384 = vpack.c.b16 %v7072, %v7064
        %v7385 = vpack.c.b16 %v7081, %v7073
        %v7386 = vpack.c.b16 %v7082, %v7074
        %v7387 = vpack.c.b16 %v7083, %v7075
        %v7388 = vpack.c.b16 %v7084, %v7076
        %v7389 = vpack.c.b16 %v7085, %v7077
        %v7390 = vpack.c.b16 %v7086, %v7078
        %v7391 = vpack.c.b16 %v7087, %v7079
        %v7392 = vpack.c.b16 %v7088, %v7080
        %v7393 = vpack.c.b16 %v7097, %v7089
        %v7394 = vpack.c.b16 %v7098, %v7090
        %v7395 = vpack.c.b16 %v7099, %v7091
        %v7396 = vpack.c.b16 %v7100, %v7092
        %v7397 = vpack.c.b16 %v7101, %v7093
        %v7398 = vpack.c.b16 %v7102, %v7094
        %v7399 = vpack.c.b16 %v7103, %v7095
        %v7400 = vpack.c.b16 %v7104, %v7096
        %v7401 = vpack.c.b16 %v7113, %v7105
        %v7402 = vpack.c.b16 %v7114, %v7106
        %v7403 = vpack.c.b16 %v7115, %v7107
        %v7404 = vpack.c.b16 %v7116, %v7108
        %v7405 = vpack.c.b16 %v7117, %v7109
        %v7406 = vpack.c.b16 %v7118, %v7110
        %v7407 = vpack.c.b16 %v7119, %v7111
        %v7408 = vpack.c.b16 %v7120, %v7112
        %v7409 = vpack.c.b16 %v7129, %v7121
        %v7410 = vpack.c.b16 %v7130, %v7122
        %v7411 = vpack.c.b16 %v7131, %v7123
        %v7412 = vpack.c.b16 %v7132, %v7124
        %v7413 = vpack.c.b16 %v7133, %v7125
        %v7414 = vpack.c.b16 %v7134, %v7126
        %v7415 = vpack.c.b16 %v7135, %v7127
        %v7416 = vpack.c.b16 %v7136, %v7128
        %v7417 = vpack.c.b16 %v7145, %v7137
        %v7418 = vpack.c.b16 %v7146, %v7138
        %v7419 = vpack.c.b16 %v7147, %v7139
        %v7420 = vpack.c.b16 %v7148, %v7140
        %v7421 = vpack.c.b16 %v7149, %v7141
        %v7422 = vpack.c.b16 %v7150, %v7142
        %v7423 = vpack.c.b16 %v7151, %v7143
        %v7424 = vpack.c.b16 %v7152, %v7144
        %v7425 = vpack.c.b16 %v7161, %v7153
        %v7426 = vpack.c.b16 %v7162, %v7154
        %v7427 = vpack.c.b16 %v7163, %v7155
        %v7428 = vpack.c.b16 %v7164, %v7156
        %v7429 = vpack.c.b16 %v7165, %v7157
        %v7430 = vpack.c.b16 %v7166, %v7158
        %v7431 = vpack.c.b16 %v7167, %v7159
        %v7432 = vpack.c.b16 %v7168, %v7160
        %v7433 = vpack.c.b16 %v7177, %v7169
        %v7434 = vpack.c.b16 %v7178, %v7170
        %v7435 = vpack.c.b16 %v7179, %v7171
        %v7436 = vpack.c.b16 %v7180, %v7172
        %v7437 = vpack.c.b16 %v7181, %v7173
        %v7438 = vpack.c.b16 %v7182, %v7174
        %v7439 = vpack.c.b16 %v7183, %v7175
        %v7440 = vpack.c.b16 %v7184, %v7176
        %7697 = vmatprep.subr.bf16.mxu0 %v7242
        %7698 = vmatpush1.bf16.msra.mxu0 %v7241
        %7699 = vmatprep.subr.bf16.mxu0 %v7234
        %7700 = vmatpush1.bf16.msra.mxu0 %v7233
        %7701 = vmatprep.subr.bf16.mxu0 %v7226
        %7702 = vmatpush1.bf16.msra.mxu0 %v7225
        %7703 = vmatprep.subr.bf16.mxu0 %v7218
        %7704 = vmatpush1.bf16.msra.mxu0 %v7217
        %7705 = vmatprep.subr.bf16.mxu0 %v7210
        %7706 = vmatpush1.bf16.msra.mxu0 %v7209
        %7707 = vmatprep.subr.bf16.mxu0 %v7202
        %7708 = vmatpush1.bf16.msra.mxu0 %v7201
        %7709 = vmatprep.subr.bf16.mxu0 %v7194
        %7710 = vmatpush1.bf16.msra.mxu0 %v7193
        %7711 = vmatprep.subr.bf16.mxu0 %v7186
        %7712 = vmatpush1.bf16.msra.mxu0 %v7185
        %7713 = vmatprep.subr.bf16.mxu0 %v7306
        %7714 = vmatpush2.bf16.msra.mxu0 %v7305
        %7715 = vmatprep.subr.bf16.mxu0 %v7298
        %7716 = vmatpush2.bf16.msra.mxu0 %v7297
        %7717 = vmatprep.subr.bf16.mxu0 %v7290
        %7718 = vmatpush2.bf16.msra.mxu0 %v7289
        %7719 = vmatprep.subr.bf16.mxu0 %v7282
        %7720 = vmatpush2.bf16.msra.mxu0 %v7281
        %7721 = vmatprep.subr.bf16.mxu0 %v7274
        %7722 = vmatpush2.bf16.msra.mxu0 %v7273
        %7723 = vmatprep.subr.bf16.mxu0 %v7266
        %7724 = vmatpush2.bf16.msra.mxu0 %v7265
        %7725 = vmatprep.subr.bf16.mxu0 %v7258
        %7726 = vmatpush2.bf16.msra.mxu0 %v7257
        %7727 = vmatprep.subr.bf16.mxu0 %v7250
        %7728 = vmatpush2.bf16.msra.mxu0 %v7249
        %7729 = vmatprep.mubr.bf16.mxu0 %v6126
        %7730 = vmatmul.mubr.bf16.gmra.mxu0 %v6125
        %v7731 = vpop.f32.mrf.mxu0
        %v7732 = vadd.f32 %v6388, %v7731
        %v7733 = vpop.f32.mrf.mxu0
        %v7734 = vadd.f32 %v6392, %v7733
        %v7735 = vpop.f32.mrf.mxu0
        %v7736 = vadd.f32 %v6388, %v7735
        %v7737 = vpop.f32.mrf.mxu0
        %v7738 = vadd.f32 %v6392, %v7737
        %7739 = vdwg.mxu0
        %7740 = vmatprep.subr.bf16.mxu0 %v7370
        %7741 = vmatpush1.bf16.msra.mxu0 %v7369
        %7742 = vmatprep.subr.bf16.mxu0 %v7362
        %7743 = vmatpush1.bf16.msra.mxu0 %v7361
        %7744 = vmatprep.subr.bf16.mxu0 %v7354
        %7745 = vmatpush1.bf16.msra.mxu0 %v7353
        %7746 = vmatprep.subr.bf16.mxu0 %v7346
        %7747 = vmatpush1.bf16.msra.mxu0 %v7345
        %7748 = vmatprep.subr.bf16.mxu0 %v7338
        %7749 = vmatpush1.bf16.msra.mxu0 %v7337
        %7750 = vmatprep.subr.bf16.mxu0 %v7330
        %7751 = vmatpush1.bf16.msra.mxu0 %v7329
        %7752 = vmatprep.subr.bf16.mxu0 %v7322
        %7753 = vmatpush1.bf16.msra.mxu0 %v7321
        %7754 = vmatprep.subr.bf16.mxu0 %v7314
        %7755 = vmatpush1.bf16.msra.mxu0 %v7313
        %7756 = vmatprep.subr.bf16.mxu0 %v7434
        %7757 = vmatpush2.bf16.msra.mxu0 %v7433
        %7758 = vmatprep.subr.bf16.mxu0 %v7426
        %7759 = vmatpush2.bf16.msra.mxu0 %v7425
        %7760 = vmatprep.subr.bf16.mxu0 %v7418
        %7761 = vmatpush2.bf16.msra.mxu0 %v7417
        %7762 = vmatprep.subr.bf16.mxu0 %v7410
        %7763 = vmatpush2.bf16.msra.mxu0 %v7409
        %7764 = vmatprep.subr.bf16.mxu0 %v7402
        %7765 = vmatpush2.bf16.msra.mxu0 %v7401
        %7766 = vmatprep.subr.bf16.mxu0 %v7394
        %7767 = vmatpush2.bf16.msra.mxu0 %v7393
        %7768 = vmatprep.subr.bf16.mxu0 %v7386
        %7769 = vmatpush2.bf16.msra.mxu0 %v7385
        %7770 = vmatprep.subr.bf16.mxu0 %v7378
        %7771 = vmatpush2.bf16.msra.mxu0 %v7377
        %7772 = vmatprep.mubr.bf16.mxu0 %v6128
        %7773 = vmatmul.mubr.bf16.gmra.mxu0 %v6127
        %v7774 = vpop.f32.mrf.mxu0
        %v7775 = vadd.f32 %v7732, %v7774
        %v7776 = vpop.f32.mrf.mxu0
        %v7777 = vadd.f32 %v7734, %v7776
        %v7778 = vpop.f32.mrf.mxu0
        %v7779 = vadd.f32 %v7736, %v7778
        %v7780 = vpop.f32.mrf.mxu0
        %v7781 = vadd.f32 %v7738, %v7780
        %7782 = vdwg.mxu0
        %7783 = vmatprep.subr.bf16.mxu0 %v7244
        %7784 = vmatpush1.bf16.msra.mxu0 %v7243
        %7785 = vmatprep.subr.bf16.mxu0 %v7236
        %7786 = vmatpush1.bf16.msra.mxu0 %v7235
        %7787 = vmatprep.subr.bf16.mxu0 %v7228
        %7788 = vmatpush1.bf16.msra.mxu0 %v7227
        %7789 = vmatprep.subr.bf16.mxu0 %v7220
        %7790 = vmatpush1.bf16.msra.mxu0 %v7219
        %7791 = vmatprep.subr.bf16.mxu0 %v7212
        %7792 = vmatpush1.bf16.msra.mxu0 %v7211
        %7793 = vmatprep.subr.bf16.mxu0 %v7204
        %7794 = vmatpush1.bf16.msra.mxu0 %v7203
        %7795 = vmatprep.subr.bf16.mxu0 %v7196
        %7796 = vmatpush1.bf16.msra.mxu0 %v7195
        %7797 = vmatprep.subr.bf16.mxu0 %v7188
        %7798 = vmatpush1.bf16.msra.mxu0 %v7187
        %7799 = vmatprep.subr.bf16.mxu0 %v7308
        %7800 = vmatpush2.bf16.msra.mxu0 %v7307
        %7801 = vmatprep.subr.bf16.mxu0 %v7300
        %7802 = vmatpush2.bf16.msra.mxu0 %v7299
        %7803 = vmatprep.subr.bf16.mxu0 %v7292
        %7804 = vmatpush2.bf16.msra.mxu0 %v7291
        %7805 = vmatprep.subr.bf16.mxu0 %v7284
        %7806 = vmatpush2.bf16.msra.mxu0 %v7283
        %7807 = vmatprep.subr.bf16.mxu0 %v7276
        %7808 = vmatpush2.bf16.msra.mxu0 %v7275
        %7809 = vmatprep.subr.bf16.mxu0 %v7268
        %7810 = vmatpush2.bf16.msra.mxu0 %v7267
        %7811 = vmatprep.subr.bf16.mxu0 %v7260
        %7812 = vmatpush2.bf16.msra.mxu0 %v7259
        %7813 = vmatprep.subr.bf16.mxu0 %v7252
        %7814 = vmatpush2.bf16.msra.mxu0 %v7251
        %7815 = vmatprep.mubr.bf16.mxu0 %v6126
        %7816 = vmatmul.mubr.bf16.gmra.mxu0 %v6125
        %v7817 = vpop.f32.mrf.mxu0
        %v7818 = vadd.f32 %v6396, %v7817
        %v7819 = vpop.f32.mrf.mxu0
        %v7820 = vadd.f32 %v6400, %v7819
        %v7821 = vpop.f32.mrf.mxu0
        %v7822 = vadd.f32 %v6396, %v7821
        %v7823 = vpop.f32.mrf.mxu0
        %v7824 = vadd.f32 %v6400, %v7823
        %7825 = vdwg.mxu0
        %7826 = vmatprep.subr.bf16.mxu0 %v7372
        %7827 = vmatpush1.bf16.msra.mxu0 %v7371
        %7828 = vmatprep.subr.bf16.mxu0 %v7364
        %7829 = vmatpush1.bf16.msra.mxu0 %v7363
        %7830 = vmatprep.subr.bf16.mxu0 %v7356
        %7831 = vmatpush1.bf16.msra.mxu0 %v7355
        %7832 = vmatprep.subr.bf16.mxu0 %v7348
        %7833 = vmatpush1.bf16.msra.mxu0 %v7347
        %7834 = vmatprep.subr.bf16.mxu0 %v7340
        %7835 = vmatpush1.bf16.msra.mxu0 %v7339
        %7836 = vmatprep.subr.bf16.mxu0 %v7332
        %7837 = vmatpush1.bf16.msra.mxu0 %v7331
        %7838 = vmatprep.subr.bf16.mxu0 %v7324
        %7839 = vmatpush1.bf16.msra.mxu0 %v7323
        %7840 = vmatprep.subr.bf16.mxu0 %v7316
        %7841 = vmatpush1.bf16.msra.mxu0 %v7315
        %7842 = vmatprep.subr.bf16.mxu0 %v7436
        %7843 = vmatpush2.bf16.msra.mxu0 %v7435
        %7844 = vmatprep.subr.bf16.mxu0 %v7428
        %7845 = vmatpush2.bf16.msra.mxu0 %v7427
        %7846 = vmatprep.subr.bf16.mxu0 %v7420
        %7847 = vmatpush2.bf16.msra.mxu0 %v7419
        %7848 = vmatprep.subr.bf16.mxu0 %v7412
        %7849 = vmatpush2.bf16.msra.mxu0 %v7411
        %7850 = vmatprep.subr.bf16.mxu0 %v7404
        %7851 = vmatpush2.bf16.msra.mxu0 %v7403
        %7852 = vmatprep.subr.bf16.mxu0 %v7396
        %7853 = vmatpush2.bf16.msra.mxu0 %v7395
        %7854 = vmatprep.subr.bf16.mxu0 %v7388
        %7855 = vmatpush2.bf16.msra.mxu0 %v7387
        %7856 = vmatprep.subr.bf16.mxu0 %v7380
        %7857 = vmatpush2.bf16.msra.mxu0 %v7379
        %7858 = vmatprep.mubr.bf16.mxu0 %v6128
        %7859 = vmatmul.mubr.bf16.gmra.mxu0 %v6127
        %v7860 = vpop.f32.mrf.mxu0
        %v7861 = vadd.f32 %v7818, %v7860
        %v7862 = vpop.f32.mrf.mxu0
        %v7863 = vadd.f32 %v7820, %v7862
        %v7864 = vpop.f32.mrf.mxu0
        %v7865 = vadd.f32 %v7822, %v7864
        %v7866 = vpop.f32.mrf.mxu0
        %v7867 = vadd.f32 %v7824, %v7866
        %7868 = vdwg.mxu0
        %7869 = vmatprep.subr.bf16.mxu0 %v7246
        %7870 = vmatpush1.bf16.msra.mxu0 %v7245
        %7871 = vmatprep.subr.bf16.mxu0 %v7238
        %7872 = vmatpush1.bf16.msra.mxu0 %v7237
        %7873 = vmatprep.subr.bf16.mxu0 %v7230
        %7874 = vmatpush1.bf16.msra.mxu0 %v7229
        %7875 = vmatprep.subr.bf16.mxu0 %v7222
        %7876 = vmatpush1.bf16.msra.mxu0 %v7221
        %7877 = vmatprep.subr.bf16.mxu0 %v7214
        %7878 = vmatpush1.bf16.msra.mxu0 %v7213
        %7879 = vmatprep.subr.bf16.mxu0 %v7206
        %7880 = vmatpush1.bf16.msra.mxu0 %v7205
        %7881 = vmatprep.subr.bf16.mxu0 %v7198
        %7882 = vmatpush1.bf16.msra.mxu0 %v7197
        %7883 = vmatprep.subr.bf16.mxu0 %v7190
        %7884 = vmatpush1.bf16.msra.mxu0 %v7189
        %7885 = vmatprep.subr.bf16.mxu0 %v7310
        %7886 = vmatpush2.bf16.msra.mxu0 %v7309
        %7887 = vmatprep.subr.bf16.mxu0 %v7302
        %7888 = vmatpush2.bf16.msra.mxu0 %v7301
        %7889 = vmatprep.subr.bf16.mxu0 %v7294
        %7890 = vmatpush2.bf16.msra.mxu0 %v7293
        %7891 = vmatprep.subr.bf16.mxu0 %v7286
        %7892 = vmatpush2.bf16.msra.mxu0 %v7285
        %7893 = vmatprep.subr.bf16.mxu0 %v7278
        %7894 = vmatpush2.bf16.msra.mxu0 %v7277
        %7895 = vmatprep.subr.bf16.mxu0 %v7270
        %7896 = vmatpush2.bf16.msra.mxu0 %v7269
        %7897 = vmatprep.subr.bf16.mxu0 %v7262
        %7898 = vmatpush2.bf16.msra.mxu0 %v7261
        %7899 = vmatprep.subr.bf16.mxu0 %v7254
        %7900 = vmatpush2.bf16.msra.mxu0 %v7253
        %7901 = vmatprep.mubr.bf16.mxu0 %v6126
        %7902 = vmatmul.mubr.bf16.gmra.mxu0 %v6125
        %v7903 = vpop.f32.mrf.mxu0
        %v7904 = vadd.f32 %v6404, %v7903
        %v7905 = vpop.f32.mrf.mxu0
        %v7906 = vadd.f32 %v6408, %v7905
        %v7907 = vpop.f32.mrf.mxu0
        %v7908 = vadd.f32 %v6404, %v7907
        %v7909 = vpop.f32.mrf.mxu0
        %v7910 = vadd.f32 %v6408, %v7909
        %7911 = vdwg.mxu0
        %7912 = vmatprep.subr.bf16.mxu0 %v7374
        %7913 = vmatpush1.bf16.msra.mxu0 %v7373
        %7914 = vmatprep.subr.bf16.mxu0 %v7366
        %7915 = vmatpush1.bf16.msra.mxu0 %v7365
        %7916 = vmatprep.subr.bf16.mxu0 %v7358
        %7917 = vmatpush1.bf16.msra.mxu0 %v7357
        %7918 = vmatprep.subr.bf16.mxu0 %v7350
        %7919 = vmatpush1.bf16.msra.mxu0 %v7349
        %7920 = vmatprep.subr.bf16.mxu0 %v7342
        %7921 = vmatpush1.bf16.msra.mxu0 %v7341
        %7922 = vmatprep.subr.bf16.mxu0 %v7334
        %7923 = vmatpush1.bf16.msra.mxu0 %v7333
        %7924 = vmatprep.subr.bf16.mxu0 %v7326
        %7925 = vmatpush1.bf16.msra.mxu0 %v7325
        %7926 = vmatprep.subr.bf16.mxu0 %v7318
        %7927 = vmatpush1.bf16.msra.mxu0 %v7317
        %7928 = vmatprep.subr.bf16.mxu0 %v7438
        %7929 = vmatpush2.bf16.msra.mxu0 %v7437
        %7930 = vmatprep.subr.bf16.mxu0 %v7430
        %7931 = vmatpush2.bf16.msra.mxu0 %v7429
        %7932 = vmatprep.subr.bf16.mxu0 %v7422
        %7933 = vmatpush2.bf16.msra.mxu0 %v7421
        %7934 = vmatprep.subr.bf16.mxu0 %v7414
        %7935 = vmatpush2.bf16.msra.mxu0 %v7413
        %7936 = vmatprep.subr.bf16.mxu0 %v7406
        %7937 = vmatpush2.bf16.msra.mxu0 %v7405
        %7938 = vmatprep.subr.bf16.mxu0 %v7398
        %7939 = vmatpush2.bf16.msra.mxu0 %v7397
        %7940 = vmatprep.subr.bf16.mxu0 %v7390
        %7941 = vmatpush2.bf16.msra.mxu0 %v7389
        %7942 = vmatprep.subr.bf16.mxu0 %v7382
        %7943 = vmatpush2.bf16.msra.mxu0 %v7381
        %7944 = vmatprep.mubr.bf16.mxu0 %v6128
        %7945 = vmatmul.mubr.bf16.gmra.mxu0 %v6127
        %v7946 = vpop.f32.mrf.mxu0
        %v7947 = vadd.f32 %v7904, %v7946
        %v7948 = vpop.f32.mrf.mxu0
        %v7949 = vadd.f32 %v7906, %v7948
        %v7950 = vpop.f32.mrf.mxu0
        %v7951 = vadd.f32 %v7908, %v7950
        %v7952 = vpop.f32.mrf.mxu0
        %v7953 = vadd.f32 %v7910, %v7952
        %7954 = vdwg.mxu0
        %7955 = vmatprep.subr.bf16.mxu0 %v7248
        %7956 = vmatpush1.bf16.msra.mxu0 %v7247
        %7957 = vmatprep.subr.bf16.mxu0 %v7240
        %7958 = vmatpush1.bf16.msra.mxu0 %v7239
        %7959 = vmatprep.subr.bf16.mxu0 %v7232
        %7960 = vmatpush1.bf16.msra.mxu0 %v7231
        %7961 = vmatprep.subr.bf16.mxu0 %v7224
        %7962 = vmatpush1.bf16.msra.mxu0 %v7223
        %7963 = vmatprep.subr.bf16.mxu0 %v7216
        %7964 = vmatpush1.bf16.msra.mxu0 %v7215
        %7965 = vmatprep.subr.bf16.mxu0 %v7208
        %7966 = vmatpush1.bf16.msra.mxu0 %v7207
        %7967 = vmatprep.subr.bf16.mxu0 %v7200
        %7968 = vmatpush1.bf16.msra.mxu0 %v7199
        %7969 = vmatprep.subr.bf16.mxu0 %v7192
        %7970 = vmatpush1.bf16.msra.mxu0 %v7191
        %7971 = vmatprep.subr.bf16.mxu0 %v7312
        %7972 = vmatpush2.bf16.msra.mxu0 %v7311
        %7973 = vmatprep.subr.bf16.mxu0 %v7304
        %7974 = vmatpush2.bf16.msra.mxu0 %v7303
        %7975 = vmatprep.subr.bf16.mxu0 %v7296
        %7976 = vmatpush2.bf16.msra.mxu0 %v7295
        %7977 = vmatprep.subr.bf16.mxu0 %v7288
        %7978 = vmatpush2.bf16.msra.mxu0 %v7287
        %7979 = vmatprep.subr.bf16.mxu0 %v7280
        %7980 = vmatpush2.bf16.msra.mxu0 %v7279
        %7981 = vmatprep.subr.bf16.mxu0 %v7272
        %7982 = vmatpush2.bf16.msra.mxu0 %v7271
        %7983 = vmatprep.subr.bf16.mxu0 %v7264
        %7984 = vmatpush2.bf16.msra.mxu0 %v7263
        %7985 = vmatprep.subr.bf16.mxu0 %v7256
        %7986 = vmatpush2.bf16.msra.mxu0 %v7255
        %7987 = vmatprep.mubr.bf16.mxu0 %v6126
        %7988 = vmatmul.mubr.bf16.gmra.mxu0 %v6125
        %v7989 = vpop.f32.mrf.mxu0
        %v7990 = vadd.f32 %v6412, %v7989
        %v7991 = vpop.f32.mrf.mxu0
        %v7992 = vadd.f32 %v6416, %v7991
        %v7993 = vpop.f32.mrf.mxu0
        %v7994 = vadd.f32 %v6412, %v7993
        %v7995 = vpop.f32.mrf.mxu0
        %v7996 = vadd.f32 %v6416, %v7995
        %7997 = vdwg.mxu0
        %7998 = vmatprep.subr.bf16.mxu0 %v7376
        %7999 = vmatpush1.bf16.msra.mxu0 %v7375
        %8000 = vmatprep.subr.bf16.mxu0 %v7368
        %8001 = vmatpush1.bf16.msra.mxu0 %v7367
        %8002 = vmatprep.subr.bf16.mxu0 %v7360
        %8003 = vmatpush1.bf16.msra.mxu0 %v7359
        %8004 = vmatprep.subr.bf16.mxu0 %v7352
        %8005 = vmatpush1.bf16.msra.mxu0 %v7351
        %8006 = vmatprep.subr.bf16.mxu0 %v7344
        %8007 = vmatpush1.bf16.msra.mxu0 %v7343
        %8008 = vmatprep.subr.bf16.mxu0 %v7336
        %8009 = vmatpush1.bf16.msra.mxu0 %v7335
        %8010 = vmatprep.subr.bf16.mxu0 %v7328
        %8011 = vmatpush1.bf16.msra.mxu0 %v7327
        %8012 = vmatprep.subr.bf16.mxu0 %v7320
        %8013 = vmatpush1.bf16.msra.mxu0 %v7319
        %8014 = vmatprep.subr.bf16.mxu0 %v7440
        %8015 = vmatpush2.bf16.msra.mxu0 %v7439
        %8016 = vmatprep.subr.bf16.mxu0 %v7432
        %8017 = vmatpush2.bf16.msra.mxu0 %v7431
        %8018 = vmatprep.subr.bf16.mxu0 %v7424
        %8019 = vmatpush2.bf16.msra.mxu0 %v7423
        %8020 = vmatprep.subr.bf16.mxu0 %v7416
        %8021 = vmatpush2.bf16.msra.mxu0 %v7415
        %8022 = vmatprep.subr.bf16.mxu0 %v7408
        %8023 = vmatpush2.bf16.msra.mxu0 %v7407
        %8024 = vmatprep.subr.bf16.mxu0 %v7400
        %8025 = vmatpush2.bf16.msra.mxu0 %v7399
        %8026 = vmatprep.subr.bf16.mxu0 %v7392
        %8027 = vmatpush2.bf16.msra.mxu0 %v7391
        %8028 = vmatprep.subr.bf16.mxu0 %v7384
        %8029 = vmatpush2.bf16.msra.mxu0 %v7383
        %8030 = vmatprep.mubr.bf16.mxu0 %v6128
        %8031 = vmatmul.mubr.bf16.gmra.mxu0 %v6127
        %v8032 = vpop.f32.mrf.mxu0
        %v8033 = vadd.f32 %v7990, %v8032
        %v8034 = vpop.f32.mrf.mxu0
        %v8035 = vadd.f32 %v7992, %v8034
        %v8036 = vpop.f32.mrf.mxu0
        %v8037 = vadd.f32 %v7994, %v8036
        %v8038 = vpop.f32.mrf.mxu0
        %v8039 = vadd.f32 %v7996, %v8038
        %8040 = vdwg.mxu0
        %v8041 = vmul.f32 %v7775, 0.5
        %v8042 = vmul.f32 %v7777, 0.5
        %v8043 = vmul.f32 %v7861, 0.5
        %v8044 = vmul.f32 %v7863, 0.5
        %v8045 = vmul.f32 %v7947, 0.5
        %v8046 = vmul.f32 %v7949, 0.5
        %v8047 = vmul.f32 %v8033, 0.5
        %v8048 = vmul.f32 %v8035, 0.5
        %v8049 = vmul.f32 %v7779, 0.5
        %v8050 = vmul.f32 %v7781, 0.5
        %v8051 = vmul.f32 %v7865, 0.5
        %v8052 = vmul.f32 %v7867, 0.5
        %v8053 = vmul.f32 %v7951, 0.5
        %v8054 = vmul.f32 %v7953, 0.5
        %v8055 = vmul.f32 %v8037, 0.5
        %v8056 = vmul.f32 %v8039, 0.5
        %v8057 = vmul.f32 %v7775, 0.044715
        %v8058 = vmul.f32 %v7777, 0.044715
        %v8059 = vmul.f32 %v7861, 0.044715
        %v8060 = vmul.f32 %v7863, 0.044715
        %v8061 = vmul.f32 %v7947, 0.044715
        %v8062 = vmul.f32 %v7949, 0.044715
        %v8063 = vmul.f32 %v8033, 0.044715
        %v8064 = vmul.f32 %v8035, 0.044715
        %v8065 = vmul.f32 %v7779, 0.044715
        %v8066 = vmul.f32 %v7781, 0.044715
        %v8067 = vmul.f32 %v7865, 0.044715
        %v8068 = vmul.f32 %v7867, 0.044715
        %v8069 = vmul.f32 %v7951, 0.044715
        %v8070 = vmul.f32 %v7953, 0.044715
        %v8071 = vmul.f32 %v8037, 0.044715
        %v8072 = vmul.f32 %v8039, 0.044715
        %v8073 = vmul.f32 %v8057, %v7775
        %v8074 = vmul.f32 %v8058, %v7777
        %v8075 = vmul.f32 %v8059, %v7861
        %v8076 = vmul.f32 %v8060, %v7863
        %v8077 = vmul.f32 %v8061, %v7947
        %v8078 = vmul.f32 %v8062, %v7949
        %v8079 = vmul.f32 %v8063, %v8033
        %v8080 = vmul.f32 %v8064, %v8035
        %v8081 = vmul.f32 %v8065, %v7779
        %v8082 = vmul.f32 %v8066, %v7781
        %v8083 = vmul.f32 %v8067, %v7865
        %v8084 = vmul.f32 %v8068, %v7867
        %v8085 = vmul.f32 %v8069, %v7951
        %v8086 = vmul.f32 %v8070, %v7953
        %v8087 = vmul.f32 %v8071, %v8037
        %v8088 = vmul.f32 %v8072, %v8039
        %v8089 = vmul.f32 %v8073, %v7775
        %v8090 = vmul.f32 %v8074, %v7777
        %v8091 = vmul.f32 %v8075, %v7861
        %v8092 = vmul.f32 %v8076, %v7863
        %v8093 = vmul.f32 %v8077, %v7947
        %v8094 = vmul.f32 %v8078, %v7949
        %v8095 = vmul.f32 %v8079, %v8033
        %v8096 = vmul.f32 %v8080, %v8035
        %v8097 = vmul.f32 %v8081, %v7779
        %v8098 = vmul.f32 %v8082, %v7781
        %v8099 = vmul.f32 %v8083, %v7865
        %v8100 = vmul.f32 %v8084, %v7867
        %v8101 = vmul.f32 %v8085, %v7951
        %v8102 = vmul.f32 %v8086, %v7953
        %v8103 = vmul.f32 %v8087, %v8037
        %v8104 = vmul.f32 %v8088, %v8039
        %v8105 = vadd.f32 %v7775, %v8089
        %v8106 = vadd.f32 %v7777, %v8090
        %v8107 = vadd.f32 %v7861, %v8091
        %v8108 = vadd.f32 %v7863, %v8092
        %v8109 = vadd.f32 %v7947, %v8093
        %v8110 = vadd.f32 %v7949, %v8094
        %v8111 = vadd.f32 %v8033, %v8095
        %v8112 = vadd.f32 %v8035, %v8096
        %v8113 = vadd.f32 %v7779, %v8097
        %v8114 = vadd.f32 %v7781, %v8098
        %v8115 = vadd.f32 %v7865, %v8099
        %v8116 = vadd.f32 %v7867, %v8100
        %v8117 = vadd.f32 %v7951, %v8101
        %v8118 = vadd.f32 %v7953, %v8102
        %v8119 = vadd.f32 %v8037, %v8103
        %v8120 = vadd.f32 %v8039, %v8104
        %v8121 = vmul.f32 %v8105, 0.7978846
        %v8122 = vmul.f32 %v8106, 0.7978846
        %v8123 = vmul.f32 %v8107, 0.7978846
        %v8124 = vmul.f32 %v8108, 0.7978846
        %v8125 = vmul.f32 %v8109, 0.7978846
        %v8126 = vmul.f32 %v8110, 0.7978846
        %v8127 = vmul.f32 %v8111, 0.7978846
        %v8128 = vmul.f32 %v8112, 0.7978846
        %v8129 = vmul.f32 %v8113, 0.7978846
        %v8130 = vmul.f32 %v8114, 0.7978846
        %v8131 = vmul.f32 %v8115, 0.7978846
        %v8132 = vmul.f32 %v8116, 0.7978846
        %v8133 = vmul.f32 %v8117, 0.7978846
        %v8134 = vmul.f32 %v8118, 0.7978846
        %v8135 = vmul.f32 %v8119, 0.7978846
        %v8136 = vmul.f32 %v8120, 0.7978846
        %v8137 = vtanh.pop %v8121
        %v8138 = vtanh.pop %v8122
        %v8139 = vtanh.pop %v8123
        %v8140 = vtanh.pop %v8124
        %v8141 = vtanh.pop %v8125
        %v8142 = vtanh.pop %v8126
        %v8143 = vtanh.pop %v8127
        %v8144 = vtanh.pop %v8128
        %v8145 = vtanh.pop %v8129
        %v8146 = vtanh.pop %v8130
        %v8147 = vtanh.pop %v8131
        %v8148 = vtanh.pop %v8132
        %v8149 = vtanh.pop %v8133
        %v8150 = vtanh.pop %v8134
        %v8151 = vtanh.pop %v8135
        %v8152 = vtanh.pop %v8136
        %v8153 = vadd.f32 %v8137, 1.0
        %v8154 = vadd.f32 %v8138, 1.0
        %v8155 = vadd.f32 %v8139, 1.0
        %v8156 = vadd.f32 %v8140, 1.0
        %v8157 = vadd.f32 %v8141, 1.0
        %v8158 = vadd.f32 %v8142, 1.0
        %v8159 = vadd.f32 %v8143, 1.0
        %v8160 = vadd.f32 %v8144, 1.0
        %v8161 = vadd.f32 %v8145, 1.0
        %v8162 = vadd.f32 %v8146, 1.0
        %v8163 = vadd.f32 %v8147, 1.0
        %v8164 = vadd.f32 %v8148, 1.0
        %v8165 = vadd.f32 %v8149, 1.0
        %v8166 = vadd.f32 %v8150, 1.0
        %v8167 = vadd.f32 %v8151, 1.0
        %v8168 = vadd.f32 %v8152, 1.0
        %v8169 = vmul.f32 %v8041, %v8153
        %v8170 = vmul.f32 %v8042, %v8154
        %v8171 = vmul.f32 %v8043, %v8155
        %v8172 = vmul.f32 %v8044, %v8156
        %v8173 = vmul.f32 %v8045, %v8157
        %v8174 = vmul.f32 %v8046, %v8158
        %v8175 = vmul.f32 %v8047, %v8159
        %v8176 = vmul.f32 %v8048, %v8160
        %v8177 = vmul.f32 %v8049, %v8161
        %v8178 = vmul.f32 %v8050, %v8162
        %v8179 = vmul.f32 %v8051, %v8163
        %v8180 = vmul.f32 %v8052, %v8164
        %v8181 = vmul.f32 %v8053, %v8165
        %v8182 = vmul.f32 %v8054, %v8166
        %v8183 = vmul.f32 %v8055, %v8167
        %v8184 = vmul.f32 %v8056, %v8168
        %v8185 = vpack.c.bf16 %v8177, %v8169
        %v8186 = vpack.c.bf16 %v8178, %v8170
        %v8187 = vpack.c.bf16 %v8179, %v8171
        %v8188 = vpack.c.bf16 %v8180, %v8172
        %v8189 = vpack.c.bf16 %v8181, %v8173
        %v8190 = vpack.c.bf16 %v8182, %v8174
        %v8191 = vpack.c.bf16 %v8183, %v8175
        %v8192 = vpack.c.bf16 %v8184, %v8176
        %v8193 = vld [vmem:[%s697] sm:$0xff]
        %v8194 = vld [vmem:[%s697 + $0x8] sm:$0xff]
        %v8195 = vld [vmem:[%s697 + $0x10] sm:$0xff]
        %v8196 = vld [vmem:[%s697 + $0x18] sm:$0xff]
        %v8197 = vld [vmem:[%s697 + $0x20] sm:$0xff]
        %v8198 = vld [vmem:[%s697 + $0x28] sm:$0xff]
        %v8199 = vld [vmem:[%s697 + $0x30] sm:$0xff]
        %v8200 = vld [vmem:[%s697 + $0x38] sm:$0xff]
        %v8201 = vld [vmem:[%s697 + $0x40] sm:$0xff]
        %v8202 = vld [vmem:[%s697 + $0x48] sm:$0xff]
        %v8203 = vld [vmem:[%s697 + $0x50] sm:$0xff]
        %v8204 = vld [vmem:[%s697 + $0x58] sm:$0xff]
        %v8205 = vld [vmem:[%s697 + $0x60] sm:$0xff]
        %v8206 = vld [vmem:[%s697 + $0x68] sm:$0xff]
        %v8207 = vld [vmem:[%s697 + $0x70] sm:$0xff]
        %v8208 = vld [vmem:[%s697 + $0x78] sm:$0xff]
        %v8209 = vld [vmem:[%s697 + $0x80] sm:$0xff]
        %v8210 = vld [vmem:[%s697 + $0x88] sm:$0xff]
        %v8211 = vld [vmem:[%s697 + $0x90] sm:$0xff]
        %v8212 = vld [vmem:[%s697 + $0x98] sm:$0xff]
        %v8213 = vld [vmem:[%s697 + $0xa0] sm:$0xff]
        %v8214 = vld [vmem:[%s697 + $0xa8] sm:$0xff]
        %v8215 = vld [vmem:[%s697 + $0xb0] sm:$0xff]
        %v8216 = vld [vmem:[%s697 + $0xb8] sm:$0xff]
        %v8217 = vld [vmem:[%s697 + $0xc0] sm:$0xff]
        %v8218 = vld [vmem:[%s697 + $0xc8] sm:$0xff]
        %v8219 = vld [vmem:[%s697 + $0xd0] sm:$0xff]
        %v8220 = vld [vmem:[%s697 + $0xd8] sm:$0xff]
        %v8221 = vld [vmem:[%s697 + $0xe0] sm:$0xff]
        %v8222 = vld [vmem:[%s697 + $0xe8] sm:$0xff]
        %v8223 = vld [vmem:[%s697 + $0xf0] sm:$0xff]
        %v8224 = vld [vmem:[%s697 + $0xf8] sm:$0xff]
        %v8225 = vld [vmem:[%s697 + $0x100] sm:$0xff]
        %v8226 = vld [vmem:[%s697 + $0x108] sm:$0xff]
        %v8227 = vld [vmem:[%s697 + $0x110] sm:$0xff]
        %v8228 = vld [vmem:[%s697 + $0x118] sm:$0xff]
        %v8229 = vld [vmem:[%s697 + $0x120] sm:$0xff]
        %v8230 = vld [vmem:[%s697 + $0x128] sm:$0xff]
        %v8231 = vld [vmem:[%s697 + $0x130] sm:$0xff]
        %v8232 = vld [vmem:[%s697 + $0x138] sm:$0xff]
        %v8233 = vld [vmem:[%s697 + $0x140] sm:$0xff]
        %v8234 = vld [vmem:[%s697 + $0x148] sm:$0xff]
        %v8235 = vld [vmem:[%s697 + $0x150] sm:$0xff]
        %v8236 = vld [vmem:[%s697 + $0x158] sm:$0xff]
        %v8237 = vld [vmem:[%s697 + $0x160] sm:$0xff]
        %v8238 = vld [vmem:[%s697 + $0x168] sm:$0xff]
        %v8239 = vld [vmem:[%s697 + $0x170] sm:$0xff]
        %v8240 = vld [vmem:[%s697 + $0x178] sm:$0xff]
        %v8241 = vld [vmem:[%s697 + $0x180] sm:$0xff]
        %v8242 = vld [vmem:[%s697 + $0x188] sm:$0xff]
        %v8243 = vld [vmem:[%s697 + $0x190] sm:$0xff]
        %v8244 = vld [vmem:[%s697 + $0x198] sm:$0xff]
        %v8245 = vld [vmem:[%s697 + $0x1a0] sm:$0xff]
        %v8246 = vld [vmem:[%s697 + $0x1a8] sm:$0xff]
        %v8247 = vld [vmem:[%s697 + $0x1b0] sm:$0xff]
        %v8248 = vld [vmem:[%s697 + $0x1b8] sm:$0xff]
        %v8249 = vld [vmem:[%s697 + $0x1c0] sm:$0xff]
        %v8250 = vld [vmem:[%s697 + $0x1c8] sm:$0xff]
        %v8251 = vld [vmem:[%s697 + $0x1d0] sm:$0xff]
        %v8252 = vld [vmem:[%s697 + $0x1d8] sm:$0xff]
        %v8253 = vld [vmem:[%s697 + $0x1e0] sm:$0xff]
        %v8254 = vld [vmem:[%s697 + $0x1e8] sm:$0xff]
        %v8255 = vld [vmem:[%s697 + $0x1f0] sm:$0xff]
        %v8256 = vld [vmem:[%s697 + $0x1f8] sm:$0xff]
        %v8257 = vld [vmem:[%s697 + $0x200] sm:$0xff]
        %v8258 = vld [vmem:[%s697 + $0x208] sm:$0xff]
        %v8259 = vld [vmem:[%s697 + $0x210] sm:$0xff]
        %v8260 = vld [vmem:[%s697 + $0x218] sm:$0xff]
        %v8261 = vld [vmem:[%s697 + $0x220] sm:$0xff]
        %v8262 = vld [vmem:[%s697 + $0x228] sm:$0xff]
        %v8263 = vld [vmem:[%s697 + $0x230] sm:$0xff]
        %v8264 = vld [vmem:[%s697 + $0x238] sm:$0xff]
        %v8265 = vld [vmem:[%s697 + $0x240] sm:$0xff]
        %v8266 = vld [vmem:[%s697 + $0x248] sm:$0xff]
        %v8267 = vld [vmem:[%s697 + $0x250] sm:$0xff]
        %v8268 = vld [vmem:[%s697 + $0x258] sm:$0xff]
        %v8269 = vld [vmem:[%s697 + $0x260] sm:$0xff]
        %v8270 = vld [vmem:[%s697 + $0x268] sm:$0xff]
        %v8271 = vld [vmem:[%s697 + $0x270] sm:$0xff]
        %v8272 = vld [vmem:[%s697 + $0x278] sm:$0xff]
        %v8273 = vld [vmem:[%s697 + $0x280] sm:$0xff]
        %v8274 = vld [vmem:[%s697 + $0x288] sm:$0xff]
        %v8275 = vld [vmem:[%s697 + $0x290] sm:$0xff]
        %v8276 = vld [vmem:[%s697 + $0x298] sm:$0xff]
        %v8277 = vld [vmem:[%s697 + $0x2a0] sm:$0xff]
        %v8278 = vld [vmem:[%s697 + $0x2a8] sm:$0xff]
        %v8279 = vld [vmem:[%s697 + $0x2b0] sm:$0xff]
        %v8280 = vld [vmem:[%s697 + $0x2b8] sm:$0xff]
        %v8281 = vld [vmem:[%s697 + $0x2c0] sm:$0xff]
        %v8282 = vld [vmem:[%s697 + $0x2c8] sm:$0xff]
        %v8283 = vld [vmem:[%s697 + $0x2d0] sm:$0xff]
        %v8284 = vld [vmem:[%s697 + $0x2d8] sm:$0xff]
        %v8285 = vld [vmem:[%s697 + $0x2e0] sm:$0xff]
        %v8286 = vld [vmem:[%s697 + $0x2e8] sm:$0xff]
        %v8287 = vld [vmem:[%s697 + $0x2f0] sm:$0xff]
        %v8288 = vld [vmem:[%s697 + $0x2f8] sm:$0xff]
        %v8289 = vld [vmem:[%s697 + $0x300] sm:$0xff]
        %v8290 = vld [vmem:[%s697 + $0x308] sm:$0xff]
        %v8291 = vld [vmem:[%s697 + $0x310] sm:$0xff]
        %v8292 = vld [vmem:[%s697 + $0x318] sm:$0xff]
        %v8293 = vld [vmem:[%s697 + $0x320] sm:$0xff]
        %v8294 = vld [vmem:[%s697 + $0x328] sm:$0xff]
        %v8295 = vld [vmem:[%s697 + $0x330] sm:$0xff]
        %v8296 = vld [vmem:[%s697 + $0x338] sm:$0xff]
        %v8297 = vld [vmem:[%s697 + $0x340] sm:$0xff]
        %v8298 = vld [vmem:[%s697 + $0x348] sm:$0xff]
        %v8299 = vld [vmem:[%s697 + $0x350] sm:$0xff]
        %v8300 = vld [vmem:[%s697 + $0x358] sm:$0xff]
        %v8301 = vld [vmem:[%s697 + $0x360] sm:$0xff]
        %v8302 = vld [vmem:[%s697 + $0x368] sm:$0xff]
        %v8303 = vld [vmem:[%s697 + $0x370] sm:$0xff]
        %v8304 = vld [vmem:[%s697 + $0x378] sm:$0xff]
        %v8305 = vld [vmem:[%s697 + $0x380] sm:$0xff]
        %v8306 = vld [vmem:[%s697 + $0x388] sm:$0xff]
        %v8307 = vld [vmem:[%s697 + $0x390] sm:$0xff]
        %v8308 = vld [vmem:[%s697 + $0x398] sm:$0xff]
        %v8309 = vld [vmem:[%s697 + $0x3a0] sm:$0xff]
        %v8310 = vld [vmem:[%s697 + $0x3a8] sm:$0xff]
        %v8311 = vld [vmem:[%s697 + $0x3b0] sm:$0xff]
        %v8312 = vld [vmem:[%s697 + $0x3b8] sm:$0xff]
        %v8313 = vld [vmem:[%s697 + $0x3c0] sm:$0xff]
        %v8314 = vld [vmem:[%s697 + $0x3c8] sm:$0xff]
        %v8315 = vld [vmem:[%s697 + $0x3d0] sm:$0xff]
        %v8316 = vld [vmem:[%s697 + $0x3d8] sm:$0xff]
        %v8317 = vld [vmem:[%s697 + $0x3e0] sm:$0xff]
        %v8318 = vld [vmem:[%s697 + $0x3e8] sm:$0xff]
        %v8319 = vld [vmem:[%s697 + $0x3f0] sm:$0xff]
        %v8320 = vld [vmem:[%s697 + $0x3f8] sm:$0xff]
        %v8321 = vld [vmem:[%s697 + $0x400] sm:$0xff]
        %v8322 = vld [vmem:[%s697 + $0x408] sm:$0xff]
        %v8323 = vld [vmem:[%s697 + $0x410] sm:$0xff]
        %v8324 = vld [vmem:[%s697 + $0x418] sm:$0xff]
        %v8325 = vld [vmem:[%s697 + $0x420] sm:$0xff]
        %v8326 = vld [vmem:[%s697 + $0x428] sm:$0xff]
        %v8327 = vld [vmem:[%s697 + $0x430] sm:$0xff]
        %v8328 = vld [vmem:[%s697 + $0x438] sm:$0xff]
        %v8329 = vld [vmem:[%s697 + $0x440] sm:$0xff]
        %v8330 = vld [vmem:[%s697 + $0x448] sm:$0xff]
        %v8331 = vld [vmem:[%s697 + $0x450] sm:$0xff]
        %v8332 = vld [vmem:[%s697 + $0x458] sm:$0xff]
        %v8333 = vld [vmem:[%s697 + $0x460] sm:$0xff]
        %v8334 = vld [vmem:[%s697 + $0x468] sm:$0xff]
        %v8335 = vld [vmem:[%s697 + $0x470] sm:$0xff]
        %v8336 = vld [vmem:[%s697 + $0x478] sm:$0xff]
        %v8337 = vld [vmem:[%s697 + $0x480] sm:$0xff]
        %v8338 = vld [vmem:[%s697 + $0x488] sm:$0xff]
        %v8339 = vld [vmem:[%s697 + $0x490] sm:$0xff]
        %v8340 = vld [vmem:[%s697 + $0x498] sm:$0xff]
        %v8341 = vld [vmem:[%s697 + $0x4a0] sm:$0xff]
        %v8342 = vld [vmem:[%s697 + $0x4a8] sm:$0xff]
        %v8343 = vld [vmem:[%s697 + $0x4b0] sm:$0xff]
        %v8344 = vld [vmem:[%s697 + $0x4b8] sm:$0xff]
        %v8345 = vld [vmem:[%s697 + $0x4c0] sm:$0xff]
        %v8346 = vld [vmem:[%s697 + $0x4c8] sm:$0xff]
        %v8347 = vld [vmem:[%s697 + $0x4d0] sm:$0xff]
        %v8348 = vld [vmem:[%s697 + $0x4d8] sm:$0xff]
        %v8349 = vld [vmem:[%s697 + $0x4e0] sm:$0xff]
        %v8350 = vld [vmem:[%s697 + $0x4e8] sm:$0xff]
        %v8351 = vld [vmem:[%s697 + $0x4f0] sm:$0xff]
        %v8352 = vld [vmem:[%s697 + $0x4f8] sm:$0xff]
        %v8353 = vld [vmem:[%s697 + $0x500] sm:$0xff]
        %v8354 = vld [vmem:[%s697 + $0x508] sm:$0xff]
        %v8355 = vld [vmem:[%s697 + $0x510] sm:$0xff]
        %v8356 = vld [vmem:[%s697 + $0x518] sm:$0xff]
        %v8357 = vld [vmem:[%s697 + $0x520] sm:$0xff]
        %v8358 = vld [vmem:[%s697 + $0x528] sm:$0xff]
        %v8359 = vld [vmem:[%s697 + $0x530] sm:$0xff]
        %v8360 = vld [vmem:[%s697 + $0x538] sm:$0xff]
        %v8361 = vld [vmem:[%s697 + $0x540] sm:$0xff]
        %v8362 = vld [vmem:[%s697 + $0x548] sm:$0xff]
        %v8363 = vld [vmem:[%s697 + $0x550] sm:$0xff]
        %v8364 = vld [vmem:[%s697 + $0x558] sm:$0xff]
        %v8365 = vld [vmem:[%s697 + $0x560] sm:$0xff]
        %v8366 = vld [vmem:[%s697 + $0x568] sm:$0xff]
        %v8367 = vld [vmem:[%s697 + $0x570] sm:$0xff]
        %v8368 = vld [vmem:[%s697 + $0x578] sm:$0xff]
        %v8369 = vld [vmem:[%s697 + $0x580] sm:$0xff]
        %v8370 = vld [vmem:[%s697 + $0x588] sm:$0xff]
        %v8371 = vld [vmem:[%s697 + $0x590] sm:$0xff]
        %v8372 = vld [vmem:[%s697 + $0x598] sm:$0xff]
        %v8373 = vld [vmem:[%s697 + $0x5a0] sm:$0xff]
        %v8374 = vld [vmem:[%s697 + $0x5a8] sm:$0xff]
        %v8375 = vld [vmem:[%s697 + $0x5b0] sm:$0xff]
        %v8376 = vld [vmem:[%s697 + $0x5b8] sm:$0xff]
        %v8377 = vld [vmem:[%s697 + $0x5c0] sm:$0xff]
        %v8378 = vld [vmem:[%s697 + $0x5c8] sm:$0xff]
        %v8379 = vld [vmem:[%s697 + $0x5d0] sm:$0xff]
        %v8380 = vld [vmem:[%s697 + $0x5d8] sm:$0xff]
        %v8381 = vld [vmem:[%s697 + $0x5e0] sm:$0xff]
        %v8382 = vld [vmem:[%s697 + $0x5e8] sm:$0xff]
        %v8383 = vld [vmem:[%s697 + $0x5f0] sm:$0xff]
        %v8384 = vld [vmem:[%s697 + $0x5f8] sm:$0xff]
        %v8385 = vld [vmem:[%s697 + $0x600] sm:$0xff]
        %v8386 = vld [vmem:[%s697 + $0x608] sm:$0xff]
        %v8387 = vld [vmem:[%s697 + $0x610] sm:$0xff]
        %v8388 = vld [vmem:[%s697 + $0x618] sm:$0xff]
        %v8389 = vld [vmem:[%s697 + $0x620] sm:$0xff]
        %v8390 = vld [vmem:[%s697 + $0x628] sm:$0xff]
        %v8391 = vld [vmem:[%s697 + $0x630] sm:$0xff]
        %v8392 = vld [vmem:[%s697 + $0x638] sm:$0xff]
        %v8393 = vld [vmem:[%s697 + $0x640] sm:$0xff]
        %v8394 = vld [vmem:[%s697 + $0x648] sm:$0xff]
        %v8395 = vld [vmem:[%s697 + $0x650] sm:$0xff]
        %v8396 = vld [vmem:[%s697 + $0x658] sm:$0xff]
        %v8397 = vld [vmem:[%s697 + $0x660] sm:$0xff]
        %v8398 = vld [vmem:[%s697 + $0x668] sm:$0xff]
        %v8399 = vld [vmem:[%s697 + $0x670] sm:$0xff]
        %v8400 = vld [vmem:[%s697 + $0x678] sm:$0xff]
        %v8401 = vld [vmem:[%s697 + $0x680] sm:$0xff]
        %v8402 = vld [vmem:[%s697 + $0x688] sm:$0xff]
        %v8403 = vld [vmem:[%s697 + $0x690] sm:$0xff]
        %v8404 = vld [vmem:[%s697 + $0x698] sm:$0xff]
        %v8405 = vld [vmem:[%s697 + $0x6a0] sm:$0xff]
        %v8406 = vld [vmem:[%s697 + $0x6a8] sm:$0xff]
        %v8407 = vld [vmem:[%s697 + $0x6b0] sm:$0xff]
        %v8408 = vld [vmem:[%s697 + $0x6b8] sm:$0xff]
        %v8409 = vld [vmem:[%s697 + $0x6c0] sm:$0xff]
        %v8410 = vld [vmem:[%s697 + $0x6c8] sm:$0xff]
        %v8411 = vld [vmem:[%s697 + $0x6d0] sm:$0xff]
        %v8412 = vld [vmem:[%s697 + $0x6d8] sm:$0xff]
        %v8413 = vld [vmem:[%s697 + $0x6e0] sm:$0xff]
        %v8414 = vld [vmem:[%s697 + $0x6e8] sm:$0xff]
        %v8415 = vld [vmem:[%s697 + $0x6f0] sm:$0xff]
        %v8416 = vld [vmem:[%s697 + $0x6f8] sm:$0xff]
        %v8417 = vld [vmem:[%s697 + $0x700] sm:$0xff]
        %v8418 = vld [vmem:[%s697 + $0x708] sm:$0xff]
        %v8419 = vld [vmem:[%s697 + $0x710] sm:$0xff]
        %v8420 = vld [vmem:[%s697 + $0x718] sm:$0xff]
        %v8421 = vld [vmem:[%s697 + $0x720] sm:$0xff]
        %v8422 = vld [vmem:[%s697 + $0x728] sm:$0xff]
        %v8423 = vld [vmem:[%s697 + $0x730] sm:$0xff]
        %v8424 = vld [vmem:[%s697 + $0x738] sm:$0xff]
        %v8425 = vld [vmem:[%s697 + $0x740] sm:$0xff]
        %v8426 = vld [vmem:[%s697 + $0x748] sm:$0xff]
        %v8427 = vld [vmem:[%s697 + $0x750] sm:$0xff]
        %v8428 = vld [vmem:[%s697 + $0x758] sm:$0xff]
        %v8429 = vld [vmem:[%s697 + $0x760] sm:$0xff]
        %v8430 = vld [vmem:[%s697 + $0x768] sm:$0xff]
        %v8431 = vld [vmem:[%s697 + $0x770] sm:$0xff]
        %v8432 = vld [vmem:[%s697 + $0x778] sm:$0xff]
        %v8433 = vld [vmem:[%s697 + $0x780] sm:$0xff]
        %v8434 = vld [vmem:[%s697 + $0x788] sm:$0xff]
        %v8435 = vld [vmem:[%s697 + $0x790] sm:$0xff]
        %v8436 = vld [vmem:[%s697 + $0x798] sm:$0xff]
        %v8437 = vld [vmem:[%s697 + $0x7a0] sm:$0xff]
        %v8438 = vld [vmem:[%s697 + $0x7a8] sm:$0xff]
        %v8439 = vld [vmem:[%s697 + $0x7b0] sm:$0xff]
        %v8440 = vld [vmem:[%s697 + $0x7b8] sm:$0xff]
        %v8441 = vld [vmem:[%s697 + $0x7c0] sm:$0xff]
        %v8442 = vld [vmem:[%s697 + $0x7c8] sm:$0xff]
        %v8443 = vld [vmem:[%s697 + $0x7d0] sm:$0xff]
        %v8444 = vld [vmem:[%s697 + $0x7d8] sm:$0xff]
        %v8445 = vld [vmem:[%s697 + $0x7e0] sm:$0xff]
        %v8446 = vld [vmem:[%s697 + $0x7e8] sm:$0xff]
        %v8447 = vld [vmem:[%s697 + $0x7f0] sm:$0xff]
        %v8448 = vld [vmem:[%s697 + $0x7f8] sm:$0xff]
        %v8449 = vlaneseq
        %v8450 = vshrl.u32 %v8449, 7
        %v8451 = vsub.s32 2, %v8450
        %v8452 = vrot.slane %v1724, %v8451
        %v8453 = vlaneseq
        %v8454 = vshrl.u32 %v8453, 7
        %v8455 = vsub.s32 2, %v8454
        %v8456 = vrot.slane %v1725, %v8455
        %v8457 = vlaneseq
        %v8458 = vshrl.u32 %v8457, 7
        %v8459 = vsub.s32 2, %v8458
        %v8460 = vrot.slane %v1726, %v8459
        %v8461 = vlaneseq
        %v8462 = vshrl.u32 %v8461, 7
        %v8463 = vsub.s32 2, %v8462
        %v8464 = vrot.slane %v1727, %v8463
        %v8721 = vunpack.c.l.b16 %v8193
        %v8722 = vunpack.c.h.b16 %v8193
        %v8723 = vunpack.c.l.b16 %v8194
        %v8724 = vunpack.c.h.b16 %v8194
        %v8725 = vunpack.c.l.b16 %v8195
        %v8726 = vunpack.c.h.b16 %v8195
        %v8727 = vunpack.c.l.b16 %v8196
        %v8728 = vunpack.c.h.b16 %v8196
        %v8729 = vunpack.c.l.b16 %v8197
        %v8730 = vunpack.c.h.b16 %v8197
        %v8731 = vunpack.c.l.b16 %v8198
        %v8732 = vunpack.c.h.b16 %v8198
        %v8733 = vunpack.c.l.b16 %v8199
        %v8734 = vunpack.c.h.b16 %v8199
        %v8735 = vunpack.c.l.b16 %v8200
        %v8736 = vunpack.c.h.b16 %v8200
        %v8737 = vunpack.c.l.b16 %v8201
        %v8738 = vunpack.c.h.b16 %v8201
        %v8739 = vunpack.c.l.b16 %v8202
        %v8740 = vunpack.c.h.b16 %v8202
        %v8741 = vunpack.c.l.b16 %v8203
        %v8742 = vunpack.c.h.b16 %v8203
        %v8743 = vunpack.c.l.b16 %v8204
        %v8744 = vunpack.c.h.b16 %v8204
        %v8745 = vunpack.c.l.b16 %v8205
        %v8746 = vunpack.c.h.b16 %v8205
        %v8747 = vunpack.c.l.b16 %v8206
        %v8748 = vunpack.c.h.b16 %v8206
        %v8749 = vunpack.c.l.b16 %v8207
        %v8750 = vunpack.c.h.b16 %v8207
        %v8751 = vunpack.c.l.b16 %v8208
        %v8752 = vunpack.c.h.b16 %v8208
        %v8753 = vunpack.c.l.b16 %v8209
        %v8754 = vunpack.c.h.b16 %v8209
        %v8755 = vunpack.c.l.b16 %v8210
        %v8756 = vunpack.c.h.b16 %v8210
        %v8757 = vunpack.c.l.b16 %v8211
        %v8758 = vunpack.c.h.b16 %v8211
        %v8759 = vunpack.c.l.b16 %v8212
        %v8760 = vunpack.c.h.b16 %v8212
        %v8761 = vunpack.c.l.b16 %v8213
        %v8762 = vunpack.c.h.b16 %v8213
        %v8763 = vunpack.c.l.b16 %v8214
        %v8764 = vunpack.c.h.b16 %v8214
        %v8765 = vunpack.c.l.b16 %v8215
        %v8766 = vunpack.c.h.b16 %v8215
        %v8767 = vunpack.c.l.b16 %v8216
        %v8768 = vunpack.c.h.b16 %v8216
        %v8769 = vunpack.c.l.b16 %v8217
        %v8770 = vunpack.c.h.b16 %v8217
        %v8771 = vunpack.c.l.b16 %v8218
        %v8772 = vunpack.c.h.b16 %v8218
        %v8773 = vunpack.c.l.b16 %v8219
        %v8774 = vunpack.c.h.b16 %v8219
        %v8775 = vunpack.c.l.b16 %v8220
        %v8776 = vunpack.c.h.b16 %v8220
        %v8777 = vunpack.c.l.b16 %v8221
        %v8778 = vunpack.c.h.b16 %v8221
        %v8779 = vunpack.c.l.b16 %v8222
        %v8780 = vunpack.c.h.b16 %v8222
        %v8781 = vunpack.c.l.b16 %v8223
        %v8782 = vunpack.c.h.b16 %v8223
        %v8783 = vunpack.c.l.b16 %v8224
        %v8784 = vunpack.c.h.b16 %v8224
        %v8785 = vunpack.c.l.b16 %v8225
        %v8786 = vunpack.c.h.b16 %v8225
        %v8787 = vunpack.c.l.b16 %v8226
        %v8788 = vunpack.c.h.b16 %v8226
        %v8789 = vunpack.c.l.b16 %v8227
        %v8790 = vunpack.c.h.b16 %v8227
        %v8791 = vunpack.c.l.b16 %v8228
        %v8792 = vunpack.c.h.b16 %v8228
        %v8793 = vunpack.c.l.b16 %v8229
        %v8794 = vunpack.c.h.b16 %v8229
        %v8795 = vunpack.c.l.b16 %v8230
        %v8796 = vunpack.c.h.b16 %v8230
        %v8797 = vunpack.c.l.b16 %v8231
        %v8798 = vunpack.c.h.b16 %v8231
        %v8799 = vunpack.c.l.b16 %v8232
        %v8800 = vunpack.c.h.b16 %v8232
        %v8801 = vunpack.c.l.b16 %v8233
        %v8802 = vunpack.c.h.b16 %v8233
        %v8803 = vunpack.c.l.b16 %v8234
        %v8804 = vunpack.c.h.b16 %v8234
        %v8805 = vunpack.c.l.b16 %v8235
        %v8806 = vunpack.c.h.b16 %v8235
        %v8807 = vunpack.c.l.b16 %v8236
        %v8808 = vunpack.c.h.b16 %v8236
        %v8809 = vunpack.c.l.b16 %v8237
        %v8810 = vunpack.c.h.b16 %v8237
        %v8811 = vunpack.c.l.b16 %v8238
        %v8812 = vunpack.c.h.b16 %v8238
        %v8813 = vunpack.c.l.b16 %v8239
        %v8814 = vunpack.c.h.b16 %v8239
        %v8815 = vunpack.c.l.b16 %v8240
        %v8816 = vunpack.c.h.b16 %v8240
        %v8817 = vunpack.c.l.b16 %v8241
        %v8818 = vunpack.c.h.b16 %v8241
        %v8819 = vunpack.c.l.b16 %v8242
        %v8820 = vunpack.c.h.b16 %v8242
        %v8821 = vunpack.c.l.b16 %v8243
        %v8822 = vunpack.c.h.b16 %v8243
        %v8823 = vunpack.c.l.b16 %v8244
        %v8824 = vunpack.c.h.b16 %v8244
        %v8825 = vunpack.c.l.b16 %v8245
        %v8826 = vunpack.c.h.b16 %v8245
        %v8827 = vunpack.c.l.b16 %v8246
        %v8828 = vunpack.c.h.b16 %v8246
        %v8829 = vunpack.c.l.b16 %v8247
        %v8830 = vunpack.c.h.b16 %v8247
        %v8831 = vunpack.c.l.b16 %v8248
        %v8832 = vunpack.c.h.b16 %v8248
        %v8833 = vunpack.c.l.b16 %v8249
        %v8834 = vunpack.c.h.b16 %v8249
        %v8835 = vunpack.c.l.b16 %v8250
        %v8836 = vunpack.c.h.b16 %v8250
        %v8837 = vunpack.c.l.b16 %v8251
        %v8838 = vunpack.c.h.b16 %v8251
        %v8839 = vunpack.c.l.b16 %v8252
        %v8840 = vunpack.c.h.b16 %v8252
        %v8841 = vunpack.c.l.b16 %v8253
        %v8842 = vunpack.c.h.b16 %v8253
        %v8843 = vunpack.c.l.b16 %v8254
        %v8844 = vunpack.c.h.b16 %v8254
        %v8845 = vunpack.c.l.b16 %v8255
        %v8846 = vunpack.c.h.b16 %v8255
        %v8847 = vunpack.c.l.b16 %v8256
        %v8848 = vunpack.c.h.b16 %v8256
        %v8849 = vunpack.c.l.b16 %v8257
        %v8850 = vunpack.c.h.b16 %v8257
        %v8851 = vunpack.c.l.b16 %v8258
        %v8852 = vunpack.c.h.b16 %v8258
        %v8853 = vunpack.c.l.b16 %v8259
        %v8854 = vunpack.c.h.b16 %v8259
        %v8855 = vunpack.c.l.b16 %v8260
        %v8856 = vunpack.c.h.b16 %v8260
        %v8857 = vunpack.c.l.b16 %v8261
        %v8858 = vunpack.c.h.b16 %v8261
        %v8859 = vunpack.c.l.b16 %v8262
        %v8860 = vunpack.c.h.b16 %v8262
        %v8861 = vunpack.c.l.b16 %v8263
        %v8862 = vunpack.c.h.b16 %v8263
        %v8863 = vunpack.c.l.b16 %v8264
        %v8864 = vunpack.c.h.b16 %v8264
        %v8865 = vunpack.c.l.b16 %v8265
        %v8866 = vunpack.c.h.b16 %v8265
        %v8867 = vunpack.c.l.b16 %v8266
        %v8868 = vunpack.c.h.b16 %v8266
        %v8869 = vunpack.c.l.b16 %v8267
        %v8870 = vunpack.c.h.b16 %v8267
        %v8871 = vunpack.c.l.b16 %v8268
        %v8872 = vunpack.c.h.b16 %v8268
        %v8873 = vunpack.c.l.b16 %v8269
        %v8874 = vunpack.c.h.b16 %v8269
        %v8875 = vunpack.c.l.b16 %v8270
        %v8876 = vunpack.c.h.b16 %v8270
        %v8877 = vunpack.c.l.b16 %v8271
        %v8878 = vunpack.c.h.b16 %v8271
        %v8879 = vunpack.c.l.b16 %v8272
        %v8880 = vunpack.c.h.b16 %v8272
        %v8881 = vunpack.c.l.b16 %v8273
        %v8882 = vunpack.c.h.b16 %v8273
        %v8883 = vunpack.c.l.b16 %v8274
        %v8884 = vunpack.c.h.b16 %v8274
        %v8885 = vunpack.c.l.b16 %v8275
        %v8886 = vunpack.c.h.b16 %v8275
        %v8887 = vunpack.c.l.b16 %v8276
        %v8888 = vunpack.c.h.b16 %v8276
        %v8889 = vunpack.c.l.b16 %v8277
        %v8890 = vunpack.c.h.b16 %v8277
        %v8891 = vunpack.c.l.b16 %v8278
        %v8892 = vunpack.c.h.b16 %v8278
        %v8893 = vunpack.c.l.b16 %v8279
        %v8894 = vunpack.c.h.b16 %v8279
        %v8895 = vunpack.c.l.b16 %v8280
        %v8896 = vunpack.c.h.b16 %v8280
        %v8897 = vunpack.c.l.b16 %v8281
        %v8898 = vunpack.c.h.b16 %v8281
        %v8899 = vunpack.c.l.b16 %v8282
        %v8900 = vunpack.c.h.b16 %v8282
        %v8901 = vunpack.c.l.b16 %v8283
        %v8902 = vunpack.c.h.b16 %v8283
        %v8903 = vunpack.c.l.b16 %v8284
        %v8904 = vunpack.c.h.b16 %v8284
        %v8905 = vunpack.c.l.b16 %v8285
        %v8906 = vunpack.c.h.b16 %v8285
        %v8907 = vunpack.c.l.b16 %v8286
        %v8908 = vunpack.c.h.b16 %v8286
        %v8909 = vunpack.c.l.b16 %v8287
        %v8910 = vunpack.c.h.b16 %v8287
        %v8911 = vunpack.c.l.b16 %v8288
        %v8912 = vunpack.c.h.b16 %v8288
        %v8913 = vunpack.c.l.b16 %v8289
        %v8914 = vunpack.c.h.b16 %v8289
        %v8915 = vunpack.c.l.b16 %v8290
        %v8916 = vunpack.c.h.b16 %v8290
        %v8917 = vunpack.c.l.b16 %v8291
        %v8918 = vunpack.c.h.b16 %v8291
        %v8919 = vunpack.c.l.b16 %v8292
        %v8920 = vunpack.c.h.b16 %v8292
        %v8921 = vunpack.c.l.b16 %v8293
        %v8922 = vunpack.c.h.b16 %v8293
        %v8923 = vunpack.c.l.b16 %v8294
        %v8924 = vunpack.c.h.b16 %v8294
        %v8925 = vunpack.c.l.b16 %v8295
        %v8926 = vunpack.c.h.b16 %v8295
        %v8927 = vunpack.c.l.b16 %v8296
        %v8928 = vunpack.c.h.b16 %v8296
        %v8929 = vunpack.c.l.b16 %v8297
        %v8930 = vunpack.c.h.b16 %v8297
        %v8931 = vunpack.c.l.b16 %v8298
        %v8932 = vunpack.c.h.b16 %v8298
        %v8933 = vunpack.c.l.b16 %v8299
        %v8934 = vunpack.c.h.b16 %v8299
        %v8935 = vunpack.c.l.b16 %v8300
        %v8936 = vunpack.c.h.b16 %v8300
        %v8937 = vunpack.c.l.b16 %v8301
        %v8938 = vunpack.c.h.b16 %v8301
        %v8939 = vunpack.c.l.b16 %v8302
        %v8940 = vunpack.c.h.b16 %v8302
        %v8941 = vunpack.c.l.b16 %v8303
        %v8942 = vunpack.c.h.b16 %v8303
        %v8943 = vunpack.c.l.b16 %v8304
        %v8944 = vunpack.c.h.b16 %v8304
        %v8945 = vunpack.c.l.b16 %v8305
        %v8946 = vunpack.c.h.b16 %v8305
        %v8947 = vunpack.c.l.b16 %v8306
        %v8948 = vunpack.c.h.b16 %v8306
        %v8949 = vunpack.c.l.b16 %v8307
        %v8950 = vunpack.c.h.b16 %v8307
        %v8951 = vunpack.c.l.b16 %v8308
        %v8952 = vunpack.c.h.b16 %v8308
        %v8953 = vunpack.c.l.b16 %v8309
        %v8954 = vunpack.c.h.b16 %v8309
        %v8955 = vunpack.c.l.b16 %v8310
        %v8956 = vunpack.c.h.b16 %v8310
        %v8957 = vunpack.c.l.b16 %v8311
        %v8958 = vunpack.c.h.b16 %v8311
        %v8959 = vunpack.c.l.b16 %v8312
        %v8960 = vunpack.c.h.b16 %v8312
        %v8961 = vunpack.c.l.b16 %v8313
        %v8962 = vunpack.c.h.b16 %v8313
        %v8963 = vunpack.c.l.b16 %v8314
        %v8964 = vunpack.c.h.b16 %v8314
        %v8965 = vunpack.c.l.b16 %v8315
        %v8966 = vunpack.c.h.b16 %v8315
        %v8967 = vunpack.c.l.b16 %v8316
        %v8968 = vunpack.c.h.b16 %v8316
        %v8969 = vunpack.c.l.b16 %v8317
        %v8970 = vunpack.c.h.b16 %v8317
        %v8971 = vunpack.c.l.b16 %v8318
        %v8972 = vunpack.c.h.b16 %v8318
        %v8973 = vunpack.c.l.b16 %v8319
        %v8974 = vunpack.c.h.b16 %v8319
        %v8975 = vunpack.c.l.b16 %v8320
        %v8976 = vunpack.c.h.b16 %v8320
        %v8977 = vunpack.c.l.b16 %v8321
        %v8978 = vunpack.c.h.b16 %v8321
        %v8979 = vunpack.c.l.b16 %v8322
        %v8980 = vunpack.c.h.b16 %v8322
        %v8981 = vunpack.c.l.b16 %v8323
        %v8982 = vunpack.c.h.b16 %v8323
        %v8983 = vunpack.c.l.b16 %v8324
        %v8984 = vunpack.c.h.b16 %v8324
        %v8985 = vunpack.c.l.b16 %v8325
        %v8986 = vunpack.c.h.b16 %v8325
        %v8987 = vunpack.c.l.b16 %v8326
        %v8988 = vunpack.c.h.b16 %v8326
        %v8989 = vunpack.c.l.b16 %v8327
        %v8990 = vunpack.c.h.b16 %v8327
        %v8991 = vunpack.c.l.b16 %v8328
        %v8992 = vunpack.c.h.b16 %v8328
        %v8993 = vunpack.c.l.b16 %v8329
        %v8994 = vunpack.c.h.b16 %v8329
        %v8995 = vunpack.c.l.b16 %v8330
        %v8996 = vunpack.c.h.b16 %v8330
        %v8997 = vunpack.c.l.b16 %v8331
        %v8998 = vunpack.c.h.b16 %v8331
        %v8999 = vunpack.c.l.b16 %v8332
        %v9000 = vunpack.c.h.b16 %v8332
        %v9001 = vunpack.c.l.b16 %v8333
        %v9002 = vunpack.c.h.b16 %v8333
        %v9003 = vunpack.c.l.b16 %v8334
        %v9004 = vunpack.c.h.b16 %v8334
        %v9005 = vunpack.c.l.b16 %v8335
        %v9006 = vunpack.c.h.b16 %v8335
        %v9007 = vunpack.c.l.b16 %v8336
        %v9008 = vunpack.c.h.b16 %v8336
        %v9009 = vunpack.c.l.b16 %v8337
        %v9010 = vunpack.c.h.b16 %v8337
        %v9011 = vunpack.c.l.b16 %v8338
        %v9012 = vunpack.c.h.b16 %v8338
        %v9013 = vunpack.c.l.b16 %v8339
        %v9014 = vunpack.c.h.b16 %v8339
        %v9015 = vunpack.c.l.b16 %v8340
        %v9016 = vunpack.c.h.b16 %v8340
        %v9017 = vunpack.c.l.b16 %v8341
        %v9018 = vunpack.c.h.b16 %v8341
        %v9019 = vunpack.c.l.b16 %v8342
        %v9020 = vunpack.c.h.b16 %v8342
        %v9021 = vunpack.c.l.b16 %v8343
        %v9022 = vunpack.c.h.b16 %v8343
        %v9023 = vunpack.c.l.b16 %v8344
        %v9024 = vunpack.c.h.b16 %v8344
        %v9025 = vunpack.c.l.b16 %v8345
        %v9026 = vunpack.c.h.b16 %v8345
        %v9027 = vunpack.c.l.b16 %v8346
        %v9028 = vunpack.c.h.b16 %v8346
        %v9029 = vunpack.c.l.b16 %v8347
        %v9030 = vunpack.c.h.b16 %v8347
        %v9031 = vunpack.c.l.b16 %v8348
        %v9032 = vunpack.c.h.b16 %v8348
        %v9033 = vunpack.c.l.b16 %v8349
        %v9034 = vunpack.c.h.b16 %v8349
        %v9035 = vunpack.c.l.b16 %v8350
        %v9036 = vunpack.c.h.b16 %v8350
        %v9037 = vunpack.c.l.b16 %v8351
        %v9038 = vunpack.c.h.b16 %v8351
        %v9039 = vunpack.c.l.b16 %v8352
        %v9040 = vunpack.c.h.b16 %v8352
        %v9041 = vunpack.c.l.b16 %v8353
        %v9042 = vunpack.c.h.b16 %v8353
        %v9043 = vunpack.c.l.b16 %v8354
        %v9044 = vunpack.c.h.b16 %v8354
        %v9045 = vunpack.c.l.b16 %v8355
        %v9046 = vunpack.c.h.b16 %v8355
        %v9047 = vunpack.c.l.b16 %v8356
        %v9048 = vunpack.c.h.b16 %v8356
        %v9049 = vunpack.c.l.b16 %v8357
        %v9050 = vunpack.c.h.b16 %v8357
        %v9051 = vunpack.c.l.b16 %v8358
        %v9052 = vunpack.c.h.b16 %v8358
        %v9053 = vunpack.c.l.b16 %v8359
        %v9054 = vunpack.c.h.b16 %v8359
        %v9055 = vunpack.c.l.b16 %v8360
        %v9056 = vunpack.c.h.b16 %v8360
        %v9057 = vunpack.c.l.b16 %v8361
        %v9058 = vunpack.c.h.b16 %v8361
        %v9059 = vunpack.c.l.b16 %v8362
        %v9060 = vunpack.c.h.b16 %v8362
        %v9061 = vunpack.c.l.b16 %v8363
        %v9062 = vunpack.c.h.b16 %v8363
        %v9063 = vunpack.c.l.b16 %v8364
        %v9064 = vunpack.c.h.b16 %v8364
        %v9065 = vunpack.c.l.b16 %v8365
        %v9066 = vunpack.c.h.b16 %v8365
        %v9067 = vunpack.c.l.b16 %v8366
        %v9068 = vunpack.c.h.b16 %v8366
        %v9069 = vunpack.c.l.b16 %v8367
        %v9070 = vunpack.c.h.b16 %v8367
        %v9071 = vunpack.c.l.b16 %v8368
        %v9072 = vunpack.c.h.b16 %v8368
        %v9073 = vunpack.c.l.b16 %v8369
        %v9074 = vunpack.c.h.b16 %v8369
        %v9075 = vunpack.c.l.b16 %v8370
        %v9076 = vunpack.c.h.b16 %v8370
        %v9077 = vunpack.c.l.b16 %v8371
        %v9078 = vunpack.c.h.b16 %v8371
        %v9079 = vunpack.c.l.b16 %v8372
        %v9080 = vunpack.c.h.b16 %v8372
        %v9081 = vunpack.c.l.b16 %v8373
        %v9082 = vunpack.c.h.b16 %v8373
        %v9083 = vunpack.c.l.b16 %v8374
        %v9084 = vunpack.c.h.b16 %v8374
        %v9085 = vunpack.c.l.b16 %v8375
        %v9086 = vunpack.c.h.b16 %v8375
        %v9087 = vunpack.c.l.b16 %v8376
        %v9088 = vunpack.c.h.b16 %v8376
        %v9089 = vunpack.c.l.b16 %v8377
        %v9090 = vunpack.c.h.b16 %v8377
        %v9091 = vunpack.c.l.b16 %v8378
        %v9092 = vunpack.c.h.b16 %v8378
        %v9093 = vunpack.c.l.b16 %v8379
        %v9094 = vunpack.c.h.b16 %v8379
        %v9095 = vunpack.c.l.b16 %v8380
        %v9096 = vunpack.c.h.b16 %v8380
        %v9097 = vunpack.c.l.b16 %v8381
        %v9098 = vunpack.c.h.b16 %v8381
        %v9099 = vunpack.c.l.b16 %v8382
        %v9100 = vunpack.c.h.b16 %v8382
        %v9101 = vunpack.c.l.b16 %v8383
        %v9102 = vunpack.c.h.b16 %v8383
        %v9103 = vunpack.c.l.b16 %v8384
        %v9104 = vunpack.c.h.b16 %v8384
        %v9105 = vunpack.c.l.b16 %v8385
        %v9106 = vunpack.c.h.b16 %v8385
        %v9107 = vunpack.c.l.b16 %v8386
        %v9108 = vunpack.c.h.b16 %v8386
        %v9109 = vunpack.c.l.b16 %v8387
        %v9110 = vunpack.c.h.b16 %v8387
        %v9111 = vunpack.c.l.b16 %v8388
        %v9112 = vunpack.c.h.b16 %v8388
        %v9113 = vunpack.c.l.b16 %v8389
        %v9114 = vunpack.c.h.b16 %v8389
        %v9115 = vunpack.c.l.b16 %v8390
        %v9116 = vunpack.c.h.b16 %v8390
        %v9117 = vunpack.c.l.b16 %v8391
        %v9118 = vunpack.c.h.b16 %v8391
        %v9119 = vunpack.c.l.b16 %v8392
        %v9120 = vunpack.c.h.b16 %v8392
        %v9121 = vunpack.c.l.b16 %v8393
        %v9122 = vunpack.c.h.b16 %v8393
        %v9123 = vunpack.c.l.b16 %v8394
        %v9124 = vunpack.c.h.b16 %v8394
        %v9125 = vunpack.c.l.b16 %v8395
        %v9126 = vunpack.c.h.b16 %v8395
        %v9127 = vunpack.c.l.b16 %v8396
        %v9128 = vunpack.c.h.b16 %v8396
        %v9129 = vunpack.c.l.b16 %v8397
        %v9130 = vunpack.c.h.b16 %v8397
        %v9131 = vunpack.c.l.b16 %v8398
        %v9132 = vunpack.c.h.b16 %v8398
        %v9133 = vunpack.c.l.b16 %v8399
        %v9134 = vunpack.c.h.b16 %v8399
        %v9135 = vunpack.c.l.b16 %v8400
        %v9136 = vunpack.c.h.b16 %v8400
        %v9137 = vunpack.c.l.b16 %v8401
        %v9138 = vunpack.c.h.b16 %v8401
        %v9139 = vunpack.c.l.b16 %v8402
        %v9140 = vunpack.c.h.b16 %v8402
        %v9141 = vunpack.c.l.b16 %v8403
        %v9142 = vunpack.c.h.b16 %v8403
        %v9143 = vunpack.c.l.b16 %v8404
        %v9144 = vunpack.c.h.b16 %v8404
        %v9145 = vunpack.c.l.b16 %v8405
        %v9146 = vunpack.c.h.b16 %v8405
        %v9147 = vunpack.c.l.b16 %v8406
        %v9148 = vunpack.c.h.b16 %v8406
        %v9149 = vunpack.c.l.b16 %v8407
        %v9150 = vunpack.c.h.b16 %v8407
        %v9151 = vunpack.c.l.b16 %v8408
        %v9152 = vunpack.c.h.b16 %v8408
        %v9153 = vunpack.c.l.b16 %v8409
        %v9154 = vunpack.c.h.b16 %v8409
        %v9155 = vunpack.c.l.b16 %v8410
        %v9156 = vunpack.c.h.b16 %v8410
        %v9157 = vunpack.c.l.b16 %v8411
        %v9158 = vunpack.c.h.b16 %v8411
        %v9159 = vunpack.c.l.b16 %v8412
        %v9160 = vunpack.c.h.b16 %v8412
        %v9161 = vunpack.c.l.b16 %v8413
        %v9162 = vunpack.c.h.b16 %v8413
        %v9163 = vunpack.c.l.b16 %v8414
        %v9164 = vunpack.c.h.b16 %v8414
        %v9165 = vunpack.c.l.b16 %v8415
        %v9166 = vunpack.c.h.b16 %v8415
        %v9167 = vunpack.c.l.b16 %v8416
        %v9168 = vunpack.c.h.b16 %v8416
        %v9169 = vunpack.c.l.b16 %v8417
        %v9170 = vunpack.c.h.b16 %v8417
        %v9171 = vunpack.c.l.b16 %v8418
        %v9172 = vunpack.c.h.b16 %v8418
        %v9173 = vunpack.c.l.b16 %v8419
        %v9174 = vunpack.c.h.b16 %v8419
        %v9175 = vunpack.c.l.b16 %v8420
        %v9176 = vunpack.c.h.b16 %v8420
        %v9177 = vunpack.c.l.b16 %v8421
        %v9178 = vunpack.c.h.b16 %v8421
        %v9179 = vunpack.c.l.b16 %v8422
        %v9180 = vunpack.c.h.b16 %v8422
        %v9181 = vunpack.c.l.b16 %v8423
        %v9182 = vunpack.c.h.b16 %v8423
        %v9183 = vunpack.c.l.b16 %v8424
        %v9184 = vunpack.c.h.b16 %v8424
        %v9185 = vunpack.c.l.b16 %v8425
        %v9186 = vunpack.c.h.b16 %v8425
        %v9187 = vunpack.c.l.b16 %v8426
        %v9188 = vunpack.c.h.b16 %v8426
        %v9189 = vunpack.c.l.b16 %v8427
        %v9190 = vunpack.c.h.b16 %v8427
        %v9191 = vunpack.c.l.b16 %v8428
        %v9192 = vunpack.c.h.b16 %v8428
        %v9193 = vunpack.c.l.b16 %v8429
        %v9194 = vunpack.c.h.b16 %v8429
        %v9195 = vunpack.c.l.b16 %v8430
        %v9196 = vunpack.c.h.b16 %v8430
        %v9197 = vunpack.c.l.b16 %v8431
        %v9198 = vunpack.c.h.b16 %v8431
        %v9199 = vunpack.c.l.b16 %v8432
        %v9200 = vunpack.c.h.b16 %v8432
        %v9201 = vunpack.c.l.b16 %v8433
        %v9202 = vunpack.c.h.b16 %v8433
        %v9203 = vunpack.c.l.b16 %v8434
        %v9204 = vunpack.c.h.b16 %v8434
        %v9205 = vunpack.c.l.b16 %v8435
        %v9206 = vunpack.c.h.b16 %v8435
        %v9207 = vunpack.c.l.b16 %v8436
        %v9208 = vunpack.c.h.b16 %v8436
        %v9209 = vunpack.c.l.b16 %v8437
        %v9210 = vunpack.c.h.b16 %v8437
        %v9211 = vunpack.c.l.b16 %v8438
        %v9212 = vunpack.c.h.b16 %v8438
        %v9213 = vunpack.c.l.b16 %v8439
        %v9214 = vunpack.c.h.b16 %v8439
        %v9215 = vunpack.c.l.b16 %v8440
        %v9216 = vunpack.c.h.b16 %v8440
        %v9217 = vunpack.c.l.b16 %v8441
        %v9218 = vunpack.c.h.b16 %v8441
        %v9219 = vunpack.c.l.b16 %v8442
        %v9220 = vunpack.c.h.b16 %v8442
        %v9221 = vunpack.c.l.b16 %v8443
        %v9222 = vunpack.c.h.b16 %v8443
        %v9223 = vunpack.c.l.b16 %v8444
        %v9224 = vunpack.c.h.b16 %v8444
        %v9225 = vunpack.c.l.b16 %v8445
        %v9226 = vunpack.c.h.b16 %v8445
        %v9227 = vunpack.c.l.b16 %v8446
        %v9228 = vunpack.c.h.b16 %v8446
        %v9229 = vunpack.c.l.b16 %v8447
        %v9230 = vunpack.c.h.b16 %v8447
        %v9231 = vunpack.c.l.b16 %v8448
        %v9232 = vunpack.c.h.b16 %v8448
        %v9233 = vpack.c.b16 %v8725, %v8721
        %v9234 = vpack.c.b16 %v8726, %v8722
        %v9235 = vpack.c.b16 %v8727, %v8723
        %v9236 = vpack.c.b16 %v8728, %v8724
        %v9237 = vpack.c.b16 %v8733, %v8729
        %v9238 = vpack.c.b16 %v8734, %v8730
        %v9239 = vpack.c.b16 %v8735, %v8731
        %v9240 = vpack.c.b16 %v8736, %v8732
        %v9241 = vpack.c.b16 %v8741, %v8737
        %v9242 = vpack.c.b16 %v8742, %v8738
        %v9243 = vpack.c.b16 %v8743, %v8739
        %v9244 = vpack.c.b16 %v8744, %v8740
        %v9245 = vpack.c.b16 %v8749, %v8745
        %v9246 = vpack.c.b16 %v8750, %v8746
        %v9247 = vpack.c.b16 %v8751, %v8747
        %v9248 = vpack.c.b16 %v8752, %v8748
        %v9249 = vpack.c.b16 %v8757, %v8753
        %v9250 = vpack.c.b16 %v8758, %v8754
        %v9251 = vpack.c.b16 %v8759, %v8755
        %v9252 = vpack.c.b16 %v8760, %v8756
        %v9253 = vpack.c.b16 %v8765, %v8761
        %v9254 = vpack.c.b16 %v8766, %v8762
        %v9255 = vpack.c.b16 %v8767, %v8763
        %v9256 = vpack.c.b16 %v8768, %v8764
        %v9257 = vpack.c.b16 %v8773, %v8769
        %v9258 = vpack.c.b16 %v8774, %v8770
        %v9259 = vpack.c.b16 %v8775, %v8771
        %v9260 = vpack.c.b16 %v8776, %v8772
        %v9261 = vpack.c.b16 %v8781, %v8777
        %v9262 = vpack.c.b16 %v8782, %v8778
        %v9263 = vpack.c.b16 %v8783, %v8779
        %v9264 = vpack.c.b16 %v8784, %v8780
        %v9265 = vpack.c.b16 %v8789, %v8785
        %v9266 = vpack.c.b16 %v8790, %v8786
        %v9267 = vpack.c.b16 %v8791, %v8787
        %v9268 = vpack.c.b16 %v8792, %v8788
        %v9269 = vpack.c.b16 %v8797, %v8793
        %v9270 = vpack.c.b16 %v8798, %v8794
        %v9271 = vpack.c.b16 %v8799, %v8795
        %v9272 = vpack.c.b16 %v8800, %v8796
        %v9273 = vpack.c.b16 %v8805, %v8801
        %v9274 = vpack.c.b16 %v8806, %v8802
        %v9275 = vpack.c.b16 %v8807, %v8803
        %v9276 = vpack.c.b16 %v8808, %v8804
        %v9277 = vpack.c.b16 %v8813, %v8809
        %v9278 = vpack.c.b16 %v8814, %v8810
        %v9279 = vpack.c.b16 %v8815, %v8811
        %v9280 = vpack.c.b16 %v8816, %v8812
        %v9281 = vpack.c.b16 %v8821, %v8817
        %v9282 = vpack.c.b16 %v8822, %v8818
        %v9283 = vpack.c.b16 %v8823, %v8819
        %v9284 = vpack.c.b16 %v8824, %v8820
        %v9285 = vpack.c.b16 %v8829, %v8825
        %v9286 = vpack.c.b16 %v8830, %v8826
        %v9287 = vpack.c.b16 %v8831, %v8827
        %v9288 = vpack.c.b16 %v8832, %v8828
        %v9289 = vpack.c.b16 %v8837, %v8833
        %v9290 = vpack.c.b16 %v8838, %v8834
        %v9291 = vpack.c.b16 %v8839, %v8835
        %v9292 = vpack.c.b16 %v8840, %v8836
        %v9293 = vpack.c.b16 %v8845, %v8841
        %v9294 = vpack.c.b16 %v8846, %v8842
        %v9295 = vpack.c.b16 %v8847, %v8843
        %v9296 = vpack.c.b16 %v8848, %v8844
        %v9297 = vpack.c.b16 %v8853, %v8849
        %v9298 = vpack.c.b16 %v8854, %v8850
        %v9299 = vpack.c.b16 %v8855, %v8851
        %v9300 = vpack.c.b16 %v8856, %v8852
        %v9301 = vpack.c.b16 %v8861, %v8857
        %v9302 = vpack.c.b16 %v8862, %v8858
        %v9303 = vpack.c.b16 %v8863, %v8859
        %v9304 = vpack.c.b16 %v8864, %v8860
        %v9305 = vpack.c.b16 %v8869, %v8865
        %v9306 = vpack.c.b16 %v8870, %v8866
        %v9307 = vpack.c.b16 %v8871, %v8867
        %v9308 = vpack.c.b16 %v8872, %v8868
        %v9309 = vpack.c.b16 %v8877, %v8873
        %v9310 = vpack.c.b16 %v8878, %v8874
        %v9311 = vpack.c.b16 %v8879, %v8875
        %v9312 = vpack.c.b16 %v8880, %v8876
        %v9313 = vpack.c.b16 %v8885, %v8881
        %v9314 = vpack.c.b16 %v8886, %v8882
        %v9315 = vpack.c.b16 %v8887, %v8883
        %v9316 = vpack.c.b16 %v8888, %v8884
        %v9317 = vpack.c.b16 %v8893, %v8889
        %v9318 = vpack.c.b16 %v8894, %v8890
        %v9319 = vpack.c.b16 %v8895, %v8891
        %v9320 = vpack.c.b16 %v8896, %v8892
        %v9321 = vpack.c.b16 %v8901, %v8897
        %v9322 = vpack.c.b16 %v8902, %v8898
        %v9323 = vpack.c.b16 %v8903, %v8899
        %v9324 = vpack.c.b16 %v8904, %v8900
        %v9325 = vpack.c.b16 %v8909, %v8905
        %v9326 = vpack.c.b16 %v8910, %v8906
        %v9327 = vpack.c.b16 %v8911, %v8907
        %v9328 = vpack.c.b16 %v8912, %v8908
        %v9329 = vpack.c.b16 %v8917, %v8913
        %v9330 = vpack.c.b16 %v8918, %v8914
        %v9331 = vpack.c.b16 %v8919, %v8915
        %v9332 = vpack.c.b16 %v8920, %v8916
        %v9333 = vpack.c.b16 %v8925, %v8921
        %v9334 = vpack.c.b16 %v8926, %v8922
        %v9335 = vpack.c.b16 %v8927, %v8923
        %v9336 = vpack.c.b16 %v8928, %v8924
        %v9337 = vpack.c.b16 %v8933, %v8929
        %v9338 = vpack.c.b16 %v8934, %v8930
        %v9339 = vpack.c.b16 %v8935, %v8931
        %v9340 = vpack.c.b16 %v8936, %v8932
        %v9341 = vpack.c.b16 %v8941, %v8937
        %v9342 = vpack.c.b16 %v8942, %v8938
        %v9343 = vpack.c.b16 %v8943, %v8939
        %v9344 = vpack.c.b16 %v8944, %v8940
        %v9345 = vpack.c.b16 %v8949, %v8945
        %v9346 = vpack.c.b16 %v8950, %v8946
        %v9347 = vpack.c.b16 %v8951, %v8947
        %v9348 = vpack.c.b16 %v8952, %v8948
        %v9349 = vpack.c.b16 %v8957, %v8953
        %v9350 = vpack.c.b16 %v8958, %v8954
        %v9351 = vpack.c.b16 %v8959, %v8955
        %v9352 = vpack.c.b16 %v8960, %v8956
        %v9353 = vpack.c.b16 %v8965, %v8961
        %v9354 = vpack.c.b16 %v8966, %v8962
        %v9355 = vpack.c.b16 %v8967, %v8963
        %v9356 = vpack.c.b16 %v8968, %v8964
        %v9357 = vpack.c.b16 %v8973, %v8969
        %v9358 = vpack.c.b16 %v8974, %v8970
        %v9359 = vpack.c.b16 %v8975, %v8971
        %v9360 = vpack.c.b16 %v8976, %v8972
        %v9361 = vpack.c.b16 %v8981, %v8977
        %v9362 = vpack.c.b16 %v8982, %v8978
        %v9363 = vpack.c.b16 %v8983, %v8979
        %v9364 = vpack.c.b16 %v8984, %v8980
        %v9365 = vpack.c.b16 %v8989, %v8985
        %v9366 = vpack.c.b16 %v8990, %v8986
        %v9367 = vpack.c.b16 %v8991, %v8987
        %v9368 = vpack.c.b16 %v8992, %v8988
        %v9369 = vpack.c.b16 %v8997, %v8993
        %v9370 = vpack.c.b16 %v8998, %v8994
        %v9371 = vpack.c.b16 %v8999, %v8995
        %v9372 = vpack.c.b16 %v9000, %v8996
        %v9373 = vpack.c.b16 %v9005, %v9001
        %v9374 = vpack.c.b16 %v9006, %v9002
        %v9375 = vpack.c.b16 %v9007, %v9003
        %v9376 = vpack.c.b16 %v9008, %v9004
        %v9377 = vpack.c.b16 %v9013, %v9009
        %v9378 = vpack.c.b16 %v9014, %v9010
        %v9379 = vpack.c.b16 %v9015, %v9011
        %v9380 = vpack.c.b16 %v9016, %v9012
        %v9381 = vpack.c.b16 %v9021, %v9017
        %v9382 = vpack.c.b16 %v9022, %v9018
        %v9383 = vpack.c.b16 %v9023, %v9019
        %v9384 = vpack.c.b16 %v9024, %v9020
        %v9385 = vpack.c.b16 %v9029, %v9025
        %v9386 = vpack.c.b16 %v9030, %v9026
        %v9387 = vpack.c.b16 %v9031, %v9027
        %v9388 = vpack.c.b16 %v9032, %v9028
        %v9389 = vpack.c.b16 %v9037, %v9033
        %v9390 = vpack.c.b16 %v9038, %v9034
        %v9391 = vpack.c.b16 %v9039, %v9035
        %v9392 = vpack.c.b16 %v9040, %v9036
        %v9393 = vpack.c.b16 %v9045, %v9041
        %v9394 = vpack.c.b16 %v9046, %v9042
        %v9395 = vpack.c.b16 %v9047, %v9043
        %v9396 = vpack.c.b16 %v9048, %v9044
        %v9397 = vpack.c.b16 %v9053, %v9049
        %v9398 = vpack.c.b16 %v9054, %v9050
        %v9399 = vpack.c.b16 %v9055, %v9051
        %v9400 = vpack.c.b16 %v9056, %v9052
        %v9401 = vpack.c.b16 %v9061, %v9057
        %v9402 = vpack.c.b16 %v9062, %v9058
        %v9403 = vpack.c.b16 %v9063, %v9059
        %v9404 = vpack.c.b16 %v9064, %v9060
        %v9405 = vpack.c.b16 %v9069, %v9065
        %v9406 = vpack.c.b16 %v9070, %v9066
        %v9407 = vpack.c.b16 %v9071, %v9067
        %v9408 = vpack.c.b16 %v9072, %v9068
        %v9409 = vpack.c.b16 %v9077, %v9073
        %v9410 = vpack.c.b16 %v9078, %v9074
        %v9411 = vpack.c.b16 %v9079, %v9075
        %v9412 = vpack.c.b16 %v9080, %v9076
        %v9413 = vpack.c.b16 %v9085, %v9081
        %v9414 = vpack.c.b16 %v9086, %v9082
        %v9415 = vpack.c.b16 %v9087, %v9083
        %v9416 = vpack.c.b16 %v9088, %v9084
        %v9417 = vpack.c.b16 %v9093, %v9089
        %v9418 = vpack.c.b16 %v9094, %v9090
        %v9419 = vpack.c.b16 %v9095, %v9091
        %v9420 = vpack.c.b16 %v9096, %v9092
        %v9421 = vpack.c.b16 %v9101, %v9097
        %v9422 = vpack.c.b16 %v9102, %v9098
        %v9423 = vpack.c.b16 %v9103, %v9099
        %v9424 = vpack.c.b16 %v9104, %v9100
        %v9425 = vpack.c.b16 %v9109, %v9105
        %v9426 = vpack.c.b16 %v9110, %v9106
        %v9427 = vpack.c.b16 %v9111, %v9107
        %v9428 = vpack.c.b16 %v9112, %v9108
        %v9429 = vpack.c.b16 %v9117, %v9113
        %v9430 = vpack.c.b16 %v9118, %v9114
        %v9431 = vpack.c.b16 %v9119, %v9115
        %v9432 = vpack.c.b16 %v9120, %v9116
        %v9433 = vpack.c.b16 %v9125, %v9121
        %v9434 = vpack.c.b16 %v9126, %v9122
        %v9435 = vpack.c.b16 %v9127, %v9123
        %v9436 = vpack.c.b16 %v9128, %v9124
        %v9437 = vpack.c.b16 %v9133, %v9129
        %v9438 = vpack.c.b16 %v9134, %v9130
        %v9439 = vpack.c.b16 %v9135, %v9131
        %v9440 = vpack.c.b16 %v9136, %v9132
        %v9441 = vpack.c.b16 %v9141, %v9137
        %v9442 = vpack.c.b16 %v9142, %v9138
        %v9443 = vpack.c.b16 %v9143, %v9139
        %v9444 = vpack.c.b16 %v9144, %v9140
        %v9445 = vpack.c.b16 %v9149, %v9145
        %v9446 = vpack.c.b16 %v9150, %v9146
        %v9447 = vpack.c.b16 %v9151, %v9147
        %v9448 = vpack.c.b16 %v9152, %v9148
        %v9449 = vpack.c.b16 %v9157, %v9153
        %v9450 = vpack.c.b16 %v9158, %v9154
        %v9451 = vpack.c.b16 %v9159, %v9155
        %v9452 = vpack.c.b16 %v9160, %v9156
        %v9453 = vpack.c.b16 %v9165, %v9161
        %v9454 = vpack.c.b16 %v9166, %v9162
        %v9455 = vpack.c.b16 %v9167, %v9163
        %v9456 = vpack.c.b16 %v9168, %v9164
        %v9457 = vpack.c.b16 %v9173, %v9169
        %v9458 = vpack.c.b16 %v9174, %v9170
        %v9459 = vpack.c.b16 %v9175, %v9171
        %v9460 = vpack.c.b16 %v9176, %v9172
        %v9461 = vpack.c.b16 %v9181, %v9177
        %v9462 = vpack.c.b16 %v9182, %v9178
        %v9463 = vpack.c.b16 %v9183, %v9179
        %v9464 = vpack.c.b16 %v9184, %v9180
        %v9465 = vpack.c.b16 %v9189, %v9185
        %v9466 = vpack.c.b16 %v9190, %v9186
        %v9467 = vpack.c.b16 %v9191, %v9187
        %v9468 = vpack.c.b16 %v9192, %v9188
        %v9469 = vpack.c.b16 %v9197, %v9193
        %v9470 = vpack.c.b16 %v9198, %v9194
        %v9471 = vpack.c.b16 %v9199, %v9195
        %v9472 = vpack.c.b16 %v9200, %v9196
        %v9473 = vpack.c.b16 %v9205, %v9201
        %v9474 = vpack.c.b16 %v9206, %v9202
        %v9475 = vpack.c.b16 %v9207, %v9203
        %v9476 = vpack.c.b16 %v9208, %v9204
        %v9477 = vpack.c.b16 %v9213, %v9209
        %v9478 = vpack.c.b16 %v9214, %v9210
        %v9479 = vpack.c.b16 %v9215, %v9211
        %v9480 = vpack.c.b16 %v9216, %v9212
        %v9481 = vpack.c.b16 %v9221, %v9217
        %v9482 = vpack.c.b16 %v9222, %v9218
        %v9483 = vpack.c.b16 %v9223, %v9219
        %v9484 = vpack.c.b16 %v9224, %v9220
        %v9485 = vpack.c.b16 %v9229, %v9225
        %v9486 = vpack.c.b16 %v9230, %v9226
        %v9487 = vpack.c.b16 %v9231, %v9227
        %v9488 = vpack.c.b16 %v9232, %v9228
        %9745 = vmatprep.subr.bf16.mxu0 %v9262
        %9746 = vmatpush1.bf16.msra.mxu0 %v9261
        %9747 = vmatprep.subr.bf16.mxu0 %v9258
        %9748 = vmatpush1.bf16.msra.mxu0 %v9257
        %9749 = vmatprep.subr.bf16.mxu0 %v9254
        %9750 = vmatpush1.bf16.msra.mxu0 %v9253
        %9751 = vmatprep.subr.bf16.mxu0 %v9250
        %9752 = vmatpush1.bf16.msra.mxu0 %v9249
        %9753 = vmatprep.subr.bf16.mxu0 %v9246
        %9754 = vmatpush1.bf16.msra.mxu0 %v9245
        %9755 = vmatprep.subr.bf16.mxu0 %v9242
        %9756 = vmatpush1.bf16.msra.mxu0 %v9241
        %9757 = vmatprep.subr.bf16.mxu0 %v9238
        %9758 = vmatpush1.bf16.msra.mxu0 %v9237
        %9759 = vmatprep.subr.bf16.mxu0 %v9234
        %9760 = vmatpush1.bf16.msra.mxu0 %v9233
        %9761 = vmatprep.subr.bf16.mxu0 %v9294
        %9762 = vmatpush2.bf16.msra.mxu0 %v9293
        %9763 = vmatprep.subr.bf16.mxu0 %v9290
        %9764 = vmatpush2.bf16.msra.mxu0 %v9289
        %9765 = vmatprep.subr.bf16.mxu0 %v9286
        %9766 = vmatpush2.bf16.msra.mxu0 %v9285
        %9767 = vmatprep.subr.bf16.mxu0 %v9282
        %9768 = vmatpush2.bf16.msra.mxu0 %v9281
        %9769 = vmatprep.subr.bf16.mxu0 %v9278
        %9770 = vmatpush2.bf16.msra.mxu0 %v9277
        %9771 = vmatprep.subr.bf16.mxu0 %v9274
        %9772 = vmatpush2.bf16.msra.mxu0 %v9273
        %9773 = vmatprep.subr.bf16.mxu0 %v9270
        %9774 = vmatpush2.bf16.msra.mxu0 %v9269
        %9775 = vmatprep.subr.bf16.mxu0 %v9266
        %9776 = vmatpush2.bf16.msra.mxu0 %v9265
        %9777 = vmatprep.mubr.bf16.mxu0 %v8186
        %9778 = vmatmul.mubr.bf16.gmra.mxu0 %v8185
        %v9779 = vpop.f32.mrf.mxu0
        %v9780 = vadd.f32 %v8452, %v9779
        %v9781 = vpop.f32.mrf.mxu0
        %v9782 = vadd.f32 %v8456, %v9781
        %v9783 = vpop.f32.mrf.mxu0
        %v9784 = vadd.f32 %v8452, %v9783
        %v9785 = vpop.f32.mrf.mxu0
        %v9786 = vadd.f32 %v8456, %v9785
        %9787 = vdwg.mxu0
        %9788 = vmatprep.subr.bf16.mxu0 %v9326
        %9789 = vmatpush1.bf16.msra.mxu0 %v9325
        %9790 = vmatprep.subr.bf16.mxu0 %v9322
        %9791 = vmatpush1.bf16.msra.mxu0 %v9321
        %9792 = vmatprep.subr.bf16.mxu0 %v9318
        %9793 = vmatpush1.bf16.msra.mxu0 %v9317
        %9794 = vmatprep.subr.bf16.mxu0 %v9314
        %9795 = vmatpush1.bf16.msra.mxu0 %v9313
        %9796 = vmatprep.subr.bf16.mxu0 %v9310
        %9797 = vmatpush1.bf16.msra.mxu0 %v9309
        %9798 = vmatprep.subr.bf16.mxu0 %v9306
        %9799 = vmatpush1.bf16.msra.mxu0 %v9305
        %9800 = vmatprep.subr.bf16.mxu0 %v9302
        %9801 = vmatpush1.bf16.msra.mxu0 %v9301
        %9802 = vmatprep.subr.bf16.mxu0 %v9298
        %9803 = vmatpush1.bf16.msra.mxu0 %v9297
        %9804 = vmatprep.subr.bf16.mxu0 %v9358
        %9805 = vmatpush2.bf16.msra.mxu0 %v9357
        %9806 = vmatprep.subr.bf16.mxu0 %v9354
        %9807 = vmatpush2.bf16.msra.mxu0 %v9353
        %9808 = vmatprep.subr.bf16.mxu0 %v9350
        %9809 = vmatpush2.bf16.msra.mxu0 %v9349
        %9810 = vmatprep.subr.bf16.mxu0 %v9346
        %9811 = vmatpush2.bf16.msra.mxu0 %v9345
        %9812 = vmatprep.subr.bf16.mxu0 %v9342
        %9813 = vmatpush2.bf16.msra.mxu0 %v9341
        %9814 = vmatprep.subr.bf16.mxu0 %v9338
        %9815 = vmatpush2.bf16.msra.mxu0 %v9337
        %9816 = vmatprep.subr.bf16.mxu0 %v9334
        %9817 = vmatpush2.bf16.msra.mxu0 %v9333
        %9818 = vmatprep.subr.bf16.mxu0 %v9330
        %9819 = vmatpush2.bf16.msra.mxu0 %v9329
        %9820 = vmatprep.mubr.bf16.mxu0 %v8188
        %9821 = vmatmul.mubr.bf16.gmra.mxu0 %v8187
        %v9822 = vpop.f32.mrf.mxu0
        %v9823 = vadd.f32 %v9780, %v9822
        %v9824 = vpop.f32.mrf.mxu0
        %v9825 = vadd.f32 %v9782, %v9824
        %v9826 = vpop.f32.mrf.mxu0
        %v9827 = vadd.f32 %v9784, %v9826
        %v9828 = vpop.f32.mrf.mxu0
        %v9829 = vadd.f32 %v9786, %v9828
        %9830 = vdwg.mxu0
        %9831 = vmatprep.subr.bf16.mxu0 %v9390
        %9832 = vmatpush1.bf16.msra.mxu0 %v9389
        %9833 = vmatprep.subr.bf16.mxu0 %v9386
        %9834 = vmatpush1.bf16.msra.mxu0 %v9385
        %9835 = vmatprep.subr.bf16.mxu0 %v9382
        %9836 = vmatpush1.bf16.msra.mxu0 %v9381
        %9837 = vmatprep.subr.bf16.mxu0 %v9378
        %9838 = vmatpush1.bf16.msra.mxu0 %v9377
        %9839 = vmatprep.subr.bf16.mxu0 %v9374
        %9840 = vmatpush1.bf16.msra.mxu0 %v9373
        %9841 = vmatprep.subr.bf16.mxu0 %v9370
        %9842 = vmatpush1.bf16.msra.mxu0 %v9369
        %9843 = vmatprep.subr.bf16.mxu0 %v9366
        %9844 = vmatpush1.bf16.msra.mxu0 %v9365
        %9845 = vmatprep.subr.bf16.mxu0 %v9362
        %9846 = vmatpush1.bf16.msra.mxu0 %v9361
        %9847 = vmatprep.subr.bf16.mxu0 %v9422
        %9848 = vmatpush2.bf16.msra.mxu0 %v9421
        %9849 = vmatprep.subr.bf16.mxu0 %v9418
        %9850 = vmatpush2.bf16.msra.mxu0 %v9417
        %9851 = vmatprep.subr.bf16.mxu0 %v9414
        %9852 = vmatpush2.bf16.msra.mxu0 %v9413
        %9853 = vmatprep.subr.bf16.mxu0 %v9410
        %9854 = vmatpush2.bf16.msra.mxu0 %v9409
        %9855 = vmatprep.subr.bf16.mxu0 %v9406
        %9856 = vmatpush2.bf16.msra.mxu0 %v9405
        %9857 = vmatprep.subr.bf16.mxu0 %v9402
        %9858 = vmatpush2.bf16.msra.mxu0 %v9401
        %9859 = vmatprep.subr.bf16.mxu0 %v9398
        %9860 = vmatpush2.bf16.msra.mxu0 %v9397
        %9861 = vmatprep.subr.bf16.mxu0 %v9394
        %9862 = vmatpush2.bf16.msra.mxu0 %v9393
        %9863 = vmatprep.mubr.bf16.mxu0 %v8190
        %9864 = vmatmul.mubr.bf16.gmra.mxu0 %v8189
        %v9865 = vpop.f32.mrf.mxu0
        %v9866 = vadd.f32 %v9823, %v9865
        %v9867 = vpop.f32.mrf.mxu0
        %v9868 = vadd.f32 %v9825, %v9867
        %v9869 = vpop.f32.mrf.mxu0
        %v9870 = vadd.f32 %v9827, %v9869
        %v9871 = vpop.f32.mrf.mxu0
        %v9872 = vadd.f32 %v9829, %v9871
        %9873 = vdwg.mxu0
        %9874 = vmatprep.subr.bf16.mxu0 %v9454
        %9875 = vmatpush1.bf16.msra.mxu0 %v9453
        %9876 = vmatprep.subr.bf16.mxu0 %v9450
        %9877 = vmatpush1.bf16.msra.mxu0 %v9449
        %9878 = vmatprep.subr.bf16.mxu0 %v9446
        %9879 = vmatpush1.bf16.msra.mxu0 %v9445
        %9880 = vmatprep.subr.bf16.mxu0 %v9442
        %9881 = vmatpush1.bf16.msra.mxu0 %v9441
        %9882 = vmatprep.subr.bf16.mxu0 %v9438
        %9883 = vmatpush1.bf16.msra.mxu0 %v9437
        %9884 = vmatprep.subr.bf16.mxu0 %v9434
        %9885 = vmatpush1.bf16.msra.mxu0 %v9433
        %9886 = vmatprep.subr.bf16.mxu0 %v9430
        %9887 = vmatpush1.bf16.msra.mxu0 %v9429
        %9888 = vmatprep.subr.bf16.mxu0 %v9426
        %9889 = vmatpush1.bf16.msra.mxu0 %v9425
        %9890 = vmatprep.subr.bf16.mxu0 %v9486
        %9891 = vmatpush2.bf16.msra.mxu0 %v9485
        %9892 = vmatprep.subr.bf16.mxu0 %v9482
        %9893 = vmatpush2.bf16.msra.mxu0 %v9481
        %9894 = vmatprep.subr.bf16.mxu0 %v9478
        %9895 = vmatpush2.bf16.msra.mxu0 %v9477
        %9896 = vmatprep.subr.bf16.mxu0 %v9474
        %9897 = vmatpush2.bf16.msra.mxu0 %v9473
        %9898 = vmatprep.subr.bf16.mxu0 %v9470
        %9899 = vmatpush2.bf16.msra.mxu0 %v9469
        %9900 = vmatprep.subr.bf16.mxu0 %v9466
        %9901 = vmatpush2.bf16.msra.mxu0 %v9465
        %9902 = vmatprep.subr.bf16.mxu0 %v9462
        %9903 = vmatpush2.bf16.msra.mxu0 %v9461
        %9904 = vmatprep.subr.bf16.mxu0 %v9458
        %9905 = vmatpush2.bf16.msra.mxu0 %v9457
        %9906 = vmatprep.mubr.bf16.mxu0 %v8192
        %9907 = vmatmul.mubr.bf16.gmra.mxu0 %v8191
        %v9908 = vpop.f32.mrf.mxu0
        %v9909 = vadd.f32 %v9866, %v9908
        %v9910 = vpop.f32.mrf.mxu0
        %v9911 = vadd.f32 %v9868, %v9910
        %v9912 = vpop.f32.mrf.mxu0
        %v9913 = vadd.f32 %v9870, %v9912
        %v9914 = vpop.f32.mrf.mxu0
        %v9915 = vadd.f32 %v9872, %v9914
        %9916 = vdwg.mxu0
        %9917 = vmatprep.subr.bf16.mxu0 %v9264
        %9918 = vmatpush1.bf16.msra.mxu0 %v9263
        %9919 = vmatprep.subr.bf16.mxu0 %v9260
        %9920 = vmatpush1.bf16.msra.mxu0 %v9259
        %9921 = vmatprep.subr.bf16.mxu0 %v9256
        %9922 = vmatpush1.bf16.msra.mxu0 %v9255
        %9923 = vmatprep.subr.bf16.mxu0 %v9252
        %9924 = vmatpush1.bf16.msra.mxu0 %v9251
        %9925 = vmatprep.subr.bf16.mxu0 %v9248
        %9926 = vmatpush1.bf16.msra.mxu0 %v9247
        %9927 = vmatprep.subr.bf16.mxu0 %v9244
        %9928 = vmatpush1.bf16.msra.mxu0 %v9243
        %9929 = vmatprep.subr.bf16.mxu0 %v9240
        %9930 = vmatpush1.bf16.msra.mxu0 %v9239
        %9931 = vmatprep.subr.bf16.mxu0 %v9236
        %9932 = vmatpush1.bf16.msra.mxu0 %v9235
        %9933 = vmatprep.subr.bf16.mxu0 %v9296
        %9934 = vmatpush2.bf16.msra.mxu0 %v9295
        %9935 = vmatprep.subr.bf16.mxu0 %v9292
        %9936 = vmatpush2.bf16.msra.mxu0 %v9291
        %9937 = vmatprep.subr.bf16.mxu0 %v9288
        %9938 = vmatpush2.bf16.msra.mxu0 %v9287
        %9939 = vmatprep.subr.bf16.mxu0 %v9284
        %9940 = vmatpush2.bf16.msra.mxu0 %v9283
        %9941 = vmatprep.subr.bf16.mxu0 %v9280
        %9942 = vmatpush2.bf16.msra.mxu0 %v9279
        %9943 = vmatprep.subr.bf16.mxu0 %v9276
        %9944 = vmatpush2.bf16.msra.mxu0 %v9275
        %9945 = vmatprep.subr.bf16.mxu0 %v9272
        %9946 = vmatpush2.bf16.msra.mxu0 %v9271
        %9947 = vmatprep.subr.bf16.mxu0 %v9268
        %9948 = vmatpush2.bf16.msra.mxu0 %v9267
        %9949 = vmatprep.mubr.bf16.mxu0 %v8186
        %9950 = vmatmul.mubr.bf16.gmra.mxu0 %v8185
        %v9951 = vpop.f32.mrf.mxu0
        %v9952 = vadd.f32 %v8460, %v9951
        %v9953 = vpop.f32.mrf.mxu0
        %v9954 = vadd.f32 %v8464, %v9953
        %v9955 = vpop.f32.mrf.mxu0
        %v9956 = vadd.f32 %v8460, %v9955
        %v9957 = vpop.f32.mrf.mxu0
        %v9958 = vadd.f32 %v8464, %v9957
        %9959 = vdwg.mxu0
        %9960 = vmatprep.subr.bf16.mxu0 %v9328
        %9961 = vmatpush1.bf16.msra.mxu0 %v9327
        %9962 = vmatprep.subr.bf16.mxu0 %v9324
        %9963 = vmatpush1.bf16.msra.mxu0 %v9323
        %9964 = vmatprep.subr.bf16.mxu0 %v9320
        %9965 = vmatpush1.bf16.msra.mxu0 %v9319
        %9966 = vmatprep.subr.bf16.mxu0 %v9316
        %9967 = vmatpush1.bf16.msra.mxu0 %v9315
        %9968 = vmatprep.subr.bf16.mxu0 %v9312
        %9969 = vmatpush1.bf16.msra.mxu0 %v9311
        %9970 = vmatprep.subr.bf16.mxu0 %v9308
        %9971 = vmatpush1.bf16.msra.mxu0 %v9307
        %9972 = vmatprep.subr.bf16.mxu0 %v9304
        %9973 = vmatpush1.bf16.msra.mxu0 %v9303
        %9974 = vmatprep.subr.bf16.mxu0 %v9300
        %9975 = vmatpush1.bf16.msra.mxu0 %v9299
        %9976 = vmatprep.subr.bf16.mxu0 %v9360
        %9977 = vmatpush2.bf16.msra.mxu0 %v9359
        %9978 = vmatprep.subr.bf16.mxu0 %v9356
        %9979 = vmatpush2.bf16.msra.mxu0 %v9355
        %9980 = vmatprep.subr.bf16.mxu0 %v9352
        %9981 = vmatpush2.bf16.msra.mxu0 %v9351
        %9982 = vmatprep.subr.bf16.mxu0 %v9348
        %9983 = vmatpush2.bf16.msra.mxu0 %v9347
        %9984 = vmatprep.subr.bf16.mxu0 %v9344
        %9985 = vmatpush2.bf16.msra.mxu0 %v9343
        %9986 = vmatprep.subr.bf16.mxu0 %v9340
        %9987 = vmatpush2.bf16.msra.mxu0 %v9339
        %9988 = vmatprep.subr.bf16.mxu0 %v9336
        %9989 = vmatpush2.bf16.msra.mxu0 %v9335
        %9990 = vmatprep.subr.bf16.mxu0 %v9332
        %9991 = vmatpush2.bf16.msra.mxu0 %v9331
        %9992 = vmatprep.mubr.bf16.mxu0 %v8188
        %9993 = vmatmul.mubr.bf16.gmra.mxu0 %v8187
        %v9994 = vpop.f32.mrf.mxu0
        %v9995 = vadd.f32 %v9952, %v9994
        %v9996 = vpop.f32.mrf.mxu0
        %v9997 = vadd.f32 %v9954, %v9996
        %v9998 = vpop.f32.mrf.mxu0
        %v9999 = vadd.f32 %v9956, %v9998
        %v10000 = vpop.f32.mrf.mxu0
        %v10001 = vadd.f32 %v9958, %v10000
        %10002 = vdwg.mxu0
        %10003 = vmatprep.subr.bf16.mxu0 %v9392
        %10004 = vmatpush1.bf16.msra.mxu0 %v9391
        %10005 = vmatprep.subr.bf16.mxu0 %v9388
        %10006 = vmatpush1.bf16.msra.mxu0 %v9387
        %10007 = vmatprep.subr.bf16.mxu0 %v9384
        %10008 = vmatpush1.bf16.msra.mxu0 %v9383
        %10009 = vmatprep.subr.bf16.mxu0 %v9380
        %10010 = vmatpush1.bf16.msra.mxu0 %v9379
        %10011 = vmatprep.subr.bf16.mxu0 %v9376
        %10012 = vmatpush1.bf16.msra.mxu0 %v9375
        %10013 = vmatprep.subr.bf16.mxu0 %v9372
        %10014 = vmatpush1.bf16.msra.mxu0 %v9371
        %10015 = vmatprep.subr.bf16.mxu0 %v9368
        %10016 = vmatpush1.bf16.msra.mxu0 %v9367
        %10017 = vmatprep.subr.bf16.mxu0 %v9364
        %10018 = vmatpush1.bf16.msra.mxu0 %v9363
        %10019 = vmatprep.subr.bf16.mxu0 %v9424
        %10020 = vmatpush2.bf16.msra.mxu0 %v9423
        %10021 = vmatprep.subr.bf16.mxu0 %v9420
        %10022 = vmatpush2.bf16.msra.mxu0 %v9419
        %10023 = vmatprep.subr.bf16.mxu0 %v9416
        %10024 = vmatpush2.bf16.msra.mxu0 %v9415
        %10025 = vmatprep.subr.bf16.mxu0 %v9412
        %10026 = vmatpush2.bf16.msra.mxu0 %v9411
        %10027 = vmatprep.subr.bf16.mxu0 %v9408
        %10028 = vmatpush2.bf16.msra.mxu0 %v9407
        %10029 = vmatprep.subr.bf16.mxu0 %v9404
        %10030 = vmatpush2.bf16.msra.mxu0 %v9403
        %10031 = vmatprep.subr.bf16.mxu0 %v9400
        %10032 = vmatpush2.bf16.msra.mxu0 %v9399
        %10033 = vmatprep.subr.bf16.mxu0 %v9396
        %10034 = vmatpush2.bf16.msra.mxu0 %v9395
        %10035 = vmatprep.mubr.bf16.mxu0 %v8190
        %10036 = vmatmul.mubr.bf16.gmra.mxu0 %v8189
        %v10037 = vpop.f32.mrf.mxu0
        %v10038 = vadd.f32 %v9995, %v10037
        %v10039 = vpop.f32.mrf.mxu0
        %v10040 = vadd.f32 %v9997, %v10039
        %v10041 = vpop.f32.mrf.mxu0
        %v10042 = vadd.f32 %v9999, %v10041
        %v10043 = vpop.f32.mrf.mxu0
        %v10044 = vadd.f32 %v10001, %v10043
        %10045 = vdwg.mxu0
        %10046 = vmatprep.subr.bf16.mxu0 %v9456
        %10047 = vmatpush1.bf16.msra.mxu0 %v9455
        %10048 = vmatprep.subr.bf16.mxu0 %v9452
        %10049 = vmatpush1.bf16.msra.mxu0 %v9451
        %10050 = vmatprep.subr.bf16.mxu0 %v9448
        %10051 = vmatpush1.bf16.msra.mxu0 %v9447
        %10052 = vmatprep.subr.bf16.mxu0 %v9444
        %10053 = vmatpush1.bf16.msra.mxu0 %v9443
        %10054 = vmatprep.subr.bf16.mxu0 %v9440
        %10055 = vmatpush1.bf16.msra.mxu0 %v9439
        %10056 = vmatprep.subr.bf16.mxu0 %v9436
        %10057 = vmatpush1.bf16.msra.mxu0 %v9435
        %10058 = vmatprep.subr.bf16.mxu0 %v9432
        %10059 = vmatpush1.bf16.msra.mxu0 %v9431
        %10060 = vmatprep.subr.bf16.mxu0 %v9428
        %10061 = vmatpush1.bf16.msra.mxu0 %v9427
        %10062 = vmatprep.subr.bf16.mxu0 %v9488
        %10063 = vmatpush2.bf16.msra.mxu0 %v9487
        %10064 = vmatprep.subr.bf16.mxu0 %v9484
        %10065 = vmatpush2.bf16.msra.mxu0 %v9483
        %10066 = vmatprep.subr.bf16.mxu0 %v9480
        %10067 = vmatpush2.bf16.msra.mxu0 %v9479
        %10068 = vmatprep.subr.bf16.mxu0 %v9476
        %10069 = vmatpush2.bf16.msra.mxu0 %v9475
        %10070 = vmatprep.subr.bf16.mxu0 %v9472
        %10071 = vmatpush2.bf16.msra.mxu0 %v9471
        %10072 = vmatprep.subr.bf16.mxu0 %v9468
        %10073 = vmatpush2.bf16.msra.mxu0 %v9467
        %10074 = vmatprep.subr.bf16.mxu0 %v9464
        %10075 = vmatpush2.bf16.msra.mxu0 %v9463
        %10076 = vmatprep.subr.bf16.mxu0 %v9460
        %10077 = vmatpush2.bf16.msra.mxu0 %v9459
        %10078 = vmatprep.mubr.bf16.mxu0 %v8192
        %10079 = vmatmul.mubr.bf16.gmra.mxu0 %v8191
        %v10080 = vpop.f32.mrf.mxu0
        %v10081 = vadd.f32 %v10038, %v10080
        %v10082 = vpop.f32.mrf.mxu0
        %v10083 = vadd.f32 %v10040, %v10082
        %v10084 = vpop.f32.mrf.mxu0
        %v10085 = vadd.f32 %v10042, %v10084
        %v10086 = vpop.f32.mrf.mxu0
        %v10087 = vadd.f32 %v10044, %v10086
        %10088 = vdwg.mxu0
        %v10089 = vadd.f32 %v6117, %v9909
        %v10090 = vadd.f32 %v6118, %v9911
        %v10091 = vadd.f32 %v6119, %v10081
        %v10092 = vadd.f32 %v6120, %v10083
        %v10093 = vadd.f32 %v6121, %v9913
        %v10094 = vadd.f32 %v6122, %v9915
        %v10095 = vadd.f32 %v6123, %v10085
        %v10096 = vadd.f32 %v6124, %v10087
        %v10097 = vadd.f32 %v10089, %v10090
        %v10098 = vadd.f32 %v10097, %v10091
        %v10099 = vadd.f32 %v10098, %v10092
        %10100 = vadd.xlane.f32.xlu0 %v10099
        %v10101 = vpop.xlane.xlu0 %10100
        %v10102 = vadd.f32 %v10093, %v10094
        %v10103 = vadd.f32 %v10102, %v10095
        %v10104 = vadd.f32 %v10103, %v10096
        %10105 = vadd.xlane.f32.xlu0 %v10104
        %v10106 = vpop.xlane.xlu0 %10105
        %v10107 = vmul.f32 %v10101, %v6034
        %v10108 = vmul.f32 %v10106, %v6034
        %v10109 = vsub.f32 %v10089, %v10107
        %v10110 = vsub.f32 %v10090, %v10107
        %v10111 = vsub.f32 %v10091, %v10107
        %v10112 = vsub.f32 %v10092, %v10107
        %v10113 = vsub.f32 %v10093, %v10108
        %v10114 = vsub.f32 %v10094, %v10108
        %v10115 = vsub.f32 %v10095, %v10108
        %v10116 = vsub.f32 %v10096, %v10108
        %v10117 = vmul.f32 %v10109, %v10109
        %v10118 = vmul.f32 %v10110, %v10110
        %v10119 = vmul.f32 %v10111, %v10111
        %v10120 = vmul.f32 %v10112, %v10112
        %v10121 = vmul.f32 %v10113, %v10113
        %v10122 = vmul.f32 %v10114, %v10114
        %v10123 = vmul.f32 %v10115, %v10115
        %v10124 = vmul.f32 %v10116, %v10116
        %v10125 = vadd.f32 %v10117, %v10118
        %v10126 = vadd.f32 %v10125, %v10119
        %v10127 = vadd.f32 %v10126, %v10120
        %10128 = vadd.xlane.f32.xlu0 %v10127
        %v10129 = vpop.xlane.xlu0 %10128
        %v10130 = vadd.f32 %v10121, %v10122
        %v10131 = vadd.f32 %v10130, %v10123
        %v10132 = vadd.f32 %v10131, %v10124
        %10133 = vadd.xlane.f32.xlu0 %v10132
        %v10134 = vpop.xlane.xlu0 %10133
        %v10135 = vmul.f32 %v10129, %v6034
        %v10136 = vmul.f32 %v10134, %v6034
        %v10137 = vadd.f32 %v10135, 1e-05
        %v10138 = vadd.f32 %v10136, 1e-05
        %v10139 = vrsqrt.pop %v10137
        %v10140 = vrsqrt.pop %v10138
        %v10141 = vmul.f32 %v10109, %v10139
        %v10142 = vmul.f32 %v10110, %v10139
        %v10143 = vmul.f32 %v10111, %v10139
        %v10144 = vmul.f32 %v10112, %v10139
        %v10145 = vmul.f32 %v10113, %v10140
        %v10146 = vmul.f32 %v10114, %v10140
        %v10147 = vmul.f32 %v10115, %v10140
        %v10148 = vmul.f32 %v10116, %v10140
        %v10149 = vlaneseq
        %v10150 = vshrl.u32 %v10149, 7
        %v10151 = vsub.s32 4, %v10150
        %v10152 = vrot.slane %v1720, %v10151
        %v10153 = vlaneseq
        %v10154 = vshrl.u32 %v10153, 7
        %v10155 = vsub.s32 4, %v10154
        %v10156 = vrot.slane %v1721, %v10155
        %v10157 = vlaneseq
        %v10158 = vshrl.u32 %v10157, 7
        %v10159 = vsub.s32 4, %v10158
        %v10160 = vrot.slane %v1722, %v10159
        %v10161 = vlaneseq
        %v10162 = vshrl.u32 %v10161, 7
        %v10163 = vsub.s32 4, %v10162
        %v10164 = vrot.slane %v1723, %v10163
        %v10165 = vmul.f32 %v10141, %v10152
        %v10166 = vmul.f32 %v10142, %v10156
        %v10167 = vmul.f32 %v10143, %v10160
        %v10168 = vmul.f32 %v10144, %v10164
        %v10169 = vmul.f32 %v10145, %v10152
        %v10170 = vmul.f32 %v10146, %v10156
        %v10171 = vmul.f32 %v10147, %v10160
        %v10172 = vmul.f32 %v10148, %v10164
        %v10173 = vlaneseq
        %v10174 = vshrl.u32 %v10173, 7
        %v10175 = vsub.s32 4, %v10174
        %v10176 = vrot.slane %v1724, %v10175
        %v10177 = vlaneseq
        %v10178 = vshrl.u32 %v10177, 7
        %v10179 = vsub.s32 4, %v10178
        %v10180 = vrot.slane %v1725, %v10179
        %v10181 = vlaneseq
        %v10182 = vshrl.u32 %v10181, 7
        %v10183 = vsub.s32 4, %v10182
        %v10184 = vrot.slane %v1726, %v10183
        %v10185 = vlaneseq
        %v10186 = vshrl.u32 %v10185, 7
        %v10187 = vsub.s32 4, %v10186
        %v10188 = vrot.slane %v1727, %v10187
        %v10189 = vadd.f32 %v10165, %v10176
        %v10190 = vadd.f32 %v10166, %v10180
        %v10191 = vadd.f32 %v10167, %v10184
        %v10192 = vadd.f32 %v10168, %v10188
        %v10193 = vadd.f32 %v10169, %v10176
        %v10194 = vadd.f32 %v10170, %v10180
        %v10195 = vadd.f32 %v10171, %v10184
        %v10196 = vadd.f32 %v10172, %v10188
        %10197 = vst [vmem:[#allocation2] sm:$0xff] %v10189
        %10198 = vst [vmem:[#allocation2 + $0x8] sm:$0xff] %v10190
        %10199 = vst [vmem:[#allocation2 + $0x10] sm:$0xff] %v10191
        %10200 = vst [vmem:[#allocation2 + $0x18] sm:$0xff] %v10192
        %10201 = vst [vmem:[#allocation2 + $0x20] sm:$0xff] %v10193
        %10202 = vst [vmem:[#allocation2 + $0x28] sm:$0xff] %v10194
        %10203 = vst [vmem:[#allocation2 + $0x30] sm:$0xff] %v10195
        %10204 = vst [vmem:[#allocation2 + $0x38] sm:$0xff] %v10196
        %p10205 = scmp.eq.s32.totalorder %s41, 5
        // Predicated region
        $region133: #{style_encoder_forward.1} parent=75 // pred_check
          %p10206 = pneg %p10205
        $region134: #{style_encoder_forward.1} parent=75 // pred_check_branch
          %10208 = sbr.rel (%p10206) target = $region136
        $region135: #{style_encoder_forward.1} parent=75 // pred_region
          %v10209 = vld [vmem:[#allocation17] sm:$0xf]
          %v10210 = vld [vmem:[#allocation18] sm:$0xf]
          %v10211 = vadd.f32 %v10189, %v10190
          %v10212 = vadd.f32 %v10211, %v10191
          %v10213 = vadd.f32 %v10212, %v10192
          %10214 = vadd.xlane.f32.xlu0 %v10213
          %v10215 = vpop.xlane.xlu0 %10214
          %v10216 = vmul.f32 %v10215, %v6034
          %v10217 = vsub.f32 %v10189, %v10216
          %v10218 = vsub.f32 %v10190, %v10216
          %v10219 = vsub.f32 %v10191, %v10216
          %v10220 = vsub.f32 %v10192, %v10216
          %v10221 = vmul.f32 %v10217, %v10217
          %v10222 = vmul.f32 %v10218, %v10218
          %v10223 = vmul.f32 %v10219, %v10219
          %v10224 = vmul.f32 %v10220, %v10220
          %v10225 = vadd.f32 %v10221, %v10222
          %v10226 = vadd.f32 %v10225, %v10223
          %v10227 = vadd.f32 %v10226, %v10224
          %10228 = vadd.xlane.f32.xlu0 %v10227
          %v10229 = vpop.xlane.xlu0 %10228
          %v10230 = vmul.f32 %v10229, %v6034
          %v10231 = vadd.f32 %v10230, 1e-05
          %v10232 = vrsqrt.pop %v10231
          %v10233 = vmul.f32 %v10217, %v10232
          %v10234 = vmul.f32 %v10218, %v10232
          %v10235 = vmul.f32 %v10219, %v10232
          %v10236 = vmul.f32 %v10220, %v10232
          %v10238 = vlaneseq
          %v10239 = vshrl.u32 %v10238, 7
          %v10240 = vsub.s32 0, %v10239
          %v10241 = vrot.slane %v10209, %v10240
          %v10242 = vlaneseq
          %v10243 = vshrl.u32 %v10242, 7
          %v10244 = vsub.s32 1, %v10243
          %v10245 = vrot.slane %v10209, %v10244
          %v10246 = vlaneseq
          %v10247 = vshrl.u32 %v10246, 7
          %v10248 = vsub.s32 2, %v10247
          %v10249 = vrot.slane %v10209, %v10248
          %v10250 = vlaneseq
          %v10251 = vshrl.u32 %v10250, 7
          %v10252 = vsub.s32 3, %v10251
          %v10253 = vrot.slane %v10209, %v10252
          %v10258 = vmul.f32 %v10233, %v10241
          %v10259 = vmul.f32 %v10234, %v10245
          %v10260 = vmul.f32 %v10235, %v10249
          %v10261 = vmul.f32 %v10236, %v10253
          %v10263 = vlaneseq
          %v10264 = vshrl.u32 %v10263, 7
          %v10265 = vsub.s32 0, %v10264
          %v10266 = vrot.slane %v10210, %v10265
          %v10267 = vlaneseq
          %v10268 = vshrl.u32 %v10267, 7
          %v10269 = vsub.s32 1, %v10268
          %v10270 = vrot.slane %v10210, %v10269
          %v10271 = vlaneseq
          %v10272 = vshrl.u32 %v10271, 7
          %v10273 = vsub.s32 2, %v10272
          %v10274 = vrot.slane %v10210, %v10273
          %v10275 = vlaneseq
          %v10276 = vshrl.u32 %v10275, 7
          %v10277 = vsub.s32 3, %v10276
          %v10278 = vrot.slane %v10210, %v10277
          %v10283 = vadd.f32 %v10258, %v10266
          %v10284 = vadd.f32 %v10259, %v10270
          %v10285 = vadd.f32 %v10260, %v10274
          %v10286 = vadd.f32 %v10261, %v10278
          %10287 = vst [vmem:[%s807] sm:$0xff] %v10283
          %10288 = vst [vmem:[%s807 + $0x8] sm:$0xff] %v10284
          %10289 = vst [vmem:[%s807 + $0x10] sm:$0xff] %v10285
          %10290 = vst [vmem:[%s807 + $0x18] sm:$0xff] %v10286
          %v10291 = vpack.c.bf16 %v10283, %v10283
          %v10292 = vpack.c.bf16 %v10284, %v10284
          %v10293 = vpack.c.bf16 %v10285, %v10285
          %v10294 = vpack.c.bf16 %v10286, %v10286
          %v10295 = vld [vmem:[#allocation19] sm:$0xf]
          %v10296 = vld [vmem:[#allocation19 + $0x4] sm:$0xf]
          %v10297 = vld [vmem:[#allocation19 + $0x8] sm:$0xf]
          %v10298 = vld [vmem:[#allocation19 + $0xc] sm:$0xf]
          %v10299 = vld [vmem:[#allocation19 + $0x10] sm:$0xf]
          %v10300 = vld [vmem:[#allocation19 + $0x14] sm:$0xf]
          %v10301 = vld [vmem:[#allocation19 + $0x18] sm:$0xf]
          %v10302 = vld [vmem:[#allocation19 + $0x1c] sm:$0xf]
          %v10303 = vld [vmem:[#allocation19 + $0x20] sm:$0xf]
          %v10304 = vld [vmem:[#allocation19 + $0x24] sm:$0xf]
          %v10305 = vld [vmem:[#allocation19 + $0x28] sm:$0xf]
          %v10306 = vld [vmem:[#allocation19 + $0x2c] sm:$0xf]
          %v10307 = vld [vmem:[#allocation19 + $0x30] sm:$0xf]
          %v10308 = vld [vmem:[#allocation19 + $0x34] sm:$0xf]
          %v10309 = vld [vmem:[#allocation19 + $0x38] sm:$0xf]
          %v10310 = vld [vmem:[#allocation19 + $0x3c] sm:$0xf]
          %v10311 = vld [vmem:[#allocation19 + $0x40] sm:$0xf]
          %v10312 = vld [vmem:[#allocation19 + $0x44] sm:$0xf]
          %v10313 = vld [vmem:[#allocation19 + $0x48] sm:$0xf]
          %v10314 = vld [vmem:[#allocation19 + $0x4c] sm:$0xf]
          %v10315 = vld [vmem:[#allocation19 + $0x50] sm:$0xf]
          %v10316 = vld [vmem:[#allocation19 + $0x54] sm:$0xf]
          %v10317 = vld [vmem:[#allocation19 + $0x58] sm:$0xf]
          %v10318 = vld [vmem:[#allocation19 + $0x5c] sm:$0xf]
          %v10319 = vld [vmem:[#allocation19 + $0x60] sm:$0xf]
          %v10320 = vld [vmem:[#allocation19 + $0x64] sm:$0xf]
          %v10321 = vld [vmem:[#allocation19 + $0x68] sm:$0xf]
          %v10322 = vld [vmem:[#allocation19 + $0x6c] sm:$0xf]
          %v10323 = vld [vmem:[#allocation19 + $0x70] sm:$0xf]
          %v10324 = vld [vmem:[#allocation19 + $0x74] sm:$0xf]
          %v10325 = vld [vmem:[#allocation19 + $0x78] sm:$0xf]
          %v10326 = vld [vmem:[#allocation19 + $0x7c] sm:$0xf]
          %v10327 = vld [vmem:[#allocation19 + $0x80] sm:$0xf]
          %v10328 = vld [vmem:[#allocation19 + $0x84] sm:$0xf]
          %v10329 = vld [vmem:[#allocation19 + $0x88] sm:$0xf]
          %v10330 = vld [vmem:[#allocation19 + $0x8c] sm:$0xf]
          %v10331 = vld [vmem:[#allocation19 + $0x90] sm:$0xf]
          %v10332 = vld [vmem:[#allocation19 + $0x94] sm:$0xf]
          %v10333 = vld [vmem:[#allocation19 + $0x98] sm:$0xf]
          %v10334 = vld [vmem:[#allocation19 + $0x9c] sm:$0xf]
          %v10335 = vld [vmem:[#allocation19 + $0xa0] sm:$0xf]
          %v10336 = vld [vmem:[#allocation19 + $0xa4] sm:$0xf]
          %v10337 = vld [vmem:[#allocation19 + $0xa8] sm:$0xf]
          %v10338 = vld [vmem:[#allocation19 + $0xac] sm:$0xf]
          %v10339 = vld [vmem:[#allocation19 + $0xb0] sm:$0xf]
          %v10340 = vld [vmem:[#allocation19 + $0xb4] sm:$0xf]
          %v10341 = vld [vmem:[#allocation19 + $0xb8] sm:$0xf]
          %v10342 = vld [vmem:[#allocation19 + $0xbc] sm:$0xf]
          %v10343 = vld [vmem:[#allocation19 + $0xc0] sm:$0xf]
          %v10344 = vld [vmem:[#allocation19 + $0xc4] sm:$0xf]
          %v10345 = vld [vmem:[#allocation19 + $0xc8] sm:$0xf]
          %v10346 = vld [vmem:[#allocation19 + $0xcc] sm:$0xf]
          %v10347 = vld [vmem:[#allocation19 + $0xd0] sm:$0xf]
          %v10348 = vld [vmem:[#allocation19 + $0xd4] sm:$0xf]
          %v10349 = vld [vmem:[#allocation19 + $0xd8] sm:$0xf]
          %v10350 = vld [vmem:[#allocation19 + $0xdc] sm:$0xf]
          %v10351 = vld [vmem:[#allocation19 + $0xe0] sm:$0xf]
          %v10352 = vld [vmem:[#allocation19 + $0xe4] sm:$0xf]
          %v10353 = vld [vmem:[#allocation19 + $0xe8] sm:$0xf]
          %v10354 = vld [vmem:[#allocation19 + $0xec] sm:$0xf]
          %v10355 = vld [vmem:[#allocation19 + $0xf0] sm:$0xf]
          %v10356 = vld [vmem:[#allocation19 + $0xf4] sm:$0xf]
          %v10357 = vld [vmem:[#allocation19 + $0xf8] sm:$0xf]
          %v10358 = vld [vmem:[#allocation19 + $0xfc] sm:$0xf]
          %v10359 = vld [vmem:[#allocation21] sm:$0x1]
          %v10361 = vlaneseq
          %v10362 = vshrl.u32 %v10361, 7
          %v10363 = vsub.s32 0, %v10362
          %v10364 = vrot.slane %v10359, %v10363
          %v10430 = vunpack.c.l.b16 %v10295
          %v10431 = vunpack.c.l.b16 %v10296
          %v10432 = vunpack.c.l.b16 %v10297
          %v10433 = vunpack.c.l.b16 %v10298
          %v10434 = vunpack.c.l.b16 %v10299
          %v10435 = vunpack.c.l.b16 %v10300
          %v10436 = vunpack.c.l.b16 %v10301
          %v10437 = vunpack.c.l.b16 %v10302
          %v10438 = vunpack.c.l.b16 %v10303
          %v10439 = vunpack.c.l.b16 %v10304
          %v10440 = vunpack.c.l.b16 %v10305
          %v10441 = vunpack.c.l.b16 %v10306
          %v10442 = vunpack.c.l.b16 %v10307
          %v10443 = vunpack.c.l.b16 %v10308
          %v10444 = vunpack.c.l.b16 %v10309
          %v10445 = vunpack.c.l.b16 %v10310
          %v10446 = vunpack.c.l.b16 %v10311
          %v10447 = vunpack.c.l.b16 %v10312
          %v10448 = vunpack.c.l.b16 %v10313
          %v10449 = vunpack.c.l.b16 %v10314
          %v10450 = vunpack.c.l.b16 %v10315
          %v10451 = vunpack.c.l.b16 %v10316
          %v10452 = vunpack.c.l.b16 %v10317
          %v10453 = vunpack.c.l.b16 %v10318
          %v10454 = vunpack.c.l.b16 %v10319
          %v10455 = vunpack.c.l.b16 %v10320
          %v10456 = vunpack.c.l.b16 %v10321
          %v10457 = vunpack.c.l.b16 %v10322
          %v10458 = vunpack.c.l.b16 %v10323
          %v10459 = vunpack.c.l.b16 %v10324
          %v10460 = vunpack.c.l.b16 %v10325
          %v10461 = vunpack.c.l.b16 %v10326
          %v10462 = vunpack.c.l.b16 %v10327
          %v10463 = vunpack.c.l.b16 %v10328
          %v10464 = vunpack.c.l.b16 %v10329
          %v10465 = vunpack.c.l.b16 %v10330
          %v10466 = vunpack.c.l.b16 %v10331
          %v10467 = vunpack.c.l.b16 %v10332
          %v10468 = vunpack.c.l.b16 %v10333
          %v10469 = vunpack.c.l.b16 %v10334
          %v10470 = vunpack.c.l.b16 %v10335
          %v10471 = vunpack.c.l.b16 %v10336
          %v10472 = vunpack.c.l.b16 %v10337
          %v10473 = vunpack.c.l.b16 %v10338
          %v10474 = vunpack.c.l.b16 %v10339
          %v10475 = vunpack.c.l.b16 %v10340
          %v10476 = vunpack.c.l.b16 %v10341
          %v10477 = vunpack.c.l.b16 %v10342
          %v10478 = vunpack.c.l.b16 %v10343
          %v10479 = vunpack.c.l.b16 %v10344
          %v10480 = vunpack.c.l.b16 %v10345
          %v10481 = vunpack.c.l.b16 %v10346
          %v10482 = vunpack.c.l.b16 %v10347
          %v10483 = vunpack.c.l.b16 %v10348
          %v10484 = vunpack.c.l.b16 %v10349
          %v10485 = vunpack.c.l.b16 %v10350
          %v10486 = vunpack.c.l.b16 %v10351
          %v10487 = vunpack.c.l.b16 %v10352
          %v10488 = vunpack.c.l.b16 %v10353
          %v10489 = vunpack.c.l.b16 %v10354
          %v10490 = vunpack.c.l.b16 %v10355
          %v10491 = vunpack.c.l.b16 %v10356
          %v10492 = vunpack.c.l.b16 %v10357
          %v10493 = vunpack.c.l.b16 %v10358
          %v10494 = vpack.c.b16 %v10431, %v10430
          %v10495 = vpack.c.b16 %v10433, %v10432
          %v10496 = vpack.c.b16 %v10435, %v10434
          %v10497 = vpack.c.b16 %v10437, %v10436
          %v10498 = vpack.c.b16 %v10439, %v10438
          %v10499 = vpack.c.b16 %v10441, %v10440
          %v10500 = vpack.c.b16 %v10443, %v10442
          %v10501 = vpack.c.b16 %v10445, %v10444
          %v10502 = vpack.c.b16 %v10447, %v10446
          %v10503 = vpack.c.b16 %v10449, %v10448
          %v10504 = vpack.c.b16 %v10451, %v10450
          %v10505 = vpack.c.b16 %v10453, %v10452
          %v10506 = vpack.c.b16 %v10455, %v10454
          %v10507 = vpack.c.b16 %v10457, %v10456
          %v10508 = vpack.c.b16 %v10459, %v10458
          %v10509 = vpack.c.b16 %v10461, %v10460
          %v10510 = vpack.c.b16 %v10463, %v10462
          %v10511 = vpack.c.b16 %v10465, %v10464
          %v10512 = vpack.c.b16 %v10467, %v10466
          %v10513 = vpack.c.b16 %v10469, %v10468
          %v10514 = vpack.c.b16 %v10471, %v10470
          %v10515 = vpack.c.b16 %v10473, %v10472
          %v10516 = vpack.c.b16 %v10475, %v10474
          %v10517 = vpack.c.b16 %v10477, %v10476
          %v10518 = vpack.c.b16 %v10479, %v10478
          %v10519 = vpack.c.b16 %v10481, %v10480
          %v10520 = vpack.c.b16 %v10483, %v10482
          %v10521 = vpack.c.b16 %v10485, %v10484
          %v10522 = vpack.c.b16 %v10487, %v10486
          %v10523 = vpack.c.b16 %v10489, %v10488
          %v10524 = vpack.c.b16 %v10491, %v10490
          %v10525 = vpack.c.b16 %v10493, %v10492
          %10558 = vmatprep.subr.bf16.mxu0 0
          %10559 = vmatpush1.bf16.msra.mxu0 %v10501
          %10560 = vmatprep.subr.bf16.mxu0 0
          %10561 = vmatpush1.bf16.msra.mxu0 %v10500
          %10562 = vmatprep.subr.bf16.mxu0 0
          %10563 = vmatpush1.bf16.msra.mxu0 %v10499
          %10564 = vmatprep.subr.bf16.mxu0 0
          %10565 = vmatpush1.bf16.msra.mxu0 %v10498
          %10566 = vmatprep.subr.bf16.mxu0 0
          %10567 = vmatpush1.bf16.msra.mxu0 %v10497
          %10568 = vmatprep.subr.bf16.mxu0 0
          %10569 = vmatpush1.bf16.msra.mxu0 %v10496
          %10570 = vmatprep.subr.bf16.mxu0 0
          %10571 = vmatpush1.bf16.msra.mxu0 %v10495
          %10572 = vmatprep.subr.bf16.mxu0 0
          %10573 = vmatpush1.bf16.msra.mxu0 %v10494
          %10574 = vmatprep.subr.bf16.mxu0 0
          %10575 = vmatpush2.bf16.msra.mxu0 %v10509
          %10576 = vmatprep.subr.bf16.mxu0 0
          %10577 = vmatpush2.bf16.msra.mxu0 %v10508
          %10578 = vmatprep.subr.bf16.mxu0 0
          %10579 = vmatpush2.bf16.msra.mxu0 %v10507
          %10580 = vmatprep.subr.bf16.mxu0 0
          %10581 = vmatpush2.bf16.msra.mxu0 %v10506
          %10582 = vmatprep.subr.bf16.mxu0 0
          %10583 = vmatpush2.bf16.msra.mxu0 %v10505
          %10584 = vmatprep.subr.bf16.mxu0 0
          %10585 = vmatpush2.bf16.msra.mxu0 %v10504
          %10586 = vmatprep.subr.bf16.mxu0 0
          %10587 = vmatpush2.bf16.msra.mxu0 %v10503
          %10588 = vmatprep.subr.bf16.mxu0 0
          %10589 = vmatpush2.bf16.msra.mxu0 %v10502
          %10590 = vmatprep.mubr.bf16.mxu0 %v10292
          %10591 = vmatmul.mubr.bf16.gmra.mxu0 %v10291
          %v10592 = vpop.f32.mrf.mxu0
          %v10593 = vadd.f32 %v10364, %v10592
          %v10594 = vpop.f32.mrf.mxu0
          %v10595 = vpop.f32.mrf.mxu0
          %v10596 = vpop.f32.mrf.mxu0
          %10597 = vdwg.mxu0
          %10598 = vmatprep.subr.bf16.mxu0 0
          %10599 = vmatpush1.bf16.msra.mxu0 %v10517
          %10600 = vmatprep.subr.bf16.mxu0 0
          %10601 = vmatpush1.bf16.msra.mxu0 %v10516
          %10602 = vmatprep.subr.bf16.mxu0 0
          %10603 = vmatpush1.bf16.msra.mxu0 %v10515
          %10604 = vmatprep.subr.bf16.mxu0 0
          %10605 = vmatpush1.bf16.msra.mxu0 %v10514
          %10606 = vmatprep.subr.bf16.mxu0 0
          %10607 = vmatpush1.bf16.msra.mxu0 %v10513
          %10608 = vmatprep.subr.bf16.mxu0 0
          %10609 = vmatpush1.bf16.msra.mxu0 %v10512
          %10610 = vmatprep.subr.bf16.mxu0 0
          %10611 = vmatpush1.bf16.msra.mxu0 %v10511
          %10612 = vmatprep.subr.bf16.mxu0 0
          %10613 = vmatpush1.bf16.msra.mxu0 %v10510
          %10614 = vmatprep.subr.bf16.mxu0 0
          %10615 = vmatpush2.bf16.msra.mxu0 %v10525
          %10616 = vmatprep.subr.bf16.mxu0 0
          %10617 = vmatpush2.bf16.msra.mxu0 %v10524
          %10618 = vmatprep.subr.bf16.mxu0 0
          %10619 = vmatpush2.bf16.msra.mxu0 %v10523
          %10620 = vmatprep.subr.bf16.mxu0 0
          %10621 = vmatpush2.bf16.msra.mxu0 %v10522
          %10622 = vmatprep.subr.bf16.mxu0 0
          %10623 = vmatpush2.bf16.msra.mxu0 %v10521
          %10624 = vmatprep.subr.bf16.mxu0 0
          %10625 = vmatpush2.bf16.msra.mxu0 %v10520
          %10626 = vmatprep.subr.bf16.mxu0 0
          %10627 = vmatpush2.bf16.msra.mxu0 %v10519
          %10628 = vmatprep.subr.bf16.mxu0 0
          %10629 = vmatpush2.bf16.msra.mxu0 %v10518
          %10630 = vmatprep.mubr.bf16.mxu0 %v10294
          %10631 = vmatmul.mubr.bf16.gmra.mxu0 %v10293
          %v10632 = vpop.f32.mrf.mxu0
          %v10633 = vadd.f32 %v10593, %v10632
          %v10634 = vpop.f32.mrf.mxu0
          %v10635 = vpop.f32.mrf.mxu0
          %v10636 = vpop.f32.mrf.mxu0
          %10637 = vdwg.mxu0
          %10638 = vst [vmem:[%s811] sm:$0xff] %v10633
        $region136: #{style_encoder_forward.1} parent=75 // pred_fallthru
          _
        %p10639 = scmp.lt.s32.totalorder %s40, 1
        %s10640 = scalar_select %p10639, %s40, 1
        %s10641 = smul.addr %s10640, 4
        %s10642 = smul.addr %s10641, 8
        %s10643 = scalar_lea.vmem %s15, %s10642
        %p10644 = scmp.lt.s32.totalorder %s40, 1
        %s10645 = scalar_select %p10644, %s40, 1
        %s10646 = smul.addr %s10645, 8
        %s10647 = scalar_lea.vmem %s16, %s10646
        // Predicated region
        $region137: #{style_encoder_forward.1} parent=75 // pred_check
          %p10648 = pneg %p390
        $region138: #{style_encoder_forward.1} parent=75 // pred_check_branch
          %10650 = sbr.rel (%p10648) target = $region140
        $region139: #{style_encoder_forward.1} parent=75 // pred_region
          _
        $region140: #{style_encoder_forward.1} parent=75 // pred_fallthru
          _
        // Predicated region
        $region141: #{style_encoder_forward.1} parent=75 // pred_check
          %p10651 = pneg %p416
        $region142: #{style_encoder_forward.1} parent=75 // pred_check_branch
          %10653 = sbr.rel (%p10651) target = $region144
        $region143: #{style_encoder_forward.1} parent=75 // pred_region
          _
        $region144: #{style_encoder_forward.1} parent=75 // pred_fallthru
          _
      $region76: #{style_encoder_forward.1} parent=5 // pred_fallthru
        _
      %p10654 = scmp.le.s32.totalorder 2, %s31
      // Predicated region
      $region145: #{style_encoder_forward.1} parent=5 // pred_check
        %p10655 = pneg %p10654
      $region146: #{style_encoder_forward.1} parent=5 // pred_check_branch
        %10657 = sbr.rel (%p10655) target = $region148
      $region147: #{style_encoder_forward.1} parent=5 // pred_region
        %s10658 = ssub.s32 %s31, 2
        // Predicated region
        $region149: #{style_encoder_forward.1} parent=147 // pred_check
          %p10659 = pneg %p396
        $region150: #{style_encoder_forward.1} parent=147 // pred_check_branch
          %10661 = sbr.rel (%p10659) target = $region152
        $region151: #{style_encoder_forward.1} parent=147 // pred_region
          %p10662 = scmp.lt.s32.totalorder %s42, 1
          %s10663 = scalar_select %p10662, %s42, 1
          %s10664 = smul.addr %s10663, 4
          %s10665 = smul.addr %s10664, 8
          %s10666 = scalar_lea.vmem %s15, %s10665
        $region152: #{style_encoder_forward.1} parent=147 // pred_fallthru
          _
        // Predicated region
        $region153: #{style_encoder_forward.1} parent=147 // pred_check
          %p10667 = pneg %p422
        $region154: #{style_encoder_forward.1} parent=147 // pred_check_branch
          %10669 = sbr.rel (%p10667) target = $region156
        $region155: #{style_encoder_forward.1} parent=147 // pred_region
          %p10670 = scmp.lt.s32.totalorder %s42, 1
          %s10671 = scalar_select %p10670, %s42, 1
          %s10672 = smul.addr %s10671, 8
          %s10673 = scalar_lea.vmem %s16, %s10672
        $region156: #{style_encoder_forward.1} parent=147 // pred_fallthru
          _
      $region148: #{style_encoder_forward.1} parent=5 // pred_fallthru
        _
    $region6: #{style_encoder_forward.1} parent=1 // loop_footer
      %s35 = sadd.s32 1, %s31
    $region7: #{style_encoder_forward.1} parent=1 // loop_footer_branch
      %30 = sbr.rel target = $region3
    $region8: #{style_encoder_forward.1} parent=1 // loop_exit
      _
    %10674 = vsyncpa [#allocation6], 1
    %s10675 = scalar_lea.sflag [#allocation6], 1
    %10676 = vsyncpa %s10675, 1
    %10677 = vsyncpa [#allocation8], 1
    %10678 = vsyncpa [#allocation11], 1
    %10679 = vsyncpa [#allocation20], 1

</llo_original>
